<compile_context>
chip_gen: v7x
topology: tpu7x:2x2x1
jax: 0.10.0
libtpu: 0.0.40
codegen_flags: <defaults>
</compile_context>

<pallas_src>
import math
from functools import partial

import jax
import jax.numpy as jnp
from jax.experimental import pallas as pl
from jax.experimental.pallas import tpu as pltpu


# ----------------------------------------------------------------------------
# Single fused kernel: whole TransformerPredictor forward for one batch element
# ----------------------------------------------------------------------------

def _transformer_kernel(
    x_ref, pe_ref, win_ref, bin_ref, tgt_ref, fcw_ref, fcb_ref,
    e_wqkv_ref, e_bqkv_ref, e_wo_ref, e_bo_ref,
    e_w1_ref, e_b1_ref, e_w2_ref, e_b2_ref, e_ln_ref,
    d_sa_wv_ref, d_sa_bv_ref, d_sa_wo_ref, d_sa_bo_ref,
    d_ca_wqkv_ref, d_ca_bqkv_ref, d_ca_wo_ref, d_ca_bo_ref,
    d_w1_ref, d_b1_ref, d_w2_ref, d_b2_ref, d_ln_ref,
    out_ref,
    *, H, n_enc, n_dec, eps):
    D = win_ref.shape[1]
    Dh = D // H
    scale = 1.0 / math.sqrt(Dh)

    def layer_norm(y, g, b):
        mu = jnp.mean(y, axis=-1, keepdims=True)
        c = y - mu
        var = jnp.mean(c * c, axis=-1, keepdims=True)
        return c * jax.lax.rsqrt(var + eps) * g + b

    def mha(xq, xkv, wqkv_ref, bqkv_ref, wo_ref, bo_ref, layer):
        """Multi-head attention for one batch element.

        Per-head weights live at record offsets ((layer*3 + {q,k,v})*H + h) of the stacked
        arrays; head outputs are folded straight into the output projection accumulator so
        no lane-axis head concat / masked store is ever generated.
        """
        acc = jnp.zeros((xq.shape[0], D), jnp.float32)
        for h in range(H):
            iq = (layer * 3 + 0) * H + h
            ik = (layer * 3 + 1) * H + h
            iv = (layer * 3 + 2) * H + h
            qh = jnp.dot(xq, wqkv_ref[iq], preferred_element_type=jnp.float32) + bqkv_ref[iq]
            kh = jnp.dot(xkv, wqkv_ref[ik], preferred_element_type=jnp.float32) + bqkv_ref[ik]
            vh = jnp.dot(xkv, wqkv_ref[iv], preferred_element_type=jnp.float32) + bqkv_ref[iv]
            # scores: contract last axes of Q and K -> no materialized transpose
            s = jax.lax.dot_general(qh, kh, (((1,), (1,)), ((), ())),
                                    preferred_element_type=jnp.float32) * scale
            m = jnp.max(s, axis=-1, keepdims=True)
            p = jnp.exp(s - m)
            p = p / jnp.sum(p, axis=-1, keepdims=True)
            ctx = jnp.dot(p, vh, preferred_element_type=jnp.float32)          # (Sq, Dh)
            acc = acc + jnp.dot(ctx, wo_ref[layer * H + h],
                                preferred_element_type=jnp.float32)
        return acc + bo_ref[layer]

    # --- input projection + positional encoding (dropout = identity in eval) ---
    x = x_ref[0]                                                              # (S, In_pad)
    h = (jnp.dot(x, win_ref[...], preferred_element_type=jnp.float32)
         + bin_ref[...] + pe_ref[...])                                        # (S, D)

    # --- encoder stack (post-norm, relu) ---
    for l in range(n_enc):
        attn = mha(h, h, e_wqkv_ref, e_bqkv_ref, e_wo_ref, e_bo_ref, l)
        h = layer_norm(h + attn, e_ln_ref[4 * l + 0], e_ln_ref[4 * l + 1])
        ff = jnp.maximum(
            jnp.dot(h, e_w1_ref[l], preferred_element_type=jnp.float32) + e_b1_ref[l], 0.0)
        ff = jnp.dot(ff, e_w2_ref[l], preferred_element_type=jnp.float32) + e_b2_ref[l]
        h = layer_norm(h + ff, e_ln_ref[4 * l + 2], e_ln_ref[4 * l + 3])

    memory = h                                                                # (S, D)

    # --- decoder (target sequence length is exactly 1: the learned target embedding) ---
    t = tgt_ref[...]                                                          # (1, D)
    for l in range(n_dec):
        # Self-attention over a single position: softmax over one key == 1, so the
        # attention output equals V exactly -> only Wv/Wo matter (exact math, not an approx).
        v = jnp.dot(t, d_sa_wv_ref[l], preferred_element_type=jnp.float32) + d_sa_bv_ref[l]
        sa = jnp.dot(v, d_sa_wo_ref[l], preferred_element_type=jnp.float32) + d_sa_bo_ref[l]
        t = layer_norm(t + sa, d_ln_ref[6 * l + 0], d_ln_ref[6 * l + 1])
        # Cross-attention over encoder memory.
        ca = mha(t, memory, d_ca_wqkv_ref, d_ca_bqkv_ref, d_ca_wo_ref, d_ca_bo_ref, l)
        t = layer_norm(t + ca, d_ln_ref[6 * l + 2], d_ln_ref[6 * l + 3])
        # FFN.
        ff = jnp.maximum(
            jnp.dot(t, d_w1_ref[l], preferred_element_type=jnp.float32) + d_b1_ref[l], 0.0)
        ff = jnp.dot(ff, d_w2_ref[l], preferred_element_type=jnp.float32) + d_b2_ref[l]
        t = layer_norm(t + ff, d_ln_ref[6 * l + 4], d_ln_ref[6 * l + 5])

    # --- fc_out, lane-padded to T_pad (wrapper slices back to target_dim) ---
    out_ref[0] = jnp.dot(t, fcw_ref[...], preferred_element_type=jnp.float32) + fcb_ref[...]


# ----------------------------------------------------------------------------
# Wrapper: parameter packing + pallas_call
# ----------------------------------------------------------------------------

def positional_encoding(seq_len, d_model):
    # Identical to the PyTorch PositionalEncoding buffer (first seq_len rows).
    # Depends only on static shapes -> constant-folded under jit.
    position = jnp.arange(seq_len, dtype=jnp.float32)[:, None]
    div_term = jnp.exp(jnp.arange(0, d_model, 2, dtype=jnp.float32)
                       * (-math.log(10000.0) / d_model))
    pe = jnp.zeros((seq_len, d_model), dtype=jnp.float32)
    pe = pe.at[:, 0::2].set(jnp.sin(position * div_term))
    pe = pe.at[:, 1::2].set(jnp.cos(position * div_term))
    return pe


def pack_params(params, nhead):
    """Stack per-layer weights and pre-split attention weights per head (wrapper-side)."""
    D = params["input_proj_w"].shape[1]
    In = params["input_proj_w"].shape[0]
    T = params["fc_out_w"].shape[1]
    Dh = D // nhead
    In_pad = ((In + 7) // 8) * 8
    T_pad = ((T + 127) // 128) * 128

    def split_wq(w):                       # (D, D) -> (H, D, Dh): head h = columns h*Dh:(h+1)*Dh
        return jnp.transpose(w.reshape(D, nhead, Dh), (1, 0, 2))

    def split_bq(b):                       # (D,) -> (H, 1, Dh)
        return b.reshape(nhead, 1, Dh)

    def pack_attn(ap):
        wqkv = jnp.concatenate([split_wq(ap["wqkv"][i]) for i in range(3)], axis=0)
        bqkv = jnp.concatenate([split_bq(ap["bqkv"][i]) for i in range(3)], axis=0)
        wo = ap["wo"].reshape(nhead, Dh, D)          # head h = rows h*Dh:(h+1)*Dh of Wo
        bo = ap["bo"].reshape(1, D)
        return wqkv, bqkv, wo, bo

    ew, eb, eo, eob = [], [], [], []
    ew1, eb1, ew2, eb2, eln = [], [], [], [], []
    for lp in params["encoder_layers"]:
        w, b, o, ob = pack_attn(lp["attn"])
        ew.append(w); eb.append(b); eo.append(o); eob.append(ob)
        ew1.append(lp["w1"]); eb1.append(lp["b1"].reshape(1, -1))
        ew2.append(lp["w2"]); eb2.append(lp["b2"].reshape(1, -1))
        eln.append(jnp.stack([lp["ln1_g"], lp["ln1_b"],
                              lp["ln2_g"], lp["ln2_b"]])[:, None, :])

    dsawv, dsabv, dsawo, dsabo = [], [], [], []
    dcw, dcb, dco, dcob = [], [], [], []
    dw1, db1, dw2, db2, dln = [], [], [], [], []
    for lp in params["decoder_layers"]:
        sa = lp["self_attn"]
        dsawv.append(sa["wqkv"][2]); dsabv.append(sa["bqkv"][2].reshape(1, D))
        dsawo.append(sa["wo"]);      dsabo.append(sa["bo"].reshape(1, D))
        w, b, o, ob = pack_attn(lp["cross_attn"])
        dcw.append(w); dcb.append(b); dco.append(o); dcob.append(ob)
        dw1.append(lp["w1"]); db1.append(lp["b1"].reshape(1, -1))
        dw2.append(lp["w2"]); db2.append(lp["b2"].reshape(1, -1))
        dln.append(jnp.stack([lp["ln1_g"], lp["ln1_b"], lp["ln2_g"],
                              lp["ln2_b"], lp["ln3_g"], lp["ln3_b"]])[:, None, :])

    packed = {
        "win": jnp.pad(params["input_proj_w"], ((0, In_pad - In), (0, 0))),
        "bin": params["input_proj_b"].reshape(1, D),
        "tgt": params["target_embedding"].reshape(1, D),
        "fcw": jnp.pad(params["fc_out_w"], ((0, 0), (0, T_pad - T))),
        "fcb": jnp.pad(params["fc_out_b"], (0, T_pad - T)).reshape(1, T_pad),
        "e_wqkv": jnp.concatenate(ew, 0), "e_bqkv": jnp.concatenate(eb, 0),
        "e_wo": jnp.concatenate(eo, 0), "e_bo": jnp.stack(eob, 0),
        "e_w1": jnp.stack(ew1, 0), "e_b1": jnp.stack(eb1, 0),
        "e_w2": jnp.stack(ew2, 0), "e_b2": jnp.stack(eb2, 0),
        "e_ln": jnp.concatenate(eln, 0),
        "d_sa_wv": jnp.stack(dsawv, 0), "d_sa_bv": jnp.stack(dsabv, 0),
        "d_sa_wo": jnp.stack(dsawo, 0), "d_sa_bo": jnp.stack(dsabo, 0),
        "d_ca_wqkv": jnp.concatenate(dcw, 0), "d_ca_bqkv": jnp.concatenate(dcb, 0),
        "d_ca_wo": jnp.concatenate(dco, 0), "d_ca_bo": jnp.stack(dcob, 0),
        "d_w1": jnp.stack(dw1, 0), "d_b1": jnp.stack(db1, 0),
        "d_w2": jnp.stack(dw2, 0), "d_b2": jnp.stack(db2, 0),
        "d_ln": jnp.concatenate(dln, 0),
    }
    meta = {"D": D, "In": In, "In_pad": In_pad, "T": T, "T_pad": T_pad,
            "n_enc": len(params["encoder_layers"]),
            "n_dec": len(params["decoder_layers"])}
    return packed, meta


def transformer_predictor_forward(x, params, nhead):
    """x: (batch, seq_len, input_dim) -> (batch, target_dim). One fused pallas_call."""
    B, S, In = x.shape
    packed, meta = pack_params(params, nhead)
    D, In_pad, T, T_pad = meta["D"], meta["In_pad"], meta["T"], meta["T_pad"]

    pe = positional_encoding(S, D)
    x_p = jnp.pad(x.astype(jnp.float32), ((0, 0), (0, 0), (0, In_pad - In)))

    weight_args = [
        pe, packed["win"], packed["bin"], packed["tgt"], packed["fcw"], packed["fcb"],
        packed["e_wqkv"], packed["e_bqkv"], packed["e_wo"], packed["e_bo"],
        packed["e_w1"], packed["e_b1"], packed["e_w2"], packed["e_b2"], packed["e_ln"],
        packed["d_sa_wv"], packed["d_sa_bv"], packed["d_sa_wo"], packed["d_sa_bo"],
        packed["d_ca_wqkv"], packed["d_ca_bqkv"], packed["d_ca_wo"], packed["d_ca_bo"],
        packed["d_w1"], packed["d_b1"], packed["d_w2"], packed["d_b2"], packed["d_ln"],
    ]

    def const_spec(a):
        nd = a.ndim
        return pl.BlockSpec(a.shape, lambda b: (0,) * nd)   # same block every step -> no re-DMA

    kernel = partial(_transformer_kernel, H=nhead,
                     n_enc=meta["n_enc"], n_dec=meta["n_dec"], eps=1e-5)

    out = pl.pallas_call(
        kernel,
        out_shape=jax.ShapeDtypeStruct((B, 1, T_pad), jnp.float32),
        grid=(B,),
        in_specs=[pl.BlockSpec((1, S, In_pad), lambda b: (b, 0, 0))]
                 + [const_spec(a) for a in weight_args],
        out_specs=pl.BlockSpec((1, 1, T_pad), lambda b: (b, 0, 0)),
        compiler_params=pltpu.CompilerParams(
            dimension_semantics=("parallel",),          # batch axis: shards across v7x cores
            vmem_limit_bytes=32 * 1024 * 1024),
    )(x_p, *weight_args)

    return out[:, 0, :T]


# ----------------------------------------------------------------------------
# Pure-JAX reference (same math, standard layouts) for a correctness check
# ----------------------------------------------------------------------------

_HI = jax.lax.Precision.HIGHEST


def _reference_forward(x, params, nhead):
    B, S, _ = x.shape
    D = params["input_proj_w"].shape[1]
    H, Dh = nhead, D // nhead

    def ln(y, g, b, eps=1e-5):
        mu = jnp.mean(y, axis=-1, keepdims=True)
        var = jnp.mean((y - mu) ** 2, axis=-1, keepdims=True)
        return (y - mu) / jnp.sqrt(var + eps) * g + b

    def mha(xq, xkv, ap):
        q = jnp.dot(xq, ap["wqkv"][0], precision=_HI) + ap["bqkv"][0]
        k = jnp.dot(xkv, ap["wqkv"][1], precision=_HI) + ap["bqkv"][1]
        v = jnp.dot(xkv, ap["wqkv"][2], precision=_HI) + ap["bqkv"][2]
        split = lambda z: z.reshape(z.shape[0], z.shape[1], H, Dh).transpose(0, 2, 1, 3)
        qh, kh, vh = split(q), split(k), split(v)
        s = jnp.einsum("bhqd,bhkd->bhqk", qh, kh, precision=_HI) / math.sqrt(Dh)
        p = jax.nn.softmax(s, axis=-1)
        ctx = jnp.einsum("bhqk,bhkd->bhqd", p, vh, precision=_HI)
        ctx = ctx.transpose(0, 2, 1, 3).reshape(xq.shape[0], xq.shape[1], D)
        return jnp.dot(ctx, ap["wo"], precision=_HI) + ap["bo"]

    pe = positional_encoding(S, D)
    h = jnp.dot(x, params["input_proj_w"], precision=_HI) + params["input_proj_b"] + pe[None]
    for lp in params["encoder_layers"]:
        h = ln(h + mha(h, h, lp["attn"]), lp["ln1_g"], lp["ln1_b"])
        ff = jnp.dot(jnp.maximum(jnp.dot(h, lp["w1"], precision=_HI) + lp["b1"], 0.0),
                     lp["w2"], precision=_HI) + lp["b2"]
        h = ln(h + ff, lp["ln2_g"], lp["ln2_b"])
    mem = h
    t = jnp.broadcast_to(params["target_embedding"], (B, 1, D))
    for lp in params["decoder_layers"]:
        t = ln(t + mha(t, t, lp["self_attn"]), lp["ln1_g"], lp["ln1_b"])
        t = ln(t + mha(t, mem, lp["cross_attn"]), lp["ln2_g"], lp["ln2_b"])
        ff = jnp.dot(jnp.maximum(jnp.dot(t, lp["w1"], precision=_HI) + lp["b1"], 0.0),
                     lp["w2"], precision=_HI) + lp["b2"]
        t = ln(t + ff, lp["ln3_g"], lp["ln3_b"])
    return jnp.dot(t[:, 0, :], params["fc_out_w"], precision=_HI) + params["fc_out_b"]


# ----------------------------------------------------------------------------
# Deterministic parameter construction
# ----------------------------------------------------------------------------

def _init_attn(key, d_model, scale=0.02):
    k0, k1, k2, k3 = jax.random.split(key, 4)
    return {
        "wqkv": scale * jax.random.normal(k0, (3, d_model, d_model), jnp.float32),
        "bqkv": scale * jax.random.normal(k1, (3, d_model), jnp.float32),
        "wo": scale * jax.random.normal(k2, (d_model, d_model), jnp.float32),
        "bo": scale * jax.random.normal(k3, (d_model,), jnp.float32),
    }


def _init_ffn(key, d_model, dim_ff, scale=0.02):
    k0, k1, k2, k3 = jax.random.split(key, 4)
    return {
        "w1": scale * jax.random.normal(k0, (d_model, dim_ff), jnp.float32),
        "b1": scale * jax.random.normal(k1, (dim_ff,), jnp.float32),
        "w2": scale * jax.random.normal(k2, (dim_ff, d_model), jnp.float32),
        "b2": scale * jax.random.normal(k3, (d_model,), jnp.float32),
    }


def _init_encoder_layer(key, d_model, dim_ff, scale=0.02):
    k0, k1 = jax.random.split(key, 2)
    p = {"attn": _init_attn(k0, d_model, scale)}
    p.update(_init_ffn(k1, d_model, dim_ff, scale))
    p.update({"ln1_g": jnp.ones((d_model,), jnp.float32), "ln1_b": jnp.zeros((d_model,), jnp.float32),
              "ln2_g": jnp.ones((d_model,), jnp.float32), "ln2_b": jnp.zeros((d_model,), jnp.float32)})
    return p


def _init_decoder_layer(key, d_model, dim_ff, scale=0.02):
    k0, k1, k2 = jax.random.split(key, 3)
    p = {"self_attn": _init_attn(k0, d_model, scale),
         "cross_attn": _init_attn(k1, d_model, scale)}
    p.update(_init_ffn(k2, d_model, dim_ff, scale))
    p.update({"ln1_g": jnp.ones((d_model,), jnp.float32), "ln1_b": jnp.zeros((d_model,), jnp.float32),
              "ln2_g": jnp.ones((d_model,), jnp.float32), "ln2_b": jnp.zeros((d_model,), jnp.float32),
              "ln3_g": jnp.ones((d_model,), jnp.float32), "ln3_b": jnp.zeros((d_model,), jnp.float32)})
    return p


def init_params(key, input_dim, d_model, dim_ff, target_dim,
                num_encoder_layers, num_decoder_layers, scale=0.02):
    keys = jax.random.split(key, 3 + num_encoder_layers + num_decoder_layers)
    return {
        "input_proj_w": scale * jax.random.normal(keys[0], (input_dim, d_model), jnp.float32),
        "input_proj_b": jnp.zeros((d_model,), jnp.float32),
        "fc_out_w": scale * jax.random.normal(keys[1], (d_model, target_dim), jnp.float32),
        "fc_out_b": jnp.zeros((target_dim,), jnp.float32),
        "target_embedding": jax.random.normal(keys[2], (1, 1, d_model), jnp.float32),
        "encoder_layers": [
            _init_encoder_layer(keys[3 + i], d_model, dim_ff, scale)
            for i in range(num_encoder_layers)],
        "decoder_layers": [
            _init_decoder_layer(keys[3 + num_encoder_layers + i], d_model, dim_ff, scale)
            for i in range(num_decoder_layers)],
    }


# ----------------------------------------------------------------------------

if __name__ == "__main__":
    # Small shapes consistent with the module's forward contract:
    # x: (batch, seq_len, input_dim) -> out: (batch, target_dim)
    batch, seq_len = 2, 8
    input_dim, target_dim = 7, 7
    d_model, nhead, dim_ff = 32, 4, 64
    num_encoder_layers, num_decoder_layers = 2, 1

    key = jax.random.PRNGKey(0)
    k_params, k_x = jax.random.split(key)
    params = init_params(k_params, input_dim, d_model, dim_ff, target_dim,
                         num_encoder_layers, num_decoder_layers)
    x = jax.random.normal(k_x, (batch, seq_len, input_dim), jnp.float32)

    fwd = jax.jit(lambda xx, pp: transformer_predictor_forward(xx, pp, nhead))
    out = jax.block_until_ready(fwd(x, params))
    assert out.shape == (batch, target_dim), out.shape
    assert bool(jnp.all(jnp.isfinite(out)))

    ref = jax.block_until_ready(jax.jit(lambda xx, pp: _reference_forward(xx, pp, nhead))(x, params))
    max_err = float(jnp.max(jnp.abs(out - ref)))
    assert max_err < 1e-3, f"kernel/reference mismatch: max abs err = {max_err}"

    print("KERNEL_OK")
</pallas_src>

<mosaic_0001>
module attributes {stable_mosaic.version = 11 : i64} {
  func.func @_transformer_kernel(%arg0: i32, %arg1: memref<1x8x8xf32, #tpu.memory_space<vmem>>, %arg2: memref<8x32xf32, #tpu.memory_space<vmem>>, %arg3: memref<8x32xf32, #tpu.memory_space<vmem>>, %arg4: memref<1x32xf32, #tpu.memory_space<vmem>>, %arg5: memref<1x32xf32, #tpu.memory_space<vmem>>, %arg6: memref<32x128xf32, #tpu.memory_space<vmem>>, %arg7: memref<1x128xf32, #tpu.memory_space<vmem>>, %arg8: memref<24x32x8xf32, #tpu.memory_space<vmem>>, %arg9: memref<24x1x8xf32, #tpu.memory_space<vmem>>, %arg10: memref<8x8x32xf32, #tpu.memory_space<vmem>>, %arg11: memref<2x1x32xf32, #tpu.memory_space<vmem>>, %arg12: memref<2x32x64xf32, #tpu.memory_space<vmem>>, %arg13: memref<2x1x64xf32, #tpu.memory_space<vmem>>, %arg14: memref<2x64x32xf32, #tpu.memory_space<vmem>>, %arg15: memref<2x1x32xf32, #tpu.memory_space<vmem>>, %arg16: memref<8x1x32xf32, #tpu.memory_space<vmem>>, %arg17: memref<1x32x32xf32, #tpu.memory_space<vmem>>, %arg18: memref<1x1x32xf32, #tpu.memory_space<vmem>>, %arg19: memref<1x32x32xf32, #tpu.memory_space<vmem>>, %arg20: memref<1x1x32xf32, #tpu.memory_space<vmem>>, %arg21: memref<12x32x8xf32, #tpu.memory_space<vmem>>, %arg22: memref<12x1x8xf32, #tpu.memory_space<vmem>>, %arg23: memref<4x8x32xf32, #tpu.memory_space<vmem>>, %arg24: memref<1x1x32xf32, #tpu.memory_space<vmem>>, %arg25: memref<1x32x64xf32, #tpu.memory_space<vmem>>, %arg26: memref<1x1x64xf32, #tpu.memory_space<vmem>>, %arg27: memref<1x64x32xf32, #tpu.memory_space<vmem>>, %arg28: memref<1x1x32xf32, #tpu.memory_space<vmem>>, %arg29: memref<6x1x32xf32, #tpu.memory_space<vmem>>, %arg30: memref<1x1x128xf32, #tpu.memory_space<vmem>>) attributes {dimension_semantics = [#tpu.dimension_semantics<parallel>], iteration_bounds = array<i64: 2>, scalar_prefetch = 0 : i64, scratch_operands = 0 : i64, tpu.core_type = #tpu.core_type<tc>, window_params = [{transform_indices = @transform_0, window_bounds = array<i64: 1, 8, 8>}, {pipeline_mode = #tpu.pipeline_mode<synchronous>, transform_indices = @transform_1, window_bounds = array<i64: 8, 32>}, {pipeline_mode = #tpu.pipeline_mode<synchronous>, transform_indices = @transform_2, window_bounds = array<i64: 8, 32>}, {pipeline_mode = #tpu.pipeline_mode<synchronous>, transform_indices = @transform_3, window_bounds = array<i64: 1, 32>}, {pipeline_mode = #tpu.pipeline_mode<synchronous>, transform_indices = @transform_4, window_bounds = array<i64: 1, 32>}, {pipeline_mode = #tpu.pipeline_mode<synchronous>, transform_indices = @transform_5, window_bounds = array<i64: 32, 128>}, {pipeline_mode = #tpu.pipeline_mode<synchronous>, transform_indices = @transform_6, window_bounds = array<i64: 1, 128>}, {pipeline_mode = #tpu.pipeline_mode<synchronous>, transform_indices = @transform_7, window_bounds = array<i64: 24, 32, 8>}, {pipeline_mode = #tpu.pipeline_mode<synchronous>, transform_indices = @transform_8, window_bounds = array<i64: 24, 1, 8>}, {pipeline_mode = #tpu.pipeline_mode<synchronous>, transform_indices = @transform_9, window_bounds = array<i64: 8, 8, 32>}, {pipeline_mode = #tpu.pipeline_mode<synchronous>, transform_indices = @transform_10, window_bounds = array<i64: 2, 1, 32>}, {pipeline_mode = #tpu.pipeline_mode<synchronous>, transform_indices = @transform_11, window_bounds = array<i64: 2, 32, 64>}, {pipeline_mode = #tpu.pipeline_mode<synchronous>, transform_indices = @transform_12, window_bounds = array<i64: 2, 1, 64>}, {pipeline_mode = #tpu.pipeline_mode<synchronous>, transform_indices = @transform_13, window_bounds = array<i64: 2, 64, 32>}, {pipeline_mode = #tpu.pipeline_mode<synchronous>, transform_indices = @transform_14, window_bounds = array<i64: 2, 1, 32>}, {pipeline_mode = #tpu.pipeline_mode<synchronous>, transform_indices = @transform_15, window_bounds = array<i64: 8, 1, 32>}, {pipeline_mode = #tpu.pipeline_mode<synchronous>, transform_indices = @transform_16, window_bounds = array<i64: 1, 32, 32>}, {pipeline_mode = #tpu.pipeline_mode<synchronous>, transform_indices = @transform_17, window_bounds = array<i64: 1, 1, 32>}, {pipeline_mode = #tpu.pipeline_mode<synchronous>, transform_indices = @transform_18, window_bounds = array<i64: 1, 32, 32>}, {pipeline_mode = #tpu.pipeline_mode<synchronous>, transform_indices = @transform_19, window_bounds = array<i64: 1, 1, 32>}, {pipeline_mode = #tpu.pipeline_mode<synchronous>, transform_indices = @transform_20, window_bounds = array<i64: 12, 32, 8>}, {pipeline_mode = #tpu.pipeline_mode<synchronous>, transform_indices = @transform_21, window_bounds = array<i64: 12, 1, 8>}, {pipeline_mode = #tpu.pipeline_mode<synchronous>, transform_indices = @transform_22, window_bounds = array<i64: 4, 8, 32>}, {pipeline_mode = #tpu.pipeline_mode<synchronous>, transform_indices = @transform_23, window_bounds = array<i64: 1, 1, 32>}, {pipeline_mode = #tpu.pipeline_mode<synchronous>, transform_indices = @transform_24, window_bounds = array<i64: 1, 32, 64>}, {pipeline_mode = #tpu.pipeline_mode<synchronous>, transform_indices = @transform_25, window_bounds = array<i64: 1, 1, 64>}, {pipeline_mode = #tpu.pipeline_mode<synchronous>, transform_indices = @transform_26, window_bounds = array<i64: 1, 64, 32>}, {pipeline_mode = #tpu.pipeline_mode<synchronous>, transform_indices = @transform_27, window_bounds = array<i64: 1, 1, 32>}, {pipeline_mode = #tpu.pipeline_mode<synchronous>, transform_indices = @transform_28, window_bounds = array<i64: 6, 1, 32>}, {transform_indices = @transform_29, window_bounds = array<i64: 1, 1, 128>}]} {
    %c0 = arith.constant 0 : index
    %c0_0 = arith.constant 0 : index
    %c0_1 = arith.constant 0 : index
    %0 = vector.load %arg1[%c0, %c0_0, %c0_1] : memref<1x8x8xf32, #tpu.memory_space<vmem>>, vector<1x8x8xf32>
    %1 = vector.shape_cast %0 : vector<1x8x8xf32> to vector<8x8xf32>
    %c0_2 = arith.constant 0 : index
    %c0_3 = arith.constant 0 : index
    %2 = vector.load %arg3[%c0_2, %c0_3] : memref<8x32xf32, #tpu.memory_space<vmem>>, vector<8x32xf32>
    %cst = arith.constant dense<0.000000e+00> : vector<8x32xf32>
    %3 = tpu.matmul %1, %2, %cst {dimension_numbers = #tpu.dot_dimension_numbers<[1], [0], [0], [1], [0, 0, 1, 1], [], []>} : vector<8x8xf32>, vector<8x32xf32>, vector<8x32xf32> -> vector<8x32xf32>
    %c0_4 = arith.constant 0 : index
    %c0_5 = arith.constant 0 : index
    %4 = vector.load %arg4[%c0_4, %c0_5] : memref<1x32xf32, #tpu.memory_space<vmem>>, vector<1x32xf32>
    %5 = vector.broadcast %4 : vector<1x32xf32> to vector<8x32xf32>
    %6 = arith.addf %3, %5 : vector<8x32xf32>
    %c0_6 = arith.constant 0 : index
    %c0_7 = arith.constant 0 : index
    %7 = vector.load %arg2[%c0_6, %c0_7] : memref<8x32xf32, #tpu.memory_space<vmem>>, vector<8x32xf32>
    %8 = arith.addf %6, %7 : vector<8x32xf32>
    %cst_8 = arith.constant 0.000000e+00 : f32
    %9 = vector.broadcast %cst_8 : f32 to vector<8x32xf32>
    %c0_9 = arith.constant 0 : index
    %c0_10 = arith.constant 0 : index
    %c0_11 = arith.constant 0 : index
    %10 = vector.load %arg8[%c0_9, %c0_10, %c0_11] : memref<24x32x8xf32, #tpu.memory_space<vmem>>, vector<1x32x8xf32>
    %11 = vector.shape_cast %10 : vector<1x32x8xf32> to vector<32x8xf32>
    %cst_12 = arith.constant dense<0.000000e+00> : vector<8x8xf32>
    %12 = tpu.matmul %8, %11, %cst_12 {dimension_numbers = #tpu.dot_dimension_numbers<[1], [0], [0], [1], [0, 0, 1, 1], [], []>} : vector<8x32xf32>, vector<32x8xf32>, vector<8x8xf32> -> vector<8x8xf32>
    %c0_13 = arith.constant 0 : index
    %c0_14 = arith.constant 0 : index
    %c0_15 = arith.constant 0 : index
    %13 = vector.load %arg9[%c0_13, %c0_14, %c0_15] : memref<24x1x8xf32, #tpu.memory_space<vmem>>, vector<1x1x8xf32>
    %14 = vector.shape_cast %13 : vector<1x1x8xf32> to vector<1x8xf32>
    %15 = vector.broadcast %14 : vector<1x8xf32> to vector<8x8xf32>
    %16 = arith.addf %12, %15 : vector<8x8xf32>
    %c4 = arith.constant 4 : index
    %c0_16 = arith.constant 0 : index
    %c0_17 = arith.constant 0 : index
    %17 = vector.load %arg8[%c4, %c0_16, %c0_17] : memref<24x32x8xf32, #tpu.memory_space<vmem>>, vector<1x32x8xf32>
    %18 = vector.shape_cast %17 : vector<1x32x8xf32> to vector<32x8xf32>
    %cst_18 = arith.constant dense<0.000000e+00> : vector<8x8xf32>
    %19 = tpu.matmul %8, %18, %cst_18 {dimension_numbers = #tpu.dot_dimension_numbers<[1], [0], [0], [1], [0, 0, 1, 1], [], []>} : vector<8x32xf32>, vector<32x8xf32>, vector<8x8xf32> -> vector<8x8xf32>
    %c4_19 = arith.constant 4 : index
    %c0_20 = arith.constant 0 : index
    %c0_21 = arith.constant 0 : index
    %20 = vector.load %arg9[%c4_19, %c0_20, %c0_21] : memref<24x1x8xf32, #tpu.memory_space<vmem>>, vector<1x1x8xf32>
    %21 = vector.shape_cast %20 : vector<1x1x8xf32> to vector<1x8xf32>
    %22 = vector.broadcast %21 : vector<1x8xf32> to vector<8x8xf32>
    %23 = arith.addf %19, %22 : vector<8x8xf32>
    %c8 = arith.constant 8 : index
    %c0_22 = arith.constant 0 : index
    %c0_23 = arith.constant 0 : index
    %24 = vector.load %arg8[%c8, %c0_22, %c0_23] : memref<24x32x8xf32, #tpu.memory_space<vmem>>, vector<1x32x8xf32>
    %25 = vector.shape_cast %24 : vector<1x32x8xf32> to vector<32x8xf32>
    %cst_24 = arith.constant dense<0.000000e+00> : vector<8x8xf32>
    %26 = tpu.matmul %8, %25, %cst_24 {dimension_numbers = #tpu.dot_dimension_numbers<[1], [0], [0], [1], [0, 0, 1, 1], [], []>} : vector<8x32xf32>, vector<32x8xf32>, vector<8x8xf32> -> vector<8x8xf32>
    %c8_25 = arith.constant 8 : index
    %c0_26 = arith.constant 0 : index
    %c0_27 = arith.constant 0 : index
    %27 = vector.load %arg9[%c8_25, %c0_26, %c0_27] : memref<24x1x8xf32, #tpu.memory_space<vmem>>, vector<1x1x8xf32>
    %28 = vector.shape_cast %27 : vector<1x1x8xf32> to vector<1x8xf32>
    %29 = vector.broadcast %28 : vector<1x8xf32> to vector<8x8xf32>
    %30 = arith.addf %26, %29 : vector<8x8xf32>
    %cst_28 = arith.constant dense<0.000000e+00> : vector<8x8xf32>
    %31 = tpu.matmul %16, %23, %cst_28 {dimension_numbers = #tpu.dot_dimension_numbers<[1], [1], [0], [0], [0, 0, 1, 0], [], []>} : vector<8x8xf32>, vector<8x8xf32>, vector<8x8xf32> -> vector<8x8xf32>
    %cst_29 = arith.constant 0.353553385 : f32
    %32 = vector.broadcast %cst_29 : f32 to vector<8x8xf32>
    %33 = arith.mulf %31, %32 : vector<8x8xf32>
    %cst_30 = arith.constant dense<0xFF800000> : vector<8xf32>
    %34 = vector.multi_reduction <maximumf>, %33, %cst_30 [1] : vector<8x8xf32> to vector<8xf32>
    %35 = vector.shape_cast %34 : vector<8xf32> to vector<8x1xf32>
    %36 = vector.broadcast %35 : vector<8x1xf32> to vector<8x8xf32>
    %37 = arith.subf %33, %36 : vector<8x8xf32>
    %38 = math.exp %37 : vector<8x8xf32>
    %cst_31 = arith.constant dense<0.000000e+00> : vector<8xf32>
    %39 = vector.multi_reduction <add>, %38, %cst_31 [1] : vector<8x8xf32> to vector<8xf32>
    %40 = vector.shape_cast %39 : vector<8xf32> to vector<8x1xf32>
    %41 = vector.broadcast %40 : vector<8x1xf32> to vector<8x8xf32>
    %42 = arith.divf %38, %41 : vector<8x8xf32>
    %cst_32 = arith.constant dense<0.000000e+00> : vector<8x8xf32>
    %43 = tpu.matmul %42, %30, %cst_32 {dimension_numbers = #tpu.dot_dimension_numbers<[1], [0], [0], [1], [0, 0, 1, 1], [], []>} : vector<8x8xf32>, vector<8x8xf32>, vector<8x8xf32> -> vector<8x8xf32>
    %c0_33 = arith.constant 0 : index
    %c0_34 = arith.constant 0 : index
    %c0_35 = arith.constant 0 : index
    %44 = vector.load %arg10[%c0_33, %c0_34, %c0_35] : memref<8x8x32xf32, #tpu.memory_space<vmem>>, vector<1x8x32xf32>
    %45 = vector.shape_cast %44 : vector<1x8x32xf32> to vector<8x32xf32>
    %cst_36 = arith.constant dense<0.000000e+00> : vector<8x32xf32>
    %46 = tpu.matmul %43, %45, %cst_36 {dimension_numbers = #tpu.dot_dimension_numbers<[1], [0], [0], [1], [0, 0, 1, 1], [], []>} : vector<8x8xf32>, vector<8x32xf32>, vector<8x32xf32> -> vector<8x32xf32>
    %47 = arith.addf %9, %46 : vector<8x32xf32>
    %c1 = arith.constant 1 : index
    %c0_37 = arith.constant 0 : index
    %c0_38 = arith.constant 0 : index
    %48 = vector.load %arg8[%c1, %c0_37, %c0_38] : memref<24x32x8xf32, #tpu.memory_space<vmem>>, vector<1x32x8xf32>
    %49 = vector.shape_cast %48 : vector<1x32x8xf32> to vector<32x8xf32>
    %cst_39 = arith.constant dense<0.000000e+00> : vector<8x8xf32>
    %50 = tpu.matmul %8, %49, %cst_39 {dimension_numbers = #tpu.dot_dimension_numbers<[1], [0], [0], [1], [0, 0, 1, 1], [], []>} : vector<8x32xf32>, vector<32x8xf32>, vector<8x8xf32> -> vector<8x8xf32>
    %c1_40 = arith.constant 1 : index
    %c0_41 = arith.constant 0 : index
    %c0_42 = arith.constant 0 : index
    %51 = vector.load %arg9[%c1_40, %c0_41, %c0_42] : memref<24x1x8xf32, #tpu.memory_space<vmem>>, vector<1x1x8xf32>
    %52 = vector.shape_cast %51 : vector<1x1x8xf32> to vector<1x8xf32>
    %53 = vector.broadcast %52 : vector<1x8xf32> to vector<8x8xf32>
    %54 = arith.addf %50, %53 : vector<8x8xf32>
    %c5 = arith.constant 5 : index
    %c0_43 = arith.constant 0 : index
    %c0_44 = arith.constant 0 : index
    %55 = vector.load %arg8[%c5, %c0_43, %c0_44] : memref<24x32x8xf32, #tpu.memory_space<vmem>>, vector<1x32x8xf32>
    %56 = vector.shape_cast %55 : vector<1x32x8xf32> to vector<32x8xf32>
    %cst_45 = arith.constant dense<0.000000e+00> : vector<8x8xf32>
    %57 = tpu.matmul %8, %56, %cst_45 {dimension_numbers = #tpu.dot_dimension_numbers<[1], [0], [0], [1], [0, 0, 1, 1], [], []>} : vector<8x32xf32>, vector<32x8xf32>, vector<8x8xf32> -> vector<8x8xf32>
    %c5_46 = arith.constant 5 : index
    %c0_47 = arith.constant 0 : index
    %c0_48 = arith.constant 0 : index
    %58 = vector.load %arg9[%c5_46, %c0_47, %c0_48] : memref<24x1x8xf32, #tpu.memory_space<vmem>>, vector<1x1x8xf32>
    %59 = vector.shape_cast %58 : vector<1x1x8xf32> to vector<1x8xf32>
    %60 = vector.broadcast %59 : vector<1x8xf32> to vector<8x8xf32>
    %61 = arith.addf %57, %60 : vector<8x8xf32>
    %c9 = arith.constant 9 : index
    %c0_49 = arith.constant 0 : index
    %c0_50 = arith.constant 0 : index
    %62 = vector.load %arg8[%c9, %c0_49, %c0_50] : memref<24x32x8xf32, #tpu.memory_space<vmem>>, vector<1x32x8xf32>
    %63 = vector.shape_cast %62 : vector<1x32x8xf32> to vector<32x8xf32>
    %cst_51 = arith.constant dense<0.000000e+00> : vector<8x8xf32>
    %64 = tpu.matmul %8, %63, %cst_51 {dimension_numbers = #tpu.dot_dimension_numbers<[1], [0], [0], [1], [0, 0, 1, 1], [], []>} : vector<8x32xf32>, vector<32x8xf32>, vector<8x8xf32> -> vector<8x8xf32>
    %c9_52 = arith.constant 9 : index
    %c0_53 = arith.constant 0 : index
    %c0_54 = arith.constant 0 : index
    %65 = vector.load %arg9[%c9_52, %c0_53, %c0_54] : memref<24x1x8xf32, #tpu.memory_space<vmem>>, vector<1x1x8xf32>
    %66 = vector.shape_cast %65 : vector<1x1x8xf32> to vector<1x8xf32>
    %67 = vector.broadcast %66 : vector<1x8xf32> to vector<8x8xf32>
    %68 = arith.addf %64, %67 : vector<8x8xf32>
    %cst_55 = arith.constant dense<0.000000e+00> : vector<8x8xf32>
    %69 = tpu.matmul %54, %61, %cst_55 {dimension_numbers = #tpu.dot_dimension_numbers<[1], [1], [0], [0], [0, 0, 1, 0], [], []>} : vector<8x8xf32>, vector<8x8xf32>, vector<8x8xf32> -> vector<8x8xf32>
    %cst_56 = arith.constant 0.353553385 : f32
    %70 = vector.broadcast %cst_56 : f32 to vector<8x8xf32>
    %71 = arith.mulf %69, %70 : vector<8x8xf32>
    %cst_57 = arith.constant dense<0xFF800000> : vector<8xf32>
    %72 = vector.multi_reduction <maximumf>, %71, %cst_57 [1] : vector<8x8xf32> to vector<8xf32>
    %73 = vector.shape_cast %72 : vector<8xf32> to vector<8x1xf32>
    %74 = vector.broadcast %73 : vector<8x1xf32> to vector<8x8xf32>
    %75 = arith.subf %71, %74 : vector<8x8xf32>
    %76 = math.exp %75 : vector<8x8xf32>
    %cst_58 = arith.constant dense<0.000000e+00> : vector<8xf32>
    %77 = vector.multi_reduction <add>, %76, %cst_58 [1] : vector<8x8xf32> to vector<8xf32>
    %78 = vector.shape_cast %77 : vector<8xf32> to vector<8x1xf32>
    %79 = vector.broadcast %78 : vector<8x1xf32> to vector<8x8xf32>
    %80 = arith.divf %76, %79 : vector<8x8xf32>
    %cst_59 = arith.constant dense<0.000000e+00> : vector<8x8xf32>
    %81 = tpu.matmul %80, %68, %cst_59 {dimension_numbers = #tpu.dot_dimension_numbers<[1], [0], [0], [1], [0, 0, 1, 1], [], []>} : vector<8x8xf32>, vector<8x8xf32>, vector<8x8xf32> -> vector<8x8xf32>
    %c1_60 = arith.constant 1 : index
    %c0_61 = arith.constant 0 : index
    %c0_62 = arith.constant 0 : index
    %82 = vector.load %arg10[%c1_60, %c0_61, %c0_62] : memref<8x8x32xf32, #tpu.memory_space<vmem>>, vector<1x8x32xf32>
    %83 = vector.shape_cast %82 : vector<1x8x32xf32> to vector<8x32xf32>
    %cst_63 = arith.constant dense<0.000000e+00> : vector<8x32xf32>
    %84 = tpu.matmul %81, %83, %cst_63 {dimension_numbers = #tpu.dot_dimension_numbers<[1], [0], [0], [1], [0, 0, 1, 1], [], []>} : vector<8x8xf32>, vector<8x32xf32>, vector<8x32xf32> -> vector<8x32xf32>
    %85 = arith.addf %47, %84 : vector<8x32xf32>
    %c2 = arith.constant 2 : index
    %c0_64 = arith.constant 0 : index
    %c0_65 = arith.constant 0 : index
    %86 = vector.load %arg8[%c2, %c0_64, %c0_65] : memref<24x32x8xf32, #tpu.memory_space<vmem>>, vector<1x32x8xf32>
    %87 = vector.shape_cast %86 : vector<1x32x8xf32> to vector<32x8xf32>
    %cst_66 = arith.constant dense<0.000000e+00> : vector<8x8xf32>
    %88 = tpu.matmul %8, %87, %cst_66 {dimension_numbers = #tpu.dot_dimension_numbers<[1], [0], [0], [1], [0, 0, 1, 1], [], []>} : vector<8x32xf32>, vector<32x8xf32>, vector<8x8xf32> -> vector<8x8xf32>
    %c2_67 = arith.constant 2 : index
    %c0_68 = arith.constant 0 : index
    %c0_69 = arith.constant 0 : index
    %89 = vector.load %arg9[%c2_67, %c0_68, %c0_69] : memref<24x1x8xf32, #tpu.memory_space<vmem>>, vector<1x1x8xf32>
    %90 = vector.shape_cast %89 : vector<1x1x8xf32> to vector<1x8xf32>
    %91 = vector.broadcast %90 : vector<1x8xf32> to vector<8x8xf32>
    %92 = arith.addf %88, %91 : vector<8x8xf32>
    %c6 = arith.constant 6 : index
    %c0_70 = arith.constant 0 : index
    %c0_71 = arith.constant 0 : index
    %93 = vector.load %arg8[%c6, %c0_70, %c0_71] : memref<24x32x8xf32, #tpu.memory_space<vmem>>, vector<1x32x8xf32>
    %94 = vector.shape_cast %93 : vector<1x32x8xf32> to vector<32x8xf32>
    %cst_72 = arith.constant dense<0.000000e+00> : vector<8x8xf32>
    %95 = tpu.matmul %8, %94, %cst_72 {dimension_numbers = #tpu.dot_dimension_numbers<[1], [0], [0], [1], [0, 0, 1, 1], [], []>} : vector<8x32xf32>, vector<32x8xf32>, vector<8x8xf32> -> vector<8x8xf32>
    %c6_73 = arith.constant 6 : index
    %c0_74 = arith.constant 0 : index
    %c0_75 = arith.constant 0 : index
    %96 = vector.load %arg9[%c6_73, %c0_74, %c0_75] : memref<24x1x8xf32, #tpu.memory_space<vmem>>, vector<1x1x8xf32>
    %97 = vector.shape_cast %96 : vector<1x1x8xf32> to vector<1x8xf32>
    %98 = vector.broadcast %97 : vector<1x8xf32> to vector<8x8xf32>
    %99 = arith.addf %95, %98 : vector<8x8xf32>
    %c10 = arith.constant 10 : index
    %c0_76 = arith.constant 0 : index
    %c0_77 = arith.constant 0 : index
    %100 = vector.load %arg8[%c10, %c0_76, %c0_77] : memref<24x32x8xf32, #tpu.memory_space<vmem>>, vector<1x32x8xf32>
    %101 = vector.shape_cast %100 : vector<1x32x8xf32> to vector<32x8xf32>
    %cst_78 = arith.constant dense<0.000000e+00> : vector<8x8xf32>
    %102 = tpu.matmul %8, %101, %cst_78 {dimension_numbers = #tpu.dot_dimension_numbers<[1], [0], [0], [1], [0, 0, 1, 1], [], []>} : vector<8x32xf32>, vector<32x8xf32>, vector<8x8xf32> -> vector<8x8xf32>
    %c10_79 = arith.constant 10 : index
    %c0_80 = arith.constant 0 : index
    %c0_81 = arith.constant 0 : index
    %103 = vector.load %arg9[%c10_79, %c0_80, %c0_81] : memref<24x1x8xf32, #tpu.memory_space<vmem>>, vector<1x1x8xf32>
    %104 = vector.shape_cast %103 : vector<1x1x8xf32> to vector<1x8xf32>
    %105 = vector.broadcast %104 : vector<1x8xf32> to vector<8x8xf32>
    %106 = arith.addf %102, %105 : vector<8x8xf32>
    %cst_82 = arith.constant dense<0.000000e+00> : vector<8x8xf32>
    %107 = tpu.matmul %92, %99, %cst_82 {dimension_numbers = #tpu.dot_dimension_numbers<[1], [1], [0], [0], [0, 0, 1, 0], [], []>} : vector<8x8xf32>, vector<8x8xf32>, vector<8x8xf32> -> vector<8x8xf32>
    %cst_83 = arith.constant 0.353553385 : f32
    %108 = vector.broadcast %cst_83 : f32 to vector<8x8xf32>
    %109 = arith.mulf %107, %108 : vector<8x8xf32>
    %cst_84 = arith.constant dense<0xFF800000> : vector<8xf32>
    %110 = vector.multi_reduction <maximumf>, %109, %cst_84 [1] : vector<8x8xf32> to vector<8xf32>
    %111 = vector.shape_cast %110 : vector<8xf32> to vector<8x1xf32>
    %112 = vector.broadcast %111 : vector<8x1xf32> to vector<8x8xf32>
    %113 = arith.subf %109, %112 : vector<8x8xf32>
    %114 = math.exp %113 : vector<8x8xf32>
    %cst_85 = arith.constant dense<0.000000e+00> : vector<8xf32>
    %115 = vector.multi_reduction <add>, %114, %cst_85 [1] : vector<8x8xf32> to vector<8xf32>
    %116 = vector.shape_cast %115 : vector<8xf32> to vector<8x1xf32>
    %117 = vector.broadcast %116 : vector<8x1xf32> to vector<8x8xf32>
    %118 = arith.divf %114, %117 : vector<8x8xf32>
    %cst_86 = arith.constant dense<0.000000e+00> : vector<8x8xf32>
    %119 = tpu.matmul %118, %106, %cst_86 {dimension_numbers = #tpu.dot_dimension_numbers<[1], [0], [0], [1], [0, 0, 1, 1], [], []>} : vector<8x8xf32>, vector<8x8xf32>, vector<8x8xf32> -> vector<8x8xf32>
    %c2_87 = arith.constant 2 : index
    %c0_88 = arith.constant 0 : index
    %c0_89 = arith.constant 0 : index
    %120 = vector.load %arg10[%c2_87, %c0_88, %c0_89] : memref<8x8x32xf32, #tpu.memory_space<vmem>>, vector<1x8x32xf32>
    %121 = vector.shape_cast %120 : vector<1x8x32xf32> to vector<8x32xf32>
    %cst_90 = arith.constant dense<0.000000e+00> : vector<8x32xf32>
    %122 = tpu.matmul %119, %121, %cst_90 {dimension_numbers = #tpu.dot_dimension_numbers<[1], [0], [0], [1], [0, 0, 1, 1], [], []>} : vector<8x8xf32>, vector<8x32xf32>, vector<8x32xf32> -> vector<8x32xf32>
    %123 = arith.addf %85, %122 : vector<8x32xf32>
    %c3 = arith.constant 3 : index
    %c0_91 = arith.constant 0 : index
    %c0_92 = arith.constant 0 : index
    %124 = vector.load %arg8[%c3, %c0_91, %c0_92] : memref<24x32x8xf32, #tpu.memory_space<vmem>>, vector<1x32x8xf32>
    %125 = vector.shape_cast %124 : vector<1x32x8xf32> to vector<32x8xf32>
    %cst_93 = arith.constant dense<0.000000e+00> : vector<8x8xf32>
    %126 = tpu.matmul %8, %125, %cst_93 {dimension_numbers = #tpu.dot_dimension_numbers<[1], [0], [0], [1], [0, 0, 1, 1], [], []>} : vector<8x32xf32>, vector<32x8xf32>, vector<8x8xf32> -> vector<8x8xf32>
    %c3_94 = arith.constant 3 : index
    %c0_95 = arith.constant 0 : index
    %c0_96 = arith.constant 0 : index
    %127 = vector.load %arg9[%c3_94, %c0_95, %c0_96] : memref<24x1x8xf32, #tpu.memory_space<vmem>>, vector<1x1x8xf32>
    %128 = vector.shape_cast %127 : vector<1x1x8xf32> to vector<1x8xf32>
    %129 = vector.broadcast %128 : vector<1x8xf32> to vector<8x8xf32>
    %130 = arith.addf %126, %129 : vector<8x8xf32>
    %c7 = arith.constant 7 : index
    %c0_97 = arith.constant 0 : index
    %c0_98 = arith.constant 0 : index
    %131 = vector.load %arg8[%c7, %c0_97, %c0_98] : memref<24x32x8xf32, #tpu.memory_space<vmem>>, vector<1x32x8xf32>
    %132 = vector.shape_cast %131 : vector<1x32x8xf32> to vector<32x8xf32>
    %cst_99 = arith.constant dense<0.000000e+00> : vector<8x8xf32>
    %133 = tpu.matmul %8, %132, %cst_99 {dimension_numbers = #tpu.dot_dimension_numbers<[1], [0], [0], [1], [0, 0, 1, 1], [], []>} : vector<8x32xf32>, vector<32x8xf32>, vector<8x8xf32> -> vector<8x8xf32>
    %c7_100 = arith.constant 7 : index
    %c0_101 = arith.constant 0 : index
    %c0_102 = arith.constant 0 : index
    %134 = vector.load %arg9[%c7_100, %c0_101, %c0_102] : memref<24x1x8xf32, #tpu.memory_space<vmem>>, vector<1x1x8xf32>
    %135 = vector.shape_cast %134 : vector<1x1x8xf32> to vector<1x8xf32>
    %136 = vector.broadcast %135 : vector<1x8xf32> to vector<8x8xf32>
    %137 = arith.addf %133, %136 : vector<8x8xf32>
    %c11 = arith.constant 11 : index
    %c0_103 = arith.constant 0 : index
    %c0_104 = arith.constant 0 : index
    %138 = vector.load %arg8[%c11, %c0_103, %c0_104] : memref<24x32x8xf32, #tpu.memory_space<vmem>>, vector<1x32x8xf32>
    %139 = vector.shape_cast %138 : vector<1x32x8xf32> to vector<32x8xf32>
    %cst_105 = arith.constant dense<0.000000e+00> : vector<8x8xf32>
    %140 = tpu.matmul %8, %139, %cst_105 {dimension_numbers = #tpu.dot_dimension_numbers<[1], [0], [0], [1], [0, 0, 1, 1], [], []>} : vector<8x32xf32>, vector<32x8xf32>, vector<8x8xf32> -> vector<8x8xf32>
    %c11_106 = arith.constant 11 : index
    %c0_107 = arith.constant 0 : index
    %c0_108 = arith.constant 0 : index
    %141 = vector.load %arg9[%c11_106, %c0_107, %c0_108] : memref<24x1x8xf32, #tpu.memory_space<vmem>>, vector<1x1x8xf32>
    %142 = vector.shape_cast %141 : vector<1x1x8xf32> to vector<1x8xf32>
    %143 = vector.broadcast %142 : vector<1x8xf32> to vector<8x8xf32>
    %144 = arith.addf %140, %143 : vector<8x8xf32>
    %cst_109 = arith.constant dense<0.000000e+00> : vector<8x8xf32>
    %145 = tpu.matmul %130, %137, %cst_109 {dimension_numbers = #tpu.dot_dimension_numbers<[1], [1], [0], [0], [0, 0, 1, 0], [], []>} : vector<8x8xf32>, vector<8x8xf32>, vector<8x8xf32> -> vector<8x8xf32>
    %cst_110 = arith.constant 0.353553385 : f32
    %146 = vector.broadcast %cst_110 : f32 to vector<8x8xf32>
    %147 = arith.mulf %145, %146 : vector<8x8xf32>
    %cst_111 = arith.constant dense<0xFF800000> : vector<8xf32>
    %148 = vector.multi_reduction <maximumf>, %147, %cst_111 [1] : vector<8x8xf32> to vector<8xf32>
    %149 = vector.shape_cast %148 : vector<8xf32> to vector<8x1xf32>
    %150 = vector.broadcast %149 : vector<8x1xf32> to vector<8x8xf32>
    %151 = arith.subf %147, %150 : vector<8x8xf32>
    %152 = math.exp %151 : vector<8x8xf32>
    %cst_112 = arith.constant dense<0.000000e+00> : vector<8xf32>
    %153 = vector.multi_reduction <add>, %152, %cst_112 [1] : vector<8x8xf32> to vector<8xf32>
    %154 = vector.shape_cast %153 : vector<8xf32> to vector<8x1xf32>
    %155 = vector.broadcast %154 : vector<8x1xf32> to vector<8x8xf32>
    %156 = arith.divf %152, %155 : vector<8x8xf32>
    %cst_113 = arith.constant dense<0.000000e+00> : vector<8x8xf32>
    %157 = tpu.matmul %156, %144, %cst_113 {dimension_numbers = #tpu.dot_dimension_numbers<[1], [0], [0], [1], [0, 0, 1, 1], [], []>} : vector<8x8xf32>, vector<8x8xf32>, vector<8x8xf32> -> vector<8x8xf32>
    %c3_114 = arith.constant 3 : index
    %c0_115 = arith.constant 0 : index
    %c0_116 = arith.constant 0 : index
    %158 = vector.load %arg10[%c3_114, %c0_115, %c0_116] : memref<8x8x32xf32, #tpu.memory_space<vmem>>, vector<1x8x32xf32>
    %159 = vector.shape_cast %158 : vector<1x8x32xf32> to vector<8x32xf32>
    %cst_117 = arith.constant dense<0.000000e+00> : vector<8x32xf32>
    %160 = tpu.matmul %157, %159, %cst_117 {dimension_numbers = #tpu.dot_dimension_numbers<[1], [0], [0], [1], [0, 0, 1, 1], [], []>} : vector<8x8xf32>, vector<8x32xf32>, vector<8x32xf32> -> vector<8x32xf32>
    %161 = arith.addf %123, %160 : vector<8x32xf32>
    %c0_118 = arith.constant 0 : index
    %c0_119 = arith.constant 0 : index
    %c0_120 = arith.constant 0 : index
    %162 = vector.load %arg11[%c0_118, %c0_119, %c0_120] : memref<2x1x32xf32, #tpu.memory_space<vmem>>, vector<1x1x32xf32>
    %163 = vector.shape_cast %162 : vector<1x1x32xf32> to vector<1x32xf32>
    %164 = vector.broadcast %163 : vector<1x32xf32> to vector<8x32xf32>
    %165 = arith.addf %161, %164 : vector<8x32xf32>
    %166 = arith.addf %8, %165 : vector<8x32xf32>
    %c0_121 = arith.constant 0 : index
    %c0_122 = arith.constant 0 : index
    %c0_123 = arith.constant 0 : index
    %167 = vector.load %arg16[%c0_121, %c0_122, %c0_123] : memref<8x1x32xf32, #tpu.memory_space<vmem>>, vector<1x1x32xf32>
    %168 = vector.shape_cast %167 : vector<1x1x32xf32> to vector<1x32xf32>
    %c1_124 = arith.constant 1 : index
    %c0_125 = arith.constant 0 : index
    %c0_126 = arith.constant 0 : index
    %169 = vector.load %arg16[%c1_124, %c0_125, %c0_126] : memref<8x1x32xf32, #tpu.memory_space<vmem>>, vector<1x1x32xf32>
    %170 = vector.shape_cast %169 : vector<1x1x32xf32> to vector<1x32xf32>
    %cst_127 = arith.constant dense<0.000000e+00> : vector<8xf32>
    %171 = vector.multi_reduction <add>, %166, %cst_127 [1] : vector<8x32xf32> to vector<8xf32>
    %172 = vector.shape_cast %171 : vector<8xf32> to vector<8x1xf32>
    %cst_128 = arith.constant 3.200000e+01 : f32
    %173 = vector.broadcast %cst_128 : f32 to vector<8x1xf32>
    %174 = arith.divf %172, %173 : vector<8x1xf32>
    %175 = vector.broadcast %174 : vector<8x1xf32> to vector<8x32xf32>
    %176 = arith.subf %166, %175 : vector<8x32xf32>
    %177 = arith.mulf %176, %176 : vector<8x32xf32>
    %cst_129 = arith.constant dense<0.000000e+00> : vector<8xf32>
    %178 = vector.multi_reduction <add>, %177, %cst_129 [1] : vector<8x32xf32> to vector<8xf32>
    %179 = vector.shape_cast %178 : vector<8xf32> to vector<8x1xf32>
    %cst_130 = arith.constant 3.200000e+01 : f32
    %180 = vector.broadcast %cst_130 : f32 to vector<8x1xf32>
    %181 = arith.divf %179, %180 : vector<8x1xf32>
    %cst_131 = arith.constant 9.99999974E-6 : f32
    %182 = vector.broadcast %cst_131 : f32 to vector<8x1xf32>
    %183 = arith.addf %181, %182 : vector<8x1xf32>
    %184 = math.rsqrt %183 : vector<8x1xf32>
    %185 = vector.broadcast %184 : vector<8x1xf32> to vector<8x32xf32>
    %186 = arith.mulf %176, %185 : vector<8x32xf32>
    %187 = vector.broadcast %168 : vector<1x32xf32> to vector<8x32xf32>
    %188 = arith.mulf %186, %187 : vector<8x32xf32>
    %189 = vector.broadcast %170 : vector<1x32xf32> to vector<8x32xf32>
    %190 = arith.addf %188, %189 : vector<8x32xf32>
    %c0_132 = arith.constant 0 : index
    %c0_133 = arith.constant 0 : index
    %c0_134 = arith.constant 0 : index
    %191 = vector.load %arg12[%c0_132, %c0_133, %c0_134] : memref<2x32x64xf32, #tpu.memory_space<vmem>>, vector<1x32x64xf32>
    %192 = vector.shape_cast %191 : vector<1x32x64xf32> to vector<32x64xf32>
    %cst_135 = arith.constant dense<0.000000e+00> : vector<8x64xf32>
    %193 = tpu.matmul %190, %192, %cst_135 {dimension_numbers = #tpu.dot_dimension_numbers<[1], [0], [0], [1], [0, 0, 1, 1], [], []>} : vector<8x32xf32>, vector<32x64xf32>, vector<8x64xf32> -> vector<8x64xf32>
    %c0_136 = arith.constant 0 : index
    %c0_137 = arith.constant 0 : index
    %c0_138 = arith.constant 0 : index
    %194 = vector.load %arg13[%c0_136, %c0_137, %c0_138] : memref<2x1x64xf32, #tpu.memory_space<vmem>>, vector<1x1x64xf32>
    %195 = vector.shape_cast %194 : vector<1x1x64xf32> to vector<1x64xf32>
    %196 = vector.broadcast %195 : vector<1x64xf32> to vector<8x64xf32>
    %197 = arith.addf %193, %196 : vector<8x64xf32>
    %cst_139 = arith.constant 0.000000e+00 : f32
    %198 = vector.broadcast %cst_139 : f32 to vector<8x64xf32>
    %199 = arith.maximumf %197, %198 : vector<8x64xf32>
    %c0_140 = arith.constant 0 : index
    %c0_141 = arith.constant 0 : index
    %c0_142 = arith.constant 0 : index
    %200 = vector.load %arg14[%c0_140, %c0_141, %c0_142] : memref<2x64x32xf32, #tpu.memory_space<vmem>>, vector<1x64x32xf32>
    %201 = vector.shape_cast %200 : vector<1x64x32xf32> to vector<64x32xf32>
    %cst_143 = arith.constant dense<0.000000e+00> : vector<8x32xf32>
    %202 = tpu.matmul %199, %201, %cst_143 {dimension_numbers = #tpu.dot_dimension_numbers<[1], [0], [0], [1], [0, 0, 1, 1], [], []>} : vector<8x64xf32>, vector<64x32xf32>, vector<8x32xf32> -> vector<8x32xf32>
    %c0_144 = arith.constant 0 : index
    %c0_145 = arith.constant 0 : index
    %c0_146 = arith.constant 0 : index
    %203 = vector.load %arg15[%c0_144, %c0_145, %c0_146] : memref<2x1x32xf32, #tpu.memory_space<vmem>>, vector<1x1x32xf32>
    %204 = vector.shape_cast %203 : vector<1x1x32xf32> to vector<1x32xf32>
    %205 = vector.broadcast %204 : vector<1x32xf32> to vector<8x32xf32>
    %206 = arith.addf %202, %205 : vector<8x32xf32>
    %207 = arith.addf %190, %206 : vector<8x32xf32>
    %c2_147 = arith.constant 2 : index
    %c0_148 = arith.constant 0 : index
    %c0_149 = arith.constant 0 : index
    %208 = vector.load %arg16[%c2_147, %c0_148, %c0_149] : memref<8x1x32xf32, #tpu.memory_space<vmem>>, vector<1x1x32xf32>
    %209 = vector.shape_cast %208 : vector<1x1x32xf32> to vector<1x32xf32>
    %c3_150 = arith.constant 3 : index
    %c0_151 = arith.constant 0 : index
    %c0_152 = arith.constant 0 : index
    %210 = vector.load %arg16[%c3_150, %c0_151, %c0_152] : memref<8x1x32xf32, #tpu.memory_space<vmem>>, vector<1x1x32xf32>
    %211 = vector.shape_cast %210 : vector<1x1x32xf32> to vector<1x32xf32>
    %cst_153 = arith.constant dense<0.000000e+00> : vector<8xf32>
    %212 = vector.multi_reduction <add>, %207, %cst_153 [1] : vector<8x32xf32> to vector<8xf32>
    %213 = vector.shape_cast %212 : vector<8xf32> to vector<8x1xf32>
    %cst_154 = arith.constant 3.200000e+01 : f32
    %214 = vector.broadcast %cst_154 : f32 to vector<8x1xf32>
    %215 = arith.divf %213, %214 : vector<8x1xf32>
    %216 = vector.broadcast %215 : vector<8x1xf32> to vector<8x32xf32>
    %217 = arith.subf %207, %216 : vector<8x32xf32>
    %218 = arith.mulf %217, %217 : vector<8x32xf32>
    %cst_155 = arith.constant dense<0.000000e+00> : vector<8xf32>
    %219 = vector.multi_reduction <add>, %218, %cst_155 [1] : vector<8x32xf32> to vector<8xf32>
    %220 = vector.shape_cast %219 : vector<8xf32> to vector<8x1xf32>
    %cst_156 = arith.constant 3.200000e+01 : f32
    %221 = vector.broadcast %cst_156 : f32 to vector<8x1xf32>
    %222 = arith.divf %220, %221 : vector<8x1xf32>
    %cst_157 = arith.constant 9.99999974E-6 : f32
    %223 = vector.broadcast %cst_157 : f32 to vector<8x1xf32>
    %224 = arith.addf %222, %223 : vector<8x1xf32>
    %225 = math.rsqrt %224 : vector<8x1xf32>
    %226 = vector.broadcast %225 : vector<8x1xf32> to vector<8x32xf32>
    %227 = arith.mulf %217, %226 : vector<8x32xf32>
    %228 = vector.broadcast %209 : vector<1x32xf32> to vector<8x32xf32>
    %229 = arith.mulf %227, %228 : vector<8x32xf32>
    %230 = vector.broadcast %211 : vector<1x32xf32> to vector<8x32xf32>
    %231 = arith.addf %229, %230 : vector<8x32xf32>
    %cst_158 = arith.constant 0.000000e+00 : f32
    %232 = vector.broadcast %cst_158 : f32 to vector<8x32xf32>
    %c12 = arith.constant 12 : index
    %c0_159 = arith.constant 0 : index
    %c0_160 = arith.constant 0 : index
    %233 = vector.load %arg8[%c12, %c0_159, %c0_160] : memref<24x32x8xf32, #tpu.memory_space<vmem>>, vector<1x32x8xf32>
    %234 = vector.shape_cast %233 : vector<1x32x8xf32> to vector<32x8xf32>
    %cst_161 = arith.constant dense<0.000000e+00> : vector<8x8xf32>
    %235 = tpu.matmul %231, %234, %cst_161 {dimension_numbers = #tpu.dot_dimension_numbers<[1], [0], [0], [1], [0, 0, 1, 1], [], []>} : vector<8x32xf32>, vector<32x8xf32>, vector<8x8xf32> -> vector<8x8xf32>
    %c12_162 = arith.constant 12 : index
    %c0_163 = arith.constant 0 : index
    %c0_164 = arith.constant 0 : index
    %236 = vector.load %arg9[%c12_162, %c0_163, %c0_164] : memref<24x1x8xf32, #tpu.memory_space<vmem>>, vector<1x1x8xf32>
    %237 = vector.shape_cast %236 : vector<1x1x8xf32> to vector<1x8xf32>
    %238 = vector.broadcast %237 : vector<1x8xf32> to vector<8x8xf32>
    %239 = arith.addf %235, %238 : vector<8x8xf32>
    %c16 = arith.constant 16 : index
    %c0_165 = arith.constant 0 : index
    %c0_166 = arith.constant 0 : index
    %240 = vector.load %arg8[%c16, %c0_165, %c0_166] : memref<24x32x8xf32, #tpu.memory_space<vmem>>, vector<1x32x8xf32>
    %241 = vector.shape_cast %240 : vector<1x32x8xf32> to vector<32x8xf32>
    %cst_167 = arith.constant dense<0.000000e+00> : vector<8x8xf32>
    %242 = tpu.matmul %231, %241, %cst_167 {dimension_numbers = #tpu.dot_dimension_numbers<[1], [0], [0], [1], [0, 0, 1, 1], [], []>} : vector<8x32xf32>, vector<32x8xf32>, vector<8x8xf32> -> vector<8x8xf32>
    %c16_168 = arith.constant 16 : index
    %c0_169 = arith.constant 0 : index
    %c0_170 = arith.constant 0 : index
    %243 = vector.load %arg9[%c16_168, %c0_169, %c0_170] : memref<24x1x8xf32, #tpu.memory_space<vmem>>, vector<1x1x8xf32>
    %244 = vector.shape_cast %243 : vector<1x1x8xf32> to vector<1x8xf32>
    %245 = vector.broadcast %244 : vector<1x8xf32> to vector<8x8xf32>
    %246 = arith.addf %242, %245 : vector<8x8xf32>
    %c20 = arith.constant 20 : index
    %c0_171 = arith.constant 0 : index
    %c0_172 = arith.constant 0 : index
    %247 = vector.load %arg8[%c20, %c0_171, %c0_172] : memref<24x32x8xf32, #tpu.memory_space<vmem>>, vector<1x32x8xf32>
    %248 = vector.shape_cast %247 : vector<1x32x8xf32> to vector<32x8xf32>
    %cst_173 = arith.constant dense<0.000000e+00> : vector<8x8xf32>
    %249 = tpu.matmul %231, %248, %cst_173 {dimension_numbers = #tpu.dot_dimension_numbers<[1], [0], [0], [1], [0, 0, 1, 1], [], []>} : vector<8x32xf32>, vector<32x8xf32>, vector<8x8xf32> -> vector<8x8xf32>
    %c20_174 = arith.constant 20 : index
    %c0_175 = arith.constant 0 : index
    %c0_176 = arith.constant 0 : index
    %250 = vector.load %arg9[%c20_174, %c0_175, %c0_176] : memref<24x1x8xf32, #tpu.memory_space<vmem>>, vector<1x1x8xf32>
    %251 = vector.shape_cast %250 : vector<1x1x8xf32> to vector<1x8xf32>
    %252 = vector.broadcast %251 : vector<1x8xf32> to vector<8x8xf32>
    %253 = arith.addf %249, %252 : vector<8x8xf32>
    %cst_177 = arith.constant dense<0.000000e+00> : vector<8x8xf32>
    %254 = tpu.matmul %239, %246, %cst_177 {dimension_numbers = #tpu.dot_dimension_numbers<[1], [1], [0], [0], [0, 0, 1, 0], [], []>} : vector<8x8xf32>, vector<8x8xf32>, vector<8x8xf32> -> vector<8x8xf32>
    %cst_178 = arith.constant 0.353553385 : f32
    %255 = vector.broadcast %cst_178 : f32 to vector<8x8xf32>
    %256 = arith.mulf %254, %255 : vector<8x8xf32>
    %cst_179 = arith.constant dense<0xFF800000> : vector<8xf32>
    %257 = vector.multi_reduction <maximumf>, %256, %cst_179 [1] : vector<8x8xf32> to vector<8xf32>
    %258 = vector.shape_cast %257 : vector<8xf32> to vector<8x1xf32>
    %259 = vector.broadcast %258 : vector<8x1xf32> to vector<8x8xf32>
    %260 = arith.subf %256, %259 : vector<8x8xf32>
    %261 = math.exp %260 : vector<8x8xf32>
    %cst_180 = arith.constant dense<0.000000e+00> : vector<8xf32>
    %262 = vector.multi_reduction <add>, %261, %cst_180 [1] : vector<8x8xf32> to vector<8xf32>
    %263 = vector.shape_cast %262 : vector<8xf32> to vector<8x1xf32>
    %264 = vector.broadcast %263 : vector<8x1xf32> to vector<8x8xf32>
    %265 = arith.divf %261, %264 : vector<8x8xf32>
    %cst_181 = arith.constant dense<0.000000e+00> : vector<8x8xf32>
    %266 = tpu.matmul %265, %253, %cst_181 {dimension_numbers = #tpu.dot_dimension_numbers<[1], [0], [0], [1], [0, 0, 1, 1], [], []>} : vector<8x8xf32>, vector<8x8xf32>, vector<8x8xf32> -> vector<8x8xf32>
    %c4_182 = arith.constant 4 : index
    %c0_183 = arith.constant 0 : index
    %c0_184 = arith.constant 0 : index
    %267 = vector.load %arg10[%c4_182, %c0_183, %c0_184] : memref<8x8x32xf32, #tpu.memory_space<vmem>>, vector<1x8x32xf32>
    %268 = vector.shape_cast %267 : vector<1x8x32xf32> to vector<8x32xf32>
    %cst_185 = arith.constant dense<0.000000e+00> : vector<8x32xf32>
    %269 = tpu.matmul %266, %268, %cst_185 {dimension_numbers = #tpu.dot_dimension_numbers<[1], [0], [0], [1], [0, 0, 1, 1], [], []>} : vector<8x8xf32>, vector<8x32xf32>, vector<8x32xf32> -> vector<8x32xf32>
    %270 = arith.addf %232, %269 : vector<8x32xf32>
    %c13 = arith.constant 13 : index
    %c0_186 = arith.constant 0 : index
    %c0_187 = arith.constant 0 : index
    %271 = vector.load %arg8[%c13, %c0_186, %c0_187] : memref<24x32x8xf32, #tpu.memory_space<vmem>>, vector<1x32x8xf32>
    %272 = vector.shape_cast %271 : vector<1x32x8xf32> to vector<32x8xf32>
    %cst_188 = arith.constant dense<0.000000e+00> : vector<8x8xf32>
    %273 = tpu.matmul %231, %272, %cst_188 {dimension_numbers = #tpu.dot_dimension_numbers<[1], [0], [0], [1], [0, 0, 1, 1], [], []>} : vector<8x32xf32>, vector<32x8xf32>, vector<8x8xf32> -> vector<8x8xf32>
    %c13_189 = arith.constant 13 : index
    %c0_190 = arith.constant 0 : index
    %c0_191 = arith.constant 0 : index
    %274 = vector.load %arg9[%c13_189, %c0_190, %c0_191] : memref<24x1x8xf32, #tpu.memory_space<vmem>>, vector<1x1x8xf32>
    %275 = vector.shape_cast %274 : vector<1x1x8xf32> to vector<1x8xf32>
    %276 = vector.broadcast %275 : vector<1x8xf32> to vector<8x8xf32>
    %277 = arith.addf %273, %276 : vector<8x8xf32>
    %c17 = arith.constant 17 : index
    %c0_192 = arith.constant 0 : index
    %c0_193 = arith.constant 0 : index
    %278 = vector.load %arg8[%c17, %c0_192, %c0_193] : memref<24x32x8xf32, #tpu.memory_space<vmem>>, vector<1x32x8xf32>
    %279 = vector.shape_cast %278 : vector<1x32x8xf32> to vector<32x8xf32>
    %cst_194 = arith.constant dense<0.000000e+00> : vector<8x8xf32>
    %280 = tpu.matmul %231, %279, %cst_194 {dimension_numbers = #tpu.dot_dimension_numbers<[1], [0], [0], [1], [0, 0, 1, 1], [], []>} : vector<8x32xf32>, vector<32x8xf32>, vector<8x8xf32> -> vector<8x8xf32>
    %c17_195 = arith.constant 17 : index
    %c0_196 = arith.constant 0 : index
    %c0_197 = arith.constant 0 : index
    %281 = vector.load %arg9[%c17_195, %c0_196, %c0_197] : memref<24x1x8xf32, #tpu.memory_space<vmem>>, vector<1x1x8xf32>
    %282 = vector.shape_cast %281 : vector<1x1x8xf32> to vector<1x8xf32>
    %283 = vector.broadcast %282 : vector<1x8xf32> to vector<8x8xf32>
    %284 = arith.addf %280, %283 : vector<8x8xf32>
    %c21 = arith.constant 21 : index
    %c0_198 = arith.constant 0 : index
    %c0_199 = arith.constant 0 : index
    %285 = vector.load %arg8[%c21, %c0_198, %c0_199] : memref<24x32x8xf32, #tpu.memory_space<vmem>>, vector<1x32x8xf32>
    %286 = vector.shape_cast %285 : vector<1x32x8xf32> to vector<32x8xf32>
    %cst_200 = arith.constant dense<0.000000e+00> : vector<8x8xf32>
    %287 = tpu.matmul %231, %286, %cst_200 {dimension_numbers = #tpu.dot_dimension_numbers<[1], [0], [0], [1], [0, 0, 1, 1], [], []>} : vector<8x32xf32>, vector<32x8xf32>, vector<8x8xf32> -> vector<8x8xf32>
    %c21_201 = arith.constant 21 : index
    %c0_202 = arith.constant 0 : index
    %c0_203 = arith.constant 0 : index
    %288 = vector.load %arg9[%c21_201, %c0_202, %c0_203] : memref<24x1x8xf32, #tpu.memory_space<vmem>>, vector<1x1x8xf32>
    %289 = vector.shape_cast %288 : vector<1x1x8xf32> to vector<1x8xf32>
    %290 = vector.broadcast %289 : vector<1x8xf32> to vector<8x8xf32>
    %291 = arith.addf %287, %290 : vector<8x8xf32>
    %cst_204 = arith.constant dense<0.000000e+00> : vector<8x8xf32>
    %292 = tpu.matmul %277, %284, %cst_204 {dimension_numbers = #tpu.dot_dimension_numbers<[1], [1], [0], [0], [0, 0, 1, 0], [], []>} : vector<8x8xf32>, vector<8x8xf32>, vector<8x8xf32> -> vector<8x8xf32>
    %cst_205 = arith.constant 0.353553385 : f32
    %293 = vector.broadcast %cst_205 : f32 to vector<8x8xf32>
    %294 = arith.mulf %292, %293 : vector<8x8xf32>
    %cst_206 = arith.constant dense<0xFF800000> : vector<8xf32>
    %295 = vector.multi_reduction <maximumf>, %294, %cst_206 [1] : vector<8x8xf32> to vector<8xf32>
    %296 = vector.shape_cast %295 : vector<8xf32> to vector<8x1xf32>
    %297 = vector.broadcast %296 : vector<8x1xf32> to vector<8x8xf32>
    %298 = arith.subf %294, %297 : vector<8x8xf32>
    %299 = math.exp %298 : vector<8x8xf32>
    %cst_207 = arith.constant dense<0.000000e+00> : vector<8xf32>
    %300 = vector.multi_reduction <add>, %299, %cst_207 [1] : vector<8x8xf32> to vector<8xf32>
    %301 = vector.shape_cast %300 : vector<8xf32> to vector<8x1xf32>
    %302 = vector.broadcast %301 : vector<8x1xf32> to vector<8x8xf32>
    %303 = arith.divf %299, %302 : vector<8x8xf32>
    %cst_208 = arith.constant dense<0.000000e+00> : vector<8x8xf32>
    %304 = tpu.matmul %303, %291, %cst_208 {dimension_numbers = #tpu.dot_dimension_numbers<[1], [0], [0], [1], [0, 0, 1, 1], [], []>} : vector<8x8xf32>, vector<8x8xf32>, vector<8x8xf32> -> vector<8x8xf32>
    %c5_209 = arith.constant 5 : index
    %c0_210 = arith.constant 0 : index
    %c0_211 = arith.constant 0 : index
    %305 = vector.load %arg10[%c5_209, %c0_210, %c0_211] : memref<8x8x32xf32, #tpu.memory_space<vmem>>, vector<1x8x32xf32>
    %306 = vector.shape_cast %305 : vector<1x8x32xf32> to vector<8x32xf32>
    %cst_212 = arith.constant dense<0.000000e+00> : vector<8x32xf32>
    %307 = tpu.matmul %304, %306, %cst_212 {dimension_numbers = #tpu.dot_dimension_numbers<[1], [0], [0], [1], [0, 0, 1, 1], [], []>} : vector<8x8xf32>, vector<8x32xf32>, vector<8x32xf32> -> vector<8x32xf32>
    %308 = arith.addf %270, %307 : vector<8x32xf32>
    %c14 = arith.constant 14 : index
    %c0_213 = arith.constant 0 : index
    %c0_214 = arith.constant 0 : index
    %309 = vector.load %arg8[%c14, %c0_213, %c0_214] : memref<24x32x8xf32, #tpu.memory_space<vmem>>, vector<1x32x8xf32>
    %310 = vector.shape_cast %309 : vector<1x32x8xf32> to vector<32x8xf32>
    %cst_215 = arith.constant dense<0.000000e+00> : vector<8x8xf32>
    %311 = tpu.matmul %231, %310, %cst_215 {dimension_numbers = #tpu.dot_dimension_numbers<[1], [0], [0], [1], [0, 0, 1, 1], [], []>} : vector<8x32xf32>, vector<32x8xf32>, vector<8x8xf32> -> vector<8x8xf32>
    %c14_216 = arith.constant 14 : index
    %c0_217 = arith.constant 0 : index
    %c0_218 = arith.constant 0 : index
    %312 = vector.load %arg9[%c14_216, %c0_217, %c0_218] : memref<24x1x8xf32, #tpu.memory_space<vmem>>, vector<1x1x8xf32>
    %313 = vector.shape_cast %312 : vector<1x1x8xf32> to vector<1x8xf32>
    %314 = vector.broadcast %313 : vector<1x8xf32> to vector<8x8xf32>
    %315 = arith.addf %311, %314 : vector<8x8xf32>
    %c18 = arith.constant 18 : index
    %c0_219 = arith.constant 0 : index
    %c0_220 = arith.constant 0 : index
    %316 = vector.load %arg8[%c18, %c0_219, %c0_220] : memref<24x32x8xf32, #tpu.memory_space<vmem>>, vector<1x32x8xf32>
    %317 = vector.shape_cast %316 : vector<1x32x8xf32> to vector<32x8xf32>
    %cst_221 = arith.constant dense<0.000000e+00> : vector<8x8xf32>
    %318 = tpu.matmul %231, %317, %cst_221 {dimension_numbers = #tpu.dot_dimension_numbers<[1], [0], [0], [1], [0, 0, 1, 1], [], []>} : vector<8x32xf32>, vector<32x8xf32>, vector<8x8xf32> -> vector<8x8xf32>
    %c18_222 = arith.constant 18 : index
    %c0_223 = arith.constant 0 : index
    %c0_224 = arith.constant 0 : index
    %319 = vector.load %arg9[%c18_222, %c0_223, %c0_224] : memref<24x1x8xf32, #tpu.memory_space<vmem>>, vector<1x1x8xf32>
    %320 = vector.shape_cast %319 : vector<1x1x8xf32> to vector<1x8xf32>
    %321 = vector.broadcast %320 : vector<1x8xf32> to vector<8x8xf32>
    %322 = arith.addf %318, %321 : vector<8x8xf32>
    %c22 = arith.constant 22 : index
    %c0_225 = arith.constant 0 : index
    %c0_226 = arith.constant 0 : index
    %323 = vector.load %arg8[%c22, %c0_225, %c0_226] : memref<24x32x8xf32, #tpu.memory_space<vmem>>, vector<1x32x8xf32>
    %324 = vector.shape_cast %323 : vector<1x32x8xf32> to vector<32x8xf32>
    %cst_227 = arith.constant dense<0.000000e+00> : vector<8x8xf32>
    %325 = tpu.matmul %231, %324, %cst_227 {dimension_numbers = #tpu.dot_dimension_numbers<[1], [0], [0], [1], [0, 0, 1, 1], [], []>} : vector<8x32xf32>, vector<32x8xf32>, vector<8x8xf32> -> vector<8x8xf32>
    %c22_228 = arith.constant 22 : index
    %c0_229 = arith.constant 0 : index
    %c0_230 = arith.constant 0 : index
    %326 = vector.load %arg9[%c22_228, %c0_229, %c0_230] : memref<24x1x8xf32, #tpu.memory_space<vmem>>, vector<1x1x8xf32>
    %327 = vector.shape_cast %326 : vector<1x1x8xf32> to vector<1x8xf32>
    %328 = vector.broadcast %327 : vector<1x8xf32> to vector<8x8xf32>
    %329 = arith.addf %325, %328 : vector<8x8xf32>
    %cst_231 = arith.constant dense<0.000000e+00> : vector<8x8xf32>
    %330 = tpu.matmul %315, %322, %cst_231 {dimension_numbers = #tpu.dot_dimension_numbers<[1], [1], [0], [0], [0, 0, 1, 0], [], []>} : vector<8x8xf32>, vector<8x8xf32>, vector<8x8xf32> -> vector<8x8xf32>
    %cst_232 = arith.constant 0.353553385 : f32
    %331 = vector.broadcast %cst_232 : f32 to vector<8x8xf32>
    %332 = arith.mulf %330, %331 : vector<8x8xf32>
    %cst_233 = arith.constant dense<0xFF800000> : vector<8xf32>
    %333 = vector.multi_reduction <maximumf>, %332, %cst_233 [1] : vector<8x8xf32> to vector<8xf32>
    %334 = vector.shape_cast %333 : vector<8xf32> to vector<8x1xf32>
    %335 = vector.broadcast %334 : vector<8x1xf32> to vector<8x8xf32>
    %336 = arith.subf %332, %335 : vector<8x8xf32>
    %337 = math.exp %336 : vector<8x8xf32>
    %cst_234 = arith.constant dense<0.000000e+00> : vector<8xf32>
    %338 = vector.multi_reduction <add>, %337, %cst_234 [1] : vector<8x8xf32> to vector<8xf32>
    %339 = vector.shape_cast %338 : vector<8xf32> to vector<8x1xf32>
    %340 = vector.broadcast %339 : vector<8x1xf32> to vector<8x8xf32>
    %341 = arith.divf %337, %340 : vector<8x8xf32>
    %cst_235 = arith.constant dense<0.000000e+00> : vector<8x8xf32>
    %342 = tpu.matmul %341, %329, %cst_235 {dimension_numbers = #tpu.dot_dimension_numbers<[1], [0], [0], [1], [0, 0, 1, 1], [], []>} : vector<8x8xf32>, vector<8x8xf32>, vector<8x8xf32> -> vector<8x8xf32>
    %c6_236 = arith.constant 6 : index
    %c0_237 = arith.constant 0 : index
    %c0_238 = arith.constant 0 : index
    %343 = vector.load %arg10[%c6_236, %c0_237, %c0_238] : memref<8x8x32xf32, #tpu.memory_space<vmem>>, vector<1x8x32xf32>
    %344 = vector.shape_cast %343 : vector<1x8x32xf32> to vector<8x32xf32>
    %cst_239 = arith.constant dense<0.000000e+00> : vector<8x32xf32>
    %345 = tpu.matmul %342, %344, %cst_239 {dimension_numbers = #tpu.dot_dimension_numbers<[1], [0], [0], [1], [0, 0, 1, 1], [], []>} : vector<8x8xf32>, vector<8x32xf32>, vector<8x32xf32> -> vector<8x32xf32>
    %346 = arith.addf %308, %345 : vector<8x32xf32>
    %c15 = arith.constant 15 : index
    %c0_240 = arith.constant 0 : index
    %c0_241 = arith.constant 0 : index
    %347 = vector.load %arg8[%c15, %c0_240, %c0_241] : memref<24x32x8xf32, #tpu.memory_space<vmem>>, vector<1x32x8xf32>
    %348 = vector.shape_cast %347 : vector<1x32x8xf32> to vector<32x8xf32>
    %cst_242 = arith.constant dense<0.000000e+00> : vector<8x8xf32>
    %349 = tpu.matmul %231, %348, %cst_242 {dimension_numbers = #tpu.dot_dimension_numbers<[1], [0], [0], [1], [0, 0, 1, 1], [], []>} : vector<8x32xf32>, vector<32x8xf32>, vector<8x8xf32> -> vector<8x8xf32>
    %c15_243 = arith.constant 15 : index
    %c0_244 = arith.constant 0 : index
    %c0_245 = arith.constant 0 : index
    %350 = vector.load %arg9[%c15_243, %c0_244, %c0_245] : memref<24x1x8xf32, #tpu.memory_space<vmem>>, vector<1x1x8xf32>
    %351 = vector.shape_cast %350 : vector<1x1x8xf32> to vector<1x8xf32>
    %352 = vector.broadcast %351 : vector<1x8xf32> to vector<8x8xf32>
    %353 = arith.addf %349, %352 : vector<8x8xf32>
    %c19 = arith.constant 19 : index
    %c0_246 = arith.constant 0 : index
    %c0_247 = arith.constant 0 : index
    %354 = vector.load %arg8[%c19, %c0_246, %c0_247] : memref<24x32x8xf32, #tpu.memory_space<vmem>>, vector<1x32x8xf32>
    %355 = vector.shape_cast %354 : vector<1x32x8xf32> to vector<32x8xf32>
    %cst_248 = arith.constant dense<0.000000e+00> : vector<8x8xf32>
    %356 = tpu.matmul %231, %355, %cst_248 {dimension_numbers = #tpu.dot_dimension_numbers<[1], [0], [0], [1], [0, 0, 1, 1], [], []>} : vector<8x32xf32>, vector<32x8xf32>, vector<8x8xf32> -> vector<8x8xf32>
    %c19_249 = arith.constant 19 : index
    %c0_250 = arith.constant 0 : index
    %c0_251 = arith.constant 0 : index
    %357 = vector.load %arg9[%c19_249, %c0_250, %c0_251] : memref<24x1x8xf32, #tpu.memory_space<vmem>>, vector<1x1x8xf32>
    %358 = vector.shape_cast %357 : vector<1x1x8xf32> to vector<1x8xf32>
    %359 = vector.broadcast %358 : vector<1x8xf32> to vector<8x8xf32>
    %360 = arith.addf %356, %359 : vector<8x8xf32>
    %c23 = arith.constant 23 : index
    %c0_252 = arith.constant 0 : index
    %c0_253 = arith.constant 0 : index
    %361 = vector.load %arg8[%c23, %c0_252, %c0_253] : memref<24x32x8xf32, #tpu.memory_space<vmem>>, vector<1x32x8xf32>
    %362 = vector.shape_cast %361 : vector<1x32x8xf32> to vector<32x8xf32>
    %cst_254 = arith.constant dense<0.000000e+00> : vector<8x8xf32>
    %363 = tpu.matmul %231, %362, %cst_254 {dimension_numbers = #tpu.dot_dimension_numbers<[1], [0], [0], [1], [0, 0, 1, 1], [], []>} : vector<8x32xf32>, vector<32x8xf32>, vector<8x8xf32> -> vector<8x8xf32>
    %c23_255 = arith.constant 23 : index
    %c0_256 = arith.constant 0 : index
    %c0_257 = arith.constant 0 : index
    %364 = vector.load %arg9[%c23_255, %c0_256, %c0_257] : memref<24x1x8xf32, #tpu.memory_space<vmem>>, vector<1x1x8xf32>
    %365 = vector.shape_cast %364 : vector<1x1x8xf32> to vector<1x8xf32>
    %366 = vector.broadcast %365 : vector<1x8xf32> to vector<8x8xf32>
    %367 = arith.addf %363, %366 : vector<8x8xf32>
    %cst_258 = arith.constant dense<0.000000e+00> : vector<8x8xf32>
    %368 = tpu.matmul %353, %360, %cst_258 {dimension_numbers = #tpu.dot_dimension_numbers<[1], [1], [0], [0], [0, 0, 1, 0], [], []>} : vector<8x8xf32>, vector<8x8xf32>, vector<8x8xf32> -> vector<8x8xf32>
    %cst_259 = arith.constant 0.353553385 : f32
    %369 = vector.broadcast %cst_259 : f32 to vector<8x8xf32>
    %370 = arith.mulf %368, %369 : vector<8x8xf32>
    %cst_260 = arith.constant dense<0xFF800000> : vector<8xf32>
    %371 = vector.multi_reduction <maximumf>, %370, %cst_260 [1] : vector<8x8xf32> to vector<8xf32>
    %372 = vector.shape_cast %371 : vector<8xf32> to vector<8x1xf32>
    %373 = vector.broadcast %372 : vector<8x1xf32> to vector<8x8xf32>
    %374 = arith.subf %370, %373 : vector<8x8xf32>
    %375 = math.exp %374 : vector<8x8xf32>
    %cst_261 = arith.constant dense<0.000000e+00> : vector<8xf32>
    %376 = vector.multi_reduction <add>, %375, %cst_261 [1] : vector<8x8xf32> to vector<8xf32>
    %377 = vector.shape_cast %376 : vector<8xf32> to vector<8x1xf32>
    %378 = vector.broadcast %377 : vector<8x1xf32> to vector<8x8xf32>
    %379 = arith.divf %375, %378 : vector<8x8xf32>
    %cst_262 = arith.constant dense<0.000000e+00> : vector<8x8xf32>
    %380 = tpu.matmul %379, %367, %cst_262 {dimension_numbers = #tpu.dot_dimension_numbers<[1], [0], [0], [1], [0, 0, 1, 1], [], []>} : vector<8x8xf32>, vector<8x8xf32>, vector<8x8xf32> -> vector<8x8xf32>
    %c7_263 = arith.constant 7 : index
    %c0_264 = arith.constant 0 : index
    %c0_265 = arith.constant 0 : index
    %381 = vector.load %arg10[%c7_263, %c0_264, %c0_265] : memref<8x8x32xf32, #tpu.memory_space<vmem>>, vector<1x8x32xf32>
    %382 = vector.shape_cast %381 : vector<1x8x32xf32> to vector<8x32xf32>
    %cst_266 = arith.constant dense<0.000000e+00> : vector<8x32xf32>
    %383 = tpu.matmul %380, %382, %cst_266 {dimension_numbers = #tpu.dot_dimension_numbers<[1], [0], [0], [1], [0, 0, 1, 1], [], []>} : vector<8x8xf32>, vector<8x32xf32>, vector<8x32xf32> -> vector<8x32xf32>
    %384 = arith.addf %346, %383 : vector<8x32xf32>
    %c1_267 = arith.constant 1 : index
    %c0_268 = arith.constant 0 : index
    %c0_269 = arith.constant 0 : index
    %385 = vector.load %arg11[%c1_267, %c0_268, %c0_269] : memref<2x1x32xf32, #tpu.memory_space<vmem>>, vector<1x1x32xf32>
    %386 = vector.shape_cast %385 : vector<1x1x32xf32> to vector<1x32xf32>
    %387 = vector.broadcast %386 : vector<1x32xf32> to vector<8x32xf32>
    %388 = arith.addf %384, %387 : vector<8x32xf32>
    %389 = arith.addf %231, %388 : vector<8x32xf32>
    %c4_270 = arith.constant 4 : index
    %c0_271 = arith.constant 0 : index
    %c0_272 = arith.constant 0 : index
    %390 = vector.load %arg16[%c4_270, %c0_271, %c0_272] : memref<8x1x32xf32, #tpu.memory_space<vmem>>, vector<1x1x32xf32>
    %391 = vector.shape_cast %390 : vector<1x1x32xf32> to vector<1x32xf32>
    %c5_273 = arith.constant 5 : index
    %c0_274 = arith.constant 0 : index
    %c0_275 = arith.constant 0 : index
    %392 = vector.load %arg16[%c5_273, %c0_274, %c0_275] : memref<8x1x32xf32, #tpu.memory_space<vmem>>, vector<1x1x32xf32>
    %393 = vector.shape_cast %392 : vector<1x1x32xf32> to vector<1x32xf32>
    %cst_276 = arith.constant dense<0.000000e+00> : vector<8xf32>
    %394 = vector.multi_reduction <add>, %389, %cst_276 [1] : vector<8x32xf32> to vector<8xf32>
    %395 = vector.shape_cast %394 : vector<8xf32> to vector<8x1xf32>
    %cst_277 = arith.constant 3.200000e+01 : f32
    %396 = vector.broadcast %cst_277 : f32 to vector<8x1xf32>
    %397 = arith.divf %395, %396 : vector<8x1xf32>
    %398 = vector.broadcast %397 : vector<8x1xf32> to vector<8x32xf32>
    %399 = arith.subf %389, %398 : vector<8x32xf32>
    %400 = arith.mulf %399, %399 : vector<8x32xf32>
    %cst_278 = arith.constant dense<0.000000e+00> : vector<8xf32>
    %401 = vector.multi_reduction <add>, %400, %cst_278 [1] : vector<8x32xf32> to vector<8xf32>
    %402 = vector.shape_cast %401 : vector<8xf32> to vector<8x1xf32>
    %cst_279 = arith.constant 3.200000e+01 : f32
    %403 = vector.broadcast %cst_279 : f32 to vector<8x1xf32>
    %404 = arith.divf %402, %403 : vector<8x1xf32>
    %cst_280 = arith.constant 9.99999974E-6 : f32
    %405 = vector.broadcast %cst_280 : f32 to vector<8x1xf32>
    %406 = arith.addf %404, %405 : vector<8x1xf32>
    %407 = math.rsqrt %406 : vector<8x1xf32>
    %408 = vector.broadcast %407 : vector<8x1xf32> to vector<8x32xf32>
    %409 = arith.mulf %399, %408 : vector<8x32xf32>
    %410 = vector.broadcast %391 : vector<1x32xf32> to vector<8x32xf32>
    %411 = arith.mulf %409, %410 : vector<8x32xf32>
    %412 = vector.broadcast %393 : vector<1x32xf32> to vector<8x32xf32>
    %413 = arith.addf %411, %412 : vector<8x32xf32>
    %c1_281 = arith.constant 1 : index
    %c0_282 = arith.constant 0 : index
    %c0_283 = arith.constant 0 : index
    %414 = vector.load %arg12[%c1_281, %c0_282, %c0_283] : memref<2x32x64xf32, #tpu.memory_space<vmem>>, vector<1x32x64xf32>
    %415 = vector.shape_cast %414 : vector<1x32x64xf32> to vector<32x64xf32>
    %cst_284 = arith.constant dense<0.000000e+00> : vector<8x64xf32>
    %416 = tpu.matmul %413, %415, %cst_284 {dimension_numbers = #tpu.dot_dimension_numbers<[1], [0], [0], [1], [0, 0, 1, 1], [], []>} : vector<8x32xf32>, vector<32x64xf32>, vector<8x64xf32> -> vector<8x64xf32>
    %c1_285 = arith.constant 1 : index
    %c0_286 = arith.constant 0 : index
    %c0_287 = arith.constant 0 : index
    %417 = vector.load %arg13[%c1_285, %c0_286, %c0_287] : memref<2x1x64xf32, #tpu.memory_space<vmem>>, vector<1x1x64xf32>
    %418 = vector.shape_cast %417 : vector<1x1x64xf32> to vector<1x64xf32>
    %419 = vector.broadcast %418 : vector<1x64xf32> to vector<8x64xf32>
    %420 = arith.addf %416, %419 : vector<8x64xf32>
    %cst_288 = arith.constant 0.000000e+00 : f32
    %421 = vector.broadcast %cst_288 : f32 to vector<8x64xf32>
    %422 = arith.maximumf %420, %421 : vector<8x64xf32>
    %c1_289 = arith.constant 1 : index
    %c0_290 = arith.constant 0 : index
    %c0_291 = arith.constant 0 : index
    %423 = vector.load %arg14[%c1_289, %c0_290, %c0_291] : memref<2x64x32xf32, #tpu.memory_space<vmem>>, vector<1x64x32xf32>
    %424 = vector.shape_cast %423 : vector<1x64x32xf32> to vector<64x32xf32>
    %cst_292 = arith.constant dense<0.000000e+00> : vector<8x32xf32>
    %425 = tpu.matmul %422, %424, %cst_292 {dimension_numbers = #tpu.dot_dimension_numbers<[1], [0], [0], [1], [0, 0, 1, 1], [], []>} : vector<8x64xf32>, vector<64x32xf32>, vector<8x32xf32> -> vector<8x32xf32>
    %c1_293 = arith.constant 1 : index
    %c0_294 = arith.constant 0 : index
    %c0_295 = arith.constant 0 : index
    %426 = vector.load %arg15[%c1_293, %c0_294, %c0_295] : memref<2x1x32xf32, #tpu.memory_space<vmem>>, vector<1x1x32xf32>
    %427 = vector.shape_cast %426 : vector<1x1x32xf32> to vector<1x32xf32>
    %428 = vector.broadcast %427 : vector<1x32xf32> to vector<8x32xf32>
    %429 = arith.addf %425, %428 : vector<8x32xf32>
    %430 = arith.addf %413, %429 : vector<8x32xf32>
    %c6_296 = arith.constant 6 : index
    %c0_297 = arith.constant 0 : index
    %c0_298 = arith.constant 0 : index
    %431 = vector.load %arg16[%c6_296, %c0_297, %c0_298] : memref<8x1x32xf32, #tpu.memory_space<vmem>>, vector<1x1x32xf32>
    %432 = vector.shape_cast %431 : vector<1x1x32xf32> to vector<1x32xf32>
    %c7_299 = arith.constant 7 : index
    %c0_300 = arith.constant 0 : index
    %c0_301 = arith.constant 0 : index
    %433 = vector.load %arg16[%c7_299, %c0_300, %c0_301] : memref<8x1x32xf32, #tpu.memory_space<vmem>>, vector<1x1x32xf32>
    %434 = vector.shape_cast %433 : vector<1x1x32xf32> to vector<1x32xf32>
    %cst_302 = arith.constant dense<0.000000e+00> : vector<8xf32>
    %435 = vector.multi_reduction <add>, %430, %cst_302 [1] : vector<8x32xf32> to vector<8xf32>
    %436 = vector.shape_cast %435 : vector<8xf32> to vector<8x1xf32>
    %cst_303 = arith.constant 3.200000e+01 : f32
    %437 = vector.broadcast %cst_303 : f32 to vector<8x1xf32>
    %438 = arith.divf %436, %437 : vector<8x1xf32>
    %439 = vector.broadcast %438 : vector<8x1xf32> to vector<8x32xf32>
    %440 = arith.subf %430, %439 : vector<8x32xf32>
    %441 = arith.mulf %440, %440 : vector<8x32xf32>
    %cst_304 = arith.constant dense<0.000000e+00> : vector<8xf32>
    %442 = vector.multi_reduction <add>, %441, %cst_304 [1] : vector<8x32xf32> to vector<8xf32>
    %443 = vector.shape_cast %442 : vector<8xf32> to vector<8x1xf32>
    %cst_305 = arith.constant 3.200000e+01 : f32
    %444 = vector.broadcast %cst_305 : f32 to vector<8x1xf32>
    %445 = arith.divf %443, %444 : vector<8x1xf32>
    %cst_306 = arith.constant 9.99999974E-6 : f32
    %446 = vector.broadcast %cst_306 : f32 to vector<8x1xf32>
    %447 = arith.addf %445, %446 : vector<8x1xf32>
    %448 = math.rsqrt %447 : vector<8x1xf32>
    %449 = vector.broadcast %448 : vector<8x1xf32> to vector<8x32xf32>
    %450 = arith.mulf %440, %449 : vector<8x32xf32>
    %451 = vector.broadcast %432 : vector<1x32xf32> to vector<8x32xf32>
    %452 = arith.mulf %450, %451 : vector<8x32xf32>
    %453 = vector.broadcast %434 : vector<1x32xf32> to vector<8x32xf32>
    %454 = arith.addf %452, %453 : vector<8x32xf32>
    %c0_307 = arith.constant 0 : index
    %c0_308 = arith.constant 0 : index
    %455 = vector.load %arg5[%c0_307, %c0_308] : memref<1x32xf32, #tpu.memory_space<vmem>>, vector<1x32xf32>
    %c0_309 = arith.constant 0 : index
    %c0_310 = arith.constant 0 : index
    %c0_311 = arith.constant 0 : index
    %456 = vector.load %arg17[%c0_309, %c0_310, %c0_311] : memref<1x32x32xf32, #tpu.memory_space<vmem>>, vector<1x32x32xf32>
    %457 = vector.shape_cast %456 : vector<1x32x32xf32> to vector<32x32xf32>
    %cst_312 = arith.constant dense<0.000000e+00> : vector<1x32xf32>
    %458 = tpu.matmul %455, %457, %cst_312 {dimension_numbers = #tpu.dot_dimension_numbers<[1], [0], [0], [1], [0, 0, 1, 1], [], []>} : vector<1x32xf32>, vector<32x32xf32>, vector<1x32xf32> -> vector<1x32xf32>
    %c0_313 = arith.constant 0 : index
    %c0_314 = arith.constant 0 : index
    %c0_315 = arith.constant 0 : index
    %459 = vector.load %arg18[%c0_313, %c0_314, %c0_315] : memref<1x1x32xf32, #tpu.memory_space<vmem>>, vector<1x1x32xf32>
    %460 = vector.shape_cast %459 : vector<1x1x32xf32> to vector<1x32xf32>
    %461 = arith.addf %458, %460 : vector<1x32xf32>
    %c0_316 = arith.constant 0 : index
    %c0_317 = arith.constant 0 : index
    %c0_318 = arith.constant 0 : index
    %462 = vector.load %arg19[%c0_316, %c0_317, %c0_318] : memref<1x32x32xf32, #tpu.memory_space<vmem>>, vector<1x32x32xf32>
    %463 = vector.shape_cast %462 : vector<1x32x32xf32> to vector<32x32xf32>
    %cst_319 = arith.constant dense<0.000000e+00> : vector<1x32xf32>
    %464 = tpu.matmul %461, %463, %cst_319 {dimension_numbers = #tpu.dot_dimension_numbers<[1], [0], [0], [1], [0, 0, 1, 1], [], []>} : vector<1x32xf32>, vector<32x32xf32>, vector<1x32xf32> -> vector<1x32xf32>
    %c0_320 = arith.constant 0 : index
    %c0_321 = arith.constant 0 : index
    %c0_322 = arith.constant 0 : index
    %465 = vector.load %arg20[%c0_320, %c0_321, %c0_322] : memref<1x1x32xf32, #tpu.memory_space<vmem>>, vector<1x1x32xf32>
    %466 = vector.shape_cast %465 : vector<1x1x32xf32> to vector<1x32xf32>
    %467 = arith.addf %464, %466 : vector<1x32xf32>
    %468 = arith.addf %455, %467 : vector<1x32xf32>
    %c0_323 = arith.constant 0 : index
    %c0_324 = arith.constant 0 : index
    %c0_325 = arith.constant 0 : index
    %469 = vector.load %arg29[%c0_323, %c0_324, %c0_325] : memref<6x1x32xf32, #tpu.memory_space<vmem>>, vector<1x1x32xf32>
    %470 = vector.shape_cast %469 : vector<1x1x32xf32> to vector<1x32xf32>
    %c1_326 = arith.constant 1 : index
    %c0_327 = arith.constant 0 : index
    %c0_328 = arith.constant 0 : index
    %471 = vector.load %arg29[%c1_326, %c0_327, %c0_328] : memref<6x1x32xf32, #tpu.memory_space<vmem>>, vector<1x1x32xf32>
    %472 = vector.shape_cast %471 : vector<1x1x32xf32> to vector<1x32xf32>
    %cst_329 = arith.constant dense<0.000000e+00> : vector<1xf32>
    %473 = vector.multi_reduction <add>, %468, %cst_329 [1] : vector<1x32xf32> to vector<1xf32>
    %474 = vector.shape_cast %473 : vector<1xf32> to vector<1x1xf32>
    %cst_330 = arith.constant 3.200000e+01 : f32
    %475 = vector.broadcast %cst_330 : f32 to vector<1x1xf32>
    %476 = arith.divf %474, %475 : vector<1x1xf32>
    %477 = vector.broadcast %476 : vector<1x1xf32> to vector<1x32xf32>
    %478 = arith.subf %468, %477 : vector<1x32xf32>
    %479 = arith.mulf %478, %478 : vector<1x32xf32>
    %cst_331 = arith.constant dense<0.000000e+00> : vector<1xf32>
    %480 = vector.multi_reduction <add>, %479, %cst_331 [1] : vector<1x32xf32> to vector<1xf32>
    %481 = vector.shape_cast %480 : vector<1xf32> to vector<1x1xf32>
    %cst_332 = arith.constant 3.200000e+01 : f32
    %482 = vector.broadcast %cst_332 : f32 to vector<1x1xf32>
    %483 = arith.divf %481, %482 : vector<1x1xf32>
    %cst_333 = arith.constant 9.99999974E-6 : f32
    %484 = vector.broadcast %cst_333 : f32 to vector<1x1xf32>
    %485 = arith.addf %483, %484 : vector<1x1xf32>
    %486 = math.rsqrt %485 : vector<1x1xf32>
    %487 = vector.broadcast %486 : vector<1x1xf32> to vector<1x32xf32>
    %488 = arith.mulf %478, %487 : vector<1x32xf32>
    %489 = arith.mulf %488, %470 : vector<1x32xf32>
    %490 = arith.addf %489, %472 : vector<1x32xf32>
    %cst_334 = arith.constant 0.000000e+00 : f32
    %491 = vector.broadcast %cst_334 : f32 to vector<1x32xf32>
    %c0_335 = arith.constant 0 : index
    %c0_336 = arith.constant 0 : index
    %c0_337 = arith.constant 0 : index
    %492 = vector.load %arg21[%c0_335, %c0_336, %c0_337] : memref<12x32x8xf32, #tpu.memory_space<vmem>>, vector<1x32x8xf32>
    %493 = vector.shape_cast %492 : vector<1x32x8xf32> to vector<32x8xf32>
    %cst_338 = arith.constant dense<0.000000e+00> : vector<1x8xf32>
    %494 = tpu.matmul %490, %493, %cst_338 {dimension_numbers = #tpu.dot_dimension_numbers<[1], [0], [0], [1], [0, 0, 1, 1], [], []>} : vector<1x32xf32>, vector<32x8xf32>, vector<1x8xf32> -> vector<1x8xf32>
    %c0_339 = arith.constant 0 : index
    %c0_340 = arith.constant 0 : index
    %c0_341 = arith.constant 0 : index
    %495 = vector.load %arg22[%c0_339, %c0_340, %c0_341] : memref<12x1x8xf32, #tpu.memory_space<vmem>>, vector<1x1x8xf32>
    %496 = vector.shape_cast %495 : vector<1x1x8xf32> to vector<1x8xf32>
    %497 = arith.addf %494, %496 : vector<1x8xf32>
    %c4_342 = arith.constant 4 : index
    %c0_343 = arith.constant 0 : index
    %c0_344 = arith.constant 0 : index
    %498 = vector.load %arg21[%c4_342, %c0_343, %c0_344] : memref<12x32x8xf32, #tpu.memory_space<vmem>>, vector<1x32x8xf32>
    %499 = vector.shape_cast %498 : vector<1x32x8xf32> to vector<32x8xf32>
    %cst_345 = arith.constant dense<0.000000e+00> : vector<8x8xf32>
    %500 = tpu.matmul %454, %499, %cst_345 {dimension_numbers = #tpu.dot_dimension_numbers<[1], [0], [0], [1], [0, 0, 1, 1], [], []>} : vector<8x32xf32>, vector<32x8xf32>, vector<8x8xf32> -> vector<8x8xf32>
    %c4_346 = arith.constant 4 : index
    %c0_347 = arith.constant 0 : index
    %c0_348 = arith.constant 0 : index
    %501 = vector.load %arg22[%c4_346, %c0_347, %c0_348] : memref<12x1x8xf32, #tpu.memory_space<vmem>>, vector<1x1x8xf32>
    %502 = vector.shape_cast %501 : vector<1x1x8xf32> to vector<1x8xf32>
    %503 = vector.broadcast %502 : vector<1x8xf32> to vector<8x8xf32>
    %504 = arith.addf %500, %503 : vector<8x8xf32>
    %c8_349 = arith.constant 8 : index
    %c0_350 = arith.constant 0 : index
    %c0_351 = arith.constant 0 : index
    %505 = vector.load %arg21[%c8_349, %c0_350, %c0_351] : memref<12x32x8xf32, #tpu.memory_space<vmem>>, vector<1x32x8xf32>
    %506 = vector.shape_cast %505 : vector<1x32x8xf32> to vector<32x8xf32>
    %cst_352 = arith.constant dense<0.000000e+00> : vector<8x8xf32>
    %507 = tpu.matmul %454, %506, %cst_352 {dimension_numbers = #tpu.dot_dimension_numbers<[1], [0], [0], [1], [0, 0, 1, 1], [], []>} : vector<8x32xf32>, vector<32x8xf32>, vector<8x8xf32> -> vector<8x8xf32>
    %c8_353 = arith.constant 8 : index
    %c0_354 = arith.constant 0 : index
    %c0_355 = arith.constant 0 : index
    %508 = vector.load %arg22[%c8_353, %c0_354, %c0_355] : memref<12x1x8xf32, #tpu.memory_space<vmem>>, vector<1x1x8xf32>
    %509 = vector.shape_cast %508 : vector<1x1x8xf32> to vector<1x8xf32>
    %510 = vector.broadcast %509 : vector<1x8xf32> to vector<8x8xf32>
    %511 = arith.addf %507, %510 : vector<8x8xf32>
    %cst_356 = arith.constant dense<0.000000e+00> : vector<1x8xf32>
    %512 = tpu.matmul %497, %504, %cst_356 {dimension_numbers = #tpu.dot_dimension_numbers<[1], [1], [0], [0], [0, 0, 1, 0], [], []>} : vector<1x8xf32>, vector<8x8xf32>, vector<1x8xf32> -> vector<1x8xf32>
    %cst_357 = arith.constant 0.353553385 : f32
    %513 = vector.broadcast %cst_357 : f32 to vector<1x8xf32>
    %514 = arith.mulf %512, %513 : vector<1x8xf32>
    %cst_358 = arith.constant dense<0xFF800000> : vector<1xf32>
    %515 = vector.multi_reduction <maximumf>, %514, %cst_358 [1] : vector<1x8xf32> to vector<1xf32>
    %516 = vector.shape_cast %515 : vector<1xf32> to vector<1x1xf32>
    %517 = vector.broadcast %516 : vector<1x1xf32> to vector<1x8xf32>
    %518 = arith.subf %514, %517 : vector<1x8xf32>
    %519 = math.exp %518 : vector<1x8xf32>
    %cst_359 = arith.constant dense<0.000000e+00> : vector<1xf32>
    %520 = vector.multi_reduction <add>, %519, %cst_359 [1] : vector<1x8xf32> to vector<1xf32>
    %521 = vector.shape_cast %520 : vector<1xf32> to vector<1x1xf32>
    %522 = vector.broadcast %521 : vector<1x1xf32> to vector<1x8xf32>
    %523 = arith.divf %519, %522 : vector<1x8xf32>
    %cst_360 = arith.constant dense<0.000000e+00> : vector<1x8xf32>
    %524 = tpu.matmul %523, %511, %cst_360 {dimension_numbers = #tpu.dot_dimension_numbers<[1], [0], [0], [1], [0, 0, 1, 1], [], []>} : vector<1x8xf32>, vector<8x8xf32>, vector<1x8xf32> -> vector<1x8xf32>
    %c0_361 = arith.constant 0 : index
    %c0_362 = arith.constant 0 : index
    %c0_363 = arith.constant 0 : index
    %525 = vector.load %arg23[%c0_361, %c0_362, %c0_363] : memref<4x8x32xf32, #tpu.memory_space<vmem>>, vector<1x8x32xf32>
    %526 = vector.shape_cast %525 : vector<1x8x32xf32> to vector<8x32xf32>
    %cst_364 = arith.constant dense<0.000000e+00> : vector<1x32xf32>
    %527 = tpu.matmul %524, %526, %cst_364 {dimension_numbers = #tpu.dot_dimension_numbers<[1], [0], [0], [1], [0, 0, 1, 1], [], []>} : vector<1x8xf32>, vector<8x32xf32>, vector<1x32xf32> -> vector<1x32xf32>
    %528 = arith.addf %491, %527 : vector<1x32xf32>
    %c1_365 = arith.constant 1 : index
    %c0_366 = arith.constant 0 : index
    %c0_367 = arith.constant 0 : index
    %529 = vector.load %arg21[%c1_365, %c0_366, %c0_367] : memref<12x32x8xf32, #tpu.memory_space<vmem>>, vector<1x32x8xf32>
    %530 = vector.shape_cast %529 : vector<1x32x8xf32> to vector<32x8xf32>
    %cst_368 = arith.constant dense<0.000000e+00> : vector<1x8xf32>
    %531 = tpu.matmul %490, %530, %cst_368 {dimension_numbers = #tpu.dot_dimension_numbers<[1], [0], [0], [1], [0, 0, 1, 1], [], []>} : vector<1x32xf32>, vector<32x8xf32>, vector<1x8xf32> -> vector<1x8xf32>
    %c1_369 = arith.constant 1 : index
    %c0_370 = arith.constant 0 : index
    %c0_371 = arith.constant 0 : index
    %532 = vector.load %arg22[%c1_369, %c0_370, %c0_371] : memref<12x1x8xf32, #tpu.memory_space<vmem>>, vector<1x1x8xf32>
    %533 = vector.shape_cast %532 : vector<1x1x8xf32> to vector<1x8xf32>
    %534 = arith.addf %531, %533 : vector<1x8xf32>
    %c5_372 = arith.constant 5 : index
    %c0_373 = arith.constant 0 : index
    %c0_374 = arith.constant 0 : index
    %535 = vector.load %arg21[%c5_372, %c0_373, %c0_374] : memref<12x32x8xf32, #tpu.memory_space<vmem>>, vector<1x32x8xf32>
    %536 = vector.shape_cast %535 : vector<1x32x8xf32> to vector<32x8xf32>
    %cst_375 = arith.constant dense<0.000000e+00> : vector<8x8xf32>
    %537 = tpu.matmul %454, %536, %cst_375 {dimension_numbers = #tpu.dot_dimension_numbers<[1], [0], [0], [1], [0, 0, 1, 1], [], []>} : vector<8x32xf32>, vector<32x8xf32>, vector<8x8xf32> -> vector<8x8xf32>
    %c5_376 = arith.constant 5 : index
    %c0_377 = arith.constant 0 : index
    %c0_378 = arith.constant 0 : index
    %538 = vector.load %arg22[%c5_376, %c0_377, %c0_378] : memref<12x1x8xf32, #tpu.memory_space<vmem>>, vector<1x1x8xf32>
    %539 = vector.shape_cast %538 : vector<1x1x8xf32> to vector<1x8xf32>
    %540 = vector.broadcast %539 : vector<1x8xf32> to vector<8x8xf32>
    %541 = arith.addf %537, %540 : vector<8x8xf32>
    %c9_379 = arith.constant 9 : index
    %c0_380 = arith.constant 0 : index
    %c0_381 = arith.constant 0 : index
    %542 = vector.load %arg21[%c9_379, %c0_380, %c0_381] : memref<12x32x8xf32, #tpu.memory_space<vmem>>, vector<1x32x8xf32>
    %543 = vector.shape_cast %542 : vector<1x32x8xf32> to vector<32x8xf32>
    %cst_382 = arith.constant dense<0.000000e+00> : vector<8x8xf32>
    %544 = tpu.matmul %454, %543, %cst_382 {dimension_numbers = #tpu.dot_dimension_numbers<[1], [0], [0], [1], [0, 0, 1, 1], [], []>} : vector<8x32xf32>, vector<32x8xf32>, vector<8x8xf32> -> vector<8x8xf32>
    %c9_383 = arith.constant 9 : index
    %c0_384 = arith.constant 0 : index
    %c0_385 = arith.constant 0 : index
    %545 = vector.load %arg22[%c9_383, %c0_384, %c0_385] : memref<12x1x8xf32, #tpu.memory_space<vmem>>, vector<1x1x8xf32>
    %546 = vector.shape_cast %545 : vector<1x1x8xf32> to vector<1x8xf32>
    %547 = vector.broadcast %546 : vector<1x8xf32> to vector<8x8xf32>
    %548 = arith.addf %544, %547 : vector<8x8xf32>
    %cst_386 = arith.constant dense<0.000000e+00> : vector<1x8xf32>
    %549 = tpu.matmul %534, %541, %cst_386 {dimension_numbers = #tpu.dot_dimension_numbers<[1], [1], [0], [0], [0, 0, 1, 0], [], []>} : vector<1x8xf32>, vector<8x8xf32>, vector<1x8xf32> -> vector<1x8xf32>
    %cst_387 = arith.constant 0.353553385 : f32
    %550 = vector.broadcast %cst_387 : f32 to vector<1x8xf32>
    %551 = arith.mulf %549, %550 : vector<1x8xf32>
    %cst_388 = arith.constant dense<0xFF800000> : vector<1xf32>
    %552 = vector.multi_reduction <maximumf>, %551, %cst_388 [1] : vector<1x8xf32> to vector<1xf32>
    %553 = vector.shape_cast %552 : vector<1xf32> to vector<1x1xf32>
    %554 = vector.broadcast %553 : vector<1x1xf32> to vector<1x8xf32>
    %555 = arith.subf %551, %554 : vector<1x8xf32>
    %556 = math.exp %555 : vector<1x8xf32>
    %cst_389 = arith.constant dense<0.000000e+00> : vector<1xf32>
    %557 = vector.multi_reduction <add>, %556, %cst_389 [1] : vector<1x8xf32> to vector<1xf32>
    %558 = vector.shape_cast %557 : vector<1xf32> to vector<1x1xf32>
    %559 = vector.broadcast %558 : vector<1x1xf32> to vector<1x8xf32>
    %560 = arith.divf %556, %559 : vector<1x8xf32>
    %cst_390 = arith.constant dense<0.000000e+00> : vector<1x8xf32>
    %561 = tpu.matmul %560, %548, %cst_390 {dimension_numbers = #tpu.dot_dimension_numbers<[1], [0], [0], [1], [0, 0, 1, 1], [], []>} : vector<1x8xf32>, vector<8x8xf32>, vector<1x8xf32> -> vector<1x8xf32>
    %c1_391 = arith.constant 1 : index
    %c0_392 = arith.constant 0 : index
    %c0_393 = arith.constant 0 : index
    %562 = vector.load %arg23[%c1_391, %c0_392, %c0_393] : memref<4x8x32xf32, #tpu.memory_space<vmem>>, vector<1x8x32xf32>
    %563 = vector.shape_cast %562 : vector<1x8x32xf32> to vector<8x32xf32>
    %cst_394 = arith.constant dense<0.000000e+00> : vector<1x32xf32>
    %564 = tpu.matmul %561, %563, %cst_394 {dimension_numbers = #tpu.dot_dimension_numbers<[1], [0], [0], [1], [0, 0, 1, 1], [], []>} : vector<1x8xf32>, vector<8x32xf32>, vector<1x32xf32> -> vector<1x32xf32>
    %565 = arith.addf %528, %564 : vector<1x32xf32>
    %c2_395 = arith.constant 2 : index
    %c0_396 = arith.constant 0 : index
    %c0_397 = arith.constant 0 : index
    %566 = vector.load %arg21[%c2_395, %c0_396, %c0_397] : memref<12x32x8xf32, #tpu.memory_space<vmem>>, vector<1x32x8xf32>
    %567 = vector.shape_cast %566 : vector<1x32x8xf32> to vector<32x8xf32>
    %cst_398 = arith.constant dense<0.000000e+00> : vector<1x8xf32>
    %568 = tpu.matmul %490, %567, %cst_398 {dimension_numbers = #tpu.dot_dimension_numbers<[1], [0], [0], [1], [0, 0, 1, 1], [], []>} : vector<1x32xf32>, vector<32x8xf32>, vector<1x8xf32> -> vector<1x8xf32>
    %c2_399 = arith.constant 2 : index
    %c0_400 = arith.constant 0 : index
    %c0_401 = arith.constant 0 : index
    %569 = vector.load %arg22[%c2_399, %c0_400, %c0_401] : memref<12x1x8xf32, #tpu.memory_space<vmem>>, vector<1x1x8xf32>
    %570 = vector.shape_cast %569 : vector<1x1x8xf32> to vector<1x8xf32>
    %571 = arith.addf %568, %570 : vector<1x8xf32>
    %c6_402 = arith.constant 6 : index
    %c0_403 = arith.constant 0 : index
    %c0_404 = arith.constant 0 : index
    %572 = vector.load %arg21[%c6_402, %c0_403, %c0_404] : memref<12x32x8xf32, #tpu.memory_space<vmem>>, vector<1x32x8xf32>
    %573 = vector.shape_cast %572 : vector<1x32x8xf32> to vector<32x8xf32>
    %cst_405 = arith.constant dense<0.000000e+00> : vector<8x8xf32>
    %574 = tpu.matmul %454, %573, %cst_405 {dimension_numbers = #tpu.dot_dimension_numbers<[1], [0], [0], [1], [0, 0, 1, 1], [], []>} : vector<8x32xf32>, vector<32x8xf32>, vector<8x8xf32> -> vector<8x8xf32>
    %c6_406 = arith.constant 6 : index
    %c0_407 = arith.constant 0 : index
    %c0_408 = arith.constant 0 : index
    %575 = vector.load %arg22[%c6_406, %c0_407, %c0_408] : memref<12x1x8xf32, #tpu.memory_space<vmem>>, vector<1x1x8xf32>
    %576 = vector.shape_cast %575 : vector<1x1x8xf32> to vector<1x8xf32>
    %577 = vector.broadcast %576 : vector<1x8xf32> to vector<8x8xf32>
    %578 = arith.addf %574, %577 : vector<8x8xf32>
    %c10_409 = arith.constant 10 : index
    %c0_410 = arith.constant 0 : index
    %c0_411 = arith.constant 0 : index
    %579 = vector.load %arg21[%c10_409, %c0_410, %c0_411] : memref<12x32x8xf32, #tpu.memory_space<vmem>>, vector<1x32x8xf32>
    %580 = vector.shape_cast %579 : vector<1x32x8xf32> to vector<32x8xf32>
    %cst_412 = arith.constant dense<0.000000e+00> : vector<8x8xf32>
    %581 = tpu.matmul %454, %580, %cst_412 {dimension_numbers = #tpu.dot_dimension_numbers<[1], [0], [0], [1], [0, 0, 1, 1], [], []>} : vector<8x32xf32>, vector<32x8xf32>, vector<8x8xf32> -> vector<8x8xf32>
    %c10_413 = arith.constant 10 : index
    %c0_414 = arith.constant 0 : index
    %c0_415 = arith.constant 0 : index
    %582 = vector.load %arg22[%c10_413, %c0_414, %c0_415] : memref<12x1x8xf32, #tpu.memory_space<vmem>>, vector<1x1x8xf32>
    %583 = vector.shape_cast %582 : vector<1x1x8xf32> to vector<1x8xf32>
    %584 = vector.broadcast %583 : vector<1x8xf32> to vector<8x8xf32>
    %585 = arith.addf %581, %584 : vector<8x8xf32>
    %cst_416 = arith.constant dense<0.000000e+00> : vector<1x8xf32>
    %586 = tpu.matmul %571, %578, %cst_416 {dimension_numbers = #tpu.dot_dimension_numbers<[1], [1], [0], [0], [0, 0, 1, 0], [], []>} : vector<1x8xf32>, vector<8x8xf32>, vector<1x8xf32> -> vector<1x8xf32>
    %cst_417 = arith.constant 0.353553385 : f32
    %587 = vector.broadcast %cst_417 : f32 to vector<1x8xf32>
    %588 = arith.mulf %586, %587 : vector<1x8xf32>
    %cst_418 = arith.constant dense<0xFF800000> : vector<1xf32>
    %589 = vector.multi_reduction <maximumf>, %588, %cst_418 [1] : vector<1x8xf32> to vector<1xf32>
    %590 = vector.shape_cast %589 : vector<1xf32> to vector<1x1xf32>
    %591 = vector.broadcast %590 : vector<1x1xf32> to vector<1x8xf32>
    %592 = arith.subf %588, %591 : vector<1x8xf32>
    %593 = math.exp %592 : vector<1x8xf32>
    %cst_419 = arith.constant dense<0.000000e+00> : vector<1xf32>
    %594 = vector.multi_reduction <add>, %593, %cst_419 [1] : vector<1x8xf32> to vector<1xf32>
    %595 = vector.shape_cast %594 : vector<1xf32> to vector<1x1xf32>
    %596 = vector.broadcast %595 : vector<1x1xf32> to vector<1x8xf32>
    %597 = arith.divf %593, %596 : vector<1x8xf32>
    %cst_420 = arith.constant dense<0.000000e+00> : vector<1x8xf32>
    %598 = tpu.matmul %597, %585, %cst_420 {dimension_numbers = #tpu.dot_dimension_numbers<[1], [0], [0], [1], [0, 0, 1, 1], [], []>} : vector<1x8xf32>, vector<8x8xf32>, vector<1x8xf32> -> vector<1x8xf32>
    %c2_421 = arith.constant 2 : index
    %c0_422 = arith.constant 0 : index
    %c0_423 = arith.constant 0 : index
    %599 = vector.load %arg23[%c2_421, %c0_422, %c0_423] : memref<4x8x32xf32, #tpu.memory_space<vmem>>, vector<1x8x32xf32>
    %600 = vector.shape_cast %599 : vector<1x8x32xf32> to vector<8x32xf32>
    %cst_424 = arith.constant dense<0.000000e+00> : vector<1x32xf32>
    %601 = tpu.matmul %598, %600, %cst_424 {dimension_numbers = #tpu.dot_dimension_numbers<[1], [0], [0], [1], [0, 0, 1, 1], [], []>} : vector<1x8xf32>, vector<8x32xf32>, vector<1x32xf32> -> vector<1x32xf32>
    %602 = arith.addf %565, %601 : vector<1x32xf32>
    %c3_425 = arith.constant 3 : index
    %c0_426 = arith.constant 0 : index
    %c0_427 = arith.constant 0 : index
    %603 = vector.load %arg21[%c3_425, %c0_426, %c0_427] : memref<12x32x8xf32, #tpu.memory_space<vmem>>, vector<1x32x8xf32>
    %604 = vector.shape_cast %603 : vector<1x32x8xf32> to vector<32x8xf32>
    %cst_428 = arith.constant dense<0.000000e+00> : vector<1x8xf32>
    %605 = tpu.matmul %490, %604, %cst_428 {dimension_numbers = #tpu.dot_dimension_numbers<[1], [0], [0], [1], [0, 0, 1, 1], [], []>} : vector<1x32xf32>, vector<32x8xf32>, vector<1x8xf32> -> vector<1x8xf32>
    %c3_429 = arith.constant 3 : index
    %c0_430 = arith.constant 0 : index
    %c0_431 = arith.constant 0 : index
    %606 = vector.load %arg22[%c3_429, %c0_430, %c0_431] : memref<12x1x8xf32, #tpu.memory_space<vmem>>, vector<1x1x8xf32>
    %607 = vector.shape_cast %606 : vector<1x1x8xf32> to vector<1x8xf32>
    %608 = arith.addf %605, %607 : vector<1x8xf32>
    %c7_432 = arith.constant 7 : index
    %c0_433 = arith.constant 0 : index
    %c0_434 = arith.constant 0 : index
    %609 = vector.load %arg21[%c7_432, %c0_433, %c0_434] : memref<12x32x8xf32, #tpu.memory_space<vmem>>, vector<1x32x8xf32>
    %610 = vector.shape_cast %609 : vector<1x32x8xf32> to vector<32x8xf32>
    %cst_435 = arith.constant dense<0.000000e+00> : vector<8x8xf32>
    %611 = tpu.matmul %454, %610, %cst_435 {dimension_numbers = #tpu.dot_dimension_numbers<[1], [0], [0], [1], [0, 0, 1, 1], [], []>} : vector<8x32xf32>, vector<32x8xf32>, vector<8x8xf32> -> vector<8x8xf32>
    %c7_436 = arith.constant 7 : index
    %c0_437 = arith.constant 0 : index
    %c0_438 = arith.constant 0 : index
    %612 = vector.load %arg22[%c7_436, %c0_437, %c0_438] : memref<12x1x8xf32, #tpu.memory_space<vmem>>, vector<1x1x8xf32>
    %613 = vector.shape_cast %612 : vector<1x1x8xf32> to vector<1x8xf32>
    %614 = vector.broadcast %613 : vector<1x8xf32> to vector<8x8xf32>
    %615 = arith.addf %611, %614 : vector<8x8xf32>
    %c11_439 = arith.constant 11 : index
    %c0_440 = arith.constant 0 : index
    %c0_441 = arith.constant 0 : index
    %616 = vector.load %arg21[%c11_439, %c0_440, %c0_441] : memref<12x32x8xf32, #tpu.memory_space<vmem>>, vector<1x32x8xf32>
    %617 = vector.shape_cast %616 : vector<1x32x8xf32> to vector<32x8xf32>
    %cst_442 = arith.constant dense<0.000000e+00> : vector<8x8xf32>
    %618 = tpu.matmul %454, %617, %cst_442 {dimension_numbers = #tpu.dot_dimension_numbers<[1], [0], [0], [1], [0, 0, 1, 1], [], []>} : vector<8x32xf32>, vector<32x8xf32>, vector<8x8xf32> -> vector<8x8xf32>
    %c11_443 = arith.constant 11 : index
    %c0_444 = arith.constant 0 : index
    %c0_445 = arith.constant 0 : index
    %619 = vector.load %arg22[%c11_443, %c0_444, %c0_445] : memref<12x1x8xf32, #tpu.memory_space<vmem>>, vector<1x1x8xf32>
    %620 = vector.shape_cast %619 : vector<1x1x8xf32> to vector<1x8xf32>
    %621 = vector.broadcast %620 : vector<1x8xf32> to vector<8x8xf32>
    %622 = arith.addf %618, %621 : vector<8x8xf32>
    %cst_446 = arith.constant dense<0.000000e+00> : vector<1x8xf32>
    %623 = tpu.matmul %608, %615, %cst_446 {dimension_numbers = #tpu.dot_dimension_numbers<[1], [1], [0], [0], [0, 0, 1, 0], [], []>} : vector<1x8xf32>, vector<8x8xf32>, vector<1x8xf32> -> vector<1x8xf32>
    %cst_447 = arith.constant 0.353553385 : f32
    %624 = vector.broadcast %cst_447 : f32 to vector<1x8xf32>
    %625 = arith.mulf %623, %624 : vector<1x8xf32>
    %cst_448 = arith.constant dense<0xFF800000> : vector<1xf32>
    %626 = vector.multi_reduction <maximumf>, %625, %cst_448 [1] : vector<1x8xf32> to vector<1xf32>
    %627 = vector.shape_cast %626 : vector<1xf32> to vector<1x1xf32>
    %628 = vector.broadcast %627 : vector<1x1xf32> to vector<1x8xf32>
    %629 = arith.subf %625, %628 : vector<1x8xf32>
    %630 = math.exp %629 : vector<1x8xf32>
    %cst_449 = arith.constant dense<0.000000e+00> : vector<1xf32>
    %631 = vector.multi_reduction <add>, %630, %cst_449 [1] : vector<1x8xf32> to vector<1xf32>
    %632 = vector.shape_cast %631 : vector<1xf32> to vector<1x1xf32>
    %633 = vector.broadcast %632 : vector<1x1xf32> to vector<1x8xf32>
    %634 = arith.divf %630, %633 : vector<1x8xf32>
    %cst_450 = arith.constant dense<0.000000e+00> : vector<1x8xf32>
    %635 = tpu.matmul %634, %622, %cst_450 {dimension_numbers = #tpu.dot_dimension_numbers<[1], [0], [0], [1], [0, 0, 1, 1], [], []>} : vector<1x8xf32>, vector<8x8xf32>, vector<1x8xf32> -> vector<1x8xf32>
    %c3_451 = arith.constant 3 : index
    %c0_452 = arith.constant 0 : index
    %c0_453 = arith.constant 0 : index
    %636 = vector.load %arg23[%c3_451, %c0_452, %c0_453] : memref<4x8x32xf32, #tpu.memory_space<vmem>>, vector<1x8x32xf32>
    %637 = vector.shape_cast %636 : vector<1x8x32xf32> to vector<8x32xf32>
    %cst_454 = arith.constant dense<0.000000e+00> : vector<1x32xf32>
    %638 = tpu.matmul %635, %637, %cst_454 {dimension_numbers = #tpu.dot_dimension_numbers<[1], [0], [0], [1], [0, 0, 1, 1], [], []>} : vector<1x8xf32>, vector<8x32xf32>, vector<1x32xf32> -> vector<1x32xf32>
    %639 = arith.addf %602, %638 : vector<1x32xf32>
    %c0_455 = arith.constant 0 : index
    %c0_456 = arith.constant 0 : index
    %c0_457 = arith.constant 0 : index
    %640 = vector.load %arg24[%c0_455, %c0_456, %c0_457] : memref<1x1x32xf32, #tpu.memory_space<vmem>>, vector<1x1x32xf32>
    %641 = vector.shape_cast %640 : vector<1x1x32xf32> to vector<1x32xf32>
    %642 = arith.addf %639, %641 : vector<1x32xf32>
    %643 = arith.addf %490, %642 : vector<1x32xf32>
    %c2_458 = arith.constant 2 : index
    %c0_459 = arith.constant 0 : index
    %c0_460 = arith.constant 0 : index
    %644 = vector.load %arg29[%c2_458, %c0_459, %c0_460] : memref<6x1x32xf32, #tpu.memory_space<vmem>>, vector<1x1x32xf32>
    %645 = vector.shape_cast %644 : vector<1x1x32xf32> to vector<1x32xf32>
    %c3_461 = arith.constant 3 : index
    %c0_462 = arith.constant 0 : index
    %c0_463 = arith.constant 0 : index
    %646 = vector.load %arg29[%c3_461, %c0_462, %c0_463] : memref<6x1x32xf32, #tpu.memory_space<vmem>>, vector<1x1x32xf32>
    %647 = vector.shape_cast %646 : vector<1x1x32xf32> to vector<1x32xf32>
    %cst_464 = arith.constant dense<0.000000e+00> : vector<1xf32>
    %648 = vector.multi_reduction <add>, %643, %cst_464 [1] : vector<1x32xf32> to vector<1xf32>
    %649 = vector.shape_cast %648 : vector<1xf32> to vector<1x1xf32>
    %cst_465 = arith.constant 3.200000e+01 : f32
    %650 = vector.broadcast %cst_465 : f32 to vector<1x1xf32>
    %651 = arith.divf %649, %650 : vector<1x1xf32>
    %652 = vector.broadcast %651 : vector<1x1xf32> to vector<1x32xf32>
    %653 = arith.subf %643, %652 : vector<1x32xf32>
    %654 = arith.mulf %653, %653 : vector<1x32xf32>
    %cst_466 = arith.constant dense<0.000000e+00> : vector<1xf32>
    %655 = vector.multi_reduction <add>, %654, %cst_466 [1] : vector<1x32xf32> to vector<1xf32>
    %656 = vector.shape_cast %655 : vector<1xf32> to vector<1x1xf32>
    %cst_467 = arith.constant 3.200000e+01 : f32
    %657 = vector.broadcast %cst_467 : f32 to vector<1x1xf32>
    %658 = arith.divf %656, %657 : vector<1x1xf32>
    %cst_468 = arith.constant 9.99999974E-6 : f32
    %659 = vector.broadcast %cst_468 : f32 to vector<1x1xf32>
    %660 = arith.addf %658, %659 : vector<1x1xf32>
    %661 = math.rsqrt %660 : vector<1x1xf32>
    %662 = vector.broadcast %661 : vector<1x1xf32> to vector<1x32xf32>
    %663 = arith.mulf %653, %662 : vector<1x32xf32>
    %664 = arith.mulf %663, %645 : vector<1x32xf32>
    %665 = arith.addf %664, %647 : vector<1x32xf32>
    %c0_469 = arith.constant 0 : index
    %c0_470 = arith.constant 0 : index
    %c0_471 = arith.constant 0 : index
    %666 = vector.load %arg25[%c0_469, %c0_470, %c0_471] : memref<1x32x64xf32, #tpu.memory_space<vmem>>, vector<1x32x64xf32>
    %667 = vector.shape_cast %666 : vector<1x32x64xf32> to vector<32x64xf32>
    %cst_472 = arith.constant dense<0.000000e+00> : vector<1x64xf32>
    %668 = tpu.matmul %665, %667, %cst_472 {dimension_numbers = #tpu.dot_dimension_numbers<[1], [0], [0], [1], [0, 0, 1, 1], [], []>} : vector<1x32xf32>, vector<32x64xf32>, vector<1x64xf32> -> vector<1x64xf32>
    %c0_473 = arith.constant 0 : index
    %c0_474 = arith.constant 0 : index
    %c0_475 = arith.constant 0 : index
    %669 = vector.load %arg26[%c0_473, %c0_474, %c0_475] : memref<1x1x64xf32, #tpu.memory_space<vmem>>, vector<1x1x64xf32>
    %670 = vector.shape_cast %669 : vector<1x1x64xf32> to vector<1x64xf32>
    %671 = arith.addf %668, %670 : vector<1x64xf32>
    %cst_476 = arith.constant 0.000000e+00 : f32
    %672 = vector.broadcast %cst_476 : f32 to vector<1x64xf32>
    %673 = arith.maximumf %671, %672 : vector<1x64xf32>
    %c0_477 = arith.constant 0 : index
    %c0_478 = arith.constant 0 : index
    %c0_479 = arith.constant 0 : index
    %674 = vector.load %arg27[%c0_477, %c0_478, %c0_479] : memref<1x64x32xf32, #tpu.memory_space<vmem>>, vector<1x64x32xf32>
    %675 = vector.shape_cast %674 : vector<1x64x32xf32> to vector<64x32xf32>
    %cst_480 = arith.constant dense<0.000000e+00> : vector<1x32xf32>
    %676 = tpu.matmul %673, %675, %cst_480 {dimension_numbers = #tpu.dot_dimension_numbers<[1], [0], [0], [1], [0, 0, 1, 1], [], []>} : vector<1x64xf32>, vector<64x32xf32>, vector<1x32xf32> -> vector<1x32xf32>
    %c0_481 = arith.constant 0 : index
    %c0_482 = arith.constant 0 : index
    %c0_483 = arith.constant 0 : index
    %677 = vector.load %arg28[%c0_481, %c0_482, %c0_483] : memref<1x1x32xf32, #tpu.memory_space<vmem>>, vector<1x1x32xf32>
    %678 = vector.shape_cast %677 : vector<1x1x32xf32> to vector<1x32xf32>
    %679 = arith.addf %676, %678 : vector<1x32xf32>
    %680 = arith.addf %665, %679 : vector<1x32xf32>
    %c4_484 = arith.constant 4 : index
    %c0_485 = arith.constant 0 : index
    %c0_486 = arith.constant 0 : index
    %681 = vector.load %arg29[%c4_484, %c0_485, %c0_486] : memref<6x1x32xf32, #tpu.memory_space<vmem>>, vector<1x1x32xf32>
    %682 = vector.shape_cast %681 : vector<1x1x32xf32> to vector<1x32xf32>
    %c5_487 = arith.constant 5 : index
    %c0_488 = arith.constant 0 : index
    %c0_489 = arith.constant 0 : index
    %683 = vector.load %arg29[%c5_487, %c0_488, %c0_489] : memref<6x1x32xf32, #tpu.memory_space<vmem>>, vector<1x1x32xf32>
    %684 = vector.shape_cast %683 : vector<1x1x32xf32> to vector<1x32xf32>
    %cst_490 = arith.constant dense<0.000000e+00> : vector<1xf32>
    %685 = vector.multi_reduction <add>, %680, %cst_490 [1] : vector<1x32xf32> to vector<1xf32>
    %686 = vector.shape_cast %685 : vector<1xf32> to vector<1x1xf32>
    %cst_491 = arith.constant 3.200000e+01 : f32
    %687 = vector.broadcast %cst_491 : f32 to vector<1x1xf32>
    %688 = arith.divf %686, %687 : vector<1x1xf32>
    %689 = vector.broadcast %688 : vector<1x1xf32> to vector<1x32xf32>
    %690 = arith.subf %680, %689 : vector<1x32xf32>
    %691 = arith.mulf %690, %690 : vector<1x32xf32>
    %cst_492 = arith.constant dense<0.000000e+00> : vector<1xf32>
    %692 = vector.multi_reduction <add>, %691, %cst_492 [1] : vector<1x32xf32> to vector<1xf32>
    %693 = vector.shape_cast %692 : vector<1xf32> to vector<1x1xf32>
    %cst_493 = arith.constant 3.200000e+01 : f32
    %694 = vector.broadcast %cst_493 : f32 to vector<1x1xf32>
    %695 = arith.divf %693, %694 : vector<1x1xf32>
    %cst_494 = arith.constant 9.99999974E-6 : f32
    %696 = vector.broadcast %cst_494 : f32 to vector<1x1xf32>
    %697 = arith.addf %695, %696 : vector<1x1xf32>
    %698 = math.rsqrt %697 : vector<1x1xf32>
    %699 = vector.broadcast %698 : vector<1x1xf32> to vector<1x32xf32>
    %700 = arith.mulf %690, %699 : vector<1x32xf32>
    %701 = arith.mulf %700, %682 : vector<1x32xf32>
    %702 = arith.addf %701, %684 : vector<1x32xf32>
    %c0_495 = arith.constant 0 : index
    %c0_496 = arith.constant 0 : index
    %703 = vector.load %arg6[%c0_495, %c0_496] : memref<32x128xf32, #tpu.memory_space<vmem>>, vector<32x128xf32>
    %cst_497 = arith.constant dense<0.000000e+00> : vector<1x128xf32>
    %704 = tpu.matmul %702, %703, %cst_497 {dimension_numbers = #tpu.dot_dimension_numbers<[1], [0], [0], [1], [0, 0, 1, 1], [], []>} : vector<1x32xf32>, vector<32x128xf32>, vector<1x128xf32> -> vector<1x128xf32>
    %c0_498 = arith.constant 0 : index
    %c0_499 = arith.constant 0 : index
    %705 = vector.load %arg7[%c0_498, %c0_499] : memref<1x128xf32, #tpu.memory_space<vmem>>, vector<1x128xf32>
    %706 = arith.addf %704, %705 : vector<1x128xf32>
    %c0_500 = arith.constant 0 : index
    %c0_501 = arith.constant 0 : index
    %c0_502 = arith.constant 0 : index
    %707 = vector.load %arg30[%c0_500, %c0_501, %c0_502] : memref<1x1x128xf32, #tpu.memory_space<vmem>>, vector<1x1x128xf32>
    %708 = vector.shape_cast %707 : vector<1x1x128xf32> to vector<1x128xf32>
    %709 = vector.shape_cast %706 : vector<1x128xf32> to vector<1x1x128xf32>
    tpu.vector_store %arg30[%c0_500, %c0_501, %c0_502], %709 {strides = array<i32>} : memref<1x1x128xf32, #tpu.memory_space<vmem>>, vector<1x1x128xf32>,
    return
  }
  func.func @transform_0(%arg0: i32) -> (i32, i32, i32) {
    %c0_i32 = arith.constant 0 : i32
    %c0_i32_0 = arith.constant 0 : i32
    %c0_i32_1 = arith.constant 0 : i32
    return %arg0, %c0_i32, %c0_i32_0 : i32, i32, i32
  }
  func.func @transform_1(%arg0: i32) -> (i32, i32) {
    %c0_i32 = arith.constant 0 : i32
    %c0_i32_0 = arith.constant 0 : i32
    %c0_i32_1 = arith.constant 0 : i32
    return %c0_i32, %c0_i32_0 : i32, i32
  }
  func.func @transform_2(%arg0: i32) -> (i32, i32) {
    %c0_i32 = arith.constant 0 : i32
    %c0_i32_0 = arith.constant 0 : i32
    %c0_i32_1 = arith.constant 0 : i32
    return %c0_i32, %c0_i32_0 : i32, i32
  }
  func.func @transform_3(%arg0: i32) -> (i32, i32) {
    %c0_i32 = arith.constant 0 : i32
    %c0_i32_0 = arith.constant 0 : i32
    %c0_i32_1 = arith.constant 0 : i32
    return %c0_i32, %c0_i32_0 : i32, i32
  }
  func.func @transform_4(%arg0: i32) -> (i32, i32) {
    %c0_i32 = arith.constant 0 : i32
    %c0_i32_0 = arith.constant 0 : i32
    %c0_i32_1 = arith.constant 0 : i32
    return %c0_i32, %c0_i32_0 : i32, i32
  }
  func.func @transform_5(%arg0: i32) -> (i32, i32) {
    %c0_i32 = arith.constant 0 : i32
    %c0_i32_0 = arith.constant 0 : i32
    %c0_i32_1 = arith.constant 0 : i32
    return %c0_i32, %c0_i32_0 : i32, i32
  }
  func.func @transform_6(%arg0: i32) -> (i32, i32) {
    %c0_i32 = arith.constant 0 : i32
    %c0_i32_0 = arith.constant 0 : i32
    %c0_i32_1 = arith.constant 0 : i32
    return %c0_i32, %c0_i32_0 : i32, i32
  }
  func.func @transform_7(%arg0: i32) -> (i32, i32, i32) {
    %c0_i32 = arith.constant 0 : i32
    %c0_i32_0 = arith.constant 0 : i32
    %c0_i32_1 = arith.constant 0 : i32
    %c0_i32_2 = arith.constant 0 : i32
    return %c0_i32, %c0_i32_0, %c0_i32_1 : i32, i32, i32
  }
  func.func @transform_8(%arg0: i32) -> (i32, i32, i32) {
    %c0_i32 = arith.constant 0 : i32
    %c0_i32_0 = arith.constant 0 : i32
    %c0_i32_1 = arith.constant 0 : i32
    %c0_i32_2 = arith.constant 0 : i32
    return %c0_i32, %c0_i32_0, %c0_i32_1 : i32, i32, i32
  }
  func.func @transform_9(%arg0: i32) -> (i32, i32, i32) {
    %c0_i32 = arith.constant 0 : i32
    %c0_i32_0 = arith.constant 0 : i32
    %c0_i32_1 = arith.constant 0 : i32
    %c0_i32_2 = arith.constant 0 : i32
    return %c0_i32, %c0_i32_0, %c0_i32_1 : i32, i32, i32
  }
  func.func @transform_10(%arg0: i32) -> (i32, i32, i32) {
    %c0_i32 = arith.constant 0 : i32
    %c0_i32_0 = arith.constant 0 : i32
    %c0_i32_1 = arith.constant 0 : i32
    %c0_i32_2 = arith.constant 0 : i32
    return %c0_i32, %c0_i32_0, %c0_i32_1 : i32, i32, i32
  }
  func.func @transform_11(%arg0: i32) -> (i32, i32, i32) {
    %c0_i32 = arith.constant 0 : i32
    %c0_i32_0 = arith.constant 0 : i32
    %c0_i32_1 = arith.constant 0 : i32
    %c0_i32_2 = arith.constant 0 : i32
    return %c0_i32, %c0_i32_0, %c0_i32_1 : i32, i32, i32
  }
  func.func @transform_12(%arg0: i32) -> (i32, i32, i32) {
    %c0_i32 = arith.constant 0 : i32
    %c0_i32_0 = arith.constant 0 : i32
    %c0_i32_1 = arith.constant 0 : i32
    %c0_i32_2 = arith.constant 0 : i32
    return %c0_i32, %c0_i32_0, %c0_i32_1 : i32, i32, i32
  }
  func.func @transform_13(%arg0: i32) -> (i32, i32, i32) {
    %c0_i32 = arith.constant 0 : i32
    %c0_i32_0 = arith.constant 0 : i32
    %c0_i32_1 = arith.constant 0 : i32
    %c0_i32_2 = arith.constant 0 : i32
    return %c0_i32, %c0_i32_0, %c0_i32_1 : i32, i32, i32
  }
  func.func @transform_14(%arg0: i32) -> (i32, i32, i32) {
    %c0_i32 = arith.constant 0 : i32
    %c0_i32_0 = arith.constant 0 : i32
    %c0_i32_1 = arith.constant 0 : i32
    %c0_i32_2 = arith.constant 0 : i32
    return %c0_i32, %c0_i32_0, %c0_i32_1 : i32, i32, i32
  }
  func.func @transform_15(%arg0: i32) -> (i32, i32, i32) {
    %c0_i32 = arith.constant 0 : i32
    %c0_i32_0 = arith.constant 0 : i32
    %c0_i32_1 = arith.constant 0 : i32
    %c0_i32_2 = arith.constant 0 : i32
    return %c0_i32, %c0_i32_0, %c0_i32_1 : i32, i32, i32
  }
  func.func @transform_16(%arg0: i32) -> (i32, i32, i32) {
    %c0_i32 = arith.constant 0 : i32
    %c0_i32_0 = arith.constant 0 : i32
    %c0_i32_1 = arith.constant 0 : i32
    %c0_i32_2 = arith.constant 0 : i32
    return %c0_i32, %c0_i32_0, %c0_i32_1 : i32, i32, i32
  }
  func.func @transform_17(%arg0: i32) -> (i32, i32, i32) {
    %c0_i32 = arith.constant 0 : i32
    %c0_i32_0 = arith.constant 0 : i32
    %c0_i32_1 = arith.constant 0 : i32
    %c0_i32_2 = arith.constant 0 : i32
    return %c0_i32, %c0_i32_0, %c0_i32_1 : i32, i32, i32
  }
  func.func @transform_18(%arg0: i32) -> (i32, i32, i32) {
    %c0_i32 = arith.constant 0 : i32
    %c0_i32_0 = arith.constant 0 : i32
    %c0_i32_1 = arith.constant 0 : i32
    %c0_i32_2 = arith.constant 0 : i32
    return %c0_i32, %c0_i32_0, %c0_i32_1 : i32, i32, i32
  }
  func.func @transform_19(%arg0: i32) -> (i32, i32, i32) {
    %c0_i32 = arith.constant 0 : i32
    %c0_i32_0 = arith.constant 0 : i32
    %c0_i32_1 = arith.constant 0 : i32
    %c0_i32_2 = arith.constant 0 : i32
    return %c0_i32, %c0_i32_0, %c0_i32_1 : i32, i32, i32
  }
  func.func @transform_20(%arg0: i32) -> (i32, i32, i32) {
    %c0_i32 = arith.constant 0 : i32
    %c0_i32_0 = arith.constant 0 : i32
    %c0_i32_1 = arith.constant 0 : i32
    %c0_i32_2 = arith.constant 0 : i32
    return %c0_i32, %c0_i32_0, %c0_i32_1 : i32, i32, i32
  }
  func.func @transform_21(%arg0: i32) -> (i32, i32, i32) {
    %c0_i32 = arith.constant 0 : i32
    %c0_i32_0 = arith.constant 0 : i32
    %c0_i32_1 = arith.constant 0 : i32
    %c0_i32_2 = arith.constant 0 : i32
    return %c0_i32, %c0_i32_0, %c0_i32_1 : i32, i32, i32
  }
  func.func @transform_22(%arg0: i32) -> (i32, i32, i32) {
    %c0_i32 = arith.constant 0 : i32
    %c0_i32_0 = arith.constant 0 : i32
    %c0_i32_1 = arith.constant 0 : i32
    %c0_i32_2 = arith.constant 0 : i32
    return %c0_i32, %c0_i32_0, %c0_i32_1 : i32, i32, i32
  }
  func.func @transform_23(%arg0: i32) -> (i32, i32, i32) {
    %c0_i32 = arith.constant 0 : i32
    %c0_i32_0 = arith.constant 0 : i32
    %c0_i32_1 = arith.constant 0 : i32
    %c0_i32_2 = arith.constant 0 : i32
    return %c0_i32, %c0_i32_0, %c0_i32_1 : i32, i32, i32
  }
  func.func @transform_24(%arg0: i32) -> (i32, i32, i32) {
    %c0_i32 = arith.constant 0 : i32
    %c0_i32_0 = arith.constant 0 : i32
    %c0_i32_1 = arith.constant 0 : i32
    %c0_i32_2 = arith.constant 0 : i32
    return %c0_i32, %c0_i32_0, %c0_i32_1 : i32, i32, i32
  }
  func.func @transform_25(%arg0: i32) -> (i32, i32, i32) {
    %c0_i32 = arith.constant 0 : i32
    %c0_i32_0 = arith.constant 0 : i32
    %c0_i32_1 = arith.constant 0 : i32
    %c0_i32_2 = arith.constant 0 : i32
    return %c0_i32, %c0_i32_0, %c0_i32_1 : i32, i32, i32
  }
  func.func @transform_26(%arg0: i32) -> (i32, i32, i32) {
    %c0_i32 = arith.constant 0 : i32
    %c0_i32_0 = arith.constant 0 : i32
    %c0_i32_1 = arith.constant 0 : i32
    %c0_i32_2 = arith.constant 0 : i32
    return %c0_i32, %c0_i32_0, %c0_i32_1 : i32, i32, i32
  }
  func.func @transform_27(%arg0: i32) -> (i32, i32, i32) {
    %c0_i32 = arith.constant 0 : i32
    %c0_i32_0 = arith.constant 0 : i32
    %c0_i32_1 = arith.constant 0 : i32
    %c0_i32_2 = arith.constant 0 : i32
    return %c0_i32, %c0_i32_0, %c0_i32_1 : i32, i32, i32
  }
  func.func @transform_28(%arg0: i32) -> (i32, i32, i32) {
    %c0_i32 = arith.constant 0 : i32
    %c0_i32_0 = arith.constant 0 : i32
    %c0_i32_1 = arith.constant 0 : i32
    %c0_i32_2 = arith.constant 0 : i32
    return %c0_i32, %c0_i32_0, %c0_i32_1 : i32, i32, i32
  }
  func.func @transform_29(%arg0: i32) -> (i32, i32, i32) {
    %c0_i32 = arith.constant 0 : i32
    %c0_i32_0 = arith.constant 0 : i32
    %c0_i32_1 = arith.constant 0 : i32
    return %arg0, %c0_i32, %c0_i32_0 : i32, i32, i32
  }
}

</mosaic_0001>

<llo_original>
// kernel: squeeze.23
$region0: #{squeeze.23}
  %s0 = inlined_call_operand.vmem [shape: f32[32], index: 0, kind: input, shape index: {}]
  %s1 = inlined_call_operand.vmem [shape: f32[4,1,8], index: 1, kind: output, shape index: {}]
  $region1: #{squeeze.23} parent=0
    #allocation0 [shape = 'u8[4096]{0}', space=vmem, size = 0x1000, scoped, tag = 'scoped mem for output reshape']
    #allocation1 [shape = 'u8[4096]{0}', space=vmem, size = 0x1000, scoped, tag = 'scoped mem for input reshape']
    %s3 = sshllo.u32 0, 1
    %v4 = vld [vmem:[%s0] sm:%s3]
    %5 = vst [vmem:[#allocation1] sm:%s3] %v4
    %v6 = vld [vmem:[#allocation1] sm:$0x1]
    %vm7 = vcmask 64512
    %8 = vst.msk [vmem:[#allocation0] sm:$0x1] %vm7, %v6
    %v9 = vld [vmem:[#allocation1] sm:$0x1]
    %10 = vrot.lane.b32.xlu0 %v9, 120
    %v11 = vpop.permute.xlu0 %10
    %vm12 = vcmask 64512
    %s13 = scalar_lea.vmem [#allocation0], 1
    %14 = vst.msk [vmem:[%s13] sm:$0x1] %vm12, %v11
    %v15 = vld [vmem:[#allocation1] sm:$0x1]
    %16 = vrot.lane.b32.xlu0 %v15, 112
    %v17 = vpop.permute.xlu0 %16
    %vm18 = vcmask 64512
    %s19 = scalar_lea.vmem [#allocation0], 2
    %20 = vst.msk [vmem:[%s19] sm:$0x1] %vm18, %v17
    %v21 = vld [vmem:[#allocation1] sm:$0x1]
    %22 = vrot.lane.b32.xlu0 %v21, 104
    %v23 = vpop.permute.xlu0 %22
    %vm24 = vcmask 64512
    %s25 = scalar_lea.vmem [#allocation0], 3
    %26 = vst.msk [vmem:[%s25] sm:$0x1] %vm24, %v23
    %s28 = sshllo.u32 0, 4
    %v30 = vld [vmem:[#allocation0] sm:%s28]
    %s31 = sshllo.u32 0, 4
    %32 = vst [vmem:[%s1] sm:%s31] %v30

// kernel: _lambda_.1
$region0: #{_lambda_.1}
  #allocation0 [shape = 'u32[]', space=smem, size = 0x4, offset = 0x4, fixed_abs, tag = 'smem constant byte address 0x4 - core index']
  #allocation1 [shape = 'u32[144,128]{1,0:T(1,128)}', space=vmem, size = 0x12000, scoped, tag = 'internal scratch']
  %s0 = inlined_call_operand.smem [shape: u32[30], index: -1, kind: input, shape index: {}]
  %s1 = sld [smem:[%s0]]
  %s2 = scalar_lea.smem %s0, 1
  %s3 = sld [smem:[%s2]]
  %s4 = scalar_lea.smem %s0, 2
  %s5 = sld [smem:[%s4]]
  %s6 = scalar_lea.smem %s0, 3
  %s7 = sld [smem:[%s6]]
  %s8 = scalar_lea.smem %s0, 4
  %s9 = sld [smem:[%s8]]
  %s10 = scalar_lea.smem %s0, 5
  %s11 = sld [smem:[%s10]]
  %s12 = scalar_lea.smem %s0, 6
  %s13 = sld [smem:[%s12]]
  %s14 = scalar_lea.smem %s0, 7
  %s15 = sld [smem:[%s14]]
  %s16 = scalar_lea.smem %s0, 8
  %s17 = sld [smem:[%s16]]
  %s18 = scalar_lea.smem %s0, 9
  %s19 = sld [smem:[%s18]]
  %s20 = scalar_lea.smem %s0, 10
  %s21 = sld [smem:[%s20]]
  %s22 = scalar_lea.smem %s0, 11
  %s23 = sld [smem:[%s22]]
  %s24 = scalar_lea.smem %s0, 12
  %s25 = sld [smem:[%s24]]
  %s26 = scalar_lea.smem %s0, 13
  %s27 = sld [smem:[%s26]]
  %s28 = scalar_lea.smem %s0, 14
  %s29 = sld [smem:[%s28]]
  %s30 = scalar_lea.smem %s0, 15
  %s31 = sld [smem:[%s30]]
  %s32 = scalar_lea.smem %s0, 16
  %s33 = sld [smem:[%s32]]
  %s34 = scalar_lea.smem %s0, 17
  %s35 = sld [smem:[%s34]]
  %s36 = scalar_lea.smem %s0, 18
  %s37 = sld [smem:[%s36]]
  %s38 = scalar_lea.smem %s0, 19
  %s39 = sld [smem:[%s38]]
  %s40 = scalar_lea.smem %s0, 20
  %s41 = sld [smem:[%s40]]
  %s42 = scalar_lea.smem %s0, 21
  %s43 = sld [smem:[%s42]]
  %s44 = scalar_lea.smem %s0, 22
  %s45 = sld [smem:[%s44]]
  %s46 = scalar_lea.smem %s0, 23
  %s47 = sld [smem:[%s46]]
  %s48 = scalar_lea.smem %s0, 24
  %s49 = sld [smem:[%s48]]
  %s50 = scalar_lea.smem %s0, 25
  %s51 = sld [smem:[%s50]]
  %s52 = scalar_lea.smem %s0, 26
  %s53 = sld [smem:[%s52]]
  %s54 = scalar_lea.smem %s0, 27
  %s55 = sld [smem:[%s54]]
  %s56 = scalar_lea.smem %s0, 28
  %s57 = sld [smem:[%s56]]
  %s58 = scalar_lea.smem %s0, 29
  %s59 = sld [smem:[%s58]]
  %s60 = sld [smem:[#allocation0]]
  $region149: #{_lambda_.1} parent=0
    _
  %s62 = ssub.s32 1, %s60
  %s63 = scalar_select 0, %s62, %s60
  $region1: #{_lambda_.1} parent=0
    #allocation2 [shape = 'u8[1024]{0}', space=vmem, size = 0x400, scoped, tag = 'output window, operand 0']
    #allocation3 [shape = 's32[2]{0}', space=sflag, size = 0x8, scoped, tag = 'scoped memory for _lambda_.1']
    %64 = vsyncpa [#allocation3], 0
    %s65 = scalar_lea.sflag [#allocation3], 1
    %66 = vsyncpa %s65, 0
    loop: start=0, step=1, limit=4
    $region2: #{_lambda_.1} parent=1 // loop_pre_header
      _
    $region3: #{_lambda_.1} parent=1 // loop_header
      %s68 = sphi 0, %s72
      %p69 = scmp.ge.s32.totalorder %s68, 4
      %s78 = sphi 0, %s80
      %s81 = sphi 0, %s78
      %s82 = sphi 0, %s81
      %s98 = sphi 0, %s82
      %s102 = sphi 0, %s102
      %s104 = sphi 0, %s102
      %s105 = sphi 0, %s104
      %s119 = sphi 0, %s105
      %s123 = sphi 0, %s123
      %s125 = sphi 0, %s123
      %s126 = sphi 0, %s125
      %s140 = sphi 0, %s126
      %s144 = sphi 0, %s144
      %s146 = sphi 0, %s144
      %s147 = sphi 0, %s146
      %s161 = sphi 0, %s147
      %s165 = sphi 0, %s165
      %s167 = sphi 0, %s165
      %s168 = sphi 0, %s167
      %s182 = sphi 0, %s168
      %s186 = sphi 0, %s186
      %s188 = sphi 0, %s186
      %s189 = sphi 0, %s188
      %s203 = sphi 0, %s189
      %s207 = sphi 0, %s207
      %s209 = sphi 0, %s207
      %s210 = sphi 0, %s209
      %s224 = sphi 0, %s210
      %s228 = sphi 0, %s228
      %s230 = sphi 0, %s228
      %s231 = sphi 0, %s230
      %s245 = sphi 0, %s231
      %s249 = sphi 0, %s249
      %s251 = sphi 0, %s249
      %s252 = sphi 0, %s251
      %s266 = sphi 0, %s252
      %s270 = sphi 0, %s270
      %s272 = sphi 0, %s270
      %s273 = sphi 0, %s272
      %s287 = sphi 0, %s273
      %s291 = sphi 0, %s291
      %s293 = sphi 0, %s291
      %s294 = sphi 0, %s293
      %s308 = sphi 0, %s294
      %s312 = sphi 0, %s312
      %s314 = sphi 0, %s312
      %s315 = sphi 0, %s314
      %s329 = sphi 0, %s315
      %s333 = sphi 0, %s333
      %s335 = sphi 0, %s333
      %s336 = sphi 0, %s335
      %s350 = sphi 0, %s336
      %s354 = sphi 0, %s354
      %s356 = sphi 0, %s354
      %s357 = sphi 0, %s356
      %s371 = sphi 0, %s357
      %s375 = sphi 0, %s375
      %s377 = sphi 0, %s375
      %s378 = sphi 0, %s377
      %s392 = sphi 0, %s378
      %s396 = sphi 0, %s396
      %s398 = sphi 0, %s396
      %s399 = sphi 0, %s398
      %s413 = sphi 0, %s399
      %s417 = sphi 0, %s417
      %s419 = sphi 0, %s417
      %s420 = sphi 0, %s419
      %s434 = sphi 0, %s420
      %s438 = sphi 0, %s438
      %s440 = sphi 0, %s438
      %s441 = sphi 0, %s440
      %s455 = sphi 0, %s441
      %s459 = sphi 0, %s459
      %s461 = sphi 0, %s459
      %s462 = sphi 0, %s461
      %s476 = sphi 0, %s462
      %s480 = sphi 0, %s480
      %s482 = sphi 0, %s480
      %s483 = sphi 0, %s482
      %s497 = sphi 0, %s483
      %s501 = sphi 0, %s501
      %s503 = sphi 0, %s501
      %s504 = sphi 0, %s503
      %s518 = sphi 0, %s504
      %s522 = sphi 0, %s522
      %s524 = sphi 0, %s522
      %s525 = sphi 0, %s524
      %s539 = sphi 0, %s525
      %s543 = sphi 0, %s543
      %s545 = sphi 0, %s543
      %s546 = sphi 0, %s545
      %s560 = sphi 0, %s546
      %s564 = sphi 0, %s564
      %s566 = sphi 0, %s564
      %s567 = sphi 0, %s566
      %s581 = sphi 0, %s567
      %s585 = sphi 0, %s585
      %s587 = sphi 0, %s585
      %s588 = sphi 0, %s587
      %s602 = sphi 0, %s588
      %s606 = sphi 0, %s606
      %s608 = sphi 0, %s606
      %s609 = sphi 0, %s608
      %s623 = sphi 0, %s609
      %s627 = sphi 0, %s627
      %s629 = sphi 0, %s627
      %s630 = sphi 0, %s629
      %s644 = sphi 0, %s630
      %s648 = sphi 0, %s648
      %s650 = sphi 0, %s648
      %s651 = sphi 0, %s650
      %s665 = sphi 0, %s651
      %s669 = sphi 0, %s669
      %s671 = sphi 0, %s669
      %s672 = sphi 0, %s671
      %s686 = sphi 0, %s672
      %s692 = sphi 0, %s694
      %s695 = sphi 0, %s692
      %s696 = sphi 0, %s695
      %s712 = sphi 0, %s696
    $region4: #{_lambda_.1} parent=1 // loop_header_branch
      %71 = sbr.rel (%p69) target = $region8
    $region5: #{_lambda_.1} parent=1 // loop_body
      %s73 = ssub.s32 %s68, 1
      %s74 = ssub.s32 %s68, 2
      %s75 = sadd.s32 %s68, 1
      %s76 = ssub.s32 %s68, %s75
      %p77 = scmp.eq.s32.totalorder %s76, 0
      %s79 = sadd.s32 %s78, 1
      %s80 = scalar_select %p77, %s78, %s79
      %p83 = pneg %p77
      %p84 = scmp.eq.s32.totalorder %s68, 1
      %p85 = por %p83, %p84
      %p86 = scmp.ne.s32.totalorder %s78, %s81
      %p87 = scmp.eq.s32.totalorder %s68, 0
      %p88 = por %p86, %p87
      %p89 = scmp.ne.s32.totalorder %s78, %s81
      %p90 = scmp.eq.s32.totalorder %s73, 1
      %p91 = por %p89, %p90
      %p92 = scmp.ne.s32.totalorder %s81, %s82
      %p93 = scmp.eq.s32.totalorder %s73, 0
      %p94 = por %p92, %p93
      %p95 = scmp.ne.s32.totalorder %s81, %s82
      %p96 = scmp.eq.s32.totalorder %s74, 1
      %p97 = por %p95, %p96
      %p99 = scmp.ne.s32.totalorder %s82, %s98
      %p100 = scmp.eq.s32.totalorder %s74, 0
      %p101 = por %p99, %p100
      %s103 = sadd.s32 %s102, 1
      %p106 = scmp.eq.s32.totalorder %s68, 1
      %p107 = scmp.ne.s32.totalorder %s102, %s104
      %p108 = scmp.eq.s32.totalorder %s68, 0
      %p109 = por %p107, %p108
      %p110 = scmp.ne.s32.totalorder %s102, %s104
      %p111 = scmp.eq.s32.totalorder %s73, 1
      %p112 = por %p110, %p111
      %p113 = scmp.ne.s32.totalorder %s104, %s105
      %p114 = scmp.eq.s32.totalorder %s73, 0
      %p115 = por %p113, %p114
      %p116 = scmp.ne.s32.totalorder %s104, %s105
      %p117 = scmp.eq.s32.totalorder %s74, 1
      %p118 = por %p116, %p117
      %p120 = scmp.ne.s32.totalorder %s105, %s119
      %p121 = scmp.eq.s32.totalorder %s74, 0
      %p122 = por %p120, %p121
      %s124 = sadd.s32 %s123, 1
      %p127 = scmp.eq.s32.totalorder %s68, 1
      %p128 = scmp.ne.s32.totalorder %s123, %s125
      %p129 = scmp.eq.s32.totalorder %s68, 0
      %p130 = por %p128, %p129
      %p131 = scmp.ne.s32.totalorder %s123, %s125
      %p132 = scmp.eq.s32.totalorder %s73, 1
      %p133 = por %p131, %p132
      %p134 = scmp.ne.s32.totalorder %s125, %s126
      %p135 = scmp.eq.s32.totalorder %s73, 0
      %p136 = por %p134, %p135
      %p137 = scmp.ne.s32.totalorder %s125, %s126
      %p138 = scmp.eq.s32.totalorder %s74, 1
      %p139 = por %p137, %p138
      %p141 = scmp.ne.s32.totalorder %s126, %s140
      %p142 = scmp.eq.s32.totalorder %s74, 0
      %p143 = por %p141, %p142
      %s145 = sadd.s32 %s144, 1
      %p148 = scmp.eq.s32.totalorder %s68, 1
      %p149 = scmp.ne.s32.totalorder %s144, %s146
      %p150 = scmp.eq.s32.totalorder %s68, 0
      %p151 = por %p149, %p150
      %p152 = scmp.ne.s32.totalorder %s144, %s146
      %p153 = scmp.eq.s32.totalorder %s73, 1
      %p154 = por %p152, %p153
      %p155 = scmp.ne.s32.totalorder %s146, %s147
      %p156 = scmp.eq.s32.totalorder %s73, 0
      %p157 = por %p155, %p156
      %p158 = scmp.ne.s32.totalorder %s146, %s147
      %p159 = scmp.eq.s32.totalorder %s74, 1
      %p160 = por %p158, %p159
      %p162 = scmp.ne.s32.totalorder %s147, %s161
      %p163 = scmp.eq.s32.totalorder %s74, 0
      %p164 = por %p162, %p163
      %s166 = sadd.s32 %s165, 1
      %p169 = scmp.eq.s32.totalorder %s68, 1
      %p170 = scmp.ne.s32.totalorder %s165, %s167
      %p171 = scmp.eq.s32.totalorder %s68, 0
      %p172 = por %p170, %p171
      %p173 = scmp.ne.s32.totalorder %s165, %s167
      %p174 = scmp.eq.s32.totalorder %s73, 1
      %p175 = por %p173, %p174
      %p176 = scmp.ne.s32.totalorder %s167, %s168
      %p177 = scmp.eq.s32.totalorder %s73, 0
      %p178 = por %p176, %p177
      %p179 = scmp.ne.s32.totalorder %s167, %s168
      %p180 = scmp.eq.s32.totalorder %s74, 1
      %p181 = por %p179, %p180
      %p183 = scmp.ne.s32.totalorder %s168, %s182
      %p184 = scmp.eq.s32.totalorder %s74, 0
      %p185 = por %p183, %p184
      %s187 = sadd.s32 %s186, 1
      %p190 = scmp.eq.s32.totalorder %s68, 1
      %p191 = scmp.ne.s32.totalorder %s186, %s188
      %p192 = scmp.eq.s32.totalorder %s68, 0
      %p193 = por %p191, %p192
      %p194 = scmp.ne.s32.totalorder %s186, %s188
      %p195 = scmp.eq.s32.totalorder %s73, 1
      %p196 = por %p194, %p195
      %p197 = scmp.ne.s32.totalorder %s188, %s189
      %p198 = scmp.eq.s32.totalorder %s73, 0
      %p199 = por %p197, %p198
      %p200 = scmp.ne.s32.totalorder %s188, %s189
      %p201 = scmp.eq.s32.totalorder %s74, 1
      %p202 = por %p200, %p201
      %p204 = scmp.ne.s32.totalorder %s189, %s203
      %p205 = scmp.eq.s32.totalorder %s74, 0
      %p206 = por %p204, %p205
      %s208 = sadd.s32 %s207, 1
      %p211 = scmp.eq.s32.totalorder %s68, 1
      %p212 = scmp.ne.s32.totalorder %s207, %s209
      %p213 = scmp.eq.s32.totalorder %s68, 0
      %p214 = por %p212, %p213
      %p215 = scmp.ne.s32.totalorder %s207, %s209
      %p216 = scmp.eq.s32.totalorder %s73, 1
      %p217 = por %p215, %p216
      %p218 = scmp.ne.s32.totalorder %s209, %s210
      %p219 = scmp.eq.s32.totalorder %s73, 0
      %p220 = por %p218, %p219
      %p221 = scmp.ne.s32.totalorder %s209, %s210
      %p222 = scmp.eq.s32.totalorder %s74, 1
      %p223 = por %p221, %p222
      %p225 = scmp.ne.s32.totalorder %s210, %s224
      %p226 = scmp.eq.s32.totalorder %s74, 0
      %p227 = por %p225, %p226
      %s229 = sadd.s32 %s228, 1
      %p232 = scmp.eq.s32.totalorder %s68, 1
      %p233 = scmp.ne.s32.totalorder %s228, %s230
      %p234 = scmp.eq.s32.totalorder %s68, 0
      %p235 = por %p233, %p234
      %p236 = scmp.ne.s32.totalorder %s228, %s230
      %p237 = scmp.eq.s32.totalorder %s73, 1
      %p238 = por %p236, %p237
      %p239 = scmp.ne.s32.totalorder %s230, %s231
      %p240 = scmp.eq.s32.totalorder %s73, 0
      %p241 = por %p239, %p240
      %p242 = scmp.ne.s32.totalorder %s230, %s231
      %p243 = scmp.eq.s32.totalorder %s74, 1
      %p244 = por %p242, %p243
      %p246 = scmp.ne.s32.totalorder %s231, %s245
      %p247 = scmp.eq.s32.totalorder %s74, 0
      %p248 = por %p246, %p247
      %s250 = sadd.s32 %s249, 1
      %p253 = scmp.eq.s32.totalorder %s68, 1
      %p254 = scmp.ne.s32.totalorder %s249, %s251
      %p255 = scmp.eq.s32.totalorder %s68, 0
      %p256 = por %p254, %p255
      %p257 = scmp.ne.s32.totalorder %s249, %s251
      %p258 = scmp.eq.s32.totalorder %s73, 1
      %p259 = por %p257, %p258
      %p260 = scmp.ne.s32.totalorder %s251, %s252
      %p261 = scmp.eq.s32.totalorder %s73, 0
      %p262 = por %p260, %p261
      %p263 = scmp.ne.s32.totalorder %s251, %s252
      %p264 = scmp.eq.s32.totalorder %s74, 1
      %p265 = por %p263, %p264
      %p267 = scmp.ne.s32.totalorder %s252, %s266
      %p268 = scmp.eq.s32.totalorder %s74, 0
      %p269 = por %p267, %p268
      %s271 = sadd.s32 %s270, 1
      %p274 = scmp.eq.s32.totalorder %s68, 1
      %p275 = scmp.ne.s32.totalorder %s270, %s272
      %p276 = scmp.eq.s32.totalorder %s68, 0
      %p277 = por %p275, %p276
      %p278 = scmp.ne.s32.totalorder %s270, %s272
      %p279 = scmp.eq.s32.totalorder %s73, 1
      %p280 = por %p278, %p279
      %p281 = scmp.ne.s32.totalorder %s272, %s273
      %p282 = scmp.eq.s32.totalorder %s73, 0
      %p283 = por %p281, %p282
      %p284 = scmp.ne.s32.totalorder %s272, %s273
      %p285 = scmp.eq.s32.totalorder %s74, 1
      %p286 = por %p284, %p285
      %p288 = scmp.ne.s32.totalorder %s273, %s287
      %p289 = scmp.eq.s32.totalorder %s74, 0
      %p290 = por %p288, %p289
      %s292 = sadd.s32 %s291, 1
      %p295 = scmp.eq.s32.totalorder %s68, 1
      %p296 = scmp.ne.s32.totalorder %s291, %s293
      %p297 = scmp.eq.s32.totalorder %s68, 0
      %p298 = por %p296, %p297
      %p299 = scmp.ne.s32.totalorder %s291, %s293
      %p300 = scmp.eq.s32.totalorder %s73, 1
      %p301 = por %p299, %p300
      %p302 = scmp.ne.s32.totalorder %s293, %s294
      %p303 = scmp.eq.s32.totalorder %s73, 0
      %p304 = por %p302, %p303
      %p305 = scmp.ne.s32.totalorder %s293, %s294
      %p306 = scmp.eq.s32.totalorder %s74, 1
      %p307 = por %p305, %p306
      %p309 = scmp.ne.s32.totalorder %s294, %s308
      %p310 = scmp.eq.s32.totalorder %s74, 0
      %p311 = por %p309, %p310
      %s313 = sadd.s32 %s312, 1
      %p316 = scmp.eq.s32.totalorder %s68, 1
      %p317 = scmp.ne.s32.totalorder %s312, %s314
      %p318 = scmp.eq.s32.totalorder %s68, 0
      %p319 = por %p317, %p318
      %p320 = scmp.ne.s32.totalorder %s312, %s314
      %p321 = scmp.eq.s32.totalorder %s73, 1
      %p322 = por %p320, %p321
      %p323 = scmp.ne.s32.totalorder %s314, %s315
      %p324 = scmp.eq.s32.totalorder %s73, 0
      %p325 = por %p323, %p324
      %p326 = scmp.ne.s32.totalorder %s314, %s315
      %p327 = scmp.eq.s32.totalorder %s74, 1
      %p328 = por %p326, %p327
      %p330 = scmp.ne.s32.totalorder %s315, %s329
      %p331 = scmp.eq.s32.totalorder %s74, 0
      %p332 = por %p330, %p331
      %s334 = sadd.s32 %s333, 1
      %p337 = scmp.eq.s32.totalorder %s68, 1
      %p338 = scmp.ne.s32.totalorder %s333, %s335
      %p339 = scmp.eq.s32.totalorder %s68, 0
      %p340 = por %p338, %p339
      %p341 = scmp.ne.s32.totalorder %s333, %s335
      %p342 = scmp.eq.s32.totalorder %s73, 1
      %p343 = por %p341, %p342
      %p344 = scmp.ne.s32.totalorder %s335, %s336
      %p345 = scmp.eq.s32.totalorder %s73, 0
      %p346 = por %p344, %p345
      %p347 = scmp.ne.s32.totalorder %s335, %s336
      %p348 = scmp.eq.s32.totalorder %s74, 1
      %p349 = por %p347, %p348
      %p351 = scmp.ne.s32.totalorder %s336, %s350
      %p352 = scmp.eq.s32.totalorder %s74, 0
      %p353 = por %p351, %p352
      %s355 = sadd.s32 %s354, 1
      %p358 = scmp.eq.s32.totalorder %s68, 1
      %p359 = scmp.ne.s32.totalorder %s354, %s356
      %p360 = scmp.eq.s32.totalorder %s68, 0
      %p361 = por %p359, %p360
      %p362 = scmp.ne.s32.totalorder %s354, %s356
      %p363 = scmp.eq.s32.totalorder %s73, 1
      %p364 = por %p362, %p363
      %p365 = scmp.ne.s32.totalorder %s356, %s357
      %p366 = scmp.eq.s32.totalorder %s73, 0
      %p367 = por %p365, %p366
      %p368 = scmp.ne.s32.totalorder %s356, %s357
      %p369 = scmp.eq.s32.totalorder %s74, 1
      %p370 = por %p368, %p369
      %p372 = scmp.ne.s32.totalorder %s357, %s371
      %p373 = scmp.eq.s32.totalorder %s74, 0
      %p374 = por %p372, %p373
      %s376 = sadd.s32 %s375, 1
      %p379 = scmp.eq.s32.totalorder %s68, 1
      %p380 = scmp.ne.s32.totalorder %s375, %s377
      %p381 = scmp.eq.s32.totalorder %s68, 0
      %p382 = por %p380, %p381
      %p383 = scmp.ne.s32.totalorder %s375, %s377
      %p384 = scmp.eq.s32.totalorder %s73, 1
      %p385 = por %p383, %p384
      %p386 = scmp.ne.s32.totalorder %s377, %s378
      %p387 = scmp.eq.s32.totalorder %s73, 0
      %p388 = por %p386, %p387
      %p389 = scmp.ne.s32.totalorder %s377, %s378
      %p390 = scmp.eq.s32.totalorder %s74, 1
      %p391 = por %p389, %p390
      %p393 = scmp.ne.s32.totalorder %s378, %s392
      %p394 = scmp.eq.s32.totalorder %s74, 0
      %p395 = por %p393, %p394
      %s397 = sadd.s32 %s396, 1
      %p400 = scmp.eq.s32.totalorder %s68, 1
      %p401 = scmp.ne.s32.totalorder %s396, %s398
      %p402 = scmp.eq.s32.totalorder %s68, 0
      %p403 = por %p401, %p402
      %p404 = scmp.ne.s32.totalorder %s396, %s398
      %p405 = scmp.eq.s32.totalorder %s73, 1
      %p406 = por %p404, %p405
      %p407 = scmp.ne.s32.totalorder %s398, %s399
      %p408 = scmp.eq.s32.totalorder %s73, 0
      %p409 = por %p407, %p408
      %p410 = scmp.ne.s32.totalorder %s398, %s399
      %p411 = scmp.eq.s32.totalorder %s74, 1
      %p412 = por %p410, %p411
      %p414 = scmp.ne.s32.totalorder %s399, %s413
      %p415 = scmp.eq.s32.totalorder %s74, 0
      %p416 = por %p414, %p415
      %s418 = sadd.s32 %s417, 1
      %p421 = scmp.eq.s32.totalorder %s68, 1
      %p422 = scmp.ne.s32.totalorder %s417, %s419
      %p423 = scmp.eq.s32.totalorder %s68, 0
      %p424 = por %p422, %p423
      %p425 = scmp.ne.s32.totalorder %s417, %s419
      %p426 = scmp.eq.s32.totalorder %s73, 1
      %p427 = por %p425, %p426
      %p428 = scmp.ne.s32.totalorder %s419, %s420
      %p429 = scmp.eq.s32.totalorder %s73, 0
      %p430 = por %p428, %p429
      %p431 = scmp.ne.s32.totalorder %s419, %s420
      %p432 = scmp.eq.s32.totalorder %s74, 1
      %p433 = por %p431, %p432
      %p435 = scmp.ne.s32.totalorder %s420, %s434
      %p436 = scmp.eq.s32.totalorder %s74, 0
      %p437 = por %p435, %p436
      %s439 = sadd.s32 %s438, 1
      %p442 = scmp.eq.s32.totalorder %s68, 1
      %p443 = scmp.ne.s32.totalorder %s438, %s440
      %p444 = scmp.eq.s32.totalorder %s68, 0
      %p445 = por %p443, %p444
      %p446 = scmp.ne.s32.totalorder %s438, %s440
      %p447 = scmp.eq.s32.totalorder %s73, 1
      %p448 = por %p446, %p447
      %p449 = scmp.ne.s32.totalorder %s440, %s441
      %p450 = scmp.eq.s32.totalorder %s73, 0
      %p451 = por %p449, %p450
      %p452 = scmp.ne.s32.totalorder %s440, %s441
      %p453 = scmp.eq.s32.totalorder %s74, 1
      %p454 = por %p452, %p453
      %p456 = scmp.ne.s32.totalorder %s441, %s455
      %p457 = scmp.eq.s32.totalorder %s74, 0
      %p458 = por %p456, %p457
      %s460 = sadd.s32 %s459, 1
      %p463 = scmp.eq.s32.totalorder %s68, 1
      %p464 = scmp.ne.s32.totalorder %s459, %s461
      %p465 = scmp.eq.s32.totalorder %s68, 0
      %p466 = por %p464, %p465
      %p467 = scmp.ne.s32.totalorder %s459, %s461
      %p468 = scmp.eq.s32.totalorder %s73, 1
      %p469 = por %p467, %p468
      %p470 = scmp.ne.s32.totalorder %s461, %s462
      %p471 = scmp.eq.s32.totalorder %s73, 0
      %p472 = por %p470, %p471
      %p473 = scmp.ne.s32.totalorder %s461, %s462
      %p474 = scmp.eq.s32.totalorder %s74, 1
      %p475 = por %p473, %p474
      %p477 = scmp.ne.s32.totalorder %s462, %s476
      %p478 = scmp.eq.s32.totalorder %s74, 0
      %p479 = por %p477, %p478
      %s481 = sadd.s32 %s480, 1
      %p484 = scmp.eq.s32.totalorder %s68, 1
      %p485 = scmp.ne.s32.totalorder %s480, %s482
      %p486 = scmp.eq.s32.totalorder %s68, 0
      %p487 = por %p485, %p486
      %p488 = scmp.ne.s32.totalorder %s480, %s482
      %p489 = scmp.eq.s32.totalorder %s73, 1
      %p490 = por %p488, %p489
      %p491 = scmp.ne.s32.totalorder %s482, %s483
      %p492 = scmp.eq.s32.totalorder %s73, 0
      %p493 = por %p491, %p492
      %p494 = scmp.ne.s32.totalorder %s482, %s483
      %p495 = scmp.eq.s32.totalorder %s74, 1
      %p496 = por %p494, %p495
      %p498 = scmp.ne.s32.totalorder %s483, %s497
      %p499 = scmp.eq.s32.totalorder %s74, 0
      %p500 = por %p498, %p499
      %s502 = sadd.s32 %s501, 1
      %p505 = scmp.eq.s32.totalorder %s68, 1
      %p506 = scmp.ne.s32.totalorder %s501, %s503
      %p507 = scmp.eq.s32.totalorder %s68, 0
      %p508 = por %p506, %p507
      %p509 = scmp.ne.s32.totalorder %s501, %s503
      %p510 = scmp.eq.s32.totalorder %s73, 1
      %p511 = por %p509, %p510
      %p512 = scmp.ne.s32.totalorder %s503, %s504
      %p513 = scmp.eq.s32.totalorder %s73, 0
      %p514 = por %p512, %p513
      %p515 = scmp.ne.s32.totalorder %s503, %s504
      %p516 = scmp.eq.s32.totalorder %s74, 1
      %p517 = por %p515, %p516
      %p519 = scmp.ne.s32.totalorder %s504, %s518
      %p520 = scmp.eq.s32.totalorder %s74, 0
      %p521 = por %p519, %p520
      %s523 = sadd.s32 %s522, 1
      %p526 = scmp.eq.s32.totalorder %s68, 1
      %p527 = scmp.ne.s32.totalorder %s522, %s524
      %p528 = scmp.eq.s32.totalorder %s68, 0
      %p529 = por %p527, %p528
      %p530 = scmp.ne.s32.totalorder %s522, %s524
      %p531 = scmp.eq.s32.totalorder %s73, 1
      %p532 = por %p530, %p531
      %p533 = scmp.ne.s32.totalorder %s524, %s525
      %p534 = scmp.eq.s32.totalorder %s73, 0
      %p535 = por %p533, %p534
      %p536 = scmp.ne.s32.totalorder %s524, %s525
      %p537 = scmp.eq.s32.totalorder %s74, 1
      %p538 = por %p536, %p537
      %p540 = scmp.ne.s32.totalorder %s525, %s539
      %p541 = scmp.eq.s32.totalorder %s74, 0
      %p542 = por %p540, %p541
      %s544 = sadd.s32 %s543, 1
      %p547 = scmp.eq.s32.totalorder %s68, 1
      %p548 = scmp.ne.s32.totalorder %s543, %s545
      %p549 = scmp.eq.s32.totalorder %s68, 0
      %p550 = por %p548, %p549
      %p551 = scmp.ne.s32.totalorder %s543, %s545
      %p552 = scmp.eq.s32.totalorder %s73, 1
      %p553 = por %p551, %p552
      %p554 = scmp.ne.s32.totalorder %s545, %s546
      %p555 = scmp.eq.s32.totalorder %s73, 0
      %p556 = por %p554, %p555
      %p557 = scmp.ne.s32.totalorder %s545, %s546
      %p558 = scmp.eq.s32.totalorder %s74, 1
      %p559 = por %p557, %p558
      %p561 = scmp.ne.s32.totalorder %s546, %s560
      %p562 = scmp.eq.s32.totalorder %s74, 0
      %p563 = por %p561, %p562
      %s565 = sadd.s32 %s564, 1
      %p568 = scmp.eq.s32.totalorder %s68, 1
      %p569 = scmp.ne.s32.totalorder %s564, %s566
      %p570 = scmp.eq.s32.totalorder %s68, 0
      %p571 = por %p569, %p570
      %p572 = scmp.ne.s32.totalorder %s564, %s566
      %p573 = scmp.eq.s32.totalorder %s73, 1
      %p574 = por %p572, %p573
      %p575 = scmp.ne.s32.totalorder %s566, %s567
      %p576 = scmp.eq.s32.totalorder %s73, 0
      %p577 = por %p575, %p576
      %p578 = scmp.ne.s32.totalorder %s566, %s567
      %p579 = scmp.eq.s32.totalorder %s74, 1
      %p580 = por %p578, %p579
      %p582 = scmp.ne.s32.totalorder %s567, %s581
      %p583 = scmp.eq.s32.totalorder %s74, 0
      %p584 = por %p582, %p583
      %s586 = sadd.s32 %s585, 1
      %p589 = scmp.eq.s32.totalorder %s68, 1
      %p590 = scmp.ne.s32.totalorder %s585, %s587
      %p591 = scmp.eq.s32.totalorder %s68, 0
      %p592 = por %p590, %p591
      %p593 = scmp.ne.s32.totalorder %s585, %s587
      %p594 = scmp.eq.s32.totalorder %s73, 1
      %p595 = por %p593, %p594
      %p596 = scmp.ne.s32.totalorder %s587, %s588
      %p597 = scmp.eq.s32.totalorder %s73, 0
      %p598 = por %p596, %p597
      %p599 = scmp.ne.s32.totalorder %s587, %s588
      %p600 = scmp.eq.s32.totalorder %s74, 1
      %p601 = por %p599, %p600
      %p603 = scmp.ne.s32.totalorder %s588, %s602
      %p604 = scmp.eq.s32.totalorder %s74, 0
      %p605 = por %p603, %p604
      %s607 = sadd.s32 %s606, 1
      %p610 = scmp.eq.s32.totalorder %s68, 1
      %p611 = scmp.ne.s32.totalorder %s606, %s608
      %p612 = scmp.eq.s32.totalorder %s68, 0
      %p613 = por %p611, %p612
      %p614 = scmp.ne.s32.totalorder %s606, %s608
      %p615 = scmp.eq.s32.totalorder %s73, 1
      %p616 = por %p614, %p615
      %p617 = scmp.ne.s32.totalorder %s608, %s609
      %p618 = scmp.eq.s32.totalorder %s73, 0
      %p619 = por %p617, %p618
      %p620 = scmp.ne.s32.totalorder %s608, %s609
      %p621 = scmp.eq.s32.totalorder %s74, 1
      %p622 = por %p620, %p621
      %p624 = scmp.ne.s32.totalorder %s609, %s623
      %p625 = scmp.eq.s32.totalorder %s74, 0
      %p626 = por %p624, %p625
      %s628 = sadd.s32 %s627, 1
      %p631 = scmp.eq.s32.totalorder %s68, 1
      %p632 = scmp.ne.s32.totalorder %s627, %s629
      %p633 = scmp.eq.s32.totalorder %s68, 0
      %p634 = por %p632, %p633
      %p635 = scmp.ne.s32.totalorder %s627, %s629
      %p636 = scmp.eq.s32.totalorder %s73, 1
      %p637 = por %p635, %p636
      %p638 = scmp.ne.s32.totalorder %s629, %s630
      %p639 = scmp.eq.s32.totalorder %s73, 0
      %p640 = por %p638, %p639
      %p641 = scmp.ne.s32.totalorder %s629, %s630
      %p642 = scmp.eq.s32.totalorder %s74, 1
      %p643 = por %p641, %p642
      %p645 = scmp.ne.s32.totalorder %s630, %s644
      %p646 = scmp.eq.s32.totalorder %s74, 0
      %p647 = por %p645, %p646
      %s649 = sadd.s32 %s648, 1
      %p652 = scmp.eq.s32.totalorder %s68, 1
      %p653 = scmp.ne.s32.totalorder %s648, %s650
      %p654 = scmp.eq.s32.totalorder %s68, 0
      %p655 = por %p653, %p654
      %p656 = scmp.ne.s32.totalorder %s648, %s650
      %p657 = scmp.eq.s32.totalorder %s73, 1
      %p658 = por %p656, %p657
      %p659 = scmp.ne.s32.totalorder %s650, %s651
      %p660 = scmp.eq.s32.totalorder %s73, 0
      %p661 = por %p659, %p660
      %p662 = scmp.ne.s32.totalorder %s650, %s651
      %p663 = scmp.eq.s32.totalorder %s74, 1
      %p664 = por %p662, %p663
      %p666 = scmp.ne.s32.totalorder %s651, %s665
      %p667 = scmp.eq.s32.totalorder %s74, 0
      %p668 = por %p666, %p667
      %s670 = sadd.s32 %s669, 1
      %p673 = scmp.eq.s32.totalorder %s68, 1
      %p674 = scmp.ne.s32.totalorder %s669, %s671
      %p675 = scmp.eq.s32.totalorder %s68, 0
      %p676 = por %p674, %p675
      %p677 = scmp.ne.s32.totalorder %s669, %s671
      %p678 = scmp.eq.s32.totalorder %s73, 1
      %p679 = por %p677, %p678
      %p680 = scmp.ne.s32.totalorder %s671, %s672
      %p681 = scmp.eq.s32.totalorder %s73, 0
      %p682 = por %p680, %p681
      %p683 = scmp.ne.s32.totalorder %s671, %s672
      %p684 = scmp.eq.s32.totalorder %s74, 1
      %p685 = por %p683, %p684
      %p687 = scmp.ne.s32.totalorder %s672, %s686
      %p688 = scmp.eq.s32.totalorder %s74, 0
      %p689 = por %p687, %p688
      %s690 = ssub.s32 %s68, %s75
      %p691 = scmp.eq.s32.totalorder %s690, 0
      %s693 = sadd.s32 %s692, 1
      %s694 = scalar_select %p691, %s692, %s693
      %p697 = pneg %p691
      %p698 = scmp.eq.s32.totalorder %s68, 1
      %p699 = por %p697, %p698
      %p700 = scmp.ne.s32.totalorder %s692, %s695
      %p701 = scmp.eq.s32.totalorder %s68, 0
      %p702 = por %p700, %p701
      %p703 = scmp.ne.s32.totalorder %s692, %s695
      %p704 = scmp.eq.s32.totalorder %s73, 1
      %p705 = por %p703, %p704
      %p706 = scmp.ne.s32.totalorder %s695, %s696
      %p707 = scmp.eq.s32.totalorder %s73, 0
      %p708 = por %p706, %p707
      %p709 = scmp.ne.s32.totalorder %s695, %s696
      %p710 = scmp.eq.s32.totalorder %s74, 1
      %p711 = por %p709, %p710
      %p713 = scmp.ne.s32.totalorder %s696, %s712
      %p714 = scmp.eq.s32.totalorder %s74, 0
      %p715 = por %p713, %p714
      %p716 = scmp.le.s32.totalorder 1, %s68
      %p717 = scmp.lt.s32.totalorder %s68, 3
      %p718 = pnand %p716, %p717
      %p719 = pneg %p718
      // Predicated region
      $region9: #{_lambda_.1} parent=5 // pred_check
        _
      $region10: #{_lambda_.1} parent=5 // pred_check_branch
        %721 = sbr.rel (%p718) target = $region12
      $region11: #{_lambda_.1} parent=5 // pred_region
        %s722 = ssub.s32 %s68, 1
        // Predicated region
        $region13: #{_lambda_.1} parent=11 // pred_check
          %p723 = pneg %p115
        $region14: #{_lambda_.1} parent=11 // pred_check_branch
          %725 = sbr.rel (%p723) target = $region16
        $region15: #{_lambda_.1} parent=11 // pred_region
          _
        $region16: #{_lambda_.1} parent=11 // pred_fallthru
          _
        // Predicated region
        $region17: #{_lambda_.1} parent=11 // pred_check
          %p726 = pneg %p136
        $region18: #{_lambda_.1} parent=11 // pred_check_branch
          %728 = sbr.rel (%p726) target = $region20
        $region19: #{_lambda_.1} parent=11 // pred_region
          _
        $region20: #{_lambda_.1} parent=11 // pred_fallthru
          _
        // Predicated region
        $region21: #{_lambda_.1} parent=11 // pred_check
          %p729 = pneg %p157
        $region22: #{_lambda_.1} parent=11 // pred_check_branch
          %731 = sbr.rel (%p729) target = $region24
        $region23: #{_lambda_.1} parent=11 // pred_region
          _
        $region24: #{_lambda_.1} parent=11 // pred_fallthru
          _
        // Predicated region
        $region25: #{_lambda_.1} parent=11 // pred_check
          %p732 = pneg %p178
        $region26: #{_lambda_.1} parent=11 // pred_check_branch
          %734 = sbr.rel (%p732) target = $region28
        $region27: #{_lambda_.1} parent=11 // pred_region
          _
        $region28: #{_lambda_.1} parent=11 // pred_fallthru
          _
        // Predicated region
        $region29: #{_lambda_.1} parent=11 // pred_check
          %p735 = pneg %p199
        $region30: #{_lambda_.1} parent=11 // pred_check_branch
          %737 = sbr.rel (%p735) target = $region32
        $region31: #{_lambda_.1} parent=11 // pred_region
          _
        $region32: #{_lambda_.1} parent=11 // pred_fallthru
          _
        // Predicated region
        $region33: #{_lambda_.1} parent=11 // pred_check
          %p738 = pneg %p220
        $region34: #{_lambda_.1} parent=11 // pred_check_branch
          %740 = sbr.rel (%p738) target = $region36
        $region35: #{_lambda_.1} parent=11 // pred_region
          _
        $region36: #{_lambda_.1} parent=11 // pred_fallthru
          _
        // Predicated region
        $region37: #{_lambda_.1} parent=11 // pred_check
          %p741 = pneg %p241
        $region38: #{_lambda_.1} parent=11 // pred_check_branch
          %743 = sbr.rel (%p741) target = $region40
        $region39: #{_lambda_.1} parent=11 // pred_region
          _
        $region40: #{_lambda_.1} parent=11 // pred_fallthru
          _
        // Predicated region
        $region41: #{_lambda_.1} parent=11 // pred_check
          %p744 = pneg %p262
        $region42: #{_lambda_.1} parent=11 // pred_check_branch
          %746 = sbr.rel (%p744) target = $region44
        $region43: #{_lambda_.1} parent=11 // pred_region
          _
        $region44: #{_lambda_.1} parent=11 // pred_fallthru
          _
        // Predicated region
        $region45: #{_lambda_.1} parent=11 // pred_check
          %p747 = pneg %p283
        $region46: #{_lambda_.1} parent=11 // pred_check_branch
          %749 = sbr.rel (%p747) target = $region48
        $region47: #{_lambda_.1} parent=11 // pred_region
          _
        $region48: #{_lambda_.1} parent=11 // pred_fallthru
          _
        // Predicated region
        $region49: #{_lambda_.1} parent=11 // pred_check
          %p750 = pneg %p304
        $region50: #{_lambda_.1} parent=11 // pred_check_branch
          %752 = sbr.rel (%p750) target = $region52
        $region51: #{_lambda_.1} parent=11 // pred_region
          _
        $region52: #{_lambda_.1} parent=11 // pred_fallthru
          _
        // Predicated region
        $region53: #{_lambda_.1} parent=11 // pred_check
          %p753 = pneg %p325
        $region54: #{_lambda_.1} parent=11 // pred_check_branch
          %755 = sbr.rel (%p753) target = $region56
        $region55: #{_lambda_.1} parent=11 // pred_region
          _
        $region56: #{_lambda_.1} parent=11 // pred_fallthru
          _
        // Predicated region
        $region57: #{_lambda_.1} parent=11 // pred_check
          %p756 = pneg %p346
        $region58: #{_lambda_.1} parent=11 // pred_check_branch
          %758 = sbr.rel (%p756) target = $region60
        $region59: #{_lambda_.1} parent=11 // pred_region
          _
        $region60: #{_lambda_.1} parent=11 // pred_fallthru
          _
        // Predicated region
        $region61: #{_lambda_.1} parent=11 // pred_check
          %p759 = pneg %p367
        $region62: #{_lambda_.1} parent=11 // pred_check_branch
          %761 = sbr.rel (%p759) target = $region64
        $region63: #{_lambda_.1} parent=11 // pred_region
          _
        $region64: #{_lambda_.1} parent=11 // pred_fallthru
          _
        // Predicated region
        $region65: #{_lambda_.1} parent=11 // pred_check
          %p762 = pneg %p388
        $region66: #{_lambda_.1} parent=11 // pred_check_branch
          %764 = sbr.rel (%p762) target = $region68
        $region67: #{_lambda_.1} parent=11 // pred_region
          _
        $region68: #{_lambda_.1} parent=11 // pred_fallthru
          _
        // Predicated region
        $region69: #{_lambda_.1} parent=11 // pred_check
          %p765 = pneg %p409
        $region70: #{_lambda_.1} parent=11 // pred_check_branch
          %767 = sbr.rel (%p765) target = $region72
        $region71: #{_lambda_.1} parent=11 // pred_region
          _
        $region72: #{_lambda_.1} parent=11 // pred_fallthru
          _
        // Predicated region
        $region73: #{_lambda_.1} parent=11 // pred_check
          %p768 = pneg %p430
        $region74: #{_lambda_.1} parent=11 // pred_check_branch
          %770 = sbr.rel (%p768) target = $region76
        $region75: #{_lambda_.1} parent=11 // pred_region
          _
        $region76: #{_lambda_.1} parent=11 // pred_fallthru
          _
        // Predicated region
        $region77: #{_lambda_.1} parent=11 // pred_check
          %p771 = pneg %p451
        $region78: #{_lambda_.1} parent=11 // pred_check_branch
          %773 = sbr.rel (%p771) target = $region80
        $region79: #{_lambda_.1} parent=11 // pred_region
          _
        $region80: #{_lambda_.1} parent=11 // pred_fallthru
          _
        // Predicated region
        $region81: #{_lambda_.1} parent=11 // pred_check
          %p774 = pneg %p472
        $region82: #{_lambda_.1} parent=11 // pred_check_branch
          %776 = sbr.rel (%p774) target = $region84
        $region83: #{_lambda_.1} parent=11 // pred_region
          _
        $region84: #{_lambda_.1} parent=11 // pred_fallthru
          _
        // Predicated region
        $region85: #{_lambda_.1} parent=11 // pred_check
          %p777 = pneg %p493
        $region86: #{_lambda_.1} parent=11 // pred_check_branch
          %779 = sbr.rel (%p777) target = $region88
        $region87: #{_lambda_.1} parent=11 // pred_region
          _
        $region88: #{_lambda_.1} parent=11 // pred_fallthru
          _
        // Predicated region
        $region89: #{_lambda_.1} parent=11 // pred_check
          %p780 = pneg %p514
        $region90: #{_lambda_.1} parent=11 // pred_check_branch
          %782 = sbr.rel (%p780) target = $region92
        $region91: #{_lambda_.1} parent=11 // pred_region
          _
        $region92: #{_lambda_.1} parent=11 // pred_fallthru
          _
        // Predicated region
        $region93: #{_lambda_.1} parent=11 // pred_check
          %p783 = pneg %p535
        $region94: #{_lambda_.1} parent=11 // pred_check_branch
          %785 = sbr.rel (%p783) target = $region96
        $region95: #{_lambda_.1} parent=11 // pred_region
          _
        $region96: #{_lambda_.1} parent=11 // pred_fallthru
          _
        // Predicated region
        $region97: #{_lambda_.1} parent=11 // pred_check
          %p786 = pneg %p556
        $region98: #{_lambda_.1} parent=11 // pred_check_branch
          %788 = sbr.rel (%p786) target = $region100
        $region99: #{_lambda_.1} parent=11 // pred_region
          _
        $region100: #{_lambda_.1} parent=11 // pred_fallthru
          _
        // Predicated region
        $region101: #{_lambda_.1} parent=11 // pred_check
          %p789 = pneg %p577
        $region102: #{_lambda_.1} parent=11 // pred_check_branch
          %791 = sbr.rel (%p789) target = $region104
        $region103: #{_lambda_.1} parent=11 // pred_region
          _
        $region104: #{_lambda_.1} parent=11 // pred_fallthru
          _
        // Predicated region
        $region105: #{_lambda_.1} parent=11 // pred_check
          %p792 = pneg %p598
        $region106: #{_lambda_.1} parent=11 // pred_check_branch
          %794 = sbr.rel (%p792) target = $region108
        $region107: #{_lambda_.1} parent=11 // pred_region
          _
        $region108: #{_lambda_.1} parent=11 // pred_fallthru
          _
        // Predicated region
        $region109: #{_lambda_.1} parent=11 // pred_check
          %p795 = pneg %p619
        $region110: #{_lambda_.1} parent=11 // pred_check_branch
          %797 = sbr.rel (%p795) target = $region112
        $region111: #{_lambda_.1} parent=11 // pred_region
          _
        $region112: #{_lambda_.1} parent=11 // pred_fallthru
          _
        // Predicated region
        $region113: #{_lambda_.1} parent=11 // pred_check
          %p798 = pneg %p640
        $region114: #{_lambda_.1} parent=11 // pred_check_branch
          %800 = sbr.rel (%p798) target = $region116
        $region115: #{_lambda_.1} parent=11 // pred_region
          _
        $region116: #{_lambda_.1} parent=11 // pred_fallthru
          _
        // Predicated region
        $region117: #{_lambda_.1} parent=11 // pred_check
          %p801 = pneg %p661
        $region118: #{_lambda_.1} parent=11 // pred_check_branch
          %803 = sbr.rel (%p801) target = $region120
        $region119: #{_lambda_.1} parent=11 // pred_region
          _
        $region120: #{_lambda_.1} parent=11 // pred_fallthru
          _
        // Predicated region
        $region121: #{_lambda_.1} parent=11 // pred_check
          %p804 = pneg %p682
        $region122: #{_lambda_.1} parent=11 // pred_check_branch
          %806 = sbr.rel (%p804) target = $region124
        $region123: #{_lambda_.1} parent=11 // pred_region
          _
        $region124: #{_lambda_.1} parent=11 // pred_fallthru
          _
      $region12: #{_lambda_.1} parent=5 // pred_fallthru
        _
      %p807 = scmp.lt.s32.totalorder %s68, 2
      // Predicated region
      $region125: #{_lambda_.1} parent=5 // pred_check
        %p808 = pneg %p807
      $region126: #{_lambda_.1} parent=5 // pred_check_branch
        %810 = sbr.rel (%p808) target = $region128
      $region127: #{_lambda_.1} parent=5 // pred_region
        // Predicated region
        $region129: #{_lambda_.1} parent=127 // pred_check
          %p811 = pneg %p88
        $region130: #{_lambda_.1} parent=127 // pred_check_branch
          %813 = sbr.rel (%p811) target = $region132
        $region131: #{_lambda_.1} parent=127 // pred_region
          %p814 = scmp.lt.s32.totalorder %s68, 1
          %s815 = scalar_select %p814, %s68, 1
          %s816 = smul.addr %s815, 8
          %s817 = scalar_lea.vmem %s1, %s816
        $region132: #{_lambda_.1} parent=127 // pred_fallthru
          _
      $region128: #{_lambda_.1} parent=5 // pred_fallthru
        _
      %p818 = scmp.le.s32.totalorder 1, %s68
      %p819 = scmp.lt.s32.totalorder %s68, 3
      %p820 = pnand %p818, %p819
      %p821 = pneg %p820
      // Predicated region
      $region133: #{_lambda_.1} parent=5 // pred_check
        _
      $region134: #{_lambda_.1} parent=5 // pred_check_branch
        %823 = sbr.rel (%p820) target = $region136
      $region135: #{_lambda_.1} parent=5 // pred_region
        %s824 = ssub.s32 %s68, 1
        %p825 = scmp.lt.s32.totalorder %s73, 1
        %s826 = scalar_select %p825, %s73, 1
        %s827 = smul.addr %s826, 8
        %s828 = scalar_lea.vmem %s1, %s827
        %p829 = pneg %p94
        %p830 = pneg %p91
        %p831 = pneg %p115
        %p832 = pneg %p112
        %p833 = pneg %p136
        %p834 = pneg %p133
        %p835 = pneg %p157
        %p836 = pneg %p154
        %p837 = pneg %p178
        %p838 = pneg %p175
        %p839 = pneg %p199
        %p840 = pneg %p196
        %p841 = pneg %p220
        %p842 = pneg %p217
        %p843 = pneg %p241
        %p844 = pneg %p238
        %p845 = pneg %p262
        %p846 = pneg %p259
        %p847 = pneg %p283
        %p848 = pneg %p280
        %p849 = pneg %p304
        %p850 = pneg %p301
        %p851 = pneg %p325
        %p852 = pneg %p322
        %p853 = pneg %p346
        %p854 = pneg %p343
        %p855 = pneg %p367
        %p856 = pneg %p364
        %p857 = pneg %p388
        %p858 = pneg %p385
        %p859 = pneg %p409
        %p860 = pneg %p406
        %p861 = pneg %p430
        %p862 = pneg %p427
        %p863 = pneg %p451
        %p864 = pneg %p448
        %p865 = pneg %p472
        %p866 = pneg %p469
        %p867 = pneg %p493
        %p868 = pneg %p490
        %p869 = pneg %p514
        %p870 = pneg %p511
        %p871 = pneg %p535
        %p872 = pneg %p532
        %p873 = pneg %p556
        %p874 = pneg %p553
        %p875 = pneg %p577
        %p876 = pneg %p574
        %p877 = pneg %p598
        %p878 = pneg %p595
        %p879 = pneg %p619
        %p880 = pneg %p616
        %p881 = pneg %p640
        %p882 = pneg %p637
        %p883 = pneg %p661
        %p884 = pneg %p658
        %p885 = pneg %p682
        %p886 = pneg %p679
        %p887 = pneg %p708
        %p888 = pneg %p705
        %s889 = sand.u32 %s695, 1
        %s890 = scalar_lea.sflag [#allocation3], %s889
        %s891 = sand.u32 %s695, 1
        %s892 = scalar_lea.vmem [#allocation2], %s891
        %p893 = scmp.lt.s32.totalorder %s73, 1
        %s894 = scalar_select %p893, %s73, 1
        %s895 = smul.addr %s894, 8
        %s896 = scalar_lea.vmem %s1, %s895
        %v897 = vld [vmem:[%s896] sm:$0xff]
        %v898 = vld [vmem:[%s5] sm:$0xff]
        %v899 = vld [vmem:[%s7] sm:$0x1]
        %v901 = vlaneseq
        %v902 = vshrl.u32 %v901, 7
        %v903 = vsub.s32 0, %v902
        %v904 = vrot.slane %v899, %v903
        %vm906 = vcmask 64512
        %v908 = vsel %vm906, %v897, 0
        %910 = vmatprep.subr.mxu0 0.0
        %911 = vmatpush1.msra.mxu0 %v898
        %912 = vmatprep.subr.mxu0 0.0
        %913 = vmatpush1.msra.mxu0 0.0
        %914 = vmatprep.subr.mxu0 0.0
        %915 = vmatpush1.msra.mxu0 0.0
        %916 = vmatprep.subr.mxu0 0.0
        %917 = vmatpush1.msra.mxu0 0.0
        %918 = vmatprep.subr.mxu0 0.0
        %919 = vmatpush1.msra.mxu0 0.0
        %920 = vmatprep.subr.mxu0 0.0
        %921 = vmatpush1.msra.mxu0 0.0
        %922 = vmatprep.subr.mxu0 0.0
        %923 = vmatpush1.msra.mxu0 0.0
        %924 = vmatprep.subr.mxu0 0.0
        %925 = vmatpush1.msra.mxu0 0.0
        %926 = vmatprep.subr.mxu0 0.0
        %927 = vmatpush1.msra.mxu0 0.0
        %928 = vmatprep.subr.mxu0 0.0
        %929 = vmatpush1.msra.mxu0 0.0
        %930 = vmatprep.subr.mxu0 0.0
        %931 = vmatpush1.msra.mxu0 0.0
        %932 = vmatprep.subr.mxu0 0.0
        %933 = vmatpush1.msra.mxu0 0.0
        %934 = vmatprep.subr.mxu0 0.0
        %935 = vmatpush1.msra.mxu0 0.0
        %936 = vmatprep.subr.mxu0 0.0
        %937 = vmatpush1.msra.mxu0 0.0
        %938 = vmatprep.subr.mxu0 0.0
        %939 = vmatpush1.msra.mxu0 0.0
        %940 = vmatprep.subr.mxu0 0.0
        %941 = vmatpush1.msra.mxu0 0.0
        %942 = vmatprep.subr.mxu0 0.0
        %943 = vmatpush1.msra.mxu0 0.0
        %944 = vmatprep.subr.mxu0 0.0
        %945 = vmatpush1.msra.mxu0 0.0
        %946 = vmatprep.subr.mxu0 0.0
        %947 = vmatpush1.msra.mxu0 0.0
        %948 = vmatprep.subr.mxu0 0.0
        %949 = vmatpush1.msra.mxu0 0.0
        %950 = vmatprep.subr.mxu0 0.0
        %951 = vmatpush1.msra.mxu0 0.0
        %952 = vmatprep.subr.mxu0 0.0
        %953 = vmatpush1.msra.mxu0 0.0
        %954 = vmatprep.subr.mxu0 0.0
        %955 = vmatpush1.msra.mxu0 0.0
        %956 = vmatprep.subr.mxu0 0.0
        %957 = vmatpush1.msra.mxu0 0.0
        %958 = vmatprep.subr.mxu0 0.0
        %959 = vmatpush1.msra.mxu0 0.0
        %960 = vmatprep.subr.mxu0 0.0
        %961 = vmatpush1.msra.mxu0 0.0
        %962 = vmatprep.subr.mxu0 0.0
        %963 = vmatpush1.msra.mxu0 0.0
        %964 = vmatprep.subr.mxu0 0.0
        %965 = vmatpush1.msra.mxu0 0.0
        %966 = vmatprep.subr.mxu0 0.0
        %967 = vmatpush1.msra.mxu0 0.0
        %968 = vmatprep.subr.mxu0 0.0
        %969 = vmatpush1.msra.mxu0 0.0
        %970 = vmatprep.subr.mxu0 0.0
        %971 = vmatpush1.msra.mxu0 0.0
        %972 = vmatprep.subr.mxu0 0.0
        %973 = vmatpush1.msra.mxu0 0.0
        %974 = vmatprep.mubr.f32.mxu0 0.0
        %975 = vmatmul.mubr.f32.gmra.mrb[0].mxu0 %v908
        %v976 = vpop.f32.mrb[0].mxu0
        %v977 = vadd.f32 %v904, %v976
        %v978 = vpop.f32.mrb[0].mxu0
        %979 = vdwg.mxu0
        %v980 = vld [vmem:[%s3] sm:$0xff]
        %v981 = vadd.f32 %v977, %v980
        %v982 = vld [vmem:[%s15] sm:$0xff]
        %v983 = vld [vmem:[%s15 + $0x8] sm:$0xff]
        %v984 = vld [vmem:[%s15 + $0x10] sm:$0xff]
        %v985 = vld [vmem:[%s15 + $0x18] sm:$0xff]
        %v986 = vld [vmem:[%s17] sm:$0x1]
        %v988 = vlaneseq
        %v989 = vshrl.u32 %v988, 7
        %v990 = vsub.s32 0, %v989
        %v991 = vrot.slane %v986, %v990
        %vm993 = vcmask 261120
        %v995 = vsel %vm993, %v981, 0
        %997 = vmatprep.subr.mxu0 0.0
        %998 = vmatpush1.msra.mxu0 %v982
        %999 = vmatprep.subr.mxu0 0.0
        %1000 = vmatpush1.msra.mxu0 %v983
        %1001 = vmatprep.subr.mxu0 0.0
        %1002 = vmatpush1.msra.mxu0 %v984
        %1003 = vmatprep.subr.mxu0 0.0
        %1004 = vmatpush1.msra.mxu0 %v985
        %1005 = vmatprep.subr.mxu0 0.0
        %1006 = vmatpush1.msra.mxu0 0.0
        %1007 = vmatprep.subr.mxu0 0.0
        %1008 = vmatpush1.msra.mxu0 0.0
        %1009 = vmatprep.subr.mxu0 0.0
        %1010 = vmatpush1.msra.mxu0 0.0
        %1011 = vmatprep.subr.mxu0 0.0
        %1012 = vmatpush1.msra.mxu0 0.0
        %1013 = vmatprep.subr.mxu0 0.0
        %1014 = vmatpush1.msra.mxu0 0.0
        %1015 = vmatprep.subr.mxu0 0.0
        %1016 = vmatpush1.msra.mxu0 0.0
        %1017 = vmatprep.subr.mxu0 0.0
        %1018 = vmatpush1.msra.mxu0 0.0
        %1019 = vmatprep.subr.mxu0 0.0
        %1020 = vmatpush1.msra.mxu0 0.0
        %1021 = vmatprep.subr.mxu0 0.0
        %1022 = vmatpush1.msra.mxu0 0.0
        %1023 = vmatprep.subr.mxu0 0.0
        %1024 = vmatpush1.msra.mxu0 0.0
        %1025 = vmatprep.subr.mxu0 0.0
        %1026 = vmatpush1.msra.mxu0 0.0
        %1027 = vmatprep.subr.mxu0 0.0
        %1028 = vmatpush1.msra.mxu0 0.0
        %1029 = vmatprep.subr.mxu0 0.0
        %1030 = vmatpush1.msra.mxu0 0.0
        %1031 = vmatprep.subr.mxu0 0.0
        %1032 = vmatpush1.msra.mxu0 0.0
        %1033 = vmatprep.subr.mxu0 0.0
        %1034 = vmatpush1.msra.mxu0 0.0
        %1035 = vmatprep.subr.mxu0 0.0
        %1036 = vmatpush1.msra.mxu0 0.0
        %1037 = vmatprep.subr.mxu0 0.0
        %1038 = vmatpush1.msra.mxu0 0.0
        %1039 = vmatprep.subr.mxu0 0.0
        %1040 = vmatpush1.msra.mxu0 0.0
        %1041 = vmatprep.subr.mxu0 0.0
        %1042 = vmatpush1.msra.mxu0 0.0
        %1043 = vmatprep.subr.mxu0 0.0
        %1044 = vmatpush1.msra.mxu0 0.0
        %1045 = vmatprep.subr.mxu0 0.0
        %1046 = vmatpush1.msra.mxu0 0.0
        %1047 = vmatprep.subr.mxu0 0.0
        %1048 = vmatpush1.msra.mxu0 0.0
        %1049 = vmatprep.subr.mxu0 0.0
        %1050 = vmatpush1.msra.mxu0 0.0
        %1051 = vmatprep.subr.mxu0 0.0
        %1052 = vmatpush1.msra.mxu0 0.0
        %1053 = vmatprep.subr.mxu0 0.0
        %1054 = vmatpush1.msra.mxu0 0.0
        %1055 = vmatprep.subr.mxu0 0.0
        %1056 = vmatpush1.msra.mxu0 0.0
        %1057 = vmatprep.subr.mxu0 0.0
        %1058 = vmatpush1.msra.mxu0 0.0
        %1059 = vmatprep.subr.mxu0 0.0
        %1060 = vmatpush1.msra.mxu0 0.0
        %1061 = vmatprep.mubr.f32.mxu0 0.0
        %1062 = vmatmul.mubr.f32.gmra.mrb[0].mxu0 %v995
        %v1063 = vpop.f32.mrb[0].mxu0
        %v1064 = vadd.f32 %v991, %v1063
        %v1065 = vpop.f32.mrb[0].mxu0
        %1066 = vdwg.mxu0
        %s1067 = scalar_lea.vmem %s15, 128
        %v1068 = vld [vmem:[%s1067] sm:$0xff]
        %v1069 = vld [vmem:[%s1067 + $0x8] sm:$0xff]
        %v1070 = vld [vmem:[%s1067 + $0x10] sm:$0xff]
        %v1071 = vld [vmem:[%s1067 + $0x18] sm:$0xff]
        %s1072 = scalar_lea.vmem %s17, 4
        %v1073 = vld [vmem:[%s1072] sm:$0x1]
        %v1075 = vlaneseq
        %v1076 = vshrl.u32 %v1075, 7
        %v1077 = vsub.s32 0, %v1076
        %v1078 = vrot.slane %v1073, %v1077
        %1080 = vmatprep.subr.mxu0 0.0
        %1081 = vmatpush1.msra.mxu0 %v1068
        %1082 = vmatprep.subr.mxu0 0.0
        %1083 = vmatpush1.msra.mxu0 %v1069
        %1084 = vmatprep.subr.mxu0 0.0
        %1085 = vmatpush1.msra.mxu0 %v1070
        %1086 = vmatprep.subr.mxu0 0.0
        %1087 = vmatpush1.msra.mxu0 %v1071
        %1088 = vmatprep.subr.mxu0 0.0
        %1089 = vmatpush1.msra.mxu0 0.0
        %1090 = vmatprep.subr.mxu0 0.0
        %1091 = vmatpush1.msra.mxu0 0.0
        %1092 = vmatprep.subr.mxu0 0.0
        %1093 = vmatpush1.msra.mxu0 0.0
        %1094 = vmatprep.subr.mxu0 0.0
        %1095 = vmatpush1.msra.mxu0 0.0
        %1096 = vmatprep.subr.mxu0 0.0
        %1097 = vmatpush1.msra.mxu0 0.0
        %1098 = vmatprep.subr.mxu0 0.0
        %1099 = vmatpush1.msra.mxu0 0.0
        %1100 = vmatprep.subr.mxu0 0.0
        %1101 = vmatpush1.msra.mxu0 0.0
        %1102 = vmatprep.subr.mxu0 0.0
        %1103 = vmatpush1.msra.mxu0 0.0
        %1104 = vmatprep.subr.mxu0 0.0
        %1105 = vmatpush1.msra.mxu0 0.0
        %1106 = vmatprep.subr.mxu0 0.0
        %1107 = vmatpush1.msra.mxu0 0.0
        %1108 = vmatprep.subr.mxu0 0.0
        %1109 = vmatpush1.msra.mxu0 0.0
        %1110 = vmatprep.subr.mxu0 0.0
        %1111 = vmatpush1.msra.mxu0 0.0
        %1112 = vmatprep.subr.mxu0 0.0
        %1113 = vmatpush1.msra.mxu0 0.0
        %1114 = vmatprep.subr.mxu0 0.0
        %1115 = vmatpush1.msra.mxu0 0.0
        %1116 = vmatprep.subr.mxu0 0.0
        %1117 = vmatpush1.msra.mxu0 0.0
        %1118 = vmatprep.subr.mxu0 0.0
        %1119 = vmatpush1.msra.mxu0 0.0
        %1120 = vmatprep.subr.mxu0 0.0
        %1121 = vmatpush1.msra.mxu0 0.0
        %1122 = vmatprep.subr.mxu0 0.0
        %1123 = vmatpush1.msra.mxu0 0.0
        %1124 = vmatprep.subr.mxu0 0.0
        %1125 = vmatpush1.msra.mxu0 0.0
        %1126 = vmatprep.subr.mxu0 0.0
        %1127 = vmatpush1.msra.mxu0 0.0
        %1128 = vmatprep.subr.mxu0 0.0
        %1129 = vmatpush1.msra.mxu0 0.0
        %1130 = vmatprep.subr.mxu0 0.0
        %1131 = vmatpush1.msra.mxu0 0.0
        %1132 = vmatprep.subr.mxu0 0.0
        %1133 = vmatpush1.msra.mxu0 0.0
        %1134 = vmatprep.subr.mxu0 0.0
        %1135 = vmatpush1.msra.mxu0 0.0
        %1136 = vmatprep.subr.mxu0 0.0
        %1137 = vmatpush1.msra.mxu0 0.0
        %1138 = vmatprep.subr.mxu0 0.0
        %1139 = vmatpush1.msra.mxu0 0.0
        %1140 = vmatprep.subr.mxu0 0.0
        %1141 = vmatpush1.msra.mxu0 0.0
        %1142 = vmatprep.subr.mxu0 0.0
        %1143 = vmatpush1.msra.mxu0 0.0
        %1144 = vmatprep.mubr.f32.mxu0 0.0
        %1145 = vmatmul.mubr.f32.gmra.mrb[0].mxu0 %v995
        %v1146 = vpop.f32.mrb[0].mxu0
        %v1147 = vadd.f32 %v1078, %v1146
        %v1148 = vpop.f32.mrb[0].mxu0
        %1149 = vdwg.mxu0
        %s1150 = scalar_lea.vmem %s15, 256
        %v1151 = vld [vmem:[%s1150] sm:$0xff]
        %v1152 = vld [vmem:[%s1150 + $0x8] sm:$0xff]
        %v1153 = vld [vmem:[%s1150 + $0x10] sm:$0xff]
        %v1154 = vld [vmem:[%s1150 + $0x18] sm:$0xff]
        %s1155 = scalar_lea.vmem %s17, 8
        %v1156 = vld [vmem:[%s1155] sm:$0x1]
        %v1158 = vlaneseq
        %v1159 = vshrl.u32 %v1158, 7
        %v1160 = vsub.s32 0, %v1159
        %v1161 = vrot.slane %v1156, %v1160
        %1163 = vmatprep.subr.mxu0 0.0
        %1164 = vmatpush1.msra.mxu0 %v1151
        %1165 = vmatprep.subr.mxu0 0.0
        %1166 = vmatpush1.msra.mxu0 %v1152
        %1167 = vmatprep.subr.mxu0 0.0
        %1168 = vmatpush1.msra.mxu0 %v1153
        %1169 = vmatprep.subr.mxu0 0.0
        %1170 = vmatpush1.msra.mxu0 %v1154
        %1171 = vmatprep.subr.mxu0 0.0
        %1172 = vmatpush1.msra.mxu0 0.0
        %1173 = vmatprep.subr.mxu0 0.0
        %1174 = vmatpush1.msra.mxu0 0.0
        %1175 = vmatprep.subr.mxu0 0.0
        %1176 = vmatpush1.msra.mxu0 0.0
        %1177 = vmatprep.subr.mxu0 0.0
        %1178 = vmatpush1.msra.mxu0 0.0
        %1179 = vmatprep.subr.mxu0 0.0
        %1180 = vmatpush1.msra.mxu0 0.0
        %1181 = vmatprep.subr.mxu0 0.0
        %1182 = vmatpush1.msra.mxu0 0.0
        %1183 = vmatprep.subr.mxu0 0.0
        %1184 = vmatpush1.msra.mxu0 0.0
        %1185 = vmatprep.subr.mxu0 0.0
        %1186 = vmatpush1.msra.mxu0 0.0
        %1187 = vmatprep.subr.mxu0 0.0
        %1188 = vmatpush1.msra.mxu0 0.0
        %1189 = vmatprep.subr.mxu0 0.0
        %1190 = vmatpush1.msra.mxu0 0.0
        %1191 = vmatprep.subr.mxu0 0.0
        %1192 = vmatpush1.msra.mxu0 0.0
        %1193 = vmatprep.subr.mxu0 0.0
        %1194 = vmatpush1.msra.mxu0 0.0
        %1195 = vmatprep.subr.mxu0 0.0
        %1196 = vmatpush1.msra.mxu0 0.0
        %1197 = vmatprep.subr.mxu0 0.0
        %1198 = vmatpush1.msra.mxu0 0.0
        %1199 = vmatprep.subr.mxu0 0.0
        %1200 = vmatpush1.msra.mxu0 0.0
        %1201 = vmatprep.subr.mxu0 0.0
        %1202 = vmatpush1.msra.mxu0 0.0
        %1203 = vmatprep.subr.mxu0 0.0
        %1204 = vmatpush1.msra.mxu0 0.0
        %1205 = vmatprep.subr.mxu0 0.0
        %1206 = vmatpush1.msra.mxu0 0.0
        %1207 = vmatprep.subr.mxu0 0.0
        %1208 = vmatpush1.msra.mxu0 0.0
        %1209 = vmatprep.subr.mxu0 0.0
        %1210 = vmatpush1.msra.mxu0 0.0
        %1211 = vmatprep.subr.mxu0 0.0
        %1212 = vmatpush1.msra.mxu0 0.0
        %1213 = vmatprep.subr.mxu0 0.0
        %1214 = vmatpush1.msra.mxu0 0.0
        %1215 = vmatprep.subr.mxu0 0.0
        %1216 = vmatpush1.msra.mxu0 0.0
        %1217 = vmatprep.subr.mxu0 0.0
        %1218 = vmatpush1.msra.mxu0 0.0
        %1219 = vmatprep.subr.mxu0 0.0
        %1220 = vmatpush1.msra.mxu0 0.0
        %1221 = vmatprep.subr.mxu0 0.0
        %1222 = vmatpush1.msra.mxu0 0.0
        %1223 = vmatprep.subr.mxu0 0.0
        %1224 = vmatpush1.msra.mxu0 0.0
        %1225 = vmatprep.subr.mxu0 0.0
        %1226 = vmatpush1.msra.mxu0 0.0
        %1227 = vmatprep.mubr.f32.mxu0 0.0
        %1228 = vmatmul.mubr.f32.gmra.mrb[0].mxu0 %v995
        %v1229 = vpop.f32.mrb[0].mxu0
        %v1230 = vadd.f32 %v1161, %v1229
        %v1231 = vpop.f32.mrb[0].mxu0
        %1232 = vdwg.mxu0
        %v1234 = vsel %vm906, %v1064, 0
        %v1237 = vsel %vm906, %v1147, 0
        %1239 = vmatprep.subr.mxu0 0.0
        %1240 = vmatpush1.xpose.msra.mxu0 %v1237
        %1241 = vmatprep.subr.mxu0 0.0
        %1242 = vmatpush1.xpose.msra.mxu0 0.0
        %1243 = vmatprep.subr.mxu0 0.0
        %1244 = vmatpush1.xpose.msra.mxu0 0.0
        %1245 = vmatprep.subr.mxu0 0.0
        %1246 = vmatpush1.xpose.msra.mxu0 0.0
        %1247 = vmatprep.subr.mxu0 0.0
        %1248 = vmatpush1.xpose.msra.mxu0 0.0
        %1249 = vmatprep.subr.mxu0 0.0
        %1250 = vmatpush1.xpose.msra.mxu0 0.0
        %1251 = vmatprep.subr.mxu0 0.0
        %1252 = vmatpush1.xpose.msra.mxu0 0.0
        %1253 = vmatprep.subr.mxu0 0.0
        %1254 = vmatpush1.xpose.msra.mxu0 0.0
        %1255 = vmatprep.subr.mxu0 0.0
        %1256 = vmatpush1.xpose.msra.mxu0 0.0
        %1257 = vmatprep.subr.mxu0 0.0
        %1258 = vmatpush1.xpose.msra.mxu0 0.0
        %1259 = vmatprep.subr.mxu0 0.0
        %1260 = vmatpush1.xpose.msra.mxu0 0.0
        %1261 = vmatprep.subr.mxu0 0.0
        %1262 = vmatpush1.xpose.msra.mxu0 0.0
        %1263 = vmatprep.subr.mxu0 0.0
        %1264 = vmatpush1.xpose.msra.mxu0 0.0
        %1265 = vmatprep.subr.mxu0 0.0
        %1266 = vmatpush1.xpose.msra.mxu0 0.0
        %1267 = vmatprep.subr.mxu0 0.0
        %1268 = vmatpush1.xpose.msra.mxu0 0.0
        %1269 = vmatprep.subr.mxu0 0.0
        %1270 = vmatpush1.xpose.msra.mxu0 0.0
        %1271 = vmatprep.subr.mxu0 0.0
        %1272 = vmatpush1.xpose.msra.mxu0 0.0
        %1273 = vmatprep.subr.mxu0 0.0
        %1274 = vmatpush1.xpose.msra.mxu0 0.0
        %1275 = vmatprep.subr.mxu0 0.0
        %1276 = vmatpush1.xpose.msra.mxu0 0.0
        %1277 = vmatprep.subr.mxu0 0.0
        %1278 = vmatpush1.xpose.msra.mxu0 0.0
        %1279 = vmatprep.subr.mxu0 0.0
        %1280 = vmatpush1.xpose.msra.mxu0 0.0
        %1281 = vmatprep.subr.mxu0 0.0
        %1282 = vmatpush1.xpose.msra.mxu0 0.0
        %1283 = vmatprep.subr.mxu0 0.0
        %1284 = vmatpush1.xpose.msra.mxu0 0.0
        %1285 = vmatprep.subr.mxu0 0.0
        %1286 = vmatpush1.xpose.msra.mxu0 0.0
        %1287 = vmatprep.subr.mxu0 0.0
        %1288 = vmatpush1.xpose.msra.mxu0 0.0
        %1289 = vmatprep.subr.mxu0 0.0
        %1290 = vmatpush1.xpose.msra.mxu0 0.0
        %1291 = vmatprep.subr.mxu0 0.0
        %1292 = vmatpush1.xpose.msra.mxu0 0.0
        %1293 = vmatprep.subr.mxu0 0.0
        %1294 = vmatpush1.xpose.msra.mxu0 0.0
        %1295 = vmatprep.subr.mxu0 0.0
        %1296 = vmatpush1.xpose.msra.mxu0 0.0
        %1297 = vmatprep.subr.mxu0 0.0
        %1298 = vmatpush1.xpose.msra.mxu0 0.0
        %1299 = vmatprep.subr.mxu0 0.0
        %1300 = vmatpush1.xpose.msra.mxu0 0.0
        %1301 = vmatprep.subr.mxu0 0.0
        %1302 = vmatpush1.xpose.msra.mxu0 0.0
        %1303 = vmatprep.mubr.f32.mxu0 0.0
        %1304 = vmatmul.mubr.f32.gmra.mrb[0].mxu0 %v1234
        %v1305 = vpop.f32.mrb[0].mxu0
        %v1306 = vadd.f32 0.0, %v1305
        %v1307 = vpop.f32.mrb[0].mxu0
        %1308 = vdwg.mxu0
        %v1309 = vmul.f32 %v1306, 0.35355338
        %v1310 = vsel %vm906, %v1309, -inf
        %1311 = vmax.xlane.f32.xlu0 %v1310
        %v1312 = vpop.xlane.xlu0 %1311
        %v1313 = vsub.f32 %v1309, %v1312
        %v1314 = vmul.f32 %v1313, 1.442695
        %v1315 = vpow.pop %v1314
        %v1316 = vsel %vm906, %v1315, 0.0
        %1317 = vadd.xlane.f32.xlu0 %v1316
        %v1318 = vpop.xlane.xlu0 %1317
        %v1319 = vrcp.pop %v1318
        %v1320 = vmul.f32 %v1315, %v1319
        %v1322 = vsel %vm906, %v1320, 0
        %1324 = vmatprep.subr.mxu0 0.0
        %1325 = vmatpush1.msra.mxu0 %v1230
        %1326 = vmatprep.subr.mxu0 0.0
        %1327 = vmatpush1.msra.mxu0 0.0
        %1328 = vmatprep.subr.mxu0 0.0
        %1329 = vmatpush1.msra.mxu0 0.0
        %1330 = vmatprep.subr.mxu0 0.0
        %1331 = vmatpush1.msra.mxu0 0.0
        %1332 = vmatprep.subr.mxu0 0.0
        %1333 = vmatpush1.msra.mxu0 0.0
        %1334 = vmatprep.subr.mxu0 0.0
        %1335 = vmatpush1.msra.mxu0 0.0
        %1336 = vmatprep.subr.mxu0 0.0
        %1337 = vmatpush1.msra.mxu0 0.0
        %1338 = vmatprep.subr.mxu0 0.0
        %1339 = vmatpush1.msra.mxu0 0.0
        %1340 = vmatprep.subr.mxu0 0.0
        %1341 = vmatpush1.msra.mxu0 0.0
        %1342 = vmatprep.subr.mxu0 0.0
        %1343 = vmatpush1.msra.mxu0 0.0
        %1344 = vmatprep.subr.mxu0 0.0
        %1345 = vmatpush1.msra.mxu0 0.0
        %1346 = vmatprep.subr.mxu0 0.0
        %1347 = vmatpush1.msra.mxu0 0.0
        %1348 = vmatprep.subr.mxu0 0.0
        %1349 = vmatpush1.msra.mxu0 0.0
        %1350 = vmatprep.subr.mxu0 0.0
        %1351 = vmatpush1.msra.mxu0 0.0
        %1352 = vmatprep.subr.mxu0 0.0
        %1353 = vmatpush1.msra.mxu0 0.0
        %1354 = vmatprep.subr.mxu0 0.0
        %1355 = vmatpush1.msra.mxu0 0.0
        %1356 = vmatprep.subr.mxu0 0.0
        %1357 = vmatpush1.msra.mxu0 0.0
        %1358 = vmatprep.subr.mxu0 0.0
        %1359 = vmatpush1.msra.mxu0 0.0
        %1360 = vmatprep.subr.mxu0 0.0
        %1361 = vmatpush1.msra.mxu0 0.0
        %1362 = vmatprep.subr.mxu0 0.0
        %1363 = vmatpush1.msra.mxu0 0.0
        %1364 = vmatprep.subr.mxu0 0.0
        %1365 = vmatpush1.msra.mxu0 0.0
        %1366 = vmatprep.subr.mxu0 0.0
        %1367 = vmatpush1.msra.mxu0 0.0
        %1368 = vmatprep.subr.mxu0 0.0
        %1369 = vmatpush1.msra.mxu0 0.0
        %1370 = vmatprep.subr.mxu0 0.0
        %1371 = vmatpush1.msra.mxu0 0.0
        %1372 = vmatprep.subr.mxu0 0.0
        %1373 = vmatpush1.msra.mxu0 0.0
        %1374 = vmatprep.subr.mxu0 0.0
        %1375 = vmatpush1.msra.mxu0 0.0
        %1376 = vmatprep.subr.mxu0 0.0
        %1377 = vmatpush1.msra.mxu0 0.0
        %1378 = vmatprep.subr.mxu0 0.0
        %1379 = vmatpush1.msra.mxu0 0.0
        %1380 = vmatprep.subr.mxu0 0.0
        %1381 = vmatpush1.msra.mxu0 0.0
        %1382 = vmatprep.subr.mxu0 0.0
        %1383 = vmatpush1.msra.mxu0 0.0
        %1384 = vmatprep.subr.mxu0 0.0
        %1385 = vmatpush1.msra.mxu0 0.0
        %1386 = vmatprep.subr.mxu0 0.0
        %1387 = vmatpush1.msra.mxu0 0.0
        %1388 = vmatprep.mubr.f32.mxu0 0.0
        %1389 = vmatmul.mubr.f32.gmra.mrb[0].mxu0 %v1322
        %v1390 = vpop.f32.mrb[0].mxu0
        %v1391 = vadd.f32 0.0, %v1390
        %v1392 = vpop.f32.mrb[0].mxu0
        %1393 = vdwg.mxu0
        %v1394 = vld [vmem:[%s19] sm:$0xff]
        %s1395 = scalar_lea.vmem %s15, 32
        %v1396 = vld [vmem:[%s1395] sm:$0xff]
        %v1397 = vld [vmem:[%s1395 + $0x8] sm:$0xff]
        %v1398 = vld [vmem:[%s1395 + $0x10] sm:$0xff]
        %v1399 = vld [vmem:[%s1395 + $0x18] sm:$0xff]
        %s1400 = scalar_lea.vmem %s17, 1
        %v1401 = vld [vmem:[%s1400] sm:$0x1]
        %v1403 = vlaneseq
        %v1404 = vshrl.u32 %v1403, 7
        %v1405 = vsub.s32 0, %v1404
        %v1406 = vrot.slane %v1401, %v1405
        %1408 = vmatprep.subr.mxu0 0.0
        %1409 = vmatpush1.msra.mxu0 %v1396
        %1410 = vmatprep.subr.mxu0 0.0
        %1411 = vmatpush1.msra.mxu0 %v1397
        %1412 = vmatprep.subr.mxu0 0.0
        %1413 = vmatpush1.msra.mxu0 %v1398
        %1414 = vmatprep.subr.mxu0 0.0
        %1415 = vmatpush1.msra.mxu0 %v1399
        %1416 = vmatprep.subr.mxu0 0.0
        %1417 = vmatpush1.msra.mxu0 0.0
        %1418 = vmatprep.subr.mxu0 0.0
        %1419 = vmatpush1.msra.mxu0 0.0
        %1420 = vmatprep.subr.mxu0 0.0
        %1421 = vmatpush1.msra.mxu0 0.0
        %1422 = vmatprep.subr.mxu0 0.0
        %1423 = vmatpush1.msra.mxu0 0.0
        %1424 = vmatprep.subr.mxu0 0.0
        %1425 = vmatpush1.msra.mxu0 0.0
        %1426 = vmatprep.subr.mxu0 0.0
        %1427 = vmatpush1.msra.mxu0 0.0
        %1428 = vmatprep.subr.mxu0 0.0
        %1429 = vmatpush1.msra.mxu0 0.0
        %1430 = vmatprep.subr.mxu0 0.0
        %1431 = vmatpush1.msra.mxu0 0.0
        %1432 = vmatprep.subr.mxu0 0.0
        %1433 = vmatpush1.msra.mxu0 0.0
        %1434 = vmatprep.subr.mxu0 0.0
        %1435 = vmatpush1.msra.mxu0 0.0
        %1436 = vmatprep.subr.mxu0 0.0
        %1437 = vmatpush1.msra.mxu0 0.0
        %1438 = vmatprep.subr.mxu0 0.0
        %1439 = vmatpush1.msra.mxu0 0.0
        %1440 = vmatprep.subr.mxu0 0.0
        %1441 = vmatpush1.msra.mxu0 0.0
        %1442 = vmatprep.subr.mxu0 0.0
        %1443 = vmatpush1.msra.mxu0 0.0
        %1444 = vmatprep.subr.mxu0 0.0
        %1445 = vmatpush1.msra.mxu0 0.0
        %1446 = vmatprep.subr.mxu0 0.0
        %1447 = vmatpush1.msra.mxu0 0.0
        %1448 = vmatprep.subr.mxu0 0.0
        %1449 = vmatpush1.msra.mxu0 0.0
        %1450 = vmatprep.subr.mxu0 0.0
        %1451 = vmatpush1.msra.mxu0 0.0
        %1452 = vmatprep.subr.mxu0 0.0
        %1453 = vmatpush1.msra.mxu0 0.0
        %1454 = vmatprep.subr.mxu0 0.0
        %1455 = vmatpush1.msra.mxu0 0.0
        %1456 = vmatprep.subr.mxu0 0.0
        %1457 = vmatpush1.msra.mxu0 0.0
        %1458 = vmatprep.subr.mxu0 0.0
        %1459 = vmatpush1.msra.mxu0 0.0
        %1460 = vmatprep.subr.mxu0 0.0
        %1461 = vmatpush1.msra.mxu0 0.0
        %1462 = vmatprep.subr.mxu0 0.0
        %1463 = vmatpush1.msra.mxu0 0.0
        %1464 = vmatprep.subr.mxu0 0.0
        %1465 = vmatpush1.msra.mxu0 0.0
        %1466 = vmatprep.subr.mxu0 0.0
        %1467 = vmatpush1.msra.mxu0 0.0
        %1468 = vmatprep.subr.mxu0 0.0
        %1469 = vmatpush1.msra.mxu0 0.0
        %1470 = vmatprep.subr.mxu0 0.0
        %1471 = vmatpush1.msra.mxu0 0.0
        %1472 = vmatprep.mubr.f32.mxu0 0.0
        %1473 = vmatmul.mubr.f32.gmra.mrb[0].mxu0 %v995
        %v1474 = vpop.f32.mrb[0].mxu0
        %v1475 = vadd.f32 %v1406, %v1474
        %v1476 = vpop.f32.mrb[0].mxu0
        %1477 = vdwg.mxu0
        %s1478 = scalar_lea.vmem %s15, 160
        %v1479 = vld [vmem:[%s1478] sm:$0xff]
        %v1480 = vld [vmem:[%s1478 + $0x8] sm:$0xff]
        %v1481 = vld [vmem:[%s1478 + $0x10] sm:$0xff]
        %v1482 = vld [vmem:[%s1478 + $0x18] sm:$0xff]
        %s1483 = scalar_lea.vmem %s17, 5
        %v1484 = vld [vmem:[%s1483] sm:$0x1]
        %v1486 = vlaneseq
        %v1487 = vshrl.u32 %v1486, 7
        %v1488 = vsub.s32 0, %v1487
        %v1489 = vrot.slane %v1484, %v1488
        %1491 = vmatprep.subr.mxu0 0.0
        %1492 = vmatpush1.msra.mxu0 %v1479
        %1493 = vmatprep.subr.mxu0 0.0
        %1494 = vmatpush1.msra.mxu0 %v1480
        %1495 = vmatprep.subr.mxu0 0.0
        %1496 = vmatpush1.msra.mxu0 %v1481
        %1497 = vmatprep.subr.mxu0 0.0
        %1498 = vmatpush1.msra.mxu0 %v1482
        %1499 = vmatprep.subr.mxu0 0.0
        %1500 = vmatpush1.msra.mxu0 0.0
        %1501 = vmatprep.subr.mxu0 0.0
        %1502 = vmatpush1.msra.mxu0 0.0
        %1503 = vmatprep.subr.mxu0 0.0
        %1504 = vmatpush1.msra.mxu0 0.0
        %1505 = vmatprep.subr.mxu0 0.0
        %1506 = vmatpush1.msra.mxu0 0.0
        %1507 = vmatprep.subr.mxu0 0.0
        %1508 = vmatpush1.msra.mxu0 0.0
        %1509 = vmatprep.subr.mxu0 0.0
        %1510 = vmatpush1.msra.mxu0 0.0
        %1511 = vmatprep.subr.mxu0 0.0
        %1512 = vmatpush1.msra.mxu0 0.0
        %1513 = vmatprep.subr.mxu0 0.0
        %1514 = vmatpush1.msra.mxu0 0.0
        %1515 = vmatprep.subr.mxu0 0.0
        %1516 = vmatpush1.msra.mxu0 0.0
        %1517 = vmatprep.subr.mxu0 0.0
        %1518 = vmatpush1.msra.mxu0 0.0
        %1519 = vmatprep.subr.mxu0 0.0
        %1520 = vmatpush1.msra.mxu0 0.0
        %1521 = vmatprep.subr.mxu0 0.0
        %1522 = vmatpush1.msra.mxu0 0.0
        %1523 = vmatprep.subr.mxu0 0.0
        %1524 = vmatpush1.msra.mxu0 0.0
        %1525 = vmatprep.subr.mxu0 0.0
        %1526 = vmatpush1.msra.mxu0 0.0
        %1527 = vmatprep.subr.mxu0 0.0
        %1528 = vmatpush1.msra.mxu0 0.0
        %1529 = vmatprep.subr.mxu0 0.0
        %1530 = vmatpush1.msra.mxu0 0.0
        %1531 = vmatprep.subr.mxu0 0.0
        %1532 = vmatpush1.msra.mxu0 0.0
        %1533 = vmatprep.subr.mxu0 0.0
        %1534 = vmatpush1.msra.mxu0 0.0
        %1535 = vmatprep.subr.mxu0 0.0
        %1536 = vmatpush1.msra.mxu0 0.0
        %1537 = vmatprep.subr.mxu0 0.0
        %1538 = vmatpush1.msra.mxu0 0.0
        %1539 = vmatprep.subr.mxu0 0.0
        %1540 = vmatpush1.msra.mxu0 0.0
        %1541 = vmatprep.subr.mxu0 0.0
        %1542 = vmatpush1.msra.mxu0 0.0
        %1543 = vmatprep.subr.mxu0 0.0
        %1544 = vmatpush1.msra.mxu0 0.0
        %1545 = vmatprep.subr.mxu0 0.0
        %1546 = vmatpush1.msra.mxu0 0.0
        %1547 = vmatprep.subr.mxu0 0.0
        %1548 = vmatpush1.msra.mxu0 0.0
        %1549 = vmatprep.subr.mxu0 0.0
        %1550 = vmatpush1.msra.mxu0 0.0
        %1551 = vmatprep.subr.mxu0 0.0
        %1552 = vmatpush1.msra.mxu0 0.0
        %1553 = vmatprep.subr.mxu0 0.0
        %1554 = vmatpush1.msra.mxu0 0.0
        %1555 = vmatprep.mubr.f32.mxu0 0.0
        %1556 = vmatmul.mubr.f32.gmra.mrb[0].mxu0 %v995
        %v1557 = vpop.f32.mrb[0].mxu0
        %v1558 = vadd.f32 %v1489, %v1557
        %v1559 = vpop.f32.mrb[0].mxu0
        %1560 = vdwg.mxu0
        %s1561 = scalar_lea.vmem %s15, 288
        %v1562 = vld [vmem:[%s1561] sm:$0xff]
        %v1563 = vld [vmem:[%s1561 + $0x8] sm:$0xff]
        %v1564 = vld [vmem:[%s1561 + $0x10] sm:$0xff]
        %v1565 = vld [vmem:[%s1561 + $0x18] sm:$0xff]
        %s1566 = scalar_lea.vmem %s17, 9
        %v1567 = vld [vmem:[%s1566] sm:$0x1]
        %v1569 = vlaneseq
        %v1570 = vshrl.u32 %v1569, 7
        %v1571 = vsub.s32 0, %v1570
        %v1572 = vrot.slane %v1567, %v1571
        %1574 = vmatprep.subr.mxu0 0.0
        %1575 = vmatpush1.msra.mxu0 %v1562
        %1576 = vmatprep.subr.mxu0 0.0
        %1577 = vmatpush1.msra.mxu0 %v1563
        %1578 = vmatprep.subr.mxu0 0.0
        %1579 = vmatpush1.msra.mxu0 %v1564
        %1580 = vmatprep.subr.mxu0 0.0
        %1581 = vmatpush1.msra.mxu0 %v1565
        %1582 = vmatprep.subr.mxu0 0.0
        %1583 = vmatpush1.msra.mxu0 0.0
        %1584 = vmatprep.subr.mxu0 0.0
        %1585 = vmatpush1.msra.mxu0 0.0
        %1586 = vmatprep.subr.mxu0 0.0
        %1587 = vmatpush1.msra.mxu0 0.0
        %1588 = vmatprep.subr.mxu0 0.0
        %1589 = vmatpush1.msra.mxu0 0.0
        %1590 = vmatprep.subr.mxu0 0.0
        %1591 = vmatpush1.msra.mxu0 0.0
        %1592 = vmatprep.subr.mxu0 0.0
        %1593 = vmatpush1.msra.mxu0 0.0
        %1594 = vmatprep.subr.mxu0 0.0
        %1595 = vmatpush1.msra.mxu0 0.0
        %1596 = vmatprep.subr.mxu0 0.0
        %1597 = vmatpush1.msra.mxu0 0.0
        %1598 = vmatprep.subr.mxu0 0.0
        %1599 = vmatpush1.msra.mxu0 0.0
        %1600 = vmatprep.subr.mxu0 0.0
        %1601 = vmatpush1.msra.mxu0 0.0
        %1602 = vmatprep.subr.mxu0 0.0
        %1603 = vmatpush1.msra.mxu0 0.0
        %1604 = vmatprep.subr.mxu0 0.0
        %1605 = vmatpush1.msra.mxu0 0.0
        %1606 = vmatprep.subr.mxu0 0.0
        %1607 = vmatpush1.msra.mxu0 0.0
        %1608 = vmatprep.subr.mxu0 0.0
        %1609 = vmatpush1.msra.mxu0 0.0
        %1610 = vmatprep.subr.mxu0 0.0
        %1611 = vmatpush1.msra.mxu0 0.0
        %1612 = vmatprep.subr.mxu0 0.0
        %1613 = vmatpush1.msra.mxu0 0.0
        %1614 = vmatprep.subr.mxu0 0.0
        %1615 = vmatpush1.msra.mxu0 0.0
        %1616 = vmatprep.subr.mxu0 0.0
        %1617 = vmatpush1.msra.mxu0 0.0
        %1618 = vmatprep.subr.mxu0 0.0
        %1619 = vmatpush1.msra.mxu0 0.0
        %1620 = vmatprep.subr.mxu0 0.0
        %1621 = vmatpush1.msra.mxu0 0.0
        %1622 = vmatprep.subr.mxu0 0.0
        %1623 = vmatpush1.msra.mxu0 0.0
        %1624 = vmatprep.subr.mxu0 0.0
        %1625 = vmatpush1.msra.mxu0 0.0
        %1626 = vmatprep.subr.mxu0 0.0
        %1627 = vmatpush1.msra.mxu0 0.0
        %1628 = vmatprep.subr.mxu0 0.0
        %1629 = vmatpush1.msra.mxu0 0.0
        %1630 = vmatprep.subr.mxu0 0.0
        %1631 = vmatpush1.msra.mxu0 0.0
        %1632 = vmatprep.subr.mxu0 0.0
        %1633 = vmatpush1.msra.mxu0 0.0
        %1634 = vmatprep.subr.mxu0 0.0
        %1635 = vmatpush1.msra.mxu0 0.0
        %1636 = vmatprep.subr.mxu0 0.0
        %1637 = vmatpush1.msra.mxu0 0.0
        %1638 = vmatprep.mubr.f32.mxu0 0.0
        %1639 = vmatmul.mubr.f32.gmra.mrb[0].mxu0 %v995
        %v1640 = vpop.f32.mrb[0].mxu0
        %v1641 = vadd.f32 %v1572, %v1640
        %v1642 = vpop.f32.mrb[0].mxu0
        %1643 = vdwg.mxu0
        %v1645 = vsel %vm906, %v1475, 0
        %v1648 = vsel %vm906, %v1558, 0
        %1650 = vmatprep.subr.mxu0 0.0
        %1651 = vmatpush1.xpose.msra.mxu0 %v1648
        %1652 = vmatprep.subr.mxu0 0.0
        %1653 = vmatpush1.xpose.msra.mxu0 0.0
        %1654 = vmatprep.subr.mxu0 0.0
        %1655 = vmatpush1.xpose.msra.mxu0 0.0
        %1656 = vmatprep.subr.mxu0 0.0
        %1657 = vmatpush1.xpose.msra.mxu0 0.0
        %1658 = vmatprep.subr.mxu0 0.0
        %1659 = vmatpush1.xpose.msra.mxu0 0.0
        %1660 = vmatprep.subr.mxu0 0.0
        %1661 = vmatpush1.xpose.msra.mxu0 0.0
        %1662 = vmatprep.subr.mxu0 0.0
        %1663 = vmatpush1.xpose.msra.mxu0 0.0
        %1664 = vmatprep.subr.mxu0 0.0
        %1665 = vmatpush1.xpose.msra.mxu0 0.0
        %1666 = vmatprep.subr.mxu0 0.0
        %1667 = vmatpush1.xpose.msra.mxu0 0.0
        %1668 = vmatprep.subr.mxu0 0.0
        %1669 = vmatpush1.xpose.msra.mxu0 0.0
        %1670 = vmatprep.subr.mxu0 0.0
        %1671 = vmatpush1.xpose.msra.mxu0 0.0
        %1672 = vmatprep.subr.mxu0 0.0
        %1673 = vmatpush1.xpose.msra.mxu0 0.0
        %1674 = vmatprep.subr.mxu0 0.0
        %1675 = vmatpush1.xpose.msra.mxu0 0.0
        %1676 = vmatprep.subr.mxu0 0.0
        %1677 = vmatpush1.xpose.msra.mxu0 0.0
        %1678 = vmatprep.subr.mxu0 0.0
        %1679 = vmatpush1.xpose.msra.mxu0 0.0
        %1680 = vmatprep.subr.mxu0 0.0
        %1681 = vmatpush1.xpose.msra.mxu0 0.0
        %1682 = vmatprep.subr.mxu0 0.0
        %1683 = vmatpush1.xpose.msra.mxu0 0.0
        %1684 = vmatprep.subr.mxu0 0.0
        %1685 = vmatpush1.xpose.msra.mxu0 0.0
        %1686 = vmatprep.subr.mxu0 0.0
        %1687 = vmatpush1.xpose.msra.mxu0 0.0
        %1688 = vmatprep.subr.mxu0 0.0
        %1689 = vmatpush1.xpose.msra.mxu0 0.0
        %1690 = vmatprep.subr.mxu0 0.0
        %1691 = vmatpush1.xpose.msra.mxu0 0.0
        %1692 = vmatprep.subr.mxu0 0.0
        %1693 = vmatpush1.xpose.msra.mxu0 0.0
        %1694 = vmatprep.subr.mxu0 0.0
        %1695 = vmatpush1.xpose.msra.mxu0 0.0
        %1696 = vmatprep.subr.mxu0 0.0
        %1697 = vmatpush1.xpose.msra.mxu0 0.0
        %1698 = vmatprep.subr.mxu0 0.0
        %1699 = vmatpush1.xpose.msra.mxu0 0.0
        %1700 = vmatprep.subr.mxu0 0.0
        %1701 = vmatpush1.xpose.msra.mxu0 0.0
        %1702 = vmatprep.subr.mxu0 0.0
        %1703 = vmatpush1.xpose.msra.mxu0 0.0
        %1704 = vmatprep.subr.mxu0 0.0
        %1705 = vmatpush1.xpose.msra.mxu0 0.0
        %1706 = vmatprep.subr.mxu0 0.0
        %1707 = vmatpush1.xpose.msra.mxu0 0.0
        %1708 = vmatprep.subr.mxu0 0.0
        %1709 = vmatpush1.xpose.msra.mxu0 0.0
        %1710 = vmatprep.subr.mxu0 0.0
        %1711 = vmatpush1.xpose.msra.mxu0 0.0
        %1712 = vmatprep.subr.mxu0 0.0
        %1713 = vmatpush1.xpose.msra.mxu0 0.0
        %1714 = vmatprep.mubr.f32.mxu0 0.0
        %1715 = vmatmul.mubr.f32.gmra.mrb[0].mxu0 %v1645
        %v1716 = vpop.f32.mrb[0].mxu0
        %v1717 = vadd.f32 0.0, %v1716
        %v1718 = vpop.f32.mrb[0].mxu0
        %1719 = vdwg.mxu0
        %v1720 = vmul.f32 %v1717, 0.35355338
        %v1721 = vsel %vm906, %v1720, -inf
        %1722 = vmax.xlane.f32.xlu0 %v1721
        %v1723 = vpop.xlane.xlu0 %1722
        %v1724 = vsub.f32 %v1720, %v1723
        %v1725 = vmul.f32 %v1724, 1.442695
        %v1726 = vpow.pop %v1725
        %v1727 = vsel %vm906, %v1726, 0.0
        %1728 = vadd.xlane.f32.xlu0 %v1727
        %v1729 = vpop.xlane.xlu0 %1728
        %v1730 = vrcp.pop %v1729
        %v1731 = vmul.f32 %v1726, %v1730
        %v1733 = vsel %vm906, %v1731, 0
        %1735 = vmatprep.subr.mxu0 0.0
        %1736 = vmatpush1.msra.mxu0 %v1641
        %1737 = vmatprep.subr.mxu0 0.0
        %1738 = vmatpush1.msra.mxu0 0.0
        %1739 = vmatprep.subr.mxu0 0.0
        %1740 = vmatpush1.msra.mxu0 0.0
        %1741 = vmatprep.subr.mxu0 0.0
        %1742 = vmatpush1.msra.mxu0 0.0
        %1743 = vmatprep.subr.mxu0 0.0
        %1744 = vmatpush1.msra.mxu0 0.0
        %1745 = vmatprep.subr.mxu0 0.0
        %1746 = vmatpush1.msra.mxu0 0.0
        %1747 = vmatprep.subr.mxu0 0.0
        %1748 = vmatpush1.msra.mxu0 0.0
        %1749 = vmatprep.subr.mxu0 0.0
        %1750 = vmatpush1.msra.mxu0 0.0
        %1751 = vmatprep.subr.mxu0 0.0
        %1752 = vmatpush1.msra.mxu0 0.0
        %1753 = vmatprep.subr.mxu0 0.0
        %1754 = vmatpush1.msra.mxu0 0.0
        %1755 = vmatprep.subr.mxu0 0.0
        %1756 = vmatpush1.msra.mxu0 0.0
        %1757 = vmatprep.subr.mxu0 0.0
        %1758 = vmatpush1.msra.mxu0 0.0
        %1759 = vmatprep.subr.mxu0 0.0
        %1760 = vmatpush1.msra.mxu0 0.0
        %1761 = vmatprep.subr.mxu0 0.0
        %1762 = vmatpush1.msra.mxu0 0.0
        %1763 = vmatprep.subr.mxu0 0.0
        %1764 = vmatpush1.msra.mxu0 0.0
        %1765 = vmatprep.subr.mxu0 0.0
        %1766 = vmatpush1.msra.mxu0 0.0
        %1767 = vmatprep.subr.mxu0 0.0
        %1768 = vmatpush1.msra.mxu0 0.0
        %1769 = vmatprep.subr.mxu0 0.0
        %1770 = vmatpush1.msra.mxu0 0.0
        %1771 = vmatprep.subr.mxu0 0.0
        %1772 = vmatpush1.msra.mxu0 0.0
        %1773 = vmatprep.subr.mxu0 0.0
        %1774 = vmatpush1.msra.mxu0 0.0
        %1775 = vmatprep.subr.mxu0 0.0
        %1776 = vmatpush1.msra.mxu0 0.0
        %1777 = vmatprep.subr.mxu0 0.0
        %1778 = vmatpush1.msra.mxu0 0.0
        %1779 = vmatprep.subr.mxu0 0.0
        %1780 = vmatpush1.msra.mxu0 0.0
        %1781 = vmatprep.subr.mxu0 0.0
        %1782 = vmatpush1.msra.mxu0 0.0
        %1783 = vmatprep.subr.mxu0 0.0
        %1784 = vmatpush1.msra.mxu0 0.0
        %1785 = vmatprep.subr.mxu0 0.0
        %1786 = vmatpush1.msra.mxu0 0.0
        %1787 = vmatprep.subr.mxu0 0.0
        %1788 = vmatpush1.msra.mxu0 0.0
        %1789 = vmatprep.subr.mxu0 0.0
        %1790 = vmatpush1.msra.mxu0 0.0
        %1791 = vmatprep.subr.mxu0 0.0
        %1792 = vmatpush1.msra.mxu0 0.0
        %1793 = vmatprep.subr.mxu0 0.0
        %1794 = vmatpush1.msra.mxu0 0.0
        %1795 = vmatprep.subr.mxu0 0.0
        %1796 = vmatpush1.msra.mxu0 0.0
        %1797 = vmatprep.subr.mxu0 0.0
        %1798 = vmatpush1.msra.mxu0 0.0
        %1799 = vmatprep.mubr.f32.mxu0 0.0
        %1800 = vmatmul.mubr.f32.gmra.mrb[0].mxu0 %v1733
        %v1801 = vpop.f32.mrb[0].mxu0
        %v1802 = vadd.f32 0.0, %v1801
        %v1803 = vpop.f32.mrb[0].mxu0
        %1804 = vdwg.mxu0
        %s1805 = scalar_lea.vmem %s19, 8
        %v1806 = vld [vmem:[%s1805] sm:$0xff]
        %v1808 = vsel %vm906, %v1802, 0
        %1810 = vmatprep.subr.mxu0 0.0
        %1811 = vmatpush1.msra.mxu0 %v1806
        %1812 = vmatprep.subr.mxu0 0.0
        %1813 = vmatpush1.msra.mxu0 0.0
        %1814 = vmatprep.subr.mxu0 0.0
        %1815 = vmatpush1.msra.mxu0 0.0
        %1816 = vmatprep.subr.mxu0 0.0
        %1817 = vmatpush1.msra.mxu0 0.0
        %1818 = vmatprep.subr.mxu0 0.0
        %1819 = vmatpush1.msra.mxu0 0.0
        %1820 = vmatprep.subr.mxu0 0.0
        %1821 = vmatpush1.msra.mxu0 0.0
        %1822 = vmatprep.subr.mxu0 0.0
        %1823 = vmatpush1.msra.mxu0 0.0
        %1824 = vmatprep.subr.mxu0 0.0
        %1825 = vmatpush1.msra.mxu0 0.0
        %1826 = vmatprep.subr.mxu0 0.0
        %1827 = vmatpush1.msra.mxu0 0.0
        %1828 = vmatprep.subr.mxu0 0.0
        %1829 = vmatpush1.msra.mxu0 0.0
        %1830 = vmatprep.subr.mxu0 0.0
        %1831 = vmatpush1.msra.mxu0 0.0
        %1832 = vmatprep.subr.mxu0 0.0
        %1833 = vmatpush1.msra.mxu0 0.0
        %1834 = vmatprep.subr.mxu0 0.0
        %1835 = vmatpush1.msra.mxu0 0.0
        %1836 = vmatprep.subr.mxu0 0.0
        %1837 = vmatpush1.msra.mxu0 0.0
        %1838 = vmatprep.subr.mxu0 0.0
        %1839 = vmatpush1.msra.mxu0 0.0
        %1840 = vmatprep.subr.mxu0 0.0
        %1841 = vmatpush1.msra.mxu0 0.0
        %1842 = vmatprep.subr.mxu0 0.0
        %1843 = vmatpush1.msra.mxu0 0.0
        %1844 = vmatprep.subr.mxu0 0.0
        %1845 = vmatpush1.msra.mxu0 0.0
        %1846 = vmatprep.subr.mxu0 0.0
        %1847 = vmatpush1.msra.mxu0 0.0
        %1848 = vmatprep.subr.mxu0 0.0
        %1849 = vmatpush1.msra.mxu0 0.0
        %1850 = vmatprep.subr.mxu0 0.0
        %1851 = vmatpush1.msra.mxu0 0.0
        %1852 = vmatprep.subr.mxu0 0.0
        %1853 = vmatpush1.msra.mxu0 0.0
        %1854 = vmatprep.subr.mxu0 0.0
        %1855 = vmatpush1.msra.mxu0 0.0
        %1856 = vmatprep.subr.mxu0 0.0
        %1857 = vmatpush1.msra.mxu0 0.0
        %1858 = vmatprep.subr.mxu0 0.0
        %1859 = vmatpush1.msra.mxu0 0.0
        %1860 = vmatprep.subr.mxu0 0.0
        %1861 = vmatpush1.msra.mxu0 0.0
        %1862 = vmatprep.subr.mxu0 0.0
        %1863 = vmatpush1.msra.mxu0 0.0
        %1864 = vmatprep.subr.mxu0 0.0
        %1865 = vmatpush1.msra.mxu0 0.0
        %1866 = vmatprep.subr.mxu0 0.0
        %1867 = vmatpush1.msra.mxu0 0.0
        %1868 = vmatprep.subr.mxu0 0.0
        %1869 = vmatpush1.msra.mxu0 0.0
        %1870 = vmatprep.subr.mxu0 0.0
        %1871 = vmatpush1.msra.mxu0 0.0
        %1872 = vmatprep.subr.mxu0 0.0
        %1873 = vmatpush1.msra.mxu0 0.0
        %1874 = vmatprep.mubr.f32.mxu0 0.0
        %1875 = vmatmul.mubr.f32.gmra.mrb[0].mxu0 %v1808
        %v1876 = vpop.f32.mrb[0].mxu0
        %v1877 = vadd.f32 0.0, %v1876
        %v1878 = vpop.f32.mrb[0].mxu0
        %1879 = vdwg.mxu0
        %v1881 = vsel %vm906, %v1391, 0
        %1883 = vmatprep.subr.mxu0 0.0
        %1884 = vmatpush1.msra.mxu0 %v1394
        %1885 = vmatprep.subr.mxu0 0.0
        %1886 = vmatpush1.msra.mxu0 0.0
        %1887 = vmatprep.subr.mxu0 0.0
        %1888 = vmatpush1.msra.mxu0 0.0
        %1889 = vmatprep.subr.mxu0 0.0
        %1890 = vmatpush1.msra.mxu0 0.0
        %1891 = vmatprep.subr.mxu0 0.0
        %1892 = vmatpush1.msra.mxu0 0.0
        %1893 = vmatprep.subr.mxu0 0.0
        %1894 = vmatpush1.msra.mxu0 0.0
        %1895 = vmatprep.subr.mxu0 0.0
        %1896 = vmatpush1.msra.mxu0 0.0
        %1897 = vmatprep.subr.mxu0 0.0
        %1898 = vmatpush1.msra.mxu0 0.0
        %1899 = vmatprep.subr.mxu0 0.0
        %1900 = vmatpush1.msra.mxu0 0.0
        %1901 = vmatprep.subr.mxu0 0.0
        %1902 = vmatpush1.msra.mxu0 0.0
        %1903 = vmatprep.subr.mxu0 0.0
        %1904 = vmatpush1.msra.mxu0 0.0
        %1905 = vmatprep.subr.mxu0 0.0
        %1906 = vmatpush1.msra.mxu0 0.0
        %1907 = vmatprep.subr.mxu0 0.0
        %1908 = vmatpush1.msra.mxu0 0.0
        %1909 = vmatprep.subr.mxu0 0.0
        %1910 = vmatpush1.msra.mxu0 0.0
        %1911 = vmatprep.subr.mxu0 0.0
        %1912 = vmatpush1.msra.mxu0 0.0
        %1913 = vmatprep.subr.mxu0 0.0
        %1914 = vmatpush1.msra.mxu0 0.0
        %1915 = vmatprep.subr.mxu0 0.0
        %1916 = vmatpush1.msra.mxu0 0.0
        %1917 = vmatprep.subr.mxu0 0.0
        %1918 = vmatpush1.msra.mxu0 0.0
        %1919 = vmatprep.subr.mxu0 0.0
        %1920 = vmatpush1.msra.mxu0 0.0
        %1921 = vmatprep.subr.mxu0 0.0
        %1922 = vmatpush1.msra.mxu0 0.0
        %1923 = vmatprep.subr.mxu0 0.0
        %1924 = vmatpush1.msra.mxu0 0.0
        %1925 = vmatprep.subr.mxu0 0.0
        %1926 = vmatpush1.msra.mxu0 0.0
        %1927 = vmatprep.subr.mxu0 0.0
        %1928 = vmatpush1.msra.mxu0 0.0
        %1929 = vmatprep.subr.mxu0 0.0
        %1930 = vmatpush1.msra.mxu0 0.0
        %1931 = vmatprep.subr.mxu0 0.0
        %1932 = vmatpush1.msra.mxu0 0.0
        %1933 = vmatprep.subr.mxu0 0.0
        %1934 = vmatpush1.msra.mxu0 0.0
        %1935 = vmatprep.subr.mxu0 0.0
        %1936 = vmatpush1.msra.mxu0 0.0
        %1937 = vmatprep.subr.mxu0 0.0
        %1938 = vmatpush1.msra.mxu0 0.0
        %1939 = vmatprep.subr.mxu0 0.0
        %1940 = vmatpush1.msra.mxu0 0.0
        %1941 = vmatprep.subr.mxu0 0.0
        %1942 = vmatpush1.msra.mxu0 0.0
        %1943 = vmatprep.subr.mxu0 0.0
        %1944 = vmatpush1.msra.mxu0 0.0
        %1945 = vmatprep.subr.mxu0 0.0
        %1946 = vmatpush1.msra.mxu0 0.0
        %1947 = vmatprep.mubr.f32.mxu0 0.0
        %1948 = vmatmul.mubr.f32.gmra.mrb[0].mxu0 %v1881
        %v1949 = vpop.f32.mrb[0].mxu0
        %v1950 = vadd.f32 %v1877, %v1949
        %v1951 = vpop.f32.mrb[0].mxu0
        %1952 = vdwg.mxu0
        %s1953 = scalar_lea.vmem %s15, 64
        %v1954 = vld [vmem:[%s1953] sm:$0xff]
        %v1955 = vld [vmem:[%s1953 + $0x8] sm:$0xff]
        %v1956 = vld [vmem:[%s1953 + $0x10] sm:$0xff]
        %v1957 = vld [vmem:[%s1953 + $0x18] sm:$0xff]
        %s1958 = scalar_lea.vmem %s17, 2
        %v1959 = vld [vmem:[%s1958] sm:$0x1]
        %v1961 = vlaneseq
        %v1962 = vshrl.u32 %v1961, 7
        %v1963 = vsub.s32 0, %v1962
        %v1964 = vrot.slane %v1959, %v1963
        %1966 = vmatprep.subr.mxu0 0.0
        %1967 = vmatpush1.msra.mxu0 %v1954
        %1968 = vmatprep.subr.mxu0 0.0
        %1969 = vmatpush1.msra.mxu0 %v1955
        %1970 = vmatprep.subr.mxu0 0.0
        %1971 = vmatpush1.msra.mxu0 %v1956
        %1972 = vmatprep.subr.mxu0 0.0
        %1973 = vmatpush1.msra.mxu0 %v1957
        %1974 = vmatprep.subr.mxu0 0.0
        %1975 = vmatpush1.msra.mxu0 0.0
        %1976 = vmatprep.subr.mxu0 0.0
        %1977 = vmatpush1.msra.mxu0 0.0
        %1978 = vmatprep.subr.mxu0 0.0
        %1979 = vmatpush1.msra.mxu0 0.0
        %1980 = vmatprep.subr.mxu0 0.0
        %1981 = vmatpush1.msra.mxu0 0.0
        %1982 = vmatprep.subr.mxu0 0.0
        %1983 = vmatpush1.msra.mxu0 0.0
        %1984 = vmatprep.subr.mxu0 0.0
        %1985 = vmatpush1.msra.mxu0 0.0
        %1986 = vmatprep.subr.mxu0 0.0
        %1987 = vmatpush1.msra.mxu0 0.0
        %1988 = vmatprep.subr.mxu0 0.0
        %1989 = vmatpush1.msra.mxu0 0.0
        %1990 = vmatprep.subr.mxu0 0.0
        %1991 = vmatpush1.msra.mxu0 0.0
        %1992 = vmatprep.subr.mxu0 0.0
        %1993 = vmatpush1.msra.mxu0 0.0
        %1994 = vmatprep.subr.mxu0 0.0
        %1995 = vmatpush1.msra.mxu0 0.0
        %1996 = vmatprep.subr.mxu0 0.0
        %1997 = vmatpush1.msra.mxu0 0.0
        %1998 = vmatprep.subr.mxu0 0.0
        %1999 = vmatpush1.msra.mxu0 0.0
        %2000 = vmatprep.subr.mxu0 0.0
        %2001 = vmatpush1.msra.mxu0 0.0
        %2002 = vmatprep.subr.mxu0 0.0
        %2003 = vmatpush1.msra.mxu0 0.0
        %2004 = vmatprep.subr.mxu0 0.0
        %2005 = vmatpush1.msra.mxu0 0.0
        %2006 = vmatprep.subr.mxu0 0.0
        %2007 = vmatpush1.msra.mxu0 0.0
        %2008 = vmatprep.subr.mxu0 0.0
        %2009 = vmatpush1.msra.mxu0 0.0
        %2010 = vmatprep.subr.mxu0 0.0
        %2011 = vmatpush1.msra.mxu0 0.0
        %2012 = vmatprep.subr.mxu0 0.0
        %2013 = vmatpush1.msra.mxu0 0.0
        %2014 = vmatprep.subr.mxu0 0.0
        %2015 = vmatpush1.msra.mxu0 0.0
        %2016 = vmatprep.subr.mxu0 0.0
        %2017 = vmatpush1.msra.mxu0 0.0
        %2018 = vmatprep.subr.mxu0 0.0
        %2019 = vmatpush1.msra.mxu0 0.0
        %2020 = vmatprep.subr.mxu0 0.0
        %2021 = vmatpush1.msra.mxu0 0.0
        %2022 = vmatprep.subr.mxu0 0.0
        %2023 = vmatpush1.msra.mxu0 0.0
        %2024 = vmatprep.subr.mxu0 0.0
        %2025 = vmatpush1.msra.mxu0 0.0
        %2026 = vmatprep.subr.mxu0 0.0
        %2027 = vmatpush1.msra.mxu0 0.0
        %2028 = vmatprep.subr.mxu0 0.0
        %2029 = vmatpush1.msra.mxu0 0.0
        %2030 = vmatprep.mubr.f32.mxu0 0.0
        %2031 = vmatmul.mubr.f32.gmra.mrb[0].mxu0 %v995
        %v2032 = vpop.f32.mrb[0].mxu0
        %v2033 = vadd.f32 %v1964, %v2032
        %v2034 = vpop.f32.mrb[0].mxu0
        %2035 = vdwg.mxu0
        %s2036 = scalar_lea.vmem %s15, 192
        %v2037 = vld [vmem:[%s2036] sm:$0xff]
        %v2038 = vld [vmem:[%s2036 + $0x8] sm:$0xff]
        %v2039 = vld [vmem:[%s2036 + $0x10] sm:$0xff]
        %v2040 = vld [vmem:[%s2036 + $0x18] sm:$0xff]
        %s2041 = scalar_lea.vmem %s17, 6
        %v2042 = vld [vmem:[%s2041] sm:$0x1]
        %v2044 = vlaneseq
        %v2045 = vshrl.u32 %v2044, 7
        %v2046 = vsub.s32 0, %v2045
        %v2047 = vrot.slane %v2042, %v2046
        %2049 = vmatprep.subr.mxu0 0.0
        %2050 = vmatpush1.msra.mxu0 %v2037
        %2051 = vmatprep.subr.mxu0 0.0
        %2052 = vmatpush1.msra.mxu0 %v2038
        %2053 = vmatprep.subr.mxu0 0.0
        %2054 = vmatpush1.msra.mxu0 %v2039
        %2055 = vmatprep.subr.mxu0 0.0
        %2056 = vmatpush1.msra.mxu0 %v2040
        %2057 = vmatprep.subr.mxu0 0.0
        %2058 = vmatpush1.msra.mxu0 0.0
        %2059 = vmatprep.subr.mxu0 0.0
        %2060 = vmatpush1.msra.mxu0 0.0
        %2061 = vmatprep.subr.mxu0 0.0
        %2062 = vmatpush1.msra.mxu0 0.0
        %2063 = vmatprep.subr.mxu0 0.0
        %2064 = vmatpush1.msra.mxu0 0.0
        %2065 = vmatprep.subr.mxu0 0.0
        %2066 = vmatpush1.msra.mxu0 0.0
        %2067 = vmatprep.subr.mxu0 0.0
        %2068 = vmatpush1.msra.mxu0 0.0
        %2069 = vmatprep.subr.mxu0 0.0
        %2070 = vmatpush1.msra.mxu0 0.0
        %2071 = vmatprep.subr.mxu0 0.0
        %2072 = vmatpush1.msra.mxu0 0.0
        %2073 = vmatprep.subr.mxu0 0.0
        %2074 = vmatpush1.msra.mxu0 0.0
        %2075 = vmatprep.subr.mxu0 0.0
        %2076 = vmatpush1.msra.mxu0 0.0
        %2077 = vmatprep.subr.mxu0 0.0
        %2078 = vmatpush1.msra.mxu0 0.0
        %2079 = vmatprep.subr.mxu0 0.0
        %2080 = vmatpush1.msra.mxu0 0.0
        %2081 = vmatprep.subr.mxu0 0.0
        %2082 = vmatpush1.msra.mxu0 0.0
        %2083 = vmatprep.subr.mxu0 0.0
        %2084 = vmatpush1.msra.mxu0 0.0
        %2085 = vmatprep.subr.mxu0 0.0
        %2086 = vmatpush1.msra.mxu0 0.0
        %2087 = vmatprep.subr.mxu0 0.0
        %2088 = vmatpush1.msra.mxu0 0.0
        %2089 = vmatprep.subr.mxu0 0.0
        %2090 = vmatpush1.msra.mxu0 0.0
        %2091 = vmatprep.subr.mxu0 0.0
        %2092 = vmatpush1.msra.mxu0 0.0
        %2093 = vmatprep.subr.mxu0 0.0
        %2094 = vmatpush1.msra.mxu0 0.0
        %2095 = vmatprep.subr.mxu0 0.0
        %2096 = vmatpush1.msra.mxu0 0.0
        %2097 = vmatprep.subr.mxu0 0.0
        %2098 = vmatpush1.msra.mxu0 0.0
        %2099 = vmatprep.subr.mxu0 0.0
        %2100 = vmatpush1.msra.mxu0 0.0
        %2101 = vmatprep.subr.mxu0 0.0
        %2102 = vmatpush1.msra.mxu0 0.0
        %2103 = vmatprep.subr.mxu0 0.0
        %2104 = vmatpush1.msra.mxu0 0.0
        %2105 = vmatprep.subr.mxu0 0.0
        %2106 = vmatpush1.msra.mxu0 0.0
        %2107 = vmatprep.subr.mxu0 0.0
        %2108 = vmatpush1.msra.mxu0 0.0
        %2109 = vmatprep.subr.mxu0 0.0
        %2110 = vmatpush1.msra.mxu0 0.0
        %2111 = vmatprep.subr.mxu0 0.0
        %2112 = vmatpush1.msra.mxu0 0.0
        %2113 = vmatprep.mubr.f32.mxu0 0.0
        %2114 = vmatmul.mubr.f32.gmra.mrb[0].mxu0 %v995
        %v2115 = vpop.f32.mrb[0].mxu0
        %v2116 = vadd.f32 %v2047, %v2115
        %v2117 = vpop.f32.mrb[0].mxu0
        %2118 = vdwg.mxu0
        %s2119 = scalar_lea.vmem %s15, 320
        %v2120 = vld [vmem:[%s2119] sm:$0xff]
        %v2121 = vld [vmem:[%s2119 + $0x8] sm:$0xff]
        %v2122 = vld [vmem:[%s2119 + $0x10] sm:$0xff]
        %v2123 = vld [vmem:[%s2119 + $0x18] sm:$0xff]
        %s2124 = scalar_lea.vmem %s17, 10
        %v2125 = vld [vmem:[%s2124] sm:$0x1]
        %v2127 = vlaneseq
        %v2128 = vshrl.u32 %v2127, 7
        %v2129 = vsub.s32 0, %v2128
        %v2130 = vrot.slane %v2125, %v2129
        %2132 = vmatprep.subr.mxu0 0.0
        %2133 = vmatpush1.msra.mxu0 %v2120
        %2134 = vmatprep.subr.mxu0 0.0
        %2135 = vmatpush1.msra.mxu0 %v2121
        %2136 = vmatprep.subr.mxu0 0.0
        %2137 = vmatpush1.msra.mxu0 %v2122
        %2138 = vmatprep.subr.mxu0 0.0
        %2139 = vmatpush1.msra.mxu0 %v2123
        %2140 = vmatprep.subr.mxu0 0.0
        %2141 = vmatpush1.msra.mxu0 0.0
        %2142 = vmatprep.subr.mxu0 0.0
        %2143 = vmatpush1.msra.mxu0 0.0
        %2144 = vmatprep.subr.mxu0 0.0
        %2145 = vmatpush1.msra.mxu0 0.0
        %2146 = vmatprep.subr.mxu0 0.0
        %2147 = vmatpush1.msra.mxu0 0.0
        %2148 = vmatprep.subr.mxu0 0.0
        %2149 = vmatpush1.msra.mxu0 0.0
        %2150 = vmatprep.subr.mxu0 0.0
        %2151 = vmatpush1.msra.mxu0 0.0
        %2152 = vmatprep.subr.mxu0 0.0
        %2153 = vmatpush1.msra.mxu0 0.0
        %2154 = vmatprep.subr.mxu0 0.0
        %2155 = vmatpush1.msra.mxu0 0.0
        %2156 = vmatprep.subr.mxu0 0.0
        %2157 = vmatpush1.msra.mxu0 0.0
        %2158 = vmatprep.subr.mxu0 0.0
        %2159 = vmatpush1.msra.mxu0 0.0
        %2160 = vmatprep.subr.mxu0 0.0
        %2161 = vmatpush1.msra.mxu0 0.0
        %2162 = vmatprep.subr.mxu0 0.0
        %2163 = vmatpush1.msra.mxu0 0.0
        %2164 = vmatprep.subr.mxu0 0.0
        %2165 = vmatpush1.msra.mxu0 0.0
        %2166 = vmatprep.subr.mxu0 0.0
        %2167 = vmatpush1.msra.mxu0 0.0
        %2168 = vmatprep.subr.mxu0 0.0
        %2169 = vmatpush1.msra.mxu0 0.0
        %2170 = vmatprep.subr.mxu0 0.0
        %2171 = vmatpush1.msra.mxu0 0.0
        %2172 = vmatprep.subr.mxu0 0.0
        %2173 = vmatpush1.msra.mxu0 0.0
        %2174 = vmatprep.subr.mxu0 0.0
        %2175 = vmatpush1.msra.mxu0 0.0
        %2176 = vmatprep.subr.mxu0 0.0
        %2177 = vmatpush1.msra.mxu0 0.0
        %2178 = vmatprep.subr.mxu0 0.0
        %2179 = vmatpush1.msra.mxu0 0.0
        %2180 = vmatprep.subr.mxu0 0.0
        %2181 = vmatpush1.msra.mxu0 0.0
        %2182 = vmatprep.subr.mxu0 0.0
        %2183 = vmatpush1.msra.mxu0 0.0
        %2184 = vmatprep.subr.mxu0 0.0
        %2185 = vmatpush1.msra.mxu0 0.0
        %2186 = vmatprep.subr.mxu0 0.0
        %2187 = vmatpush1.msra.mxu0 0.0
        %2188 = vmatprep.subr.mxu0 0.0
        %2189 = vmatpush1.msra.mxu0 0.0
        %2190 = vmatprep.subr.mxu0 0.0
        %2191 = vmatpush1.msra.mxu0 0.0
        %2192 = vmatprep.subr.mxu0 0.0
        %2193 = vmatpush1.msra.mxu0 0.0
        %2194 = vmatprep.subr.mxu0 0.0
        %2195 = vmatpush1.msra.mxu0 0.0
        %2196 = vmatprep.mubr.f32.mxu0 0.0
        %2197 = vmatmul.mubr.f32.gmra.mrb[0].mxu0 %v995
        %v2198 = vpop.f32.mrb[0].mxu0
        %v2199 = vadd.f32 %v2130, %v2198
        %v2200 = vpop.f32.mrb[0].mxu0
        %2201 = vdwg.mxu0
        %v2203 = vsel %vm906, %v2033, 0
        %v2206 = vsel %vm906, %v2116, 0
        %2208 = vmatprep.subr.mxu0 0.0
        %2209 = vmatpush1.xpose.msra.mxu0 %v2206
        %2210 = vmatprep.subr.mxu0 0.0
        %2211 = vmatpush1.xpose.msra.mxu0 0.0
        %2212 = vmatprep.subr.mxu0 0.0
        %2213 = vmatpush1.xpose.msra.mxu0 0.0
        %2214 = vmatprep.subr.mxu0 0.0
        %2215 = vmatpush1.xpose.msra.mxu0 0.0
        %2216 = vmatprep.subr.mxu0 0.0
        %2217 = vmatpush1.xpose.msra.mxu0 0.0
        %2218 = vmatprep.subr.mxu0 0.0
        %2219 = vmatpush1.xpose.msra.mxu0 0.0
        %2220 = vmatprep.subr.mxu0 0.0
        %2221 = vmatpush1.xpose.msra.mxu0 0.0
        %2222 = vmatprep.subr.mxu0 0.0
        %2223 = vmatpush1.xpose.msra.mxu0 0.0
        %2224 = vmatprep.subr.mxu0 0.0
        %2225 = vmatpush1.xpose.msra.mxu0 0.0
        %2226 = vmatprep.subr.mxu0 0.0
        %2227 = vmatpush1.xpose.msra.mxu0 0.0
        %2228 = vmatprep.subr.mxu0 0.0
        %2229 = vmatpush1.xpose.msra.mxu0 0.0
        %2230 = vmatprep.subr.mxu0 0.0
        %2231 = vmatpush1.xpose.msra.mxu0 0.0
        %2232 = vmatprep.subr.mxu0 0.0
        %2233 = vmatpush1.xpose.msra.mxu0 0.0
        %2234 = vmatprep.subr.mxu0 0.0
        %2235 = vmatpush1.xpose.msra.mxu0 0.0
        %2236 = vmatprep.subr.mxu0 0.0
        %2237 = vmatpush1.xpose.msra.mxu0 0.0
        %2238 = vmatprep.subr.mxu0 0.0
        %2239 = vmatpush1.xpose.msra.mxu0 0.0
        %2240 = vmatprep.subr.mxu0 0.0
        %2241 = vmatpush1.xpose.msra.mxu0 0.0
        %2242 = vmatprep.subr.mxu0 0.0
        %2243 = vmatpush1.xpose.msra.mxu0 0.0
        %2244 = vmatprep.subr.mxu0 0.0
        %2245 = vmatpush1.xpose.msra.mxu0 0.0
        %2246 = vmatprep.subr.mxu0 0.0
        %2247 = vmatpush1.xpose.msra.mxu0 0.0
        %2248 = vmatprep.subr.mxu0 0.0
        %2249 = vmatpush1.xpose.msra.mxu0 0.0
        %2250 = vmatprep.subr.mxu0 0.0
        %2251 = vmatpush1.xpose.msra.mxu0 0.0
        %2252 = vmatprep.subr.mxu0 0.0
        %2253 = vmatpush1.xpose.msra.mxu0 0.0
        %2254 = vmatprep.subr.mxu0 0.0
        %2255 = vmatpush1.xpose.msra.mxu0 0.0
        %2256 = vmatprep.subr.mxu0 0.0
        %2257 = vmatpush1.xpose.msra.mxu0 0.0
        %2258 = vmatprep.subr.mxu0 0.0
        %2259 = vmatpush1.xpose.msra.mxu0 0.0
        %2260 = vmatprep.subr.mxu0 0.0
        %2261 = vmatpush1.xpose.msra.mxu0 0.0
        %2262 = vmatprep.subr.mxu0 0.0
        %2263 = vmatpush1.xpose.msra.mxu0 0.0
        %2264 = vmatprep.subr.mxu0 0.0
        %2265 = vmatpush1.xpose.msra.mxu0 0.0
        %2266 = vmatprep.subr.mxu0 0.0
        %2267 = vmatpush1.xpose.msra.mxu0 0.0
        %2268 = vmatprep.subr.mxu0 0.0
        %2269 = vmatpush1.xpose.msra.mxu0 0.0
        %2270 = vmatprep.subr.mxu0 0.0
        %2271 = vmatpush1.xpose.msra.mxu0 0.0
        %2272 = vmatprep.mubr.f32.mxu0 0.0
        %2273 = vmatmul.mubr.f32.gmra.mrb[0].mxu0 %v2203
        %v2274 = vpop.f32.mrb[0].mxu0
        %v2275 = vadd.f32 0.0, %v2274
        %v2276 = vpop.f32.mrb[0].mxu0
        %2277 = vdwg.mxu0
        %v2278 = vmul.f32 %v2275, 0.35355338
        %v2279 = vsel %vm906, %v2278, -inf
        %2280 = vmax.xlane.f32.xlu0 %v2279
        %v2281 = vpop.xlane.xlu0 %2280
        %v2282 = vsub.f32 %v2278, %v2281
        %v2283 = vmul.f32 %v2282, 1.442695
        %v2284 = vpow.pop %v2283
        %v2285 = vsel %vm906, %v2284, 0.0
        %2286 = vadd.xlane.f32.xlu0 %v2285
        %v2287 = vpop.xlane.xlu0 %2286
        %v2288 = vrcp.pop %v2287
        %v2289 = vmul.f32 %v2284, %v2288
        %v2291 = vsel %vm906, %v2289, 0
        %2293 = vmatprep.subr.mxu0 0.0
        %2294 = vmatpush1.msra.mxu0 %v2199
        %2295 = vmatprep.subr.mxu0 0.0
        %2296 = vmatpush1.msra.mxu0 0.0
        %2297 = vmatprep.subr.mxu0 0.0
        %2298 = vmatpush1.msra.mxu0 0.0
        %2299 = vmatprep.subr.mxu0 0.0
        %2300 = vmatpush1.msra.mxu0 0.0
        %2301 = vmatprep.subr.mxu0 0.0
        %2302 = vmatpush1.msra.mxu0 0.0
        %2303 = vmatprep.subr.mxu0 0.0
        %2304 = vmatpush1.msra.mxu0 0.0
        %2305 = vmatprep.subr.mxu0 0.0
        %2306 = vmatpush1.msra.mxu0 0.0
        %2307 = vmatprep.subr.mxu0 0.0
        %2308 = vmatpush1.msra.mxu0 0.0
        %2309 = vmatprep.subr.mxu0 0.0
        %2310 = vmatpush1.msra.mxu0 0.0
        %2311 = vmatprep.subr.mxu0 0.0
        %2312 = vmatpush1.msra.mxu0 0.0
        %2313 = vmatprep.subr.mxu0 0.0
        %2314 = vmatpush1.msra.mxu0 0.0
        %2315 = vmatprep.subr.mxu0 0.0
        %2316 = vmatpush1.msra.mxu0 0.0
        %2317 = vmatprep.subr.mxu0 0.0
        %2318 = vmatpush1.msra.mxu0 0.0
        %2319 = vmatprep.subr.mxu0 0.0
        %2320 = vmatpush1.msra.mxu0 0.0
        %2321 = vmatprep.subr.mxu0 0.0
        %2322 = vmatpush1.msra.mxu0 0.0
        %2323 = vmatprep.subr.mxu0 0.0
        %2324 = vmatpush1.msra.mxu0 0.0
        %2325 = vmatprep.subr.mxu0 0.0
        %2326 = vmatpush1.msra.mxu0 0.0
        %2327 = vmatprep.subr.mxu0 0.0
        %2328 = vmatpush1.msra.mxu0 0.0
        %2329 = vmatprep.subr.mxu0 0.0
        %2330 = vmatpush1.msra.mxu0 0.0
        %2331 = vmatprep.subr.mxu0 0.0
        %2332 = vmatpush1.msra.mxu0 0.0
        %2333 = vmatprep.subr.mxu0 0.0
        %2334 = vmatpush1.msra.mxu0 0.0
        %2335 = vmatprep.subr.mxu0 0.0
        %2336 = vmatpush1.msra.mxu0 0.0
        %2337 = vmatprep.subr.mxu0 0.0
        %2338 = vmatpush1.msra.mxu0 0.0
        %2339 = vmatprep.subr.mxu0 0.0
        %2340 = vmatpush1.msra.mxu0 0.0
        %2341 = vmatprep.subr.mxu0 0.0
        %2342 = vmatpush1.msra.mxu0 0.0
        %2343 = vmatprep.subr.mxu0 0.0
        %2344 = vmatpush1.msra.mxu0 0.0
        %2345 = vmatprep.subr.mxu0 0.0
        %2346 = vmatpush1.msra.mxu0 0.0
        %2347 = vmatprep.subr.mxu0 0.0
        %2348 = vmatpush1.msra.mxu0 0.0
        %2349 = vmatprep.subr.mxu0 0.0
        %2350 = vmatpush1.msra.mxu0 0.0
        %2351 = vmatprep.subr.mxu0 0.0
        %2352 = vmatpush1.msra.mxu0 0.0
        %2353 = vmatprep.subr.mxu0 0.0
        %2354 = vmatpush1.msra.mxu0 0.0
        %2355 = vmatprep.subr.mxu0 0.0
        %2356 = vmatpush1.msra.mxu0 0.0
        %2357 = vmatprep.mubr.f32.mxu0 0.0
        %2358 = vmatmul.mubr.f32.gmra.mrb[0].mxu0 %v2291
        %v2359 = vpop.f32.mrb[0].mxu0
        %v2360 = vadd.f32 0.0, %v2359
        %v2361 = vpop.f32.mrb[0].mxu0
        %2362 = vdwg.mxu0
        %s2363 = scalar_lea.vmem %s19, 16
        %v2364 = vld [vmem:[%s2363] sm:$0xff]
        %v2366 = vsel %vm906, %v2360, 0
        %2368 = vmatprep.subr.mxu0 0.0
        %2369 = vmatpush1.msra.mxu0 %v2364
        %2370 = vmatprep.subr.mxu0 0.0
        %2371 = vmatpush1.msra.mxu0 0.0
        %2372 = vmatprep.subr.mxu0 0.0
        %2373 = vmatpush1.msra.mxu0 0.0
        %2374 = vmatprep.subr.mxu0 0.0
        %2375 = vmatpush1.msra.mxu0 0.0
        %2376 = vmatprep.subr.mxu0 0.0
        %2377 = vmatpush1.msra.mxu0 0.0
        %2378 = vmatprep.subr.mxu0 0.0
        %2379 = vmatpush1.msra.mxu0 0.0
        %2380 = vmatprep.subr.mxu0 0.0
        %2381 = vmatpush1.msra.mxu0 0.0
        %2382 = vmatprep.subr.mxu0 0.0
        %2383 = vmatpush1.msra.mxu0 0.0
        %2384 = vmatprep.subr.mxu0 0.0
        %2385 = vmatpush1.msra.mxu0 0.0
        %2386 = vmatprep.subr.mxu0 0.0
        %2387 = vmatpush1.msra.mxu0 0.0
        %2388 = vmatprep.subr.mxu0 0.0
        %2389 = vmatpush1.msra.mxu0 0.0
        %2390 = vmatprep.subr.mxu0 0.0
        %2391 = vmatpush1.msra.mxu0 0.0
        %2392 = vmatprep.subr.mxu0 0.0
        %2393 = vmatpush1.msra.mxu0 0.0
        %2394 = vmatprep.subr.mxu0 0.0
        %2395 = vmatpush1.msra.mxu0 0.0
        %2396 = vmatprep.subr.mxu0 0.0
        %2397 = vmatpush1.msra.mxu0 0.0
        %2398 = vmatprep.subr.mxu0 0.0
        %2399 = vmatpush1.msra.mxu0 0.0
        %2400 = vmatprep.subr.mxu0 0.0
        %2401 = vmatpush1.msra.mxu0 0.0
        %2402 = vmatprep.subr.mxu0 0.0
        %2403 = vmatpush1.msra.mxu0 0.0
        %2404 = vmatprep.subr.mxu0 0.0
        %2405 = vmatpush1.msra.mxu0 0.0
        %2406 = vmatprep.subr.mxu0 0.0
        %2407 = vmatpush1.msra.mxu0 0.0
        %2408 = vmatprep.subr.mxu0 0.0
        %2409 = vmatpush1.msra.mxu0 0.0
        %2410 = vmatprep.subr.mxu0 0.0
        %2411 = vmatpush1.msra.mxu0 0.0
        %2412 = vmatprep.subr.mxu0 0.0
        %2413 = vmatpush1.msra.mxu0 0.0
        %2414 = vmatprep.subr.mxu0 0.0
        %2415 = vmatpush1.msra.mxu0 0.0
        %2416 = vmatprep.subr.mxu0 0.0
        %2417 = vmatpush1.msra.mxu0 0.0
        %2418 = vmatprep.subr.mxu0 0.0
        %2419 = vmatpush1.msra.mxu0 0.0
        %2420 = vmatprep.subr.mxu0 0.0
        %2421 = vmatpush1.msra.mxu0 0.0
        %2422 = vmatprep.subr.mxu0 0.0
        %2423 = vmatpush1.msra.mxu0 0.0
        %2424 = vmatprep.subr.mxu0 0.0
        %2425 = vmatpush1.msra.mxu0 0.0
        %2426 = vmatprep.subr.mxu0 0.0
        %2427 = vmatpush1.msra.mxu0 0.0
        %2428 = vmatprep.subr.mxu0 0.0
        %2429 = vmatpush1.msra.mxu0 0.0
        %2430 = vmatprep.subr.mxu0 0.0
        %2431 = vmatpush1.msra.mxu0 0.0
        %2432 = vmatprep.mubr.f32.mxu0 0.0
        %2433 = vmatmul.mubr.f32.gmra.mrb[0].mxu0 %v2366
        %v2434 = vpop.f32.mrb[0].mxu0
        %v2435 = vadd.f32 0.0, %v2434
        %v2436 = vpop.f32.mrb[0].mxu0
        %2437 = vdwg.mxu0
        %v2438 = vadd.f32 %v1950, %v2435
        %s2439 = scalar_lea.vmem %s15, 96
        %v2440 = vld [vmem:[%s2439] sm:$0xff]
        %v2441 = vld [vmem:[%s2439 + $0x8] sm:$0xff]
        %v2442 = vld [vmem:[%s2439 + $0x10] sm:$0xff]
        %v2443 = vld [vmem:[%s2439 + $0x18] sm:$0xff]
        %s2444 = scalar_lea.vmem %s17, 3
        %v2445 = vld [vmem:[%s2444] sm:$0x1]
        %v2447 = vlaneseq
        %v2448 = vshrl.u32 %v2447, 7
        %v2449 = vsub.s32 0, %v2448
        %v2450 = vrot.slane %v2445, %v2449
        %2452 = vmatprep.subr.mxu0 0.0
        %2453 = vmatpush1.msra.mxu0 %v2440
        %2454 = vmatprep.subr.mxu0 0.0
        %2455 = vmatpush1.msra.mxu0 %v2441
        %2456 = vmatprep.subr.mxu0 0.0
        %2457 = vmatpush1.msra.mxu0 %v2442
        %2458 = vmatprep.subr.mxu0 0.0
        %2459 = vmatpush1.msra.mxu0 %v2443
        %2460 = vmatprep.subr.mxu0 0.0
        %2461 = vmatpush1.msra.mxu0 0.0
        %2462 = vmatprep.subr.mxu0 0.0
        %2463 = vmatpush1.msra.mxu0 0.0
        %2464 = vmatprep.subr.mxu0 0.0
        %2465 = vmatpush1.msra.mxu0 0.0
        %2466 = vmatprep.subr.mxu0 0.0
        %2467 = vmatpush1.msra.mxu0 0.0
        %2468 = vmatprep.subr.mxu0 0.0
        %2469 = vmatpush1.msra.mxu0 0.0
        %2470 = vmatprep.subr.mxu0 0.0
        %2471 = vmatpush1.msra.mxu0 0.0
        %2472 = vmatprep.subr.mxu0 0.0
        %2473 = vmatpush1.msra.mxu0 0.0
        %2474 = vmatprep.subr.mxu0 0.0
        %2475 = vmatpush1.msra.mxu0 0.0
        %2476 = vmatprep.subr.mxu0 0.0
        %2477 = vmatpush1.msra.mxu0 0.0
        %2478 = vmatprep.subr.mxu0 0.0
        %2479 = vmatpush1.msra.mxu0 0.0
        %2480 = vmatprep.subr.mxu0 0.0
        %2481 = vmatpush1.msra.mxu0 0.0
        %2482 = vmatprep.subr.mxu0 0.0
        %2483 = vmatpush1.msra.mxu0 0.0
        %2484 = vmatprep.subr.mxu0 0.0
        %2485 = vmatpush1.msra.mxu0 0.0
        %2486 = vmatprep.subr.mxu0 0.0
        %2487 = vmatpush1.msra.mxu0 0.0
        %2488 = vmatprep.subr.mxu0 0.0
        %2489 = vmatpush1.msra.mxu0 0.0
        %2490 = vmatprep.subr.mxu0 0.0
        %2491 = vmatpush1.msra.mxu0 0.0
        %2492 = vmatprep.subr.mxu0 0.0
        %2493 = vmatpush1.msra.mxu0 0.0
        %2494 = vmatprep.subr.mxu0 0.0
        %2495 = vmatpush1.msra.mxu0 0.0
        %2496 = vmatprep.subr.mxu0 0.0
        %2497 = vmatpush1.msra.mxu0 0.0
        %2498 = vmatprep.subr.mxu0 0.0
        %2499 = vmatpush1.msra.mxu0 0.0
        %2500 = vmatprep.subr.mxu0 0.0
        %2501 = vmatpush1.msra.mxu0 0.0
        %2502 = vmatprep.subr.mxu0 0.0
        %2503 = vmatpush1.msra.mxu0 0.0
        %2504 = vmatprep.subr.mxu0 0.0
        %2505 = vmatpush1.msra.mxu0 0.0
        %2506 = vmatprep.subr.mxu0 0.0
        %2507 = vmatpush1.msra.mxu0 0.0
        %2508 = vmatprep.subr.mxu0 0.0
        %2509 = vmatpush1.msra.mxu0 0.0
        %2510 = vmatprep.subr.mxu0 0.0
        %2511 = vmatpush1.msra.mxu0 0.0
        %2512 = vmatprep.subr.mxu0 0.0
        %2513 = vmatpush1.msra.mxu0 0.0
        %2514 = vmatprep.subr.mxu0 0.0
        %2515 = vmatpush1.msra.mxu0 0.0
        %2516 = vmatprep.mubr.f32.mxu0 0.0
        %2517 = vmatmul.mubr.f32.gmra.mrb[0].mxu0 %v995
        %v2518 = vpop.f32.mrb[0].mxu0
        %v2519 = vadd.f32 %v2450, %v2518
        %v2520 = vpop.f32.mrb[0].mxu0
        %2521 = vdwg.mxu0
        %s2522 = scalar_lea.vmem %s15, 224
        %v2523 = vld [vmem:[%s2522] sm:$0xff]
        %v2524 = vld [vmem:[%s2522 + $0x8] sm:$0xff]
        %v2525 = vld [vmem:[%s2522 + $0x10] sm:$0xff]
        %v2526 = vld [vmem:[%s2522 + $0x18] sm:$0xff]
        %s2527 = scalar_lea.vmem %s17, 7
        %v2528 = vld [vmem:[%s2527] sm:$0x1]
        %v2530 = vlaneseq
        %v2531 = vshrl.u32 %v2530, 7
        %v2532 = vsub.s32 0, %v2531
        %v2533 = vrot.slane %v2528, %v2532
        %2535 = vmatprep.subr.mxu0 0.0
        %2536 = vmatpush1.msra.mxu0 %v2523
        %2537 = vmatprep.subr.mxu0 0.0
        %2538 = vmatpush1.msra.mxu0 %v2524
        %2539 = vmatprep.subr.mxu0 0.0
        %2540 = vmatpush1.msra.mxu0 %v2525
        %2541 = vmatprep.subr.mxu0 0.0
        %2542 = vmatpush1.msra.mxu0 %v2526
        %2543 = vmatprep.subr.mxu0 0.0
        %2544 = vmatpush1.msra.mxu0 0.0
        %2545 = vmatprep.subr.mxu0 0.0
        %2546 = vmatpush1.msra.mxu0 0.0
        %2547 = vmatprep.subr.mxu0 0.0
        %2548 = vmatpush1.msra.mxu0 0.0
        %2549 = vmatprep.subr.mxu0 0.0
        %2550 = vmatpush1.msra.mxu0 0.0
        %2551 = vmatprep.subr.mxu0 0.0
        %2552 = vmatpush1.msra.mxu0 0.0
        %2553 = vmatprep.subr.mxu0 0.0
        %2554 = vmatpush1.msra.mxu0 0.0
        %2555 = vmatprep.subr.mxu0 0.0
        %2556 = vmatpush1.msra.mxu0 0.0
        %2557 = vmatprep.subr.mxu0 0.0
        %2558 = vmatpush1.msra.mxu0 0.0
        %2559 = vmatprep.subr.mxu0 0.0
        %2560 = vmatpush1.msra.mxu0 0.0
        %2561 = vmatprep.subr.mxu0 0.0
        %2562 = vmatpush1.msra.mxu0 0.0
        %2563 = vmatprep.subr.mxu0 0.0
        %2564 = vmatpush1.msra.mxu0 0.0
        %2565 = vmatprep.subr.mxu0 0.0
        %2566 = vmatpush1.msra.mxu0 0.0
        %2567 = vmatprep.subr.mxu0 0.0
        %2568 = vmatpush1.msra.mxu0 0.0
        %2569 = vmatprep.subr.mxu0 0.0
        %2570 = vmatpush1.msra.mxu0 0.0
        %2571 = vmatprep.subr.mxu0 0.0
        %2572 = vmatpush1.msra.mxu0 0.0
        %2573 = vmatprep.subr.mxu0 0.0
        %2574 = vmatpush1.msra.mxu0 0.0
        %2575 = vmatprep.subr.mxu0 0.0
        %2576 = vmatpush1.msra.mxu0 0.0
        %2577 = vmatprep.subr.mxu0 0.0
        %2578 = vmatpush1.msra.mxu0 0.0
        %2579 = vmatprep.subr.mxu0 0.0
        %2580 = vmatpush1.msra.mxu0 0.0
        %2581 = vmatprep.subr.mxu0 0.0
        %2582 = vmatpush1.msra.mxu0 0.0
        %2583 = vmatprep.subr.mxu0 0.0
        %2584 = vmatpush1.msra.mxu0 0.0
        %2585 = vmatprep.subr.mxu0 0.0
        %2586 = vmatpush1.msra.mxu0 0.0
        %2587 = vmatprep.subr.mxu0 0.0
        %2588 = vmatpush1.msra.mxu0 0.0
        %2589 = vmatprep.subr.mxu0 0.0
        %2590 = vmatpush1.msra.mxu0 0.0
        %2591 = vmatprep.subr.mxu0 0.0
        %2592 = vmatpush1.msra.mxu0 0.0
        %2593 = vmatprep.subr.mxu0 0.0
        %2594 = vmatpush1.msra.mxu0 0.0
        %2595 = vmatprep.subr.mxu0 0.0
        %2596 = vmatpush1.msra.mxu0 0.0
        %2597 = vmatprep.subr.mxu0 0.0
        %2598 = vmatpush1.msra.mxu0 0.0
        %2599 = vmatprep.mubr.f32.mxu0 0.0
        %2600 = vmatmul.mubr.f32.gmra.mrb[0].mxu0 %v995
        %v2601 = vpop.f32.mrb[0].mxu0
        %v2602 = vadd.f32 %v2533, %v2601
        %v2603 = vpop.f32.mrb[0].mxu0
        %2604 = vdwg.mxu0
        %s2605 = scalar_lea.vmem %s15, 352
        %v2606 = vld [vmem:[%s2605] sm:$0xff]
        %v2607 = vld [vmem:[%s2605 + $0x8] sm:$0xff]
        %v2608 = vld [vmem:[%s2605 + $0x10] sm:$0xff]
        %v2609 = vld [vmem:[%s2605 + $0x18] sm:$0xff]
        %s2610 = scalar_lea.vmem %s17, 11
        %v2611 = vld [vmem:[%s2610] sm:$0x1]
        %v2613 = vlaneseq
        %v2614 = vshrl.u32 %v2613, 7
        %v2615 = vsub.s32 0, %v2614
        %v2616 = vrot.slane %v2611, %v2615
        %2618 = vmatprep.subr.mxu0 0.0
        %2619 = vmatpush1.msra.mxu0 %v2606
        %2620 = vmatprep.subr.mxu0 0.0
        %2621 = vmatpush1.msra.mxu0 %v2607
        %2622 = vmatprep.subr.mxu0 0.0
        %2623 = vmatpush1.msra.mxu0 %v2608
        %2624 = vmatprep.subr.mxu0 0.0
        %2625 = vmatpush1.msra.mxu0 %v2609
        %2626 = vmatprep.subr.mxu0 0.0
        %2627 = vmatpush1.msra.mxu0 0.0
        %2628 = vmatprep.subr.mxu0 0.0
        %2629 = vmatpush1.msra.mxu0 0.0
        %2630 = vmatprep.subr.mxu0 0.0
        %2631 = vmatpush1.msra.mxu0 0.0
        %2632 = vmatprep.subr.mxu0 0.0
        %2633 = vmatpush1.msra.mxu0 0.0
        %2634 = vmatprep.subr.mxu0 0.0
        %2635 = vmatpush1.msra.mxu0 0.0
        %2636 = vmatprep.subr.mxu0 0.0
        %2637 = vmatpush1.msra.mxu0 0.0
        %2638 = vmatprep.subr.mxu0 0.0
        %2639 = vmatpush1.msra.mxu0 0.0
        %2640 = vmatprep.subr.mxu0 0.0
        %2641 = vmatpush1.msra.mxu0 0.0
        %2642 = vmatprep.subr.mxu0 0.0
        %2643 = vmatpush1.msra.mxu0 0.0
        %2644 = vmatprep.subr.mxu0 0.0
        %2645 = vmatpush1.msra.mxu0 0.0
        %2646 = vmatprep.subr.mxu0 0.0
        %2647 = vmatpush1.msra.mxu0 0.0
        %2648 = vmatprep.subr.mxu0 0.0
        %2649 = vmatpush1.msra.mxu0 0.0
        %2650 = vmatprep.subr.mxu0 0.0
        %2651 = vmatpush1.msra.mxu0 0.0
        %2652 = vmatprep.subr.mxu0 0.0
        %2653 = vmatpush1.msra.mxu0 0.0
        %2654 = vmatprep.subr.mxu0 0.0
        %2655 = vmatpush1.msra.mxu0 0.0
        %2656 = vmatprep.subr.mxu0 0.0
        %2657 = vmatpush1.msra.mxu0 0.0
        %2658 = vmatprep.subr.mxu0 0.0
        %2659 = vmatpush1.msra.mxu0 0.0
        %2660 = vmatprep.subr.mxu0 0.0
        %2661 = vmatpush1.msra.mxu0 0.0
        %2662 = vmatprep.subr.mxu0 0.0
        %2663 = vmatpush1.msra.mxu0 0.0
        %2664 = vmatprep.subr.mxu0 0.0
        %2665 = vmatpush1.msra.mxu0 0.0
        %2666 = vmatprep.subr.mxu0 0.0
        %2667 = vmatpush1.msra.mxu0 0.0
        %2668 = vmatprep.subr.mxu0 0.0
        %2669 = vmatpush1.msra.mxu0 0.0
        %2670 = vmatprep.subr.mxu0 0.0
        %2671 = vmatpush1.msra.mxu0 0.0
        %2672 = vmatprep.subr.mxu0 0.0
        %2673 = vmatpush1.msra.mxu0 0.0
        %2674 = vmatprep.subr.mxu0 0.0
        %2675 = vmatpush1.msra.mxu0 0.0
        %2676 = vmatprep.subr.mxu0 0.0
        %2677 = vmatpush1.msra.mxu0 0.0
        %2678 = vmatprep.subr.mxu0 0.0
        %2679 = vmatpush1.msra.mxu0 0.0
        %2680 = vmatprep.subr.mxu0 0.0
        %2681 = vmatpush1.msra.mxu0 0.0
        %2682 = vmatprep.mubr.f32.mxu0 0.0
        %2683 = vmatmul.mubr.f32.gmra.mrb[0].mxu0 %v995
        %v2684 = vpop.f32.mrb[0].mxu0
        %v2685 = vadd.f32 %v2616, %v2684
        %v2686 = vpop.f32.mrb[0].mxu0
        %2687 = vdwg.mxu0
        %v2689 = vsel %vm906, %v2519, 0
        %v2692 = vsel %vm906, %v2602, 0
        %2694 = vmatprep.subr.mxu0 0.0
        %2695 = vmatpush1.xpose.msra.mxu0 %v2692
        %2696 = vmatprep.subr.mxu0 0.0
        %2697 = vmatpush1.xpose.msra.mxu0 0.0
        %2698 = vmatprep.subr.mxu0 0.0
        %2699 = vmatpush1.xpose.msra.mxu0 0.0
        %2700 = vmatprep.subr.mxu0 0.0
        %2701 = vmatpush1.xpose.msra.mxu0 0.0
        %2702 = vmatprep.subr.mxu0 0.0
        %2703 = vmatpush1.xpose.msra.mxu0 0.0
        %2704 = vmatprep.subr.mxu0 0.0
        %2705 = vmatpush1.xpose.msra.mxu0 0.0
        %2706 = vmatprep.subr.mxu0 0.0
        %2707 = vmatpush1.xpose.msra.mxu0 0.0
        %2708 = vmatprep.subr.mxu0 0.0
        %2709 = vmatpush1.xpose.msra.mxu0 0.0
        %2710 = vmatprep.subr.mxu0 0.0
        %2711 = vmatpush1.xpose.msra.mxu0 0.0
        %2712 = vmatprep.subr.mxu0 0.0
        %2713 = vmatpush1.xpose.msra.mxu0 0.0
        %2714 = vmatprep.subr.mxu0 0.0
        %2715 = vmatpush1.xpose.msra.mxu0 0.0
        %2716 = vmatprep.subr.mxu0 0.0
        %2717 = vmatpush1.xpose.msra.mxu0 0.0
        %2718 = vmatprep.subr.mxu0 0.0
        %2719 = vmatpush1.xpose.msra.mxu0 0.0
        %2720 = vmatprep.subr.mxu0 0.0
        %2721 = vmatpush1.xpose.msra.mxu0 0.0
        %2722 = vmatprep.subr.mxu0 0.0
        %2723 = vmatpush1.xpose.msra.mxu0 0.0
        %2724 = vmatprep.subr.mxu0 0.0
        %2725 = vmatpush1.xpose.msra.mxu0 0.0
        %2726 = vmatprep.subr.mxu0 0.0
        %2727 = vmatpush1.xpose.msra.mxu0 0.0
        %2728 = vmatprep.subr.mxu0 0.0
        %2729 = vmatpush1.xpose.msra.mxu0 0.0
        %2730 = vmatprep.subr.mxu0 0.0
        %2731 = vmatpush1.xpose.msra.mxu0 0.0
        %2732 = vmatprep.subr.mxu0 0.0
        %2733 = vmatpush1.xpose.msra.mxu0 0.0
        %2734 = vmatprep.subr.mxu0 0.0
        %2735 = vmatpush1.xpose.msra.mxu0 0.0
        %2736 = vmatprep.subr.mxu0 0.0
        %2737 = vmatpush1.xpose.msra.mxu0 0.0
        %2738 = vmatprep.subr.mxu0 0.0
        %2739 = vmatpush1.xpose.msra.mxu0 0.0
        %2740 = vmatprep.subr.mxu0 0.0
        %2741 = vmatpush1.xpose.msra.mxu0 0.0
        %2742 = vmatprep.subr.mxu0 0.0
        %2743 = vmatpush1.xpose.msra.mxu0 0.0
        %2744 = vmatprep.subr.mxu0 0.0
        %2745 = vmatpush1.xpose.msra.mxu0 0.0
        %2746 = vmatprep.subr.mxu0 0.0
        %2747 = vmatpush1.xpose.msra.mxu0 0.0
        %2748 = vmatprep.subr.mxu0 0.0
        %2749 = vmatpush1.xpose.msra.mxu0 0.0
        %2750 = vmatprep.subr.mxu0 0.0
        %2751 = vmatpush1.xpose.msra.mxu0 0.0
        %2752 = vmatprep.subr.mxu0 0.0
        %2753 = vmatpush1.xpose.msra.mxu0 0.0
        %2754 = vmatprep.subr.mxu0 0.0
        %2755 = vmatpush1.xpose.msra.mxu0 0.0
        %2756 = vmatprep.subr.mxu0 0.0
        %2757 = vmatpush1.xpose.msra.mxu0 0.0
        %2758 = vmatprep.mubr.f32.mxu0 0.0
        %2759 = vmatmul.mubr.f32.gmra.mrb[0].mxu0 %v2689
        %v2760 = vpop.f32.mrb[0].mxu0
        %v2761 = vadd.f32 0.0, %v2760
        %v2762 = vpop.f32.mrb[0].mxu0
        %2763 = vdwg.mxu0
        %v2764 = vmul.f32 %v2761, 0.35355338
        %v2765 = vsel %vm906, %v2764, -inf
        %2766 = vmax.xlane.f32.xlu0 %v2765
        %v2767 = vpop.xlane.xlu0 %2766
        %v2768 = vsub.f32 %v2764, %v2767
        %v2769 = vmul.f32 %v2768, 1.442695
        %v2770 = vpow.pop %v2769
        %v2771 = vsel %vm906, %v2770, 0.0
        %2772 = vadd.xlane.f32.xlu0 %v2771
        %v2773 = vpop.xlane.xlu0 %2772
        %v2774 = vrcp.pop %v2773
        %v2775 = vmul.f32 %v2770, %v2774
        %v2777 = vsel %vm906, %v2775, 0
        %2779 = vmatprep.subr.mxu0 0.0
        %2780 = vmatpush1.msra.mxu0 %v2685
        %2781 = vmatprep.subr.mxu0 0.0
        %2782 = vmatpush1.msra.mxu0 0.0
        %2783 = vmatprep.subr.mxu0 0.0
        %2784 = vmatpush1.msra.mxu0 0.0
        %2785 = vmatprep.subr.mxu0 0.0
        %2786 = vmatpush1.msra.mxu0 0.0
        %2787 = vmatprep.subr.mxu0 0.0
        %2788 = vmatpush1.msra.mxu0 0.0
        %2789 = vmatprep.subr.mxu0 0.0
        %2790 = vmatpush1.msra.mxu0 0.0
        %2791 = vmatprep.subr.mxu0 0.0
        %2792 = vmatpush1.msra.mxu0 0.0
        %2793 = vmatprep.subr.mxu0 0.0
        %2794 = vmatpush1.msra.mxu0 0.0
        %2795 = vmatprep.subr.mxu0 0.0
        %2796 = vmatpush1.msra.mxu0 0.0
        %2797 = vmatprep.subr.mxu0 0.0
        %2798 = vmatpush1.msra.mxu0 0.0
        %2799 = vmatprep.subr.mxu0 0.0
        %2800 = vmatpush1.msra.mxu0 0.0
        %2801 = vmatprep.subr.mxu0 0.0
        %2802 = vmatpush1.msra.mxu0 0.0
        %2803 = vmatprep.subr.mxu0 0.0
        %2804 = vmatpush1.msra.mxu0 0.0
        %2805 = vmatprep.subr.mxu0 0.0
        %2806 = vmatpush1.msra.mxu0 0.0
        %2807 = vmatprep.subr.mxu0 0.0
        %2808 = vmatpush1.msra.mxu0 0.0
        %2809 = vmatprep.subr.mxu0 0.0
        %2810 = vmatpush1.msra.mxu0 0.0
        %2811 = vmatprep.subr.mxu0 0.0
        %2812 = vmatpush1.msra.mxu0 0.0
        %2813 = vmatprep.subr.mxu0 0.0
        %2814 = vmatpush1.msra.mxu0 0.0
        %2815 = vmatprep.subr.mxu0 0.0
        %2816 = vmatpush1.msra.mxu0 0.0
        %2817 = vmatprep.subr.mxu0 0.0
        %2818 = vmatpush1.msra.mxu0 0.0
        %2819 = vmatprep.subr.mxu0 0.0
        %2820 = vmatpush1.msra.mxu0 0.0
        %2821 = vmatprep.subr.mxu0 0.0
        %2822 = vmatpush1.msra.mxu0 0.0
        %2823 = vmatprep.subr.mxu0 0.0
        %2824 = vmatpush1.msra.mxu0 0.0
        %2825 = vmatprep.subr.mxu0 0.0
        %2826 = vmatpush1.msra.mxu0 0.0
        %2827 = vmatprep.subr.mxu0 0.0
        %2828 = vmatpush1.msra.mxu0 0.0
        %2829 = vmatprep.subr.mxu0 0.0
        %2830 = vmatpush1.msra.mxu0 0.0
        %2831 = vmatprep.subr.mxu0 0.0
        %2832 = vmatpush1.msra.mxu0 0.0
        %2833 = vmatprep.subr.mxu0 0.0
        %2834 = vmatpush1.msra.mxu0 0.0
        %2835 = vmatprep.subr.mxu0 0.0
        %2836 = vmatpush1.msra.mxu0 0.0
        %2837 = vmatprep.subr.mxu0 0.0
        %2838 = vmatpush1.msra.mxu0 0.0
        %2839 = vmatprep.subr.mxu0 0.0
        %2840 = vmatpush1.msra.mxu0 0.0
        %2841 = vmatprep.subr.mxu0 0.0
        %2842 = vmatpush1.msra.mxu0 0.0
        %2843 = vmatprep.mubr.f32.mxu0 0.0
        %2844 = vmatmul.mubr.f32.gmra.mrb[0].mxu0 %v2777
        %v2845 = vpop.f32.mrb[0].mxu0
        %v2846 = vadd.f32 0.0, %v2845
        %v2847 = vpop.f32.mrb[0].mxu0
        %2848 = vdwg.mxu0
        %s2849 = scalar_lea.vmem %s19, 24
        %v2850 = vld [vmem:[%s2849] sm:$0xff]
        %v2852 = vsel %vm906, %v2846, 0
        %2854 = vmatprep.subr.mxu0 0.0
        %2855 = vmatpush1.msra.mxu0 %v2850
        %2856 = vmatprep.subr.mxu0 0.0
        %2857 = vmatpush1.msra.mxu0 0.0
        %2858 = vmatprep.subr.mxu0 0.0
        %2859 = vmatpush1.msra.mxu0 0.0
        %2860 = vmatprep.subr.mxu0 0.0
        %2861 = vmatpush1.msra.mxu0 0.0
        %2862 = vmatprep.subr.mxu0 0.0
        %2863 = vmatpush1.msra.mxu0 0.0
        %2864 = vmatprep.subr.mxu0 0.0
        %2865 = vmatpush1.msra.mxu0 0.0
        %2866 = vmatprep.subr.mxu0 0.0
        %2867 = vmatpush1.msra.mxu0 0.0
        %2868 = vmatprep.subr.mxu0 0.0
        %2869 = vmatpush1.msra.mxu0 0.0
        %2870 = vmatprep.subr.mxu0 0.0
        %2871 = vmatpush1.msra.mxu0 0.0
        %2872 = vmatprep.subr.mxu0 0.0
        %2873 = vmatpush1.msra.mxu0 0.0
        %2874 = vmatprep.subr.mxu0 0.0
        %2875 = vmatpush1.msra.mxu0 0.0
        %2876 = vmatprep.subr.mxu0 0.0
        %2877 = vmatpush1.msra.mxu0 0.0
        %2878 = vmatprep.subr.mxu0 0.0
        %2879 = vmatpush1.msra.mxu0 0.0
        %2880 = vmatprep.subr.mxu0 0.0
        %2881 = vmatpush1.msra.mxu0 0.0
        %2882 = vmatprep.subr.mxu0 0.0
        %2883 = vmatpush1.msra.mxu0 0.0
        %2884 = vmatprep.subr.mxu0 0.0
        %2885 = vmatpush1.msra.mxu0 0.0
        %2886 = vmatprep.subr.mxu0 0.0
        %2887 = vmatpush1.msra.mxu0 0.0
        %2888 = vmatprep.subr.mxu0 0.0
        %2889 = vmatpush1.msra.mxu0 0.0
        %2890 = vmatprep.subr.mxu0 0.0
        %2891 = vmatpush1.msra.mxu0 0.0
        %2892 = vmatprep.subr.mxu0 0.0
        %2893 = vmatpush1.msra.mxu0 0.0
        %2894 = vmatprep.subr.mxu0 0.0
        %2895 = vmatpush1.msra.mxu0 0.0
        %2896 = vmatprep.subr.mxu0 0.0
        %2897 = vmatpush1.msra.mxu0 0.0
        %2898 = vmatprep.subr.mxu0 0.0
        %2899 = vmatpush1.msra.mxu0 0.0
        %2900 = vmatprep.subr.mxu0 0.0
        %2901 = vmatpush1.msra.mxu0 0.0
        %2902 = vmatprep.subr.mxu0 0.0
        %2903 = vmatpush1.msra.mxu0 0.0
        %2904 = vmatprep.subr.mxu0 0.0
        %2905 = vmatpush1.msra.mxu0 0.0
        %2906 = vmatprep.subr.mxu0 0.0
        %2907 = vmatpush1.msra.mxu0 0.0
        %2908 = vmatprep.subr.mxu0 0.0
        %2909 = vmatpush1.msra.mxu0 0.0
        %2910 = vmatprep.subr.mxu0 0.0
        %2911 = vmatpush1.msra.mxu0 0.0
        %2912 = vmatprep.subr.mxu0 0.0
        %2913 = vmatpush1.msra.mxu0 0.0
        %2914 = vmatprep.subr.mxu0 0.0
        %2915 = vmatpush1.msra.mxu0 0.0
        %2916 = vmatprep.subr.mxu0 0.0
        %2917 = vmatpush1.msra.mxu0 0.0
        %2918 = vmatprep.mubr.f32.mxu0 0.0
        %2919 = vmatmul.mubr.f32.gmra.mrb[0].mxu0 %v2852
        %v2920 = vpop.f32.mrb[0].mxu0
        %v2921 = vadd.f32 0.0, %v2920
        %v2922 = vpop.f32.mrb[0].mxu0
        %2923 = vdwg.mxu0
        %v2924 = vadd.f32 %v2438, %v2921
        %v2925 = vld [vmem:[%s21] sm:$0x1]
        %v2927 = vlaneseq
        %v2928 = vshrl.u32 %v2927, 7
        %v2929 = vsub.s32 0, %v2928
        %v2930 = vrot.slane %v2925, %v2929
        %v2932 = vadd.f32 %v2924, %v2930
        %v2933 = vadd.f32 %v981, %v2932
        %v2934 = vld [vmem:[%s31] sm:$0x1]
        %s2935 = scalar_lea.vmem %s31, 1
        %v2936 = vld [vmem:[%s2935] sm:$0x1]
        %v2937 = vsel %vm993, %v2933, 0.0
        %2938 = vadd.xlane.f32.xlu0 %v2937
        %v2939 = vpop.xlane.xlu0 %2938
        %v2940 = vrcp.pop 32.0
        %v2941 = vmul.f32 %v2939, %v2940
        %v2942 = vsub.f32 %v2933, %v2941
        %v2943 = vmul.f32 %v2942, %v2942
        %v2944 = vsel %vm993, %v2943, 0.0
        %2945 = vadd.xlane.f32.xlu0 %v2944
        %v2946 = vpop.xlane.xlu0 %2945
        %v2947 = vmul.f32 %v2946, %v2940
        %v2948 = vadd.f32 %v2947, 1e-05
        %v2949 = vrsqrt.pop %v2948
        %v2950 = vmul.f32 %v2942, %v2949
        %v2952 = vlaneseq
        %v2953 = vshrl.u32 %v2952, 7
        %v2954 = vsub.s32 0, %v2953
        %v2955 = vrot.slane %v2934, %v2954
        %v2957 = vmul.f32 %v2950, %v2955
        %v2959 = vlaneseq
        %v2960 = vshrl.u32 %v2959, 7
        %v2961 = vsub.s32 0, %v2960
        %v2962 = vrot.slane %v2936, %v2961
        %v2964 = vadd.f32 %v2957, %v2962
        %v2965 = vld [vmem:[%s23] sm:$0xff]
        %v2966 = vld [vmem:[%s23 + $0x8] sm:$0xff]
        %v2967 = vld [vmem:[%s23 + $0x10] sm:$0xff]
        %v2968 = vld [vmem:[%s23 + $0x18] sm:$0xff]
        %v2969 = vld [vmem:[%s25] sm:$0x1]
        %v2971 = vlaneseq
        %v2972 = vshrl.u32 %v2971, 7
        %v2973 = vsub.s32 0, %v2972
        %v2974 = vrot.slane %v2969, %v2973
        %v2977 = vsel %vm993, %v2964, 0
        %2979 = vmatprep.subr.mxu0 0.0
        %2980 = vmatpush1.msra.mxu0 %v2965
        %2981 = vmatprep.subr.mxu0 0.0
        %2982 = vmatpush1.msra.mxu0 %v2966
        %2983 = vmatprep.subr.mxu0 0.0
        %2984 = vmatpush1.msra.mxu0 %v2967
        %2985 = vmatprep.subr.mxu0 0.0
        %2986 = vmatpush1.msra.mxu0 %v2968
        %2987 = vmatprep.subr.mxu0 0.0
        %2988 = vmatpush1.msra.mxu0 0.0
        %2989 = vmatprep.subr.mxu0 0.0
        %2990 = vmatpush1.msra.mxu0 0.0
        %2991 = vmatprep.subr.mxu0 0.0
        %2992 = vmatpush1.msra.mxu0 0.0
        %2993 = vmatprep.subr.mxu0 0.0
        %2994 = vmatpush1.msra.mxu0 0.0
        %2995 = vmatprep.subr.mxu0 0.0
        %2996 = vmatpush1.msra.mxu0 0.0
        %2997 = vmatprep.subr.mxu0 0.0
        %2998 = vmatpush1.msra.mxu0 0.0
        %2999 = vmatprep.subr.mxu0 0.0
        %3000 = vmatpush1.msra.mxu0 0.0
        %3001 = vmatprep.subr.mxu0 0.0
        %3002 = vmatpush1.msra.mxu0 0.0
        %3003 = vmatprep.subr.mxu0 0.0
        %3004 = vmatpush1.msra.mxu0 0.0
        %3005 = vmatprep.subr.mxu0 0.0
        %3006 = vmatpush1.msra.mxu0 0.0
        %3007 = vmatprep.subr.mxu0 0.0
        %3008 = vmatpush1.msra.mxu0 0.0
        %3009 = vmatprep.subr.mxu0 0.0
        %3010 = vmatpush1.msra.mxu0 0.0
        %3011 = vmatprep.subr.mxu0 0.0
        %3012 = vmatpush1.msra.mxu0 0.0
        %3013 = vmatprep.subr.mxu0 0.0
        %3014 = vmatpush1.msra.mxu0 0.0
        %3015 = vmatprep.subr.mxu0 0.0
        %3016 = vmatpush1.msra.mxu0 0.0
        %3017 = vmatprep.subr.mxu0 0.0
        %3018 = vmatpush1.msra.mxu0 0.0
        %3019 = vmatprep.subr.mxu0 0.0
        %3020 = vmatpush1.msra.mxu0 0.0
        %3021 = vmatprep.subr.mxu0 0.0
        %3022 = vmatpush1.msra.mxu0 0.0
        %3023 = vmatprep.subr.mxu0 0.0
        %3024 = vmatpush1.msra.mxu0 0.0
        %3025 = vmatprep.subr.mxu0 0.0
        %3026 = vmatpush1.msra.mxu0 0.0
        %3027 = vmatprep.subr.mxu0 0.0
        %3028 = vmatpush1.msra.mxu0 0.0
        %3029 = vmatprep.subr.mxu0 0.0
        %3030 = vmatpush1.msra.mxu0 0.0
        %3031 = vmatprep.subr.mxu0 0.0
        %3032 = vmatpush1.msra.mxu0 0.0
        %3033 = vmatprep.subr.mxu0 0.0
        %3034 = vmatpush1.msra.mxu0 0.0
        %3035 = vmatprep.subr.mxu0 0.0
        %3036 = vmatpush1.msra.mxu0 0.0
        %3037 = vmatprep.subr.mxu0 0.0
        %3038 = vmatpush1.msra.mxu0 0.0
        %3039 = vmatprep.subr.mxu0 0.0
        %3040 = vmatpush1.msra.mxu0 0.0
        %3041 = vmatprep.subr.mxu0 0.0
        %3042 = vmatpush1.msra.mxu0 0.0
        %3043 = vmatprep.mubr.f32.mxu0 0.0
        %3044 = vmatmul.mubr.f32.gmra.mrb[0].mxu0 %v2977
        %v3045 = vpop.f32.mrb[0].mxu0
        %v3046 = vadd.f32 %v2974, %v3045
        %v3047 = vpop.f32.mrb[0].mxu0
        %3048 = vdwg.mxu0
        %v3049 = vmax.f32 %v3046, 0.0
        %v3050 = vld [vmem:[%s27] sm:$0xff]
        %v3051 = vld [vmem:[%s27 + $0x8] sm:$0xff]
        %v3052 = vld [vmem:[%s27 + $0x10] sm:$0xff]
        %v3053 = vld [vmem:[%s27 + $0x18] sm:$0xff]
        %v3054 = vld [vmem:[%s27 + $0x20] sm:$0xff]
        %v3055 = vld [vmem:[%s27 + $0x28] sm:$0xff]
        %v3056 = vld [vmem:[%s27 + $0x30] sm:$0xff]
        %v3057 = vld [vmem:[%s27 + $0x38] sm:$0xff]
        %v3058 = vld [vmem:[%s29] sm:$0x1]
        %v3060 = vlaneseq
        %v3061 = vshrl.u32 %v3060, 7
        %v3062 = vsub.s32 0, %v3061
        %v3063 = vrot.slane %v3058, %v3062
        %vm3065 = vcmask 523264
        %v3067 = vsel %vm3065, %v3049, 0
        %3069 = vmatprep.subr.mxu0 0.0
        %3070 = vmatpush1.msra.mxu0 %v3050
        %3071 = vmatprep.subr.mxu0 0.0
        %3072 = vmatpush1.msra.mxu0 %v3051
        %3073 = vmatprep.subr.mxu0 0.0
        %3074 = vmatpush1.msra.mxu0 %v3052
        %3075 = vmatprep.subr.mxu0 0.0
        %3076 = vmatpush1.msra.mxu0 %v3053
        %3077 = vmatprep.subr.mxu0 0.0
        %3078 = vmatpush1.msra.mxu0 %v3054
        %3079 = vmatprep.subr.mxu0 0.0
        %3080 = vmatpush1.msra.mxu0 %v3055
        %3081 = vmatprep.subr.mxu0 0.0
        %3082 = vmatpush1.msra.mxu0 %v3056
        %3083 = vmatprep.subr.mxu0 0.0
        %3084 = vmatpush1.msra.mxu0 %v3057
        %3085 = vmatprep.subr.mxu0 0.0
        %3086 = vmatpush1.msra.mxu0 0.0
        %3087 = vmatprep.subr.mxu0 0.0
        %3088 = vmatpush1.msra.mxu0 0.0
        %3089 = vmatprep.subr.mxu0 0.0
        %3090 = vmatpush1.msra.mxu0 0.0
        %3091 = vmatprep.subr.mxu0 0.0
        %3092 = vmatpush1.msra.mxu0 0.0
        %3093 = vmatprep.subr.mxu0 0.0
        %3094 = vmatpush1.msra.mxu0 0.0
        %3095 = vmatprep.subr.mxu0 0.0
        %3096 = vmatpush1.msra.mxu0 0.0
        %3097 = vmatprep.subr.mxu0 0.0
        %3098 = vmatpush1.msra.mxu0 0.0
        %3099 = vmatprep.subr.mxu0 0.0
        %3100 = vmatpush1.msra.mxu0 0.0
        %3101 = vmatprep.subr.mxu0 0.0
        %3102 = vmatpush1.msra.mxu0 0.0
        %3103 = vmatprep.subr.mxu0 0.0
        %3104 = vmatpush1.msra.mxu0 0.0
        %3105 = vmatprep.subr.mxu0 0.0
        %3106 = vmatpush1.msra.mxu0 0.0
        %3107 = vmatprep.subr.mxu0 0.0
        %3108 = vmatpush1.msra.mxu0 0.0
        %3109 = vmatprep.subr.mxu0 0.0
        %3110 = vmatpush1.msra.mxu0 0.0
        %3111 = vmatprep.subr.mxu0 0.0
        %3112 = vmatpush1.msra.mxu0 0.0
        %3113 = vmatprep.subr.mxu0 0.0
        %3114 = vmatpush1.msra.mxu0 0.0
        %3115 = vmatprep.subr.mxu0 0.0
        %3116 = vmatpush1.msra.mxu0 0.0
        %3117 = vmatprep.subr.mxu0 0.0
        %3118 = vmatpush1.msra.mxu0 0.0
        %3119 = vmatprep.subr.mxu0 0.0
        %3120 = vmatpush1.msra.mxu0 0.0
        %3121 = vmatprep.subr.mxu0 0.0
        %3122 = vmatpush1.msra.mxu0 0.0
        %3123 = vmatprep.subr.mxu0 0.0
        %3124 = vmatpush1.msra.mxu0 0.0
        %3125 = vmatprep.subr.mxu0 0.0
        %3126 = vmatpush1.msra.mxu0 0.0
        %3127 = vmatprep.subr.mxu0 0.0
        %3128 = vmatpush1.msra.mxu0 0.0
        %3129 = vmatprep.subr.mxu0 0.0
        %3130 = vmatpush1.msra.mxu0 0.0
        %3131 = vmatprep.subr.mxu0 0.0
        %3132 = vmatpush1.msra.mxu0 0.0
        %3133 = vmatprep.mubr.f32.mxu0 0.0
        %3134 = vmatmul.mubr.f32.gmra.mrb[0].mxu0 %v3067
        %v3135 = vpop.f32.mrb[0].mxu0
        %v3136 = vadd.f32 %v3063, %v3135
        %v3137 = vpop.f32.mrb[0].mxu0
        %3138 = vdwg.mxu0
        %v3139 = vadd.f32 %v2964, %v3136
        %s3140 = scalar_lea.vmem %s31, 2
        %v3141 = vld [vmem:[%s3140] sm:$0x1]
        %s3142 = scalar_lea.vmem %s31, 3
        %v3143 = vld [vmem:[%s3142] sm:$0x1]
        %v3144 = vsel %vm993, %v3139, 0.0
        %3145 = vadd.xlane.f32.xlu0 %v3144
        %v3146 = vpop.xlane.xlu0 %3145
        %v3147 = vmul.f32 %v3146, %v2940
        %v3148 = vsub.f32 %v3139, %v3147
        %v3149 = vmul.f32 %v3148, %v3148
        %v3150 = vsel %vm993, %v3149, 0.0
        %3151 = vadd.xlane.f32.xlu0 %v3150
        %v3152 = vpop.xlane.xlu0 %3151
        %v3153 = vmul.f32 %v3152, %v2940
        %v3154 = vadd.f32 %v3153, 1e-05
        %v3155 = vrsqrt.pop %v3154
        %v3156 = vmul.f32 %v3148, %v3155
        %v3158 = vlaneseq
        %v3159 = vshrl.u32 %v3158, 7
        %v3160 = vsub.s32 0, %v3159
        %v3161 = vrot.slane %v3141, %v3160
        %v3163 = vmul.f32 %v3156, %v3161
        %v3165 = vlaneseq
        %v3166 = vshrl.u32 %v3165, 7
        %v3167 = vsub.s32 0, %v3166
        %v3168 = vrot.slane %v3143, %v3167
        %v3170 = vadd.f32 %v3163, %v3168
        %s3171 = scalar_lea.vmem %s15, 384
        %v3172 = vld [vmem:[%s3171] sm:$0xff]
        %v3173 = vld [vmem:[%s3171 + $0x8] sm:$0xff]
        %v3174 = vld [vmem:[%s3171 + $0x10] sm:$0xff]
        %v3175 = vld [vmem:[%s3171 + $0x18] sm:$0xff]
        %s3176 = scalar_lea.vmem %s17, 12
        %v3177 = vld [vmem:[%s3176] sm:$0x1]
        %v3179 = vlaneseq
        %v3180 = vshrl.u32 %v3179, 7
        %v3181 = vsub.s32 0, %v3180
        %v3182 = vrot.slane %v3177, %v3181
        %v3185 = vsel %vm993, %v3170, 0
        %3187 = vmatprep.subr.mxu0 0.0
        %3188 = vmatpush1.msra.mxu0 %v3172
        %3189 = vmatprep.subr.mxu0 0.0
        %3190 = vmatpush1.msra.mxu0 %v3173
        %3191 = vmatprep.subr.mxu0 0.0
        %3192 = vmatpush1.msra.mxu0 %v3174
        %3193 = vmatprep.subr.mxu0 0.0
        %3194 = vmatpush1.msra.mxu0 %v3175
        %3195 = vmatprep.subr.mxu0 0.0
        %3196 = vmatpush1.msra.mxu0 0.0
        %3197 = vmatprep.subr.mxu0 0.0
        %3198 = vmatpush1.msra.mxu0 0.0
        %3199 = vmatprep.subr.mxu0 0.0
        %3200 = vmatpush1.msra.mxu0 0.0
        %3201 = vmatprep.subr.mxu0 0.0
        %3202 = vmatpush1.msra.mxu0 0.0
        %3203 = vmatprep.subr.mxu0 0.0
        %3204 = vmatpush1.msra.mxu0 0.0
        %3205 = vmatprep.subr.mxu0 0.0
        %3206 = vmatpush1.msra.mxu0 0.0
        %3207 = vmatprep.subr.mxu0 0.0
        %3208 = vmatpush1.msra.mxu0 0.0
        %3209 = vmatprep.subr.mxu0 0.0
        %3210 = vmatpush1.msra.mxu0 0.0
        %3211 = vmatprep.subr.mxu0 0.0
        %3212 = vmatpush1.msra.mxu0 0.0
        %3213 = vmatprep.subr.mxu0 0.0
        %3214 = vmatpush1.msra.mxu0 0.0
        %3215 = vmatprep.subr.mxu0 0.0
        %3216 = vmatpush1.msra.mxu0 0.0
        %3217 = vmatprep.subr.mxu0 0.0
        %3218 = vmatpush1.msra.mxu0 0.0
        %3219 = vmatprep.subr.mxu0 0.0
        %3220 = vmatpush1.msra.mxu0 0.0
        %3221 = vmatprep.subr.mxu0 0.0
        %3222 = vmatpush1.msra.mxu0 0.0
        %3223 = vmatprep.subr.mxu0 0.0
        %3224 = vmatpush1.msra.mxu0 0.0
        %3225 = vmatprep.subr.mxu0 0.0
        %3226 = vmatpush1.msra.mxu0 0.0
        %3227 = vmatprep.subr.mxu0 0.0
        %3228 = vmatpush1.msra.mxu0 0.0
        %3229 = vmatprep.subr.mxu0 0.0
        %3230 = vmatpush1.msra.mxu0 0.0
        %3231 = vmatprep.subr.mxu0 0.0
        %3232 = vmatpush1.msra.mxu0 0.0
        %3233 = vmatprep.subr.mxu0 0.0
        %3234 = vmatpush1.msra.mxu0 0.0
        %3235 = vmatprep.subr.mxu0 0.0
        %3236 = vmatpush1.msra.mxu0 0.0
        %3237 = vmatprep.subr.mxu0 0.0
        %3238 = vmatpush1.msra.mxu0 0.0
        %3239 = vmatprep.subr.mxu0 0.0
        %3240 = vmatpush1.msra.mxu0 0.0
        %3241 = vmatprep.subr.mxu0 0.0
        %3242 = vmatpush1.msra.mxu0 0.0
        %3243 = vmatprep.subr.mxu0 0.0
        %3244 = vmatpush1.msra.mxu0 0.0
        %3245 = vmatprep.subr.mxu0 0.0
        %3246 = vmatpush1.msra.mxu0 0.0
        %3247 = vmatprep.subr.mxu0 0.0
        %3248 = vmatpush1.msra.mxu0 0.0
        %3249 = vmatprep.subr.mxu0 0.0
        %3250 = vmatpush1.msra.mxu0 0.0
        %3251 = vmatprep.mubr.f32.mxu0 0.0
        %3252 = vmatmul.mubr.f32.gmra.mrb[0].mxu0 %v3185
        %v3253 = vpop.f32.mrb[0].mxu0
        %v3254 = vadd.f32 %v3182, %v3253
        %v3255 = vpop.f32.mrb[0].mxu0
        %3256 = vdwg.mxu0
        %s3257 = scalar_lea.vmem %s15, 512
        %v3258 = vld [vmem:[%s3257] sm:$0xff]
        %v3259 = vld [vmem:[%s3257 + $0x8] sm:$0xff]
        %v3260 = vld [vmem:[%s3257 + $0x10] sm:$0xff]
        %v3261 = vld [vmem:[%s3257 + $0x18] sm:$0xff]
        %s3262 = scalar_lea.vmem %s17, 16
        %v3263 = vld [vmem:[%s3262] sm:$0x1]
        %v3265 = vlaneseq
        %v3266 = vshrl.u32 %v3265, 7
        %v3267 = vsub.s32 0, %v3266
        %v3268 = vrot.slane %v3263, %v3267
        %3270 = vmatprep.subr.mxu0 0.0
        %3271 = vmatpush1.msra.mxu0 %v3258
        %3272 = vmatprep.subr.mxu0 0.0
        %3273 = vmatpush1.msra.mxu0 %v3259
        %3274 = vmatprep.subr.mxu0 0.0
        %3275 = vmatpush1.msra.mxu0 %v3260
        %3276 = vmatprep.subr.mxu0 0.0
        %3277 = vmatpush1.msra.mxu0 %v3261
        %3278 = vmatprep.subr.mxu0 0.0
        %3279 = vmatpush1.msra.mxu0 0.0
        %3280 = vmatprep.subr.mxu0 0.0
        %3281 = vmatpush1.msra.mxu0 0.0
        %3282 = vmatprep.subr.mxu0 0.0
        %3283 = vmatpush1.msra.mxu0 0.0
        %3284 = vmatprep.subr.mxu0 0.0
        %3285 = vmatpush1.msra.mxu0 0.0
        %3286 = vmatprep.subr.mxu0 0.0
        %3287 = vmatpush1.msra.mxu0 0.0
        %3288 = vmatprep.subr.mxu0 0.0
        %3289 = vmatpush1.msra.mxu0 0.0
        %3290 = vmatprep.subr.mxu0 0.0
        %3291 = vmatpush1.msra.mxu0 0.0
        %3292 = vmatprep.subr.mxu0 0.0
        %3293 = vmatpush1.msra.mxu0 0.0
        %3294 = vmatprep.subr.mxu0 0.0
        %3295 = vmatpush1.msra.mxu0 0.0
        %3296 = vmatprep.subr.mxu0 0.0
        %3297 = vmatpush1.msra.mxu0 0.0
        %3298 = vmatprep.subr.mxu0 0.0
        %3299 = vmatpush1.msra.mxu0 0.0
        %3300 = vmatprep.subr.mxu0 0.0
        %3301 = vmatpush1.msra.mxu0 0.0
        %3302 = vmatprep.subr.mxu0 0.0
        %3303 = vmatpush1.msra.mxu0 0.0
        %3304 = vmatprep.subr.mxu0 0.0
        %3305 = vmatpush1.msra.mxu0 0.0
        %3306 = vmatprep.subr.mxu0 0.0
        %3307 = vmatpush1.msra.mxu0 0.0
        %3308 = vmatprep.subr.mxu0 0.0
        %3309 = vmatpush1.msra.mxu0 0.0
        %3310 = vmatprep.subr.mxu0 0.0
        %3311 = vmatpush1.msra.mxu0 0.0
        %3312 = vmatprep.subr.mxu0 0.0
        %3313 = vmatpush1.msra.mxu0 0.0
        %3314 = vmatprep.subr.mxu0 0.0
        %3315 = vmatpush1.msra.mxu0 0.0
        %3316 = vmatprep.subr.mxu0 0.0
        %3317 = vmatpush1.msra.mxu0 0.0
        %3318 = vmatprep.subr.mxu0 0.0
        %3319 = vmatpush1.msra.mxu0 0.0
        %3320 = vmatprep.subr.mxu0 0.0
        %3321 = vmatpush1.msra.mxu0 0.0
        %3322 = vmatprep.subr.mxu0 0.0
        %3323 = vmatpush1.msra.mxu0 0.0
        %3324 = vmatprep.subr.mxu0 0.0
        %3325 = vmatpush1.msra.mxu0 0.0
        %3326 = vmatprep.subr.mxu0 0.0
        %3327 = vmatpush1.msra.mxu0 0.0
        %3328 = vmatprep.subr.mxu0 0.0
        %3329 = vmatpush1.msra.mxu0 0.0
        %3330 = vmatprep.subr.mxu0 0.0
        %3331 = vmatpush1.msra.mxu0 0.0
        %3332 = vmatprep.subr.mxu0 0.0
        %3333 = vmatpush1.msra.mxu0 0.0
        %3334 = vmatprep.mubr.f32.mxu0 0.0
        %3335 = vmatmul.mubr.f32.gmra.mrb[0].mxu0 %v3185
        %v3336 = vpop.f32.mrb[0].mxu0
        %v3337 = vadd.f32 %v3268, %v3336
        %v3338 = vpop.f32.mrb[0].mxu0
        %3339 = vdwg.mxu0
        %s3340 = scalar_lea.vmem %s15, 640
        %v3341 = vld [vmem:[%s3340] sm:$0xff]
        %v3342 = vld [vmem:[%s3340 + $0x8] sm:$0xff]
        %v3343 = vld [vmem:[%s3340 + $0x10] sm:$0xff]
        %v3344 = vld [vmem:[%s3340 + $0x18] sm:$0xff]
        %s3345 = scalar_lea.vmem %s17, 20
        %v3346 = vld [vmem:[%s3345] sm:$0x1]
        %v3348 = vlaneseq
        %v3349 = vshrl.u32 %v3348, 7
        %v3350 = vsub.s32 0, %v3349
        %v3351 = vrot.slane %v3346, %v3350
        %3353 = vmatprep.subr.mxu0 0.0
        %3354 = vmatpush1.msra.mxu0 %v3341
        %3355 = vmatprep.subr.mxu0 0.0
        %3356 = vmatpush1.msra.mxu0 %v3342
        %3357 = vmatprep.subr.mxu0 0.0
        %3358 = vmatpush1.msra.mxu0 %v3343
        %3359 = vmatprep.subr.mxu0 0.0
        %3360 = vmatpush1.msra.mxu0 %v3344
        %3361 = vmatprep.subr.mxu0 0.0
        %3362 = vmatpush1.msra.mxu0 0.0
        %3363 = vmatprep.subr.mxu0 0.0
        %3364 = vmatpush1.msra.mxu0 0.0
        %3365 = vmatprep.subr.mxu0 0.0
        %3366 = vmatpush1.msra.mxu0 0.0
        %3367 = vmatprep.subr.mxu0 0.0
        %3368 = vmatpush1.msra.mxu0 0.0
        %3369 = vmatprep.subr.mxu0 0.0
        %3370 = vmatpush1.msra.mxu0 0.0
        %3371 = vmatprep.subr.mxu0 0.0
        %3372 = vmatpush1.msra.mxu0 0.0
        %3373 = vmatprep.subr.mxu0 0.0
        %3374 = vmatpush1.msra.mxu0 0.0
        %3375 = vmatprep.subr.mxu0 0.0
        %3376 = vmatpush1.msra.mxu0 0.0
        %3377 = vmatprep.subr.mxu0 0.0
        %3378 = vmatpush1.msra.mxu0 0.0
        %3379 = vmatprep.subr.mxu0 0.0
        %3380 = vmatpush1.msra.mxu0 0.0
        %3381 = vmatprep.subr.mxu0 0.0
        %3382 = vmatpush1.msra.mxu0 0.0
        %3383 = vmatprep.subr.mxu0 0.0
        %3384 = vmatpush1.msra.mxu0 0.0
        %3385 = vmatprep.subr.mxu0 0.0
        %3386 = vmatpush1.msra.mxu0 0.0
        %3387 = vmatprep.subr.mxu0 0.0
        %3388 = vmatpush1.msra.mxu0 0.0
        %3389 = vmatprep.subr.mxu0 0.0
        %3390 = vmatpush1.msra.mxu0 0.0
        %3391 = vmatprep.subr.mxu0 0.0
        %3392 = vmatpush1.msra.mxu0 0.0
        %3393 = vmatprep.subr.mxu0 0.0
        %3394 = vmatpush1.msra.mxu0 0.0
        %3395 = vmatprep.subr.mxu0 0.0
        %3396 = vmatpush1.msra.mxu0 0.0
        %3397 = vmatprep.subr.mxu0 0.0
        %3398 = vmatpush1.msra.mxu0 0.0
        %3399 = vmatprep.subr.mxu0 0.0
        %3400 = vmatpush1.msra.mxu0 0.0
        %3401 = vmatprep.subr.mxu0 0.0
        %3402 = vmatpush1.msra.mxu0 0.0
        %3403 = vmatprep.subr.mxu0 0.0
        %3404 = vmatpush1.msra.mxu0 0.0
        %3405 = vmatprep.subr.mxu0 0.0
        %3406 = vmatpush1.msra.mxu0 0.0
        %3407 = vmatprep.subr.mxu0 0.0
        %3408 = vmatpush1.msra.mxu0 0.0
        %3409 = vmatprep.subr.mxu0 0.0
        %3410 = vmatpush1.msra.mxu0 0.0
        %3411 = vmatprep.subr.mxu0 0.0
        %3412 = vmatpush1.msra.mxu0 0.0
        %3413 = vmatprep.subr.mxu0 0.0
        %3414 = vmatpush1.msra.mxu0 0.0
        %3415 = vmatprep.subr.mxu0 0.0
        %3416 = vmatpush1.msra.mxu0 0.0
        %3417 = vmatprep.mubr.f32.mxu0 0.0
        %3418 = vmatmul.mubr.f32.gmra.mrb[0].mxu0 %v3185
        %v3419 = vpop.f32.mrb[0].mxu0
        %v3420 = vadd.f32 %v3351, %v3419
        %v3421 = vpop.f32.mrb[0].mxu0
        %3422 = vdwg.mxu0
        %v3424 = vsel %vm906, %v3254, 0
        %v3427 = vsel %vm906, %v3337, 0
        %3429 = vmatprep.subr.mxu0 0.0
        %3430 = vmatpush1.xpose.msra.mxu0 %v3427
        %3431 = vmatprep.subr.mxu0 0.0
        %3432 = vmatpush1.xpose.msra.mxu0 0.0
        %3433 = vmatprep.subr.mxu0 0.0
        %3434 = vmatpush1.xpose.msra.mxu0 0.0
        %3435 = vmatprep.subr.mxu0 0.0
        %3436 = vmatpush1.xpose.msra.mxu0 0.0
        %3437 = vmatprep.subr.mxu0 0.0
        %3438 = vmatpush1.xpose.msra.mxu0 0.0
        %3439 = vmatprep.subr.mxu0 0.0
        %3440 = vmatpush1.xpose.msra.mxu0 0.0
        %3441 = vmatprep.subr.mxu0 0.0
        %3442 = vmatpush1.xpose.msra.mxu0 0.0
        %3443 = vmatprep.subr.mxu0 0.0
        %3444 = vmatpush1.xpose.msra.mxu0 0.0
        %3445 = vmatprep.subr.mxu0 0.0
        %3446 = vmatpush1.xpose.msra.mxu0 0.0
        %3447 = vmatprep.subr.mxu0 0.0
        %3448 = vmatpush1.xpose.msra.mxu0 0.0
        %3449 = vmatprep.subr.mxu0 0.0
        %3450 = vmatpush1.xpose.msra.mxu0 0.0
        %3451 = vmatprep.subr.mxu0 0.0
        %3452 = vmatpush1.xpose.msra.mxu0 0.0
        %3453 = vmatprep.subr.mxu0 0.0
        %3454 = vmatpush1.xpose.msra.mxu0 0.0
        %3455 = vmatprep.subr.mxu0 0.0
        %3456 = vmatpush1.xpose.msra.mxu0 0.0
        %3457 = vmatprep.subr.mxu0 0.0
        %3458 = vmatpush1.xpose.msra.mxu0 0.0
        %3459 = vmatprep.subr.mxu0 0.0
        %3460 = vmatpush1.xpose.msra.mxu0 0.0
        %3461 = vmatprep.subr.mxu0 0.0
        %3462 = vmatpush1.xpose.msra.mxu0 0.0
        %3463 = vmatprep.subr.mxu0 0.0
        %3464 = vmatpush1.xpose.msra.mxu0 0.0
        %3465 = vmatprep.subr.mxu0 0.0
        %3466 = vmatpush1.xpose.msra.mxu0 0.0
        %3467 = vmatprep.subr.mxu0 0.0
        %3468 = vmatpush1.xpose.msra.mxu0 0.0
        %3469 = vmatprep.subr.mxu0 0.0
        %3470 = vmatpush1.xpose.msra.mxu0 0.0
        %3471 = vmatprep.subr.mxu0 0.0
        %3472 = vmatpush1.xpose.msra.mxu0 0.0
        %3473 = vmatprep.subr.mxu0 0.0
        %3474 = vmatpush1.xpose.msra.mxu0 0.0
        %3475 = vmatprep.subr.mxu0 0.0
        %3476 = vmatpush1.xpose.msra.mxu0 0.0
        %3477 = vmatprep.subr.mxu0 0.0
        %3478 = vmatpush1.xpose.msra.mxu0 0.0
        %3479 = vmatprep.subr.mxu0 0.0
        %3480 = vmatpush1.xpose.msra.mxu0 0.0
        %3481 = vmatprep.subr.mxu0 0.0
        %3482 = vmatpush1.xpose.msra.mxu0 0.0
        %3483 = vmatprep.subr.mxu0 0.0
        %3484 = vmatpush1.xpose.msra.mxu0 0.0
        %3485 = vmatprep.subr.mxu0 0.0
        %3486 = vmatpush1.xpose.msra.mxu0 0.0
        %3487 = vmatprep.subr.mxu0 0.0
        %3488 = vmatpush1.xpose.msra.mxu0 0.0
        %3489 = vmatprep.subr.mxu0 0.0
        %3490 = vmatpush1.xpose.msra.mxu0 0.0
        %3491 = vmatprep.subr.mxu0 0.0
        %3492 = vmatpush1.xpose.msra.mxu0 0.0
        %3493 = vmatprep.mubr.f32.mxu0 0.0
        %3494 = vmatmul.mubr.f32.gmra.mrb[0].mxu0 %v3424
        %v3495 = vpop.f32.mrb[0].mxu0
        %v3496 = vadd.f32 0.0, %v3495
        %v3497 = vpop.f32.mrb[0].mxu0
        %3498 = vdwg.mxu0
        %v3499 = vmul.f32 %v3496, 0.35355338
        %v3500 = vsel %vm906, %v3499, -inf
        %3501 = vmax.xlane.f32.xlu0 %v3500
        %v3502 = vpop.xlane.xlu0 %3501
        %v3503 = vsub.f32 %v3499, %v3502
        %v3504 = vmul.f32 %v3503, 1.442695
        %v3505 = vpow.pop %v3504
        %v3506 = vsel %vm906, %v3505, 0.0
        %3507 = vadd.xlane.f32.xlu0 %v3506
        %v3508 = vpop.xlane.xlu0 %3507
        %v3509 = vrcp.pop %v3508
        %v3510 = vmul.f32 %v3505, %v3509
        %v3512 = vsel %vm906, %v3510, 0
        %3514 = vmatprep.subr.mxu0 0.0
        %3515 = vmatpush1.msra.mxu0 %v3420
        %3516 = vmatprep.subr.mxu0 0.0
        %3517 = vmatpush1.msra.mxu0 0.0
        %3518 = vmatprep.subr.mxu0 0.0
        %3519 = vmatpush1.msra.mxu0 0.0
        %3520 = vmatprep.subr.mxu0 0.0
        %3521 = vmatpush1.msra.mxu0 0.0
        %3522 = vmatprep.subr.mxu0 0.0
        %3523 = vmatpush1.msra.mxu0 0.0
        %3524 = vmatprep.subr.mxu0 0.0
        %3525 = vmatpush1.msra.mxu0 0.0
        %3526 = vmatprep.subr.mxu0 0.0
        %3527 = vmatpush1.msra.mxu0 0.0
        %3528 = vmatprep.subr.mxu0 0.0
        %3529 = vmatpush1.msra.mxu0 0.0
        %3530 = vmatprep.subr.mxu0 0.0
        %3531 = vmatpush1.msra.mxu0 0.0
        %3532 = vmatprep.subr.mxu0 0.0
        %3533 = vmatpush1.msra.mxu0 0.0
        %3534 = vmatprep.subr.mxu0 0.0
        %3535 = vmatpush1.msra.mxu0 0.0
        %3536 = vmatprep.subr.mxu0 0.0
        %3537 = vmatpush1.msra.mxu0 0.0
        %3538 = vmatprep.subr.mxu0 0.0
        %3539 = vmatpush1.msra.mxu0 0.0
        %3540 = vmatprep.subr.mxu0 0.0
        %3541 = vmatpush1.msra.mxu0 0.0
        %3542 = vmatprep.subr.mxu0 0.0
        %3543 = vmatpush1.msra.mxu0 0.0
        %3544 = vmatprep.subr.mxu0 0.0
        %3545 = vmatpush1.msra.mxu0 0.0
        %3546 = vmatprep.subr.mxu0 0.0
        %3547 = vmatpush1.msra.mxu0 0.0
        %3548 = vmatprep.subr.mxu0 0.0
        %3549 = vmatpush1.msra.mxu0 0.0
        %3550 = vmatprep.subr.mxu0 0.0
        %3551 = vmatpush1.msra.mxu0 0.0
        %3552 = vmatprep.subr.mxu0 0.0
        %3553 = vmatpush1.msra.mxu0 0.0
        %3554 = vmatprep.subr.mxu0 0.0
        %3555 = vmatpush1.msra.mxu0 0.0
        %3556 = vmatprep.subr.mxu0 0.0
        %3557 = vmatpush1.msra.mxu0 0.0
        %3558 = vmatprep.subr.mxu0 0.0
        %3559 = vmatpush1.msra.mxu0 0.0
        %3560 = vmatprep.subr.mxu0 0.0
        %3561 = vmatpush1.msra.mxu0 0.0
        %3562 = vmatprep.subr.mxu0 0.0
        %3563 = vmatpush1.msra.mxu0 0.0
        %3564 = vmatprep.subr.mxu0 0.0
        %3565 = vmatpush1.msra.mxu0 0.0
        %3566 = vmatprep.subr.mxu0 0.0
        %3567 = vmatpush1.msra.mxu0 0.0
        %3568 = vmatprep.subr.mxu0 0.0
        %3569 = vmatpush1.msra.mxu0 0.0
        %3570 = vmatprep.subr.mxu0 0.0
        %3571 = vmatpush1.msra.mxu0 0.0
        %3572 = vmatprep.subr.mxu0 0.0
        %3573 = vmatpush1.msra.mxu0 0.0
        %3574 = vmatprep.subr.mxu0 0.0
        %3575 = vmatpush1.msra.mxu0 0.0
        %3576 = vmatprep.subr.mxu0 0.0
        %3577 = vmatpush1.msra.mxu0 0.0
        %3578 = vmatprep.mubr.f32.mxu0 0.0
        %3579 = vmatmul.mubr.f32.gmra.mrb[0].mxu0 %v3512
        %v3580 = vpop.f32.mrb[0].mxu0
        %v3581 = vadd.f32 0.0, %v3580
        %v3582 = vpop.f32.mrb[0].mxu0
        %3583 = vdwg.mxu0
        %s3584 = scalar_lea.vmem %s19, 32
        %v3585 = vld [vmem:[%s3584] sm:$0xff]
        %s3586 = scalar_lea.vmem %s15, 416
        %v3587 = vld [vmem:[%s3586] sm:$0xff]
        %v3588 = vld [vmem:[%s3586 + $0x8] sm:$0xff]
        %v3589 = vld [vmem:[%s3586 + $0x10] sm:$0xff]
        %v3590 = vld [vmem:[%s3586 + $0x18] sm:$0xff]
        %s3591 = scalar_lea.vmem %s17, 13
        %v3592 = vld [vmem:[%s3591] sm:$0x1]
        %v3594 = vlaneseq
        %v3595 = vshrl.u32 %v3594, 7
        %v3596 = vsub.s32 0, %v3595
        %v3597 = vrot.slane %v3592, %v3596
        %3599 = vmatprep.subr.mxu0 0.0
        %3600 = vmatpush1.msra.mxu0 %v3587
        %3601 = vmatprep.subr.mxu0 0.0
        %3602 = vmatpush1.msra.mxu0 %v3588
        %3603 = vmatprep.subr.mxu0 0.0
        %3604 = vmatpush1.msra.mxu0 %v3589
        %3605 = vmatprep.subr.mxu0 0.0
        %3606 = vmatpush1.msra.mxu0 %v3590
        %3607 = vmatprep.subr.mxu0 0.0
        %3608 = vmatpush1.msra.mxu0 0.0
        %3609 = vmatprep.subr.mxu0 0.0
        %3610 = vmatpush1.msra.mxu0 0.0
        %3611 = vmatprep.subr.mxu0 0.0
        %3612 = vmatpush1.msra.mxu0 0.0
        %3613 = vmatprep.subr.mxu0 0.0
        %3614 = vmatpush1.msra.mxu0 0.0
        %3615 = vmatprep.subr.mxu0 0.0
        %3616 = vmatpush1.msra.mxu0 0.0
        %3617 = vmatprep.subr.mxu0 0.0
        %3618 = vmatpush1.msra.mxu0 0.0
        %3619 = vmatprep.subr.mxu0 0.0
        %3620 = vmatpush1.msra.mxu0 0.0
        %3621 = vmatprep.subr.mxu0 0.0
        %3622 = vmatpush1.msra.mxu0 0.0
        %3623 = vmatprep.subr.mxu0 0.0
        %3624 = vmatpush1.msra.mxu0 0.0
        %3625 = vmatprep.subr.mxu0 0.0
        %3626 = vmatpush1.msra.mxu0 0.0
        %3627 = vmatprep.subr.mxu0 0.0
        %3628 = vmatpush1.msra.mxu0 0.0
        %3629 = vmatprep.subr.mxu0 0.0
        %3630 = vmatpush1.msra.mxu0 0.0
        %3631 = vmatprep.subr.mxu0 0.0
        %3632 = vmatpush1.msra.mxu0 0.0
        %3633 = vmatprep.subr.mxu0 0.0
        %3634 = vmatpush1.msra.mxu0 0.0
        %3635 = vmatprep.subr.mxu0 0.0
        %3636 = vmatpush1.msra.mxu0 0.0
        %3637 = vmatprep.subr.mxu0 0.0
        %3638 = vmatpush1.msra.mxu0 0.0
        %3639 = vmatprep.subr.mxu0 0.0
        %3640 = vmatpush1.msra.mxu0 0.0
        %3641 = vmatprep.subr.mxu0 0.0
        %3642 = vmatpush1.msra.mxu0 0.0
        %3643 = vmatprep.subr.mxu0 0.0
        %3644 = vmatpush1.msra.mxu0 0.0
        %3645 = vmatprep.subr.mxu0 0.0
        %3646 = vmatpush1.msra.mxu0 0.0
        %3647 = vmatprep.subr.mxu0 0.0
        %3648 = vmatpush1.msra.mxu0 0.0
        %3649 = vmatprep.subr.mxu0 0.0
        %3650 = vmatpush1.msra.mxu0 0.0
        %3651 = vmatprep.subr.mxu0 0.0
        %3652 = vmatpush1.msra.mxu0 0.0
        %3653 = vmatprep.subr.mxu0 0.0
        %3654 = vmatpush1.msra.mxu0 0.0
        %3655 = vmatprep.subr.mxu0 0.0
        %3656 = vmatpush1.msra.mxu0 0.0
        %3657 = vmatprep.subr.mxu0 0.0
        %3658 = vmatpush1.msra.mxu0 0.0
        %3659 = vmatprep.subr.mxu0 0.0
        %3660 = vmatpush1.msra.mxu0 0.0
        %3661 = vmatprep.subr.mxu0 0.0
        %3662 = vmatpush1.msra.mxu0 0.0
        %3663 = vmatprep.mubr.f32.mxu0 0.0
        %3664 = vmatmul.mubr.f32.gmra.mrb[0].mxu0 %v3185
        %v3665 = vpop.f32.mrb[0].mxu0
        %v3666 = vadd.f32 %v3597, %v3665
        %v3667 = vpop.f32.mrb[0].mxu0
        %3668 = vdwg.mxu0
        %s3669 = scalar_lea.vmem %s15, 544
        %v3670 = vld [vmem:[%s3669] sm:$0xff]
        %v3671 = vld [vmem:[%s3669 + $0x8] sm:$0xff]
        %v3672 = vld [vmem:[%s3669 + $0x10] sm:$0xff]
        %v3673 = vld [vmem:[%s3669 + $0x18] sm:$0xff]
        %s3674 = scalar_lea.vmem %s17, 17
        %v3675 = vld [vmem:[%s3674] sm:$0x1]
        %v3677 = vlaneseq
        %v3678 = vshrl.u32 %v3677, 7
        %v3679 = vsub.s32 0, %v3678
        %v3680 = vrot.slane %v3675, %v3679
        %3682 = vmatprep.subr.mxu0 0.0
        %3683 = vmatpush1.msra.mxu0 %v3670
        %3684 = vmatprep.subr.mxu0 0.0
        %3685 = vmatpush1.msra.mxu0 %v3671
        %3686 = vmatprep.subr.mxu0 0.0
        %3687 = vmatpush1.msra.mxu0 %v3672
        %3688 = vmatprep.subr.mxu0 0.0
        %3689 = vmatpush1.msra.mxu0 %v3673
        %3690 = vmatprep.subr.mxu0 0.0
        %3691 = vmatpush1.msra.mxu0 0.0
        %3692 = vmatprep.subr.mxu0 0.0
        %3693 = vmatpush1.msra.mxu0 0.0
        %3694 = vmatprep.subr.mxu0 0.0
        %3695 = vmatpush1.msra.mxu0 0.0
        %3696 = vmatprep.subr.mxu0 0.0
        %3697 = vmatpush1.msra.mxu0 0.0
        %3698 = vmatprep.subr.mxu0 0.0
        %3699 = vmatpush1.msra.mxu0 0.0
        %3700 = vmatprep.subr.mxu0 0.0
        %3701 = vmatpush1.msra.mxu0 0.0
        %3702 = vmatprep.subr.mxu0 0.0
        %3703 = vmatpush1.msra.mxu0 0.0
        %3704 = vmatprep.subr.mxu0 0.0
        %3705 = vmatpush1.msra.mxu0 0.0
        %3706 = vmatprep.subr.mxu0 0.0
        %3707 = vmatpush1.msra.mxu0 0.0
        %3708 = vmatprep.subr.mxu0 0.0
        %3709 = vmatpush1.msra.mxu0 0.0
        %3710 = vmatprep.subr.mxu0 0.0
        %3711 = vmatpush1.msra.mxu0 0.0
        %3712 = vmatprep.subr.mxu0 0.0
        %3713 = vmatpush1.msra.mxu0 0.0
        %3714 = vmatprep.subr.mxu0 0.0
        %3715 = vmatpush1.msra.mxu0 0.0
        %3716 = vmatprep.subr.mxu0 0.0
        %3717 = vmatpush1.msra.mxu0 0.0
        %3718 = vmatprep.subr.mxu0 0.0
        %3719 = vmatpush1.msra.mxu0 0.0
        %3720 = vmatprep.subr.mxu0 0.0
        %3721 = vmatpush1.msra.mxu0 0.0
        %3722 = vmatprep.subr.mxu0 0.0
        %3723 = vmatpush1.msra.mxu0 0.0
        %3724 = vmatprep.subr.mxu0 0.0
        %3725 = vmatpush1.msra.mxu0 0.0
        %3726 = vmatprep.subr.mxu0 0.0
        %3727 = vmatpush1.msra.mxu0 0.0
        %3728 = vmatprep.subr.mxu0 0.0
        %3729 = vmatpush1.msra.mxu0 0.0
        %3730 = vmatprep.subr.mxu0 0.0
        %3731 = vmatpush1.msra.mxu0 0.0
        %3732 = vmatprep.subr.mxu0 0.0
        %3733 = vmatpush1.msra.mxu0 0.0
        %3734 = vmatprep.subr.mxu0 0.0
        %3735 = vmatpush1.msra.mxu0 0.0
        %3736 = vmatprep.subr.mxu0 0.0
        %3737 = vmatpush1.msra.mxu0 0.0
        %3738 = vmatprep.subr.mxu0 0.0
        %3739 = vmatpush1.msra.mxu0 0.0
        %3740 = vmatprep.subr.mxu0 0.0
        %3741 = vmatpush1.msra.mxu0 0.0
        %3742 = vmatprep.subr.mxu0 0.0
        %3743 = vmatpush1.msra.mxu0 0.0
        %3744 = vmatprep.subr.mxu0 0.0
        %3745 = vmatpush1.msra.mxu0 0.0
        %3746 = vmatprep.mubr.f32.mxu0 0.0
        %3747 = vmatmul.mubr.f32.gmra.mrb[0].mxu0 %v3185
        %v3748 = vpop.f32.mrb[0].mxu0
        %v3749 = vadd.f32 %v3680, %v3748
        %v3750 = vpop.f32.mrb[0].mxu0
        %3751 = vdwg.mxu0
        %s3752 = scalar_lea.vmem %s15, 672
        %v3753 = vld [vmem:[%s3752] sm:$0xff]
        %v3754 = vld [vmem:[%s3752 + $0x8] sm:$0xff]
        %v3755 = vld [vmem:[%s3752 + $0x10] sm:$0xff]
        %v3756 = vld [vmem:[%s3752 + $0x18] sm:$0xff]
        %s3757 = scalar_lea.vmem %s17, 21
        %v3758 = vld [vmem:[%s3757] sm:$0x1]
        %v3760 = vlaneseq
        %v3761 = vshrl.u32 %v3760, 7
        %v3762 = vsub.s32 0, %v3761
        %v3763 = vrot.slane %v3758, %v3762
        %3765 = vmatprep.subr.mxu0 0.0
        %3766 = vmatpush1.msra.mxu0 %v3753
        %3767 = vmatprep.subr.mxu0 0.0
        %3768 = vmatpush1.msra.mxu0 %v3754
        %3769 = vmatprep.subr.mxu0 0.0
        %3770 = vmatpush1.msra.mxu0 %v3755
        %3771 = vmatprep.subr.mxu0 0.0
        %3772 = vmatpush1.msra.mxu0 %v3756
        %3773 = vmatprep.subr.mxu0 0.0
        %3774 = vmatpush1.msra.mxu0 0.0
        %3775 = vmatprep.subr.mxu0 0.0
        %3776 = vmatpush1.msra.mxu0 0.0
        %3777 = vmatprep.subr.mxu0 0.0
        %3778 = vmatpush1.msra.mxu0 0.0
        %3779 = vmatprep.subr.mxu0 0.0
        %3780 = vmatpush1.msra.mxu0 0.0
        %3781 = vmatprep.subr.mxu0 0.0
        %3782 = vmatpush1.msra.mxu0 0.0
        %3783 = vmatprep.subr.mxu0 0.0
        %3784 = vmatpush1.msra.mxu0 0.0
        %3785 = vmatprep.subr.mxu0 0.0
        %3786 = vmatpush1.msra.mxu0 0.0
        %3787 = vmatprep.subr.mxu0 0.0
        %3788 = vmatpush1.msra.mxu0 0.0
        %3789 = vmatprep.subr.mxu0 0.0
        %3790 = vmatpush1.msra.mxu0 0.0
        %3791 = vmatprep.subr.mxu0 0.0
        %3792 = vmatpush1.msra.mxu0 0.0
        %3793 = vmatprep.subr.mxu0 0.0
        %3794 = vmatpush1.msra.mxu0 0.0
        %3795 = vmatprep.subr.mxu0 0.0
        %3796 = vmatpush1.msra.mxu0 0.0
        %3797 = vmatprep.subr.mxu0 0.0
        %3798 = vmatpush1.msra.mxu0 0.0
        %3799 = vmatprep.subr.mxu0 0.0
        %3800 = vmatpush1.msra.mxu0 0.0
        %3801 = vmatprep.subr.mxu0 0.0
        %3802 = vmatpush1.msra.mxu0 0.0
        %3803 = vmatprep.subr.mxu0 0.0
        %3804 = vmatpush1.msra.mxu0 0.0
        %3805 = vmatprep.subr.mxu0 0.0
        %3806 = vmatpush1.msra.mxu0 0.0
        %3807 = vmatprep.subr.mxu0 0.0
        %3808 = vmatpush1.msra.mxu0 0.0
        %3809 = vmatprep.subr.mxu0 0.0
        %3810 = vmatpush1.msra.mxu0 0.0
        %3811 = vmatprep.subr.mxu0 0.0
        %3812 = vmatpush1.msra.mxu0 0.0
        %3813 = vmatprep.subr.mxu0 0.0
        %3814 = vmatpush1.msra.mxu0 0.0
        %3815 = vmatprep.subr.mxu0 0.0
        %3816 = vmatpush1.msra.mxu0 0.0
        %3817 = vmatprep.subr.mxu0 0.0
        %3818 = vmatpush1.msra.mxu0 0.0
        %3819 = vmatprep.subr.mxu0 0.0
        %3820 = vmatpush1.msra.mxu0 0.0
        %3821 = vmatprep.subr.mxu0 0.0
        %3822 = vmatpush1.msra.mxu0 0.0
        %3823 = vmatprep.subr.mxu0 0.0
        %3824 = vmatpush1.msra.mxu0 0.0
        %3825 = vmatprep.subr.mxu0 0.0
        %3826 = vmatpush1.msra.mxu0 0.0
        %3827 = vmatprep.subr.mxu0 0.0
        %3828 = vmatpush1.msra.mxu0 0.0
        %3829 = vmatprep.mubr.f32.mxu0 0.0
        %3830 = vmatmul.mubr.f32.gmra.mrb[0].mxu0 %v3185
        %v3831 = vpop.f32.mrb[0].mxu0
        %v3832 = vadd.f32 %v3763, %v3831
        %v3833 = vpop.f32.mrb[0].mxu0
        %3834 = vdwg.mxu0
        %v3836 = vsel %vm906, %v3666, 0
        %v3839 = vsel %vm906, %v3749, 0
        %3841 = vmatprep.subr.mxu0 0.0
        %3842 = vmatpush1.xpose.msra.mxu0 %v3839
        %3843 = vmatprep.subr.mxu0 0.0
        %3844 = vmatpush1.xpose.msra.mxu0 0.0
        %3845 = vmatprep.subr.mxu0 0.0
        %3846 = vmatpush1.xpose.msra.mxu0 0.0
        %3847 = vmatprep.subr.mxu0 0.0
        %3848 = vmatpush1.xpose.msra.mxu0 0.0
        %3849 = vmatprep.subr.mxu0 0.0
        %3850 = vmatpush1.xpose.msra.mxu0 0.0
        %3851 = vmatprep.subr.mxu0 0.0
        %3852 = vmatpush1.xpose.msra.mxu0 0.0
        %3853 = vmatprep.subr.mxu0 0.0
        %3854 = vmatpush1.xpose.msra.mxu0 0.0
        %3855 = vmatprep.subr.mxu0 0.0
        %3856 = vmatpush1.xpose.msra.mxu0 0.0
        %3857 = vmatprep.subr.mxu0 0.0
        %3858 = vmatpush1.xpose.msra.mxu0 0.0
        %3859 = vmatprep.subr.mxu0 0.0
        %3860 = vmatpush1.xpose.msra.mxu0 0.0
        %3861 = vmatprep.subr.mxu0 0.0
        %3862 = vmatpush1.xpose.msra.mxu0 0.0
        %3863 = vmatprep.subr.mxu0 0.0
        %3864 = vmatpush1.xpose.msra.mxu0 0.0
        %3865 = vmatprep.subr.mxu0 0.0
        %3866 = vmatpush1.xpose.msra.mxu0 0.0
        %3867 = vmatprep.subr.mxu0 0.0
        %3868 = vmatpush1.xpose.msra.mxu0 0.0
        %3869 = vmatprep.subr.mxu0 0.0
        %3870 = vmatpush1.xpose.msra.mxu0 0.0
        %3871 = vmatprep.subr.mxu0 0.0
        %3872 = vmatpush1.xpose.msra.mxu0 0.0
        %3873 = vmatprep.subr.mxu0 0.0
        %3874 = vmatpush1.xpose.msra.mxu0 0.0
        %3875 = vmatprep.subr.mxu0 0.0
        %3876 = vmatpush1.xpose.msra.mxu0 0.0
        %3877 = vmatprep.subr.mxu0 0.0
        %3878 = vmatpush1.xpose.msra.mxu0 0.0
        %3879 = vmatprep.subr.mxu0 0.0
        %3880 = vmatpush1.xpose.msra.mxu0 0.0
        %3881 = vmatprep.subr.mxu0 0.0
        %3882 = vmatpush1.xpose.msra.mxu0 0.0
        %3883 = vmatprep.subr.mxu0 0.0
        %3884 = vmatpush1.xpose.msra.mxu0 0.0
        %3885 = vmatprep.subr.mxu0 0.0
        %3886 = vmatpush1.xpose.msra.mxu0 0.0
        %3887 = vmatprep.subr.mxu0 0.0
        %3888 = vmatpush1.xpose.msra.mxu0 0.0
        %3889 = vmatprep.subr.mxu0 0.0
        %3890 = vmatpush1.xpose.msra.mxu0 0.0
        %3891 = vmatprep.subr.mxu0 0.0
        %3892 = vmatpush1.xpose.msra.mxu0 0.0
        %3893 = vmatprep.subr.mxu0 0.0
        %3894 = vmatpush1.xpose.msra.mxu0 0.0
        %3895 = vmatprep.subr.mxu0 0.0
        %3896 = vmatpush1.xpose.msra.mxu0 0.0
        %3897 = vmatprep.subr.mxu0 0.0
        %3898 = vmatpush1.xpose.msra.mxu0 0.0
        %3899 = vmatprep.subr.mxu0 0.0
        %3900 = vmatpush1.xpose.msra.mxu0 0.0
        %3901 = vmatprep.subr.mxu0 0.0
        %3902 = vmatpush1.xpose.msra.mxu0 0.0
        %3903 = vmatprep.subr.mxu0 0.0
        %3904 = vmatpush1.xpose.msra.mxu0 0.0
        %3905 = vmatprep.mubr.f32.mxu0 0.0
        %3906 = vmatmul.mubr.f32.gmra.mrb[0].mxu0 %v3836
        %v3907 = vpop.f32.mrb[0].mxu0
        %v3908 = vadd.f32 0.0, %v3907
        %v3909 = vpop.f32.mrb[0].mxu0
        %3910 = vdwg.mxu0
        %v3911 = vmul.f32 %v3908, 0.35355338
        %v3912 = vsel %vm906, %v3911, -inf
        %3913 = vmax.xlane.f32.xlu0 %v3912
        %v3914 = vpop.xlane.xlu0 %3913
        %v3915 = vsub.f32 %v3911, %v3914
        %v3916 = vmul.f32 %v3915, 1.442695
        %v3917 = vpow.pop %v3916
        %v3918 = vsel %vm906, %v3917, 0.0
        %3919 = vadd.xlane.f32.xlu0 %v3918
        %v3920 = vpop.xlane.xlu0 %3919
        %v3921 = vrcp.pop %v3920
        %v3922 = vmul.f32 %v3917, %v3921
        %v3924 = vsel %vm906, %v3922, 0
        %3926 = vmatprep.subr.mxu0 0.0
        %3927 = vmatpush1.msra.mxu0 %v3832
        %3928 = vmatprep.subr.mxu0 0.0
        %3929 = vmatpush1.msra.mxu0 0.0
        %3930 = vmatprep.subr.mxu0 0.0
        %3931 = vmatpush1.msra.mxu0 0.0
        %3932 = vmatprep.subr.mxu0 0.0
        %3933 = vmatpush1.msra.mxu0 0.0
        %3934 = vmatprep.subr.mxu0 0.0
        %3935 = vmatpush1.msra.mxu0 0.0
        %3936 = vmatprep.subr.mxu0 0.0
        %3937 = vmatpush1.msra.mxu0 0.0
        %3938 = vmatprep.subr.mxu0 0.0
        %3939 = vmatpush1.msra.mxu0 0.0
        %3940 = vmatprep.subr.mxu0 0.0
        %3941 = vmatpush1.msra.mxu0 0.0
        %3942 = vmatprep.subr.mxu0 0.0
        %3943 = vmatpush1.msra.mxu0 0.0
        %3944 = vmatprep.subr.mxu0 0.0
        %3945 = vmatpush1.msra.mxu0 0.0
        %3946 = vmatprep.subr.mxu0 0.0
        %3947 = vmatpush1.msra.mxu0 0.0
        %3948 = vmatprep.subr.mxu0 0.0
        %3949 = vmatpush1.msra.mxu0 0.0
        %3950 = vmatprep.subr.mxu0 0.0
        %3951 = vmatpush1.msra.mxu0 0.0
        %3952 = vmatprep.subr.mxu0 0.0
        %3953 = vmatpush1.msra.mxu0 0.0
        %3954 = vmatprep.subr.mxu0 0.0
        %3955 = vmatpush1.msra.mxu0 0.0
        %3956 = vmatprep.subr.mxu0 0.0
        %3957 = vmatpush1.msra.mxu0 0.0
        %3958 = vmatprep.subr.mxu0 0.0
        %3959 = vmatpush1.msra.mxu0 0.0
        %3960 = vmatprep.subr.mxu0 0.0
        %3961 = vmatpush1.msra.mxu0 0.0
        %3962 = vmatprep.subr.mxu0 0.0
        %3963 = vmatpush1.msra.mxu0 0.0
        %3964 = vmatprep.subr.mxu0 0.0
        %3965 = vmatpush1.msra.mxu0 0.0
        %3966 = vmatprep.subr.mxu0 0.0
        %3967 = vmatpush1.msra.mxu0 0.0
        %3968 = vmatprep.subr.mxu0 0.0
        %3969 = vmatpush1.msra.mxu0 0.0
        %3970 = vmatprep.subr.mxu0 0.0
        %3971 = vmatpush1.msra.mxu0 0.0
        %3972 = vmatprep.subr.mxu0 0.0
        %3973 = vmatpush1.msra.mxu0 0.0
        %3974 = vmatprep.subr.mxu0 0.0
        %3975 = vmatpush1.msra.mxu0 0.0
        %3976 = vmatprep.subr.mxu0 0.0
        %3977 = vmatpush1.msra.mxu0 0.0
        %3978 = vmatprep.subr.mxu0 0.0
        %3979 = vmatpush1.msra.mxu0 0.0
        %3980 = vmatprep.subr.mxu0 0.0
        %3981 = vmatpush1.msra.mxu0 0.0
        %3982 = vmatprep.subr.mxu0 0.0
        %3983 = vmatpush1.msra.mxu0 0.0
        %3984 = vmatprep.subr.mxu0 0.0
        %3985 = vmatpush1.msra.mxu0 0.0
        %3986 = vmatprep.subr.mxu0 0.0
        %3987 = vmatpush1.msra.mxu0 0.0
        %3988 = vmatprep.subr.mxu0 0.0
        %3989 = vmatpush1.msra.mxu0 0.0
        %3990 = vmatprep.mubr.f32.mxu0 0.0
        %3991 = vmatmul.mubr.f32.gmra.mrb[0].mxu0 %v3924
        %v3992 = vpop.f32.mrb[0].mxu0
        %v3993 = vadd.f32 0.0, %v3992
        %v3994 = vpop.f32.mrb[0].mxu0
        %3995 = vdwg.mxu0
        %s3996 = scalar_lea.vmem %s19, 40
        %v3997 = vld [vmem:[%s3996] sm:$0xff]
        %v3999 = vsel %vm906, %v3993, 0
        %4001 = vmatprep.subr.mxu0 0.0
        %4002 = vmatpush1.msra.mxu0 %v3997
        %4003 = vmatprep.subr.mxu0 0.0
        %4004 = vmatpush1.msra.mxu0 0.0
        %4005 = vmatprep.subr.mxu0 0.0
        %4006 = vmatpush1.msra.mxu0 0.0
        %4007 = vmatprep.subr.mxu0 0.0
        %4008 = vmatpush1.msra.mxu0 0.0
        %4009 = vmatprep.subr.mxu0 0.0
        %4010 = vmatpush1.msra.mxu0 0.0
        %4011 = vmatprep.subr.mxu0 0.0
        %4012 = vmatpush1.msra.mxu0 0.0
        %4013 = vmatprep.subr.mxu0 0.0
        %4014 = vmatpush1.msra.mxu0 0.0
        %4015 = vmatprep.subr.mxu0 0.0
        %4016 = vmatpush1.msra.mxu0 0.0
        %4017 = vmatprep.subr.mxu0 0.0
        %4018 = vmatpush1.msra.mxu0 0.0
        %4019 = vmatprep.subr.mxu0 0.0
        %4020 = vmatpush1.msra.mxu0 0.0
        %4021 = vmatprep.subr.mxu0 0.0
        %4022 = vmatpush1.msra.mxu0 0.0
        %4023 = vmatprep.subr.mxu0 0.0
        %4024 = vmatpush1.msra.mxu0 0.0
        %4025 = vmatprep.subr.mxu0 0.0
        %4026 = vmatpush1.msra.mxu0 0.0
        %4027 = vmatprep.subr.mxu0 0.0
        %4028 = vmatpush1.msra.mxu0 0.0
        %4029 = vmatprep.subr.mxu0 0.0
        %4030 = vmatpush1.msra.mxu0 0.0
        %4031 = vmatprep.subr.mxu0 0.0
        %4032 = vmatpush1.msra.mxu0 0.0
        %4033 = vmatprep.subr.mxu0 0.0
        %4034 = vmatpush1.msra.mxu0 0.0
        %4035 = vmatprep.subr.mxu0 0.0
        %4036 = vmatpush1.msra.mxu0 0.0
        %4037 = vmatprep.subr.mxu0 0.0
        %4038 = vmatpush1.msra.mxu0 0.0
        %4039 = vmatprep.subr.mxu0 0.0
        %4040 = vmatpush1.msra.mxu0 0.0
        %4041 = vmatprep.subr.mxu0 0.0
        %4042 = vmatpush1.msra.mxu0 0.0
        %4043 = vmatprep.subr.mxu0 0.0
        %4044 = vmatpush1.msra.mxu0 0.0
        %4045 = vmatprep.subr.mxu0 0.0
        %4046 = vmatpush1.msra.mxu0 0.0
        %4047 = vmatprep.subr.mxu0 0.0
        %4048 = vmatpush1.msra.mxu0 0.0
        %4049 = vmatprep.subr.mxu0 0.0
        %4050 = vmatpush1.msra.mxu0 0.0
        %4051 = vmatprep.subr.mxu0 0.0
        %4052 = vmatpush1.msra.mxu0 0.0
        %4053 = vmatprep.subr.mxu0 0.0
        %4054 = vmatpush1.msra.mxu0 0.0
        %4055 = vmatprep.subr.mxu0 0.0
        %4056 = vmatpush1.msra.mxu0 0.0
        %4057 = vmatprep.subr.mxu0 0.0
        %4058 = vmatpush1.msra.mxu0 0.0
        %4059 = vmatprep.subr.mxu0 0.0
        %4060 = vmatpush1.msra.mxu0 0.0
        %4061 = vmatprep.subr.mxu0 0.0
        %4062 = vmatpush1.msra.mxu0 0.0
        %4063 = vmatprep.subr.mxu0 0.0
        %4064 = vmatpush1.msra.mxu0 0.0
        %4065 = vmatprep.mubr.f32.mxu0 0.0
        %4066 = vmatmul.mubr.f32.gmra.mrb[0].mxu0 %v3999
        %v4067 = vpop.f32.mrb[0].mxu0
        %v4068 = vadd.f32 0.0, %v4067
        %v4069 = vpop.f32.mrb[0].mxu0
        %4070 = vdwg.mxu0
        %v4072 = vsel %vm906, %v3581, 0
        %4074 = vmatprep.subr.mxu0 0.0
        %4075 = vmatpush1.msra.mxu0 %v3585
        %4076 = vmatprep.subr.mxu0 0.0
        %4077 = vmatpush1.msra.mxu0 0.0
        %4078 = vmatprep.subr.mxu0 0.0
        %4079 = vmatpush1.msra.mxu0 0.0
        %4080 = vmatprep.subr.mxu0 0.0
        %4081 = vmatpush1.msra.mxu0 0.0
        %4082 = vmatprep.subr.mxu0 0.0
        %4083 = vmatpush1.msra.mxu0 0.0
        %4084 = vmatprep.subr.mxu0 0.0
        %4085 = vmatpush1.msra.mxu0 0.0
        %4086 = vmatprep.subr.mxu0 0.0
        %4087 = vmatpush1.msra.mxu0 0.0
        %4088 = vmatprep.subr.mxu0 0.0
        %4089 = vmatpush1.msra.mxu0 0.0
        %4090 = vmatprep.subr.mxu0 0.0
        %4091 = vmatpush1.msra.mxu0 0.0
        %4092 = vmatprep.subr.mxu0 0.0
        %4093 = vmatpush1.msra.mxu0 0.0
        %4094 = vmatprep.subr.mxu0 0.0
        %4095 = vmatpush1.msra.mxu0 0.0
        %4096 = vmatprep.subr.mxu0 0.0
        %4097 = vmatpush1.msra.mxu0 0.0
        %4098 = vmatprep.subr.mxu0 0.0
        %4099 = vmatpush1.msra.mxu0 0.0
        %4100 = vmatprep.subr.mxu0 0.0
        %4101 = vmatpush1.msra.mxu0 0.0
        %4102 = vmatprep.subr.mxu0 0.0
        %4103 = vmatpush1.msra.mxu0 0.0
        %4104 = vmatprep.subr.mxu0 0.0
        %4105 = vmatpush1.msra.mxu0 0.0
        %4106 = vmatprep.subr.mxu0 0.0
        %4107 = vmatpush1.msra.mxu0 0.0
        %4108 = vmatprep.subr.mxu0 0.0
        %4109 = vmatpush1.msra.mxu0 0.0
        %4110 = vmatprep.subr.mxu0 0.0
        %4111 = vmatpush1.msra.mxu0 0.0
        %4112 = vmatprep.subr.mxu0 0.0
        %4113 = vmatpush1.msra.mxu0 0.0
        %4114 = vmatprep.subr.mxu0 0.0
        %4115 = vmatpush1.msra.mxu0 0.0
        %4116 = vmatprep.subr.mxu0 0.0
        %4117 = vmatpush1.msra.mxu0 0.0
        %4118 = vmatprep.subr.mxu0 0.0
        %4119 = vmatpush1.msra.mxu0 0.0
        %4120 = vmatprep.subr.mxu0 0.0
        %4121 = vmatpush1.msra.mxu0 0.0
        %4122 = vmatprep.subr.mxu0 0.0
        %4123 = vmatpush1.msra.mxu0 0.0
        %4124 = vmatprep.subr.mxu0 0.0
        %4125 = vmatpush1.msra.mxu0 0.0
        %4126 = vmatprep.subr.mxu0 0.0
        %4127 = vmatpush1.msra.mxu0 0.0
        %4128 = vmatprep.subr.mxu0 0.0
        %4129 = vmatpush1.msra.mxu0 0.0
        %4130 = vmatprep.subr.mxu0 0.0
        %4131 = vmatpush1.msra.mxu0 0.0
        %4132 = vmatprep.subr.mxu0 0.0
        %4133 = vmatpush1.msra.mxu0 0.0
        %4134 = vmatprep.subr.mxu0 0.0
        %4135 = vmatpush1.msra.mxu0 0.0
        %4136 = vmatprep.subr.mxu0 0.0
        %4137 = vmatpush1.msra.mxu0 0.0
        %4138 = vmatprep.mubr.f32.mxu0 0.0
        %4139 = vmatmul.mubr.f32.gmra.mrb[0].mxu0 %v4072
        %v4140 = vpop.f32.mrb[0].mxu0
        %v4141 = vadd.f32 %v4068, %v4140
        %v4142 = vpop.f32.mrb[0].mxu0
        %4143 = vdwg.mxu0
        %s4144 = scalar_lea.vmem %s15, 448
        %v4145 = vld [vmem:[%s4144] sm:$0xff]
        %v4146 = vld [vmem:[%s4144 + $0x8] sm:$0xff]
        %v4147 = vld [vmem:[%s4144 + $0x10] sm:$0xff]
        %v4148 = vld [vmem:[%s4144 + $0x18] sm:$0xff]
        %s4149 = scalar_lea.vmem %s17, 14
        %v4150 = vld [vmem:[%s4149] sm:$0x1]
        %v4152 = vlaneseq
        %v4153 = vshrl.u32 %v4152, 7
        %v4154 = vsub.s32 0, %v4153
        %v4155 = vrot.slane %v4150, %v4154
        %4157 = vmatprep.subr.mxu0 0.0
        %4158 = vmatpush1.msra.mxu0 %v4145
        %4159 = vmatprep.subr.mxu0 0.0
        %4160 = vmatpush1.msra.mxu0 %v4146
        %4161 = vmatprep.subr.mxu0 0.0
        %4162 = vmatpush1.msra.mxu0 %v4147
        %4163 = vmatprep.subr.mxu0 0.0
        %4164 = vmatpush1.msra.mxu0 %v4148
        %4165 = vmatprep.subr.mxu0 0.0
        %4166 = vmatpush1.msra.mxu0 0.0
        %4167 = vmatprep.subr.mxu0 0.0
        %4168 = vmatpush1.msra.mxu0 0.0
        %4169 = vmatprep.subr.mxu0 0.0
        %4170 = vmatpush1.msra.mxu0 0.0
        %4171 = vmatprep.subr.mxu0 0.0
        %4172 = vmatpush1.msra.mxu0 0.0
        %4173 = vmatprep.subr.mxu0 0.0
        %4174 = vmatpush1.msra.mxu0 0.0
        %4175 = vmatprep.subr.mxu0 0.0
        %4176 = vmatpush1.msra.mxu0 0.0
        %4177 = vmatprep.subr.mxu0 0.0
        %4178 = vmatpush1.msra.mxu0 0.0
        %4179 = vmatprep.subr.mxu0 0.0
        %4180 = vmatpush1.msra.mxu0 0.0
        %4181 = vmatprep.subr.mxu0 0.0
        %4182 = vmatpush1.msra.mxu0 0.0
        %4183 = vmatprep.subr.mxu0 0.0
        %4184 = vmatpush1.msra.mxu0 0.0
        %4185 = vmatprep.subr.mxu0 0.0
        %4186 = vmatpush1.msra.mxu0 0.0
        %4187 = vmatprep.subr.mxu0 0.0
        %4188 = vmatpush1.msra.mxu0 0.0
        %4189 = vmatprep.subr.mxu0 0.0
        %4190 = vmatpush1.msra.mxu0 0.0
        %4191 = vmatprep.subr.mxu0 0.0
        %4192 = vmatpush1.msra.mxu0 0.0
        %4193 = vmatprep.subr.mxu0 0.0
        %4194 = vmatpush1.msra.mxu0 0.0
        %4195 = vmatprep.subr.mxu0 0.0
        %4196 = vmatpush1.msra.mxu0 0.0
        %4197 = vmatprep.subr.mxu0 0.0
        %4198 = vmatpush1.msra.mxu0 0.0
        %4199 = vmatprep.subr.mxu0 0.0
        %4200 = vmatpush1.msra.mxu0 0.0
        %4201 = vmatprep.subr.mxu0 0.0
        %4202 = vmatpush1.msra.mxu0 0.0
        %4203 = vmatprep.subr.mxu0 0.0
        %4204 = vmatpush1.msra.mxu0 0.0
        %4205 = vmatprep.subr.mxu0 0.0
        %4206 = vmatpush1.msra.mxu0 0.0
        %4207 = vmatprep.subr.mxu0 0.0
        %4208 = vmatpush1.msra.mxu0 0.0
        %4209 = vmatprep.subr.mxu0 0.0
        %4210 = vmatpush1.msra.mxu0 0.0
        %4211 = vmatprep.subr.mxu0 0.0
        %4212 = vmatpush1.msra.mxu0 0.0
        %4213 = vmatprep.subr.mxu0 0.0
        %4214 = vmatpush1.msra.mxu0 0.0
        %4215 = vmatprep.subr.mxu0 0.0
        %4216 = vmatpush1.msra.mxu0 0.0
        %4217 = vmatprep.subr.mxu0 0.0
        %4218 = vmatpush1.msra.mxu0 0.0
        %4219 = vmatprep.subr.mxu0 0.0
        %4220 = vmatpush1.msra.mxu0 0.0
        %4221 = vmatprep.mubr.f32.mxu0 0.0
        %4222 = vmatmul.mubr.f32.gmra.mrb[0].mxu0 %v3185
        %v4223 = vpop.f32.mrb[0].mxu0
        %v4224 = vadd.f32 %v4155, %v4223
        %v4225 = vpop.f32.mrb[0].mxu0
        %4226 = vdwg.mxu0
        %s4227 = scalar_lea.vmem %s15, 576
        %v4228 = vld [vmem:[%s4227] sm:$0xff]
        %v4229 = vld [vmem:[%s4227 + $0x8] sm:$0xff]
        %v4230 = vld [vmem:[%s4227 + $0x10] sm:$0xff]
        %v4231 = vld [vmem:[%s4227 + $0x18] sm:$0xff]
        %s4232 = scalar_lea.vmem %s17, 18
        %v4233 = vld [vmem:[%s4232] sm:$0x1]
        %v4235 = vlaneseq
        %v4236 = vshrl.u32 %v4235, 7
        %v4237 = vsub.s32 0, %v4236
        %v4238 = vrot.slane %v4233, %v4237
        %4240 = vmatprep.subr.mxu0 0.0
        %4241 = vmatpush1.msra.mxu0 %v4228
        %4242 = vmatprep.subr.mxu0 0.0
        %4243 = vmatpush1.msra.mxu0 %v4229
        %4244 = vmatprep.subr.mxu0 0.0
        %4245 = vmatpush1.msra.mxu0 %v4230
        %4246 = vmatprep.subr.mxu0 0.0
        %4247 = vmatpush1.msra.mxu0 %v4231
        %4248 = vmatprep.subr.mxu0 0.0
        %4249 = vmatpush1.msra.mxu0 0.0
        %4250 = vmatprep.subr.mxu0 0.0
        %4251 = vmatpush1.msra.mxu0 0.0
        %4252 = vmatprep.subr.mxu0 0.0
        %4253 = vmatpush1.msra.mxu0 0.0
        %4254 = vmatprep.subr.mxu0 0.0
        %4255 = vmatpush1.msra.mxu0 0.0
        %4256 = vmatprep.subr.mxu0 0.0
        %4257 = vmatpush1.msra.mxu0 0.0
        %4258 = vmatprep.subr.mxu0 0.0
        %4259 = vmatpush1.msra.mxu0 0.0
        %4260 = vmatprep.subr.mxu0 0.0
        %4261 = vmatpush1.msra.mxu0 0.0
        %4262 = vmatprep.subr.mxu0 0.0
        %4263 = vmatpush1.msra.mxu0 0.0
        %4264 = vmatprep.subr.mxu0 0.0
        %4265 = vmatpush1.msra.mxu0 0.0
        %4266 = vmatprep.subr.mxu0 0.0
        %4267 = vmatpush1.msra.mxu0 0.0
        %4268 = vmatprep.subr.mxu0 0.0
        %4269 = vmatpush1.msra.mxu0 0.0
        %4270 = vmatprep.subr.mxu0 0.0
        %4271 = vmatpush1.msra.mxu0 0.0
        %4272 = vmatprep.subr.mxu0 0.0
        %4273 = vmatpush1.msra.mxu0 0.0
        %4274 = vmatprep.subr.mxu0 0.0
        %4275 = vmatpush1.msra.mxu0 0.0
        %4276 = vmatprep.subr.mxu0 0.0
        %4277 = vmatpush1.msra.mxu0 0.0
        %4278 = vmatprep.subr.mxu0 0.0
        %4279 = vmatpush1.msra.mxu0 0.0
        %4280 = vmatprep.subr.mxu0 0.0
        %4281 = vmatpush1.msra.mxu0 0.0
        %4282 = vmatprep.subr.mxu0 0.0
        %4283 = vmatpush1.msra.mxu0 0.0
        %4284 = vmatprep.subr.mxu0 0.0
        %4285 = vmatpush1.msra.mxu0 0.0
        %4286 = vmatprep.subr.mxu0 0.0
        %4287 = vmatpush1.msra.mxu0 0.0
        %4288 = vmatprep.subr.mxu0 0.0
        %4289 = vmatpush1.msra.mxu0 0.0
        %4290 = vmatprep.subr.mxu0 0.0
        %4291 = vmatpush1.msra.mxu0 0.0
        %4292 = vmatprep.subr.mxu0 0.0
        %4293 = vmatpush1.msra.mxu0 0.0
        %4294 = vmatprep.subr.mxu0 0.0
        %4295 = vmatpush1.msra.mxu0 0.0
        %4296 = vmatprep.subr.mxu0 0.0
        %4297 = vmatpush1.msra.mxu0 0.0
        %4298 = vmatprep.subr.mxu0 0.0
        %4299 = vmatpush1.msra.mxu0 0.0
        %4300 = vmatprep.subr.mxu0 0.0
        %4301 = vmatpush1.msra.mxu0 0.0
        %4302 = vmatprep.subr.mxu0 0.0
        %4303 = vmatpush1.msra.mxu0 0.0
        %4304 = vmatprep.mubr.f32.mxu0 0.0
        %4305 = vmatmul.mubr.f32.gmra.mrb[0].mxu0 %v3185
        %v4306 = vpop.f32.mrb[0].mxu0
        %v4307 = vadd.f32 %v4238, %v4306
        %v4308 = vpop.f32.mrb[0].mxu0
        %4309 = vdwg.mxu0
        %s4310 = scalar_lea.vmem %s15, 704
        %v4311 = vld [vmem:[%s4310] sm:$0xff]
        %v4312 = vld [vmem:[%s4310 + $0x8] sm:$0xff]
        %v4313 = vld [vmem:[%s4310 + $0x10] sm:$0xff]
        %v4314 = vld [vmem:[%s4310 + $0x18] sm:$0xff]
        %s4315 = scalar_lea.vmem %s17, 22
        %v4316 = vld [vmem:[%s4315] sm:$0x1]
        %v4318 = vlaneseq
        %v4319 = vshrl.u32 %v4318, 7
        %v4320 = vsub.s32 0, %v4319
        %v4321 = vrot.slane %v4316, %v4320
        %4323 = vmatprep.subr.mxu0 0.0
        %4324 = vmatpush1.msra.mxu0 %v4311
        %4325 = vmatprep.subr.mxu0 0.0
        %4326 = vmatpush1.msra.mxu0 %v4312
        %4327 = vmatprep.subr.mxu0 0.0
        %4328 = vmatpush1.msra.mxu0 %v4313
        %4329 = vmatprep.subr.mxu0 0.0
        %4330 = vmatpush1.msra.mxu0 %v4314
        %4331 = vmatprep.subr.mxu0 0.0
        %4332 = vmatpush1.msra.mxu0 0.0
        %4333 = vmatprep.subr.mxu0 0.0
        %4334 = vmatpush1.msra.mxu0 0.0
        %4335 = vmatprep.subr.mxu0 0.0
        %4336 = vmatpush1.msra.mxu0 0.0
        %4337 = vmatprep.subr.mxu0 0.0
        %4338 = vmatpush1.msra.mxu0 0.0
        %4339 = vmatprep.subr.mxu0 0.0
        %4340 = vmatpush1.msra.mxu0 0.0
        %4341 = vmatprep.subr.mxu0 0.0
        %4342 = vmatpush1.msra.mxu0 0.0
        %4343 = vmatprep.subr.mxu0 0.0
        %4344 = vmatpush1.msra.mxu0 0.0
        %4345 = vmatprep.subr.mxu0 0.0
        %4346 = vmatpush1.msra.mxu0 0.0
        %4347 = vmatprep.subr.mxu0 0.0
        %4348 = vmatpush1.msra.mxu0 0.0
        %4349 = vmatprep.subr.mxu0 0.0
        %4350 = vmatpush1.msra.mxu0 0.0
        %4351 = vmatprep.subr.mxu0 0.0
        %4352 = vmatpush1.msra.mxu0 0.0
        %4353 = vmatprep.subr.mxu0 0.0
        %4354 = vmatpush1.msra.mxu0 0.0
        %4355 = vmatprep.subr.mxu0 0.0
        %4356 = vmatpush1.msra.mxu0 0.0
        %4357 = vmatprep.subr.mxu0 0.0
        %4358 = vmatpush1.msra.mxu0 0.0
        %4359 = vmatprep.subr.mxu0 0.0
        %4360 = vmatpush1.msra.mxu0 0.0
        %4361 = vmatprep.subr.mxu0 0.0
        %4362 = vmatpush1.msra.mxu0 0.0
        %4363 = vmatprep.subr.mxu0 0.0
        %4364 = vmatpush1.msra.mxu0 0.0
        %4365 = vmatprep.subr.mxu0 0.0
        %4366 = vmatpush1.msra.mxu0 0.0
        %4367 = vmatprep.subr.mxu0 0.0
        %4368 = vmatpush1.msra.mxu0 0.0
        %4369 = vmatprep.subr.mxu0 0.0
        %4370 = vmatpush1.msra.mxu0 0.0
        %4371 = vmatprep.subr.mxu0 0.0
        %4372 = vmatpush1.msra.mxu0 0.0
        %4373 = vmatprep.subr.mxu0 0.0
        %4374 = vmatpush1.msra.mxu0 0.0
        %4375 = vmatprep.subr.mxu0 0.0
        %4376 = vmatpush1.msra.mxu0 0.0
        %4377 = vmatprep.subr.mxu0 0.0
        %4378 = vmatpush1.msra.mxu0 0.0
        %4379 = vmatprep.subr.mxu0 0.0
        %4380 = vmatpush1.msra.mxu0 0.0
        %4381 = vmatprep.subr.mxu0 0.0
        %4382 = vmatpush1.msra.mxu0 0.0
        %4383 = vmatprep.subr.mxu0 0.0
        %4384 = vmatpush1.msra.mxu0 0.0
        %4385 = vmatprep.subr.mxu0 0.0
        %4386 = vmatpush1.msra.mxu0 0.0
        %4387 = vmatprep.mubr.f32.mxu0 0.0
        %4388 = vmatmul.mubr.f32.gmra.mrb[0].mxu0 %v3185
        %v4389 = vpop.f32.mrb[0].mxu0
        %v4390 = vadd.f32 %v4321, %v4389
        %v4391 = vpop.f32.mrb[0].mxu0
        %4392 = vdwg.mxu0
        %v4394 = vsel %vm906, %v4224, 0
        %v4397 = vsel %vm906, %v4307, 0
        %4399 = vmatprep.subr.mxu0 0.0
        %4400 = vmatpush1.xpose.msra.mxu0 %v4397
        %4401 = vmatprep.subr.mxu0 0.0
        %4402 = vmatpush1.xpose.msra.mxu0 0.0
        %4403 = vmatprep.subr.mxu0 0.0
        %4404 = vmatpush1.xpose.msra.mxu0 0.0
        %4405 = vmatprep.subr.mxu0 0.0
        %4406 = vmatpush1.xpose.msra.mxu0 0.0
        %4407 = vmatprep.subr.mxu0 0.0
        %4408 = vmatpush1.xpose.msra.mxu0 0.0
        %4409 = vmatprep.subr.mxu0 0.0
        %4410 = vmatpush1.xpose.msra.mxu0 0.0
        %4411 = vmatprep.subr.mxu0 0.0
        %4412 = vmatpush1.xpose.msra.mxu0 0.0
        %4413 = vmatprep.subr.mxu0 0.0
        %4414 = vmatpush1.xpose.msra.mxu0 0.0
        %4415 = vmatprep.subr.mxu0 0.0
        %4416 = vmatpush1.xpose.msra.mxu0 0.0
        %4417 = vmatprep.subr.mxu0 0.0
        %4418 = vmatpush1.xpose.msra.mxu0 0.0
        %4419 = vmatprep.subr.mxu0 0.0
        %4420 = vmatpush1.xpose.msra.mxu0 0.0
        %4421 = vmatprep.subr.mxu0 0.0
        %4422 = vmatpush1.xpose.msra.mxu0 0.0
        %4423 = vmatprep.subr.mxu0 0.0
        %4424 = vmatpush1.xpose.msra.mxu0 0.0
        %4425 = vmatprep.subr.mxu0 0.0
        %4426 = vmatpush1.xpose.msra.mxu0 0.0
        %4427 = vmatprep.subr.mxu0 0.0
        %4428 = vmatpush1.xpose.msra.mxu0 0.0
        %4429 = vmatprep.subr.mxu0 0.0
        %4430 = vmatpush1.xpose.msra.mxu0 0.0
        %4431 = vmatprep.subr.mxu0 0.0
        %4432 = vmatpush1.xpose.msra.mxu0 0.0
        %4433 = vmatprep.subr.mxu0 0.0
        %4434 = vmatpush1.xpose.msra.mxu0 0.0
        %4435 = vmatprep.subr.mxu0 0.0
        %4436 = vmatpush1.xpose.msra.mxu0 0.0
        %4437 = vmatprep.subr.mxu0 0.0
        %4438 = vmatpush1.xpose.msra.mxu0 0.0
        %4439 = vmatprep.subr.mxu0 0.0
        %4440 = vmatpush1.xpose.msra.mxu0 0.0
        %4441 = vmatprep.subr.mxu0 0.0
        %4442 = vmatpush1.xpose.msra.mxu0 0.0
        %4443 = vmatprep.subr.mxu0 0.0
        %4444 = vmatpush1.xpose.msra.mxu0 0.0
        %4445 = vmatprep.subr.mxu0 0.0
        %4446 = vmatpush1.xpose.msra.mxu0 0.0
        %4447 = vmatprep.subr.mxu0 0.0
        %4448 = vmatpush1.xpose.msra.mxu0 0.0
        %4449 = vmatprep.subr.mxu0 0.0
        %4450 = vmatpush1.xpose.msra.mxu0 0.0
        %4451 = vmatprep.subr.mxu0 0.0
        %4452 = vmatpush1.xpose.msra.mxu0 0.0
        %4453 = vmatprep.subr.mxu0 0.0
        %4454 = vmatpush1.xpose.msra.mxu0 0.0
        %4455 = vmatprep.subr.mxu0 0.0
        %4456 = vmatpush1.xpose.msra.mxu0 0.0
        %4457 = vmatprep.subr.mxu0 0.0
        %4458 = vmatpush1.xpose.msra.mxu0 0.0
        %4459 = vmatprep.subr.mxu0 0.0
        %4460 = vmatpush1.xpose.msra.mxu0 0.0
        %4461 = vmatprep.subr.mxu0 0.0
        %4462 = vmatpush1.xpose.msra.mxu0 0.0
        %4463 = vmatprep.mubr.f32.mxu0 0.0
        %4464 = vmatmul.mubr.f32.gmra.mrb[0].mxu0 %v4394
        %v4465 = vpop.f32.mrb[0].mxu0
        %v4466 = vadd.f32 0.0, %v4465
        %v4467 = vpop.f32.mrb[0].mxu0
        %4468 = vdwg.mxu0
        %v4469 = vmul.f32 %v4466, 0.35355338
        %v4470 = vsel %vm906, %v4469, -inf
        %4471 = vmax.xlane.f32.xlu0 %v4470
        %v4472 = vpop.xlane.xlu0 %4471
        %v4473 = vsub.f32 %v4469, %v4472
        %v4474 = vmul.f32 %v4473, 1.442695
        %v4475 = vpow.pop %v4474
        %v4476 = vsel %vm906, %v4475, 0.0
        %4477 = vadd.xlane.f32.xlu0 %v4476
        %v4478 = vpop.xlane.xlu0 %4477
        %v4479 = vrcp.pop %v4478
        %v4480 = vmul.f32 %v4475, %v4479
        %v4482 = vsel %vm906, %v4480, 0
        %4484 = vmatprep.subr.mxu0 0.0
        %4485 = vmatpush1.msra.mxu0 %v4390
        %4486 = vmatprep.subr.mxu0 0.0
        %4487 = vmatpush1.msra.mxu0 0.0
        %4488 = vmatprep.subr.mxu0 0.0
        %4489 = vmatpush1.msra.mxu0 0.0
        %4490 = vmatprep.subr.mxu0 0.0
        %4491 = vmatpush1.msra.mxu0 0.0
        %4492 = vmatprep.subr.mxu0 0.0
        %4493 = vmatpush1.msra.mxu0 0.0
        %4494 = vmatprep.subr.mxu0 0.0
        %4495 = vmatpush1.msra.mxu0 0.0
        %4496 = vmatprep.subr.mxu0 0.0
        %4497 = vmatpush1.msra.mxu0 0.0
        %4498 = vmatprep.subr.mxu0 0.0
        %4499 = vmatpush1.msra.mxu0 0.0
        %4500 = vmatprep.subr.mxu0 0.0
        %4501 = vmatpush1.msra.mxu0 0.0
        %4502 = vmatprep.subr.mxu0 0.0
        %4503 = vmatpush1.msra.mxu0 0.0
        %4504 = vmatprep.subr.mxu0 0.0
        %4505 = vmatpush1.msra.mxu0 0.0
        %4506 = vmatprep.subr.mxu0 0.0
        %4507 = vmatpush1.msra.mxu0 0.0
        %4508 = vmatprep.subr.mxu0 0.0
        %4509 = vmatpush1.msra.mxu0 0.0
        %4510 = vmatprep.subr.mxu0 0.0
        %4511 = vmatpush1.msra.mxu0 0.0
        %4512 = vmatprep.subr.mxu0 0.0
        %4513 = vmatpush1.msra.mxu0 0.0
        %4514 = vmatprep.subr.mxu0 0.0
        %4515 = vmatpush1.msra.mxu0 0.0
        %4516 = vmatprep.subr.mxu0 0.0
        %4517 = vmatpush1.msra.mxu0 0.0
        %4518 = vmatprep.subr.mxu0 0.0
        %4519 = vmatpush1.msra.mxu0 0.0
        %4520 = vmatprep.subr.mxu0 0.0
        %4521 = vmatpush1.msra.mxu0 0.0
        %4522 = vmatprep.subr.mxu0 0.0
        %4523 = vmatpush1.msra.mxu0 0.0
        %4524 = vmatprep.subr.mxu0 0.0
        %4525 = vmatpush1.msra.mxu0 0.0
        %4526 = vmatprep.subr.mxu0 0.0
        %4527 = vmatpush1.msra.mxu0 0.0
        %4528 = vmatprep.subr.mxu0 0.0
        %4529 = vmatpush1.msra.mxu0 0.0
        %4530 = vmatprep.subr.mxu0 0.0
        %4531 = vmatpush1.msra.mxu0 0.0
        %4532 = vmatprep.subr.mxu0 0.0
        %4533 = vmatpush1.msra.mxu0 0.0
        %4534 = vmatprep.subr.mxu0 0.0
        %4535 = vmatpush1.msra.mxu0 0.0
        %4536 = vmatprep.subr.mxu0 0.0
        %4537 = vmatpush1.msra.mxu0 0.0
        %4538 = vmatprep.subr.mxu0 0.0
        %4539 = vmatpush1.msra.mxu0 0.0
        %4540 = vmatprep.subr.mxu0 0.0
        %4541 = vmatpush1.msra.mxu0 0.0
        %4542 = vmatprep.subr.mxu0 0.0
        %4543 = vmatpush1.msra.mxu0 0.0
        %4544 = vmatprep.subr.mxu0 0.0
        %4545 = vmatpush1.msra.mxu0 0.0
        %4546 = vmatprep.subr.mxu0 0.0
        %4547 = vmatpush1.msra.mxu0 0.0
        %4548 = vmatprep.mubr.f32.mxu0 0.0
        %4549 = vmatmul.mubr.f32.gmra.mrb[0].mxu0 %v4482
        %v4550 = vpop.f32.mrb[0].mxu0
        %v4551 = vadd.f32 0.0, %v4550
        %v4552 = vpop.f32.mrb[0].mxu0
        %4553 = vdwg.mxu0
        %s4554 = scalar_lea.vmem %s19, 48
        %v4555 = vld [vmem:[%s4554] sm:$0xff]
        %v4557 = vsel %vm906, %v4551, 0
        %4559 = vmatprep.subr.mxu0 0.0
        %4560 = vmatpush1.msra.mxu0 %v4555
        %4561 = vmatprep.subr.mxu0 0.0
        %4562 = vmatpush1.msra.mxu0 0.0
        %4563 = vmatprep.subr.mxu0 0.0
        %4564 = vmatpush1.msra.mxu0 0.0
        %4565 = vmatprep.subr.mxu0 0.0
        %4566 = vmatpush1.msra.mxu0 0.0
        %4567 = vmatprep.subr.mxu0 0.0
        %4568 = vmatpush1.msra.mxu0 0.0
        %4569 = vmatprep.subr.mxu0 0.0
        %4570 = vmatpush1.msra.mxu0 0.0
        %4571 = vmatprep.subr.mxu0 0.0
        %4572 = vmatpush1.msra.mxu0 0.0
        %4573 = vmatprep.subr.mxu0 0.0
        %4574 = vmatpush1.msra.mxu0 0.0
        %4575 = vmatprep.subr.mxu0 0.0
        %4576 = vmatpush1.msra.mxu0 0.0
        %4577 = vmatprep.subr.mxu0 0.0
        %4578 = vmatpush1.msra.mxu0 0.0
        %4579 = vmatprep.subr.mxu0 0.0
        %4580 = vmatpush1.msra.mxu0 0.0
        %4581 = vmatprep.subr.mxu0 0.0
        %4582 = vmatpush1.msra.mxu0 0.0
        %4583 = vmatprep.subr.mxu0 0.0
        %4584 = vmatpush1.msra.mxu0 0.0
        %4585 = vmatprep.subr.mxu0 0.0
        %4586 = vmatpush1.msra.mxu0 0.0
        %4587 = vmatprep.subr.mxu0 0.0
        %4588 = vmatpush1.msra.mxu0 0.0
        %4589 = vmatprep.subr.mxu0 0.0
        %4590 = vmatpush1.msra.mxu0 0.0
        %4591 = vmatprep.subr.mxu0 0.0
        %4592 = vmatpush1.msra.mxu0 0.0
        %4593 = vmatprep.subr.mxu0 0.0
        %4594 = vmatpush1.msra.mxu0 0.0
        %4595 = vmatprep.subr.mxu0 0.0
        %4596 = vmatpush1.msra.mxu0 0.0
        %4597 = vmatprep.subr.mxu0 0.0
        %4598 = vmatpush1.msra.mxu0 0.0
        %4599 = vmatprep.subr.mxu0 0.0
        %4600 = vmatpush1.msra.mxu0 0.0
        %4601 = vmatprep.subr.mxu0 0.0
        %4602 = vmatpush1.msra.mxu0 0.0
        %4603 = vmatprep.subr.mxu0 0.0
        %4604 = vmatpush1.msra.mxu0 0.0
        %4605 = vmatprep.subr.mxu0 0.0
        %4606 = vmatpush1.msra.mxu0 0.0
        %4607 = vmatprep.subr.mxu0 0.0
        %4608 = vmatpush1.msra.mxu0 0.0
        %4609 = vmatprep.subr.mxu0 0.0
        %4610 = vmatpush1.msra.mxu0 0.0
        %4611 = vmatprep.subr.mxu0 0.0
        %4612 = vmatpush1.msra.mxu0 0.0
        %4613 = vmatprep.subr.mxu0 0.0
        %4614 = vmatpush1.msra.mxu0 0.0
        %4615 = vmatprep.subr.mxu0 0.0
        %4616 = vmatpush1.msra.mxu0 0.0
        %4617 = vmatprep.subr.mxu0 0.0
        %4618 = vmatpush1.msra.mxu0 0.0
        %4619 = vmatprep.subr.mxu0 0.0
        %4620 = vmatpush1.msra.mxu0 0.0
        %4621 = vmatprep.subr.mxu0 0.0
        %4622 = vmatpush1.msra.mxu0 0.0
        %4623 = vmatprep.mubr.f32.mxu0 0.0
        %4624 = vmatmul.mubr.f32.gmra.mrb[0].mxu0 %v4557
        %v4625 = vpop.f32.mrb[0].mxu0
        %v4626 = vadd.f32 0.0, %v4625
        %v4627 = vpop.f32.mrb[0].mxu0
        %4628 = vdwg.mxu0
        %v4629 = vadd.f32 %v4141, %v4626
        %s4630 = scalar_lea.vmem %s15, 480
        %v4631 = vld [vmem:[%s4630] sm:$0xff]
        %v4632 = vld [vmem:[%s4630 + $0x8] sm:$0xff]
        %v4633 = vld [vmem:[%s4630 + $0x10] sm:$0xff]
        %v4634 = vld [vmem:[%s4630 + $0x18] sm:$0xff]
        %s4635 = scalar_lea.vmem %s17, 15
        %v4636 = vld [vmem:[%s4635] sm:$0x1]
        %v4638 = vlaneseq
        %v4639 = vshrl.u32 %v4638, 7
        %v4640 = vsub.s32 0, %v4639
        %v4641 = vrot.slane %v4636, %v4640
        %4643 = vmatprep.subr.mxu0 0.0
        %4644 = vmatpush1.msra.mxu0 %v4631
        %4645 = vmatprep.subr.mxu0 0.0
        %4646 = vmatpush1.msra.mxu0 %v4632
        %4647 = vmatprep.subr.mxu0 0.0
        %4648 = vmatpush1.msra.mxu0 %v4633
        %4649 = vmatprep.subr.mxu0 0.0
        %4650 = vmatpush1.msra.mxu0 %v4634
        %4651 = vmatprep.subr.mxu0 0.0
        %4652 = vmatpush1.msra.mxu0 0.0
        %4653 = vmatprep.subr.mxu0 0.0
        %4654 = vmatpush1.msra.mxu0 0.0
        %4655 = vmatprep.subr.mxu0 0.0
        %4656 = vmatpush1.msra.mxu0 0.0
        %4657 = vmatprep.subr.mxu0 0.0
        %4658 = vmatpush1.msra.mxu0 0.0
        %4659 = vmatprep.subr.mxu0 0.0
        %4660 = vmatpush1.msra.mxu0 0.0
        %4661 = vmatprep.subr.mxu0 0.0
        %4662 = vmatpush1.msra.mxu0 0.0
        %4663 = vmatprep.subr.mxu0 0.0
        %4664 = vmatpush1.msra.mxu0 0.0
        %4665 = vmatprep.subr.mxu0 0.0
        %4666 = vmatpush1.msra.mxu0 0.0
        %4667 = vmatprep.subr.mxu0 0.0
        %4668 = vmatpush1.msra.mxu0 0.0
        %4669 = vmatprep.subr.mxu0 0.0
        %4670 = vmatpush1.msra.mxu0 0.0
        %4671 = vmatprep.subr.mxu0 0.0
        %4672 = vmatpush1.msra.mxu0 0.0
        %4673 = vmatprep.subr.mxu0 0.0
        %4674 = vmatpush1.msra.mxu0 0.0
        %4675 = vmatprep.subr.mxu0 0.0
        %4676 = vmatpush1.msra.mxu0 0.0
        %4677 = vmatprep.subr.mxu0 0.0
        %4678 = vmatpush1.msra.mxu0 0.0
        %4679 = vmatprep.subr.mxu0 0.0
        %4680 = vmatpush1.msra.mxu0 0.0
        %4681 = vmatprep.subr.mxu0 0.0
        %4682 = vmatpush1.msra.mxu0 0.0
        %4683 = vmatprep.subr.mxu0 0.0
        %4684 = vmatpush1.msra.mxu0 0.0
        %4685 = vmatprep.subr.mxu0 0.0
        %4686 = vmatpush1.msra.mxu0 0.0
        %4687 = vmatprep.subr.mxu0 0.0
        %4688 = vmatpush1.msra.mxu0 0.0
        %4689 = vmatprep.subr.mxu0 0.0
        %4690 = vmatpush1.msra.mxu0 0.0
        %4691 = vmatprep.subr.mxu0 0.0
        %4692 = vmatpush1.msra.mxu0 0.0
        %4693 = vmatprep.subr.mxu0 0.0
        %4694 = vmatpush1.msra.mxu0 0.0
        %4695 = vmatprep.subr.mxu0 0.0
        %4696 = vmatpush1.msra.mxu0 0.0
        %4697 = vmatprep.subr.mxu0 0.0
        %4698 = vmatpush1.msra.mxu0 0.0
        %4699 = vmatprep.subr.mxu0 0.0
        %4700 = vmatpush1.msra.mxu0 0.0
        %4701 = vmatprep.subr.mxu0 0.0
        %4702 = vmatpush1.msra.mxu0 0.0
        %4703 = vmatprep.subr.mxu0 0.0
        %4704 = vmatpush1.msra.mxu0 0.0
        %4705 = vmatprep.subr.mxu0 0.0
        %4706 = vmatpush1.msra.mxu0 0.0
        %4707 = vmatprep.mubr.f32.mxu0 0.0
        %4708 = vmatmul.mubr.f32.gmra.mrb[0].mxu0 %v3185
        %v4709 = vpop.f32.mrb[0].mxu0
        %v4710 = vadd.f32 %v4641, %v4709
        %v4711 = vpop.f32.mrb[0].mxu0
        %4712 = vdwg.mxu0
        %s4713 = scalar_lea.vmem %s15, 608
        %v4714 = vld [vmem:[%s4713] sm:$0xff]
        %v4715 = vld [vmem:[%s4713 + $0x8] sm:$0xff]
        %v4716 = vld [vmem:[%s4713 + $0x10] sm:$0xff]
        %v4717 = vld [vmem:[%s4713 + $0x18] sm:$0xff]
        %s4718 = scalar_lea.vmem %s17, 19
        %v4719 = vld [vmem:[%s4718] sm:$0x1]
        %v4721 = vlaneseq
        %v4722 = vshrl.u32 %v4721, 7
        %v4723 = vsub.s32 0, %v4722
        %v4724 = vrot.slane %v4719, %v4723
        %4726 = vmatprep.subr.mxu0 0.0
        %4727 = vmatpush1.msra.mxu0 %v4714
        %4728 = vmatprep.subr.mxu0 0.0
        %4729 = vmatpush1.msra.mxu0 %v4715
        %4730 = vmatprep.subr.mxu0 0.0
        %4731 = vmatpush1.msra.mxu0 %v4716
        %4732 = vmatprep.subr.mxu0 0.0
        %4733 = vmatpush1.msra.mxu0 %v4717
        %4734 = vmatprep.subr.mxu0 0.0
        %4735 = vmatpush1.msra.mxu0 0.0
        %4736 = vmatprep.subr.mxu0 0.0
        %4737 = vmatpush1.msra.mxu0 0.0
        %4738 = vmatprep.subr.mxu0 0.0
        %4739 = vmatpush1.msra.mxu0 0.0
        %4740 = vmatprep.subr.mxu0 0.0
        %4741 = vmatpush1.msra.mxu0 0.0
        %4742 = vmatprep.subr.mxu0 0.0
        %4743 = vmatpush1.msra.mxu0 0.0
        %4744 = vmatprep.subr.mxu0 0.0
        %4745 = vmatpush1.msra.mxu0 0.0
        %4746 = vmatprep.subr.mxu0 0.0
        %4747 = vmatpush1.msra.mxu0 0.0
        %4748 = vmatprep.subr.mxu0 0.0
        %4749 = vmatpush1.msra.mxu0 0.0
        %4750 = vmatprep.subr.mxu0 0.0
        %4751 = vmatpush1.msra.mxu0 0.0
        %4752 = vmatprep.subr.mxu0 0.0
        %4753 = vmatpush1.msra.mxu0 0.0
        %4754 = vmatprep.subr.mxu0 0.0
        %4755 = vmatpush1.msra.mxu0 0.0
        %4756 = vmatprep.subr.mxu0 0.0
        %4757 = vmatpush1.msra.mxu0 0.0
        %4758 = vmatprep.subr.mxu0 0.0
        %4759 = vmatpush1.msra.mxu0 0.0
        %4760 = vmatprep.subr.mxu0 0.0
        %4761 = vmatpush1.msra.mxu0 0.0
        %4762 = vmatprep.subr.mxu0 0.0
        %4763 = vmatpush1.msra.mxu0 0.0
        %4764 = vmatprep.subr.mxu0 0.0
        %4765 = vmatpush1.msra.mxu0 0.0
        %4766 = vmatprep.subr.mxu0 0.0
        %4767 = vmatpush1.msra.mxu0 0.0
        %4768 = vmatprep.subr.mxu0 0.0
        %4769 = vmatpush1.msra.mxu0 0.0
        %4770 = vmatprep.subr.mxu0 0.0
        %4771 = vmatpush1.msra.mxu0 0.0
        %4772 = vmatprep.subr.mxu0 0.0
        %4773 = vmatpush1.msra.mxu0 0.0
        %4774 = vmatprep.subr.mxu0 0.0
        %4775 = vmatpush1.msra.mxu0 0.0
        %4776 = vmatprep.subr.mxu0 0.0
        %4777 = vmatpush1.msra.mxu0 0.0
        %4778 = vmatprep.subr.mxu0 0.0
        %4779 = vmatpush1.msra.mxu0 0.0
        %4780 = vmatprep.subr.mxu0 0.0
        %4781 = vmatpush1.msra.mxu0 0.0
        %4782 = vmatprep.subr.mxu0 0.0
        %4783 = vmatpush1.msra.mxu0 0.0
        %4784 = vmatprep.subr.mxu0 0.0
        %4785 = vmatpush1.msra.mxu0 0.0
        %4786 = vmatprep.subr.mxu0 0.0
        %4787 = vmatpush1.msra.mxu0 0.0
        %4788 = vmatprep.subr.mxu0 0.0
        %4789 = vmatpush1.msra.mxu0 0.0
        %4790 = vmatprep.mubr.f32.mxu0 0.0
        %4791 = vmatmul.mubr.f32.gmra.mrb[0].mxu0 %v3185
        %v4792 = vpop.f32.mrb[0].mxu0
        %v4793 = vadd.f32 %v4724, %v4792
        %v4794 = vpop.f32.mrb[0].mxu0
        %4795 = vdwg.mxu0
        %s4796 = scalar_lea.vmem %s15, 736
        %v4797 = vld [vmem:[%s4796] sm:$0xff]
        %v4798 = vld [vmem:[%s4796 + $0x8] sm:$0xff]
        %v4799 = vld [vmem:[%s4796 + $0x10] sm:$0xff]
        %v4800 = vld [vmem:[%s4796 + $0x18] sm:$0xff]
        %s4801 = scalar_lea.vmem %s17, 23
        %v4802 = vld [vmem:[%s4801] sm:$0x1]
        %v4804 = vlaneseq
        %v4805 = vshrl.u32 %v4804, 7
        %v4806 = vsub.s32 0, %v4805
        %v4807 = vrot.slane %v4802, %v4806
        %4809 = vmatprep.subr.mxu0 0.0
        %4810 = vmatpush1.msra.mxu0 %v4797
        %4811 = vmatprep.subr.mxu0 0.0
        %4812 = vmatpush1.msra.mxu0 %v4798
        %4813 = vmatprep.subr.mxu0 0.0
        %4814 = vmatpush1.msra.mxu0 %v4799
        %4815 = vmatprep.subr.mxu0 0.0
        %4816 = vmatpush1.msra.mxu0 %v4800
        %4817 = vmatprep.subr.mxu0 0.0
        %4818 = vmatpush1.msra.mxu0 0.0
        %4819 = vmatprep.subr.mxu0 0.0
        %4820 = vmatpush1.msra.mxu0 0.0
        %4821 = vmatprep.subr.mxu0 0.0
        %4822 = vmatpush1.msra.mxu0 0.0
        %4823 = vmatprep.subr.mxu0 0.0
        %4824 = vmatpush1.msra.mxu0 0.0
        %4825 = vmatprep.subr.mxu0 0.0
        %4826 = vmatpush1.msra.mxu0 0.0
        %4827 = vmatprep.subr.mxu0 0.0
        %4828 = vmatpush1.msra.mxu0 0.0
        %4829 = vmatprep.subr.mxu0 0.0
        %4830 = vmatpush1.msra.mxu0 0.0
        %4831 = vmatprep.subr.mxu0 0.0
        %4832 = vmatpush1.msra.mxu0 0.0
        %4833 = vmatprep.subr.mxu0 0.0
        %4834 = vmatpush1.msra.mxu0 0.0
        %4835 = vmatprep.subr.mxu0 0.0
        %4836 = vmatpush1.msra.mxu0 0.0
        %4837 = vmatprep.subr.mxu0 0.0
        %4838 = vmatpush1.msra.mxu0 0.0
        %4839 = vmatprep.subr.mxu0 0.0
        %4840 = vmatpush1.msra.mxu0 0.0
        %4841 = vmatprep.subr.mxu0 0.0
        %4842 = vmatpush1.msra.mxu0 0.0
        %4843 = vmatprep.subr.mxu0 0.0
        %4844 = vmatpush1.msra.mxu0 0.0
        %4845 = vmatprep.subr.mxu0 0.0
        %4846 = vmatpush1.msra.mxu0 0.0
        %4847 = vmatprep.subr.mxu0 0.0
        %4848 = vmatpush1.msra.mxu0 0.0
        %4849 = vmatprep.subr.mxu0 0.0
        %4850 = vmatpush1.msra.mxu0 0.0
        %4851 = vmatprep.subr.mxu0 0.0
        %4852 = vmatpush1.msra.mxu0 0.0
        %4853 = vmatprep.subr.mxu0 0.0
        %4854 = vmatpush1.msra.mxu0 0.0
        %4855 = vmatprep.subr.mxu0 0.0
        %4856 = vmatpush1.msra.mxu0 0.0
        %4857 = vmatprep.subr.mxu0 0.0
        %4858 = vmatpush1.msra.mxu0 0.0
        %4859 = vmatprep.subr.mxu0 0.0
        %4860 = vmatpush1.msra.mxu0 0.0
        %4861 = vmatprep.subr.mxu0 0.0
        %4862 = vmatpush1.msra.mxu0 0.0
        %4863 = vmatprep.subr.mxu0 0.0
        %4864 = vmatpush1.msra.mxu0 0.0
        %4865 = vmatprep.subr.mxu0 0.0
        %4866 = vmatpush1.msra.mxu0 0.0
        %4867 = vmatprep.subr.mxu0 0.0
        %4868 = vmatpush1.msra.mxu0 0.0
        %4869 = vmatprep.subr.mxu0 0.0
        %4870 = vmatpush1.msra.mxu0 0.0
        %4871 = vmatprep.subr.mxu0 0.0
        %4872 = vmatpush1.msra.mxu0 0.0
        %4873 = vmatprep.mubr.f32.mxu0 0.0
        %4874 = vmatmul.mubr.f32.gmra.mrb[0].mxu0 %v3185
        %v4875 = vpop.f32.mrb[0].mxu0
        %v4876 = vadd.f32 %v4807, %v4875
        %v4877 = vpop.f32.mrb[0].mxu0
        %4878 = vdwg.mxu0
        %v4880 = vsel %vm906, %v4710, 0
        %v4883 = vsel %vm906, %v4793, 0
        %4885 = vmatprep.subr.mxu0 0.0
        %4886 = vmatpush1.xpose.msra.mxu0 %v4883
        %4887 = vmatprep.subr.mxu0 0.0
        %4888 = vmatpush1.xpose.msra.mxu0 0.0
        %4889 = vmatprep.subr.mxu0 0.0
        %4890 = vmatpush1.xpose.msra.mxu0 0.0
        %4891 = vmatprep.subr.mxu0 0.0
        %4892 = vmatpush1.xpose.msra.mxu0 0.0
        %4893 = vmatprep.subr.mxu0 0.0
        %4894 = vmatpush1.xpose.msra.mxu0 0.0
        %4895 = vmatprep.subr.mxu0 0.0
        %4896 = vmatpush1.xpose.msra.mxu0 0.0
        %4897 = vmatprep.subr.mxu0 0.0
        %4898 = vmatpush1.xpose.msra.mxu0 0.0
        %4899 = vmatprep.subr.mxu0 0.0
        %4900 = vmatpush1.xpose.msra.mxu0 0.0
        %4901 = vmatprep.subr.mxu0 0.0
        %4902 = vmatpush1.xpose.msra.mxu0 0.0
        %4903 = vmatprep.subr.mxu0 0.0
        %4904 = vmatpush1.xpose.msra.mxu0 0.0
        %4905 = vmatprep.subr.mxu0 0.0
        %4906 = vmatpush1.xpose.msra.mxu0 0.0
        %4907 = vmatprep.subr.mxu0 0.0
        %4908 = vmatpush1.xpose.msra.mxu0 0.0
        %4909 = vmatprep.subr.mxu0 0.0
        %4910 = vmatpush1.xpose.msra.mxu0 0.0
        %4911 = vmatprep.subr.mxu0 0.0
        %4912 = vmatpush1.xpose.msra.mxu0 0.0
        %4913 = vmatprep.subr.mxu0 0.0
        %4914 = vmatpush1.xpose.msra.mxu0 0.0
        %4915 = vmatprep.subr.mxu0 0.0
        %4916 = vmatpush1.xpose.msra.mxu0 0.0
        %4917 = vmatprep.subr.mxu0 0.0
        %4918 = vmatpush1.xpose.msra.mxu0 0.0
        %4919 = vmatprep.subr.mxu0 0.0
        %4920 = vmatpush1.xpose.msra.mxu0 0.0
        %4921 = vmatprep.subr.mxu0 0.0
        %4922 = vmatpush1.xpose.msra.mxu0 0.0
        %4923 = vmatprep.subr.mxu0 0.0
        %4924 = vmatpush1.xpose.msra.mxu0 0.0
        %4925 = vmatprep.subr.mxu0 0.0
        %4926 = vmatpush1.xpose.msra.mxu0 0.0
        %4927 = vmatprep.subr.mxu0 0.0
        %4928 = vmatpush1.xpose.msra.mxu0 0.0
        %4929 = vmatprep.subr.mxu0 0.0
        %4930 = vmatpush1.xpose.msra.mxu0 0.0
        %4931 = vmatprep.subr.mxu0 0.0
        %4932 = vmatpush1.xpose.msra.mxu0 0.0
        %4933 = vmatprep.subr.mxu0 0.0
        %4934 = vmatpush1.xpose.msra.mxu0 0.0
        %4935 = vmatprep.subr.mxu0 0.0
        %4936 = vmatpush1.xpose.msra.mxu0 0.0
        %4937 = vmatprep.subr.mxu0 0.0
        %4938 = vmatpush1.xpose.msra.mxu0 0.0
        %4939 = vmatprep.subr.mxu0 0.0
        %4940 = vmatpush1.xpose.msra.mxu0 0.0
        %4941 = vmatprep.subr.mxu0 0.0
        %4942 = vmatpush1.xpose.msra.mxu0 0.0
        %4943 = vmatprep.subr.mxu0 0.0
        %4944 = vmatpush1.xpose.msra.mxu0 0.0
        %4945 = vmatprep.subr.mxu0 0.0
        %4946 = vmatpush1.xpose.msra.mxu0 0.0
        %4947 = vmatprep.subr.mxu0 0.0
        %4948 = vmatpush1.xpose.msra.mxu0 0.0
        %4949 = vmatprep.mubr.f32.mxu0 0.0
        %4950 = vmatmul.mubr.f32.gmra.mrb[0].mxu0 %v4880
        %v4951 = vpop.f32.mrb[0].mxu0
        %v4952 = vadd.f32 0.0, %v4951
        %v4953 = vpop.f32.mrb[0].mxu0
        %4954 = vdwg.mxu0
        %v4955 = vmul.f32 %v4952, 0.35355338
        %v4956 = vsel %vm906, %v4955, -inf
        %4957 = vmax.xlane.f32.xlu0 %v4956
        %v4958 = vpop.xlane.xlu0 %4957
        %v4959 = vsub.f32 %v4955, %v4958
        %v4960 = vmul.f32 %v4959, 1.442695
        %v4961 = vpow.pop %v4960
        %v4962 = vsel %vm906, %v4961, 0.0
        %4963 = vadd.xlane.f32.xlu0 %v4962
        %v4964 = vpop.xlane.xlu0 %4963
        %v4965 = vrcp.pop %v4964
        %v4966 = vmul.f32 %v4961, %v4965
        %v4968 = vsel %vm906, %v4966, 0
        %4970 = vmatprep.subr.mxu0 0.0
        %4971 = vmatpush1.msra.mxu0 %v4876
        %4972 = vmatprep.subr.mxu0 0.0
        %4973 = vmatpush1.msra.mxu0 0.0
        %4974 = vmatprep.subr.mxu0 0.0
        %4975 = vmatpush1.msra.mxu0 0.0
        %4976 = vmatprep.subr.mxu0 0.0
        %4977 = vmatpush1.msra.mxu0 0.0
        %4978 = vmatprep.subr.mxu0 0.0
        %4979 = vmatpush1.msra.mxu0 0.0
        %4980 = vmatprep.subr.mxu0 0.0
        %4981 = vmatpush1.msra.mxu0 0.0
        %4982 = vmatprep.subr.mxu0 0.0
        %4983 = vmatpush1.msra.mxu0 0.0
        %4984 = vmatprep.subr.mxu0 0.0
        %4985 = vmatpush1.msra.mxu0 0.0
        %4986 = vmatprep.subr.mxu0 0.0
        %4987 = vmatpush1.msra.mxu0 0.0
        %4988 = vmatprep.subr.mxu0 0.0
        %4989 = vmatpush1.msra.mxu0 0.0
        %4990 = vmatprep.subr.mxu0 0.0
        %4991 = vmatpush1.msra.mxu0 0.0
        %4992 = vmatprep.subr.mxu0 0.0
        %4993 = vmatpush1.msra.mxu0 0.0
        %4994 = vmatprep.subr.mxu0 0.0
        %4995 = vmatpush1.msra.mxu0 0.0
        %4996 = vmatprep.subr.mxu0 0.0
        %4997 = vmatpush1.msra.mxu0 0.0
        %4998 = vmatprep.subr.mxu0 0.0
        %4999 = vmatpush1.msra.mxu0 0.0
        %5000 = vmatprep.subr.mxu0 0.0
        %5001 = vmatpush1.msra.mxu0 0.0
        %5002 = vmatprep.subr.mxu0 0.0
        %5003 = vmatpush1.msra.mxu0 0.0
        %5004 = vmatprep.subr.mxu0 0.0
        %5005 = vmatpush1.msra.mxu0 0.0
        %5006 = vmatprep.subr.mxu0 0.0
        %5007 = vmatpush1.msra.mxu0 0.0
        %5008 = vmatprep.subr.mxu0 0.0
        %5009 = vmatpush1.msra.mxu0 0.0
        %5010 = vmatprep.subr.mxu0 0.0
        %5011 = vmatpush1.msra.mxu0 0.0
        %5012 = vmatprep.subr.mxu0 0.0
        %5013 = vmatpush1.msra.mxu0 0.0
        %5014 = vmatprep.subr.mxu0 0.0
        %5015 = vmatpush1.msra.mxu0 0.0
        %5016 = vmatprep.subr.mxu0 0.0
        %5017 = vmatpush1.msra.mxu0 0.0
        %5018 = vmatprep.subr.mxu0 0.0
        %5019 = vmatpush1.msra.mxu0 0.0
        %5020 = vmatprep.subr.mxu0 0.0
        %5021 = vmatpush1.msra.mxu0 0.0
        %5022 = vmatprep.subr.mxu0 0.0
        %5023 = vmatpush1.msra.mxu0 0.0
        %5024 = vmatprep.subr.mxu0 0.0
        %5025 = vmatpush1.msra.mxu0 0.0
        %5026 = vmatprep.subr.mxu0 0.0
        %5027 = vmatpush1.msra.mxu0 0.0
        %5028 = vmatprep.subr.mxu0 0.0
        %5029 = vmatpush1.msra.mxu0 0.0
        %5030 = vmatprep.subr.mxu0 0.0
        %5031 = vmatpush1.msra.mxu0 0.0
        %5032 = vmatprep.subr.mxu0 0.0
        %5033 = vmatpush1.msra.mxu0 0.0
        %5034 = vmatprep.mubr.f32.mxu0 0.0
        %5035 = vmatmul.mubr.f32.gmra.mrb[0].mxu0 %v4968
        %v5036 = vpop.f32.mrb[0].mxu0
        %v5037 = vadd.f32 0.0, %v5036
        %v5038 = vpop.f32.mrb[0].mxu0
        %5039 = vdwg.mxu0
        %s5040 = scalar_lea.vmem %s19, 56
        %v5041 = vld [vmem:[%s5040] sm:$0xff]
        %v5043 = vsel %vm906, %v5037, 0
        %5045 = vmatprep.subr.mxu0 0.0
        %5046 = vmatpush1.msra.mxu0 %v5041
        %5047 = vmatprep.subr.mxu0 0.0
        %5048 = vmatpush1.msra.mxu0 0.0
        %5049 = vmatprep.subr.mxu0 0.0
        %5050 = vmatpush1.msra.mxu0 0.0
        %5051 = vmatprep.subr.mxu0 0.0
        %5052 = vmatpush1.msra.mxu0 0.0
        %5053 = vmatprep.subr.mxu0 0.0
        %5054 = vmatpush1.msra.mxu0 0.0
        %5055 = vmatprep.subr.mxu0 0.0
        %5056 = vmatpush1.msra.mxu0 0.0
        %5057 = vmatprep.subr.mxu0 0.0
        %5058 = vmatpush1.msra.mxu0 0.0
        %5059 = vmatprep.subr.mxu0 0.0
        %5060 = vmatpush1.msra.mxu0 0.0
        %5061 = vmatprep.subr.mxu0 0.0
        %5062 = vmatpush1.msra.mxu0 0.0
        %5063 = vmatprep.subr.mxu0 0.0
        %5064 = vmatpush1.msra.mxu0 0.0
        %5065 = vmatprep.subr.mxu0 0.0
        %5066 = vmatpush1.msra.mxu0 0.0
        %5067 = vmatprep.subr.mxu0 0.0
        %5068 = vmatpush1.msra.mxu0 0.0
        %5069 = vmatprep.subr.mxu0 0.0
        %5070 = vmatpush1.msra.mxu0 0.0
        %5071 = vmatprep.subr.mxu0 0.0
        %5072 = vmatpush1.msra.mxu0 0.0
        %5073 = vmatprep.subr.mxu0 0.0
        %5074 = vmatpush1.msra.mxu0 0.0
        %5075 = vmatprep.subr.mxu0 0.0
        %5076 = vmatpush1.msra.mxu0 0.0
        %5077 = vmatprep.subr.mxu0 0.0
        %5078 = vmatpush1.msra.mxu0 0.0
        %5079 = vmatprep.subr.mxu0 0.0
        %5080 = vmatpush1.msra.mxu0 0.0
        %5081 = vmatprep.subr.mxu0 0.0
        %5082 = vmatpush1.msra.mxu0 0.0
        %5083 = vmatprep.subr.mxu0 0.0
        %5084 = vmatpush1.msra.mxu0 0.0
        %5085 = vmatprep.subr.mxu0 0.0
        %5086 = vmatpush1.msra.mxu0 0.0
        %5087 = vmatprep.subr.mxu0 0.0
        %5088 = vmatpush1.msra.mxu0 0.0
        %5089 = vmatprep.subr.mxu0 0.0
        %5090 = vmatpush1.msra.mxu0 0.0
        %5091 = vmatprep.subr.mxu0 0.0
        %5092 = vmatpush1.msra.mxu0 0.0
        %5093 = vmatprep.subr.mxu0 0.0
        %5094 = vmatpush1.msra.mxu0 0.0
        %5095 = vmatprep.subr.mxu0 0.0
        %5096 = vmatpush1.msra.mxu0 0.0
        %5097 = vmatprep.subr.mxu0 0.0
        %5098 = vmatpush1.msra.mxu0 0.0
        %5099 = vmatprep.subr.mxu0 0.0
        %5100 = vmatpush1.msra.mxu0 0.0
        %5101 = vmatprep.subr.mxu0 0.0
        %5102 = vmatpush1.msra.mxu0 0.0
        %5103 = vmatprep.subr.mxu0 0.0
        %5104 = vmatpush1.msra.mxu0 0.0
        %5105 = vmatprep.subr.mxu0 0.0
        %5106 = vmatpush1.msra.mxu0 0.0
        %5107 = vmatprep.subr.mxu0 0.0
        %5108 = vmatpush1.msra.mxu0 0.0
        %5109 = vmatprep.mubr.f32.mxu0 0.0
        %5110 = vmatmul.mubr.f32.gmra.mrb[0].mxu0 %v5043
        %v5111 = vpop.f32.mrb[0].mxu0
        %v5112 = vadd.f32 0.0, %v5111
        %v5113 = vpop.f32.mrb[0].mxu0
        %5114 = vdwg.mxu0
        %v5115 = vadd.f32 %v4629, %v5112
        %s5116 = scalar_lea.vmem %s21, 1
        %v5117 = vld [vmem:[%s5116] sm:$0x1]
        %v5119 = vlaneseq
        %v5120 = vshrl.u32 %v5119, 7
        %v5121 = vsub.s32 0, %v5120
        %v5122 = vrot.slane %v5117, %v5121
        %v5124 = vadd.f32 %v5115, %v5122
        %v5125 = vadd.f32 %v3170, %v5124
        %s5126 = scalar_lea.vmem %s31, 4
        %v5127 = vld [vmem:[%s5126] sm:$0x1]
        %s5128 = scalar_lea.vmem %s31, 5
        %v5129 = vld [vmem:[%s5128] sm:$0x1]
        %v5130 = vsel %vm993, %v5125, 0.0
        %5131 = vadd.xlane.f32.xlu0 %v5130
        %v5132 = vpop.xlane.xlu0 %5131
        %v5133 = vmul.f32 %v5132, %v2940
        %v5134 = vsub.f32 %v5125, %v5133
        %v5135 = vmul.f32 %v5134, %v5134
        %v5136 = vsel %vm993, %v5135, 0.0
        %5137 = vadd.xlane.f32.xlu0 %v5136
        %v5138 = vpop.xlane.xlu0 %5137
        %v5139 = vmul.f32 %v5138, %v2940
        %v5140 = vadd.f32 %v5139, 1e-05
        %v5141 = vrsqrt.pop %v5140
        %v5142 = vmul.f32 %v5134, %v5141
        %v5144 = vlaneseq
        %v5145 = vshrl.u32 %v5144, 7
        %v5146 = vsub.s32 0, %v5145
        %v5147 = vrot.slane %v5127, %v5146
        %v5149 = vmul.f32 %v5142, %v5147
        %v5151 = vlaneseq
        %v5152 = vshrl.u32 %v5151, 7
        %v5153 = vsub.s32 0, %v5152
        %v5154 = vrot.slane %v5129, %v5153
        %v5156 = vadd.f32 %v5149, %v5154
        %s5157 = scalar_lea.vmem %s23, 32
        %v5158 = vld [vmem:[%s5157] sm:$0xff]
        %v5159 = vld [vmem:[%s5157 + $0x8] sm:$0xff]
        %v5160 = vld [vmem:[%s5157 + $0x10] sm:$0xff]
        %v5161 = vld [vmem:[%s5157 + $0x18] sm:$0xff]
        %s5162 = scalar_lea.vmem %s25, 1
        %v5163 = vld [vmem:[%s5162] sm:$0x1]
        %v5165 = vlaneseq
        %v5166 = vshrl.u32 %v5165, 7
        %v5167 = vsub.s32 0, %v5166
        %v5168 = vrot.slane %v5163, %v5167
        %v5171 = vsel %vm993, %v5156, 0
        %5173 = vmatprep.subr.mxu0 0.0
        %5174 = vmatpush1.msra.mxu0 %v5158
        %5175 = vmatprep.subr.mxu0 0.0
        %5176 = vmatpush1.msra.mxu0 %v5159
        %5177 = vmatprep.subr.mxu0 0.0
        %5178 = vmatpush1.msra.mxu0 %v5160
        %5179 = vmatprep.subr.mxu0 0.0
        %5180 = vmatpush1.msra.mxu0 %v5161
        %5181 = vmatprep.subr.mxu0 0.0
        %5182 = vmatpush1.msra.mxu0 0.0
        %5183 = vmatprep.subr.mxu0 0.0
        %5184 = vmatpush1.msra.mxu0 0.0
        %5185 = vmatprep.subr.mxu0 0.0
        %5186 = vmatpush1.msra.mxu0 0.0
        %5187 = vmatprep.subr.mxu0 0.0
        %5188 = vmatpush1.msra.mxu0 0.0
        %5189 = vmatprep.subr.mxu0 0.0
        %5190 = vmatpush1.msra.mxu0 0.0
        %5191 = vmatprep.subr.mxu0 0.0
        %5192 = vmatpush1.msra.mxu0 0.0
        %5193 = vmatprep.subr.mxu0 0.0
        %5194 = vmatpush1.msra.mxu0 0.0
        %5195 = vmatprep.subr.mxu0 0.0
        %5196 = vmatpush1.msra.mxu0 0.0
        %5197 = vmatprep.subr.mxu0 0.0
        %5198 = vmatpush1.msra.mxu0 0.0
        %5199 = vmatprep.subr.mxu0 0.0
        %5200 = vmatpush1.msra.mxu0 0.0
        %5201 = vmatprep.subr.mxu0 0.0
        %5202 = vmatpush1.msra.mxu0 0.0
        %5203 = vmatprep.subr.mxu0 0.0
        %5204 = vmatpush1.msra.mxu0 0.0
        %5205 = vmatprep.subr.mxu0 0.0
        %5206 = vmatpush1.msra.mxu0 0.0
        %5207 = vmatprep.subr.mxu0 0.0
        %5208 = vmatpush1.msra.mxu0 0.0
        %5209 = vmatprep.subr.mxu0 0.0
        %5210 = vmatpush1.msra.mxu0 0.0
        %5211 = vmatprep.subr.mxu0 0.0
        %5212 = vmatpush1.msra.mxu0 0.0
        %5213 = vmatprep.subr.mxu0 0.0
        %5214 = vmatpush1.msra.mxu0 0.0
        %5215 = vmatprep.subr.mxu0 0.0
        %5216 = vmatpush1.msra.mxu0 0.0
        %5217 = vmatprep.subr.mxu0 0.0
        %5218 = vmatpush1.msra.mxu0 0.0
        %5219 = vmatprep.subr.mxu0 0.0
        %5220 = vmatpush1.msra.mxu0 0.0
        %5221 = vmatprep.subr.mxu0 0.0
        %5222 = vmatpush1.msra.mxu0 0.0
        %5223 = vmatprep.subr.mxu0 0.0
        %5224 = vmatpush1.msra.mxu0 0.0
        %5225 = vmatprep.subr.mxu0 0.0
        %5226 = vmatpush1.msra.mxu0 0.0
        %5227 = vmatprep.subr.mxu0 0.0
        %5228 = vmatpush1.msra.mxu0 0.0
        %5229 = vmatprep.subr.mxu0 0.0
        %5230 = vmatpush1.msra.mxu0 0.0
        %5231 = vmatprep.subr.mxu0 0.0
        %5232 = vmatpush1.msra.mxu0 0.0
        %5233 = vmatprep.subr.mxu0 0.0
        %5234 = vmatpush1.msra.mxu0 0.0
        %5235 = vmatprep.subr.mxu0 0.0
        %5236 = vmatpush1.msra.mxu0 0.0
        %5237 = vmatprep.mubr.f32.mxu0 0.0
        %5238 = vmatmul.mubr.f32.gmra.mrb[0].mxu0 %v5171
        %v5239 = vpop.f32.mrb[0].mxu0
        %v5240 = vadd.f32 %v5168, %v5239
        %v5241 = vpop.f32.mrb[0].mxu0
        %5242 = vdwg.mxu0
        %v5243 = vmax.f32 %v5240, 0.0
        %s5244 = scalar_lea.vmem %s27, 64
        %v5245 = vld [vmem:[%s5244] sm:$0xff]
        %v5246 = vld [vmem:[%s5244 + $0x8] sm:$0xff]
        %v5247 = vld [vmem:[%s5244 + $0x10] sm:$0xff]
        %v5248 = vld [vmem:[%s5244 + $0x18] sm:$0xff]
        %v5249 = vld [vmem:[%s5244 + $0x20] sm:$0xff]
        %v5250 = vld [vmem:[%s5244 + $0x28] sm:$0xff]
        %v5251 = vld [vmem:[%s5244 + $0x30] sm:$0xff]
        %v5252 = vld [vmem:[%s5244 + $0x38] sm:$0xff]
        %s5253 = scalar_lea.vmem %s29, 1
        %v5254 = vld [vmem:[%s5253] sm:$0x1]
        %v5256 = vlaneseq
        %v5257 = vshrl.u32 %v5256, 7
        %v5258 = vsub.s32 0, %v5257
        %v5259 = vrot.slane %v5254, %v5258
        %v5262 = vsel %vm3065, %v5243, 0
        %5264 = vmatprep.subr.mxu0 0.0
        %5265 = vmatpush1.msra.mxu0 %v5245
        %5266 = vmatprep.subr.mxu0 0.0
        %5267 = vmatpush1.msra.mxu0 %v5246
        %5268 = vmatprep.subr.mxu0 0.0
        %5269 = vmatpush1.msra.mxu0 %v5247
        %5270 = vmatprep.subr.mxu0 0.0
        %5271 = vmatpush1.msra.mxu0 %v5248
        %5272 = vmatprep.subr.mxu0 0.0
        %5273 = vmatpush1.msra.mxu0 %v5249
        %5274 = vmatprep.subr.mxu0 0.0
        %5275 = vmatpush1.msra.mxu0 %v5250
        %5276 = vmatprep.subr.mxu0 0.0
        %5277 = vmatpush1.msra.mxu0 %v5251
        %5278 = vmatprep.subr.mxu0 0.0
        %5279 = vmatpush1.msra.mxu0 %v5252
        %5280 = vmatprep.subr.mxu0 0.0
        %5281 = vmatpush1.msra.mxu0 0.0
        %5282 = vmatprep.subr.mxu0 0.0
        %5283 = vmatpush1.msra.mxu0 0.0
        %5284 = vmatprep.subr.mxu0 0.0
        %5285 = vmatpush1.msra.mxu0 0.0
        %5286 = vmatprep.subr.mxu0 0.0
        %5287 = vmatpush1.msra.mxu0 0.0
        %5288 = vmatprep.subr.mxu0 0.0
        %5289 = vmatpush1.msra.mxu0 0.0
        %5290 = vmatprep.subr.mxu0 0.0
        %5291 = vmatpush1.msra.mxu0 0.0
        %5292 = vmatprep.subr.mxu0 0.0
        %5293 = vmatpush1.msra.mxu0 0.0
        %5294 = vmatprep.subr.mxu0 0.0
        %5295 = vmatpush1.msra.mxu0 0.0
        %5296 = vmatprep.subr.mxu0 0.0
        %5297 = vmatpush1.msra.mxu0 0.0
        %5298 = vmatprep.subr.mxu0 0.0
        %5299 = vmatpush1.msra.mxu0 0.0
        %5300 = vmatprep.subr.mxu0 0.0
        %5301 = vmatpush1.msra.mxu0 0.0
        %5302 = vmatprep.subr.mxu0 0.0
        %5303 = vmatpush1.msra.mxu0 0.0
        %5304 = vmatprep.subr.mxu0 0.0
        %5305 = vmatpush1.msra.mxu0 0.0
        %5306 = vmatprep.subr.mxu0 0.0
        %5307 = vmatpush1.msra.mxu0 0.0
        %5308 = vmatprep.subr.mxu0 0.0
        %5309 = vmatpush1.msra.mxu0 0.0
        %5310 = vmatprep.subr.mxu0 0.0
        %5311 = vmatpush1.msra.mxu0 0.0
        %5312 = vmatprep.subr.mxu0 0.0
        %5313 = vmatpush1.msra.mxu0 0.0
        %5314 = vmatprep.subr.mxu0 0.0
        %5315 = vmatpush1.msra.mxu0 0.0
        %5316 = vmatprep.subr.mxu0 0.0
        %5317 = vmatpush1.msra.mxu0 0.0
        %5318 = vmatprep.subr.mxu0 0.0
        %5319 = vmatpush1.msra.mxu0 0.0
        %5320 = vmatprep.subr.mxu0 0.0
        %5321 = vmatpush1.msra.mxu0 0.0
        %5322 = vmatprep.subr.mxu0 0.0
        %5323 = vmatpush1.msra.mxu0 0.0
        %5324 = vmatprep.subr.mxu0 0.0
        %5325 = vmatpush1.msra.mxu0 0.0
        %5326 = vmatprep.subr.mxu0 0.0
        %5327 = vmatpush1.msra.mxu0 0.0
        %5328 = vmatprep.mubr.f32.mxu0 0.0
        %5329 = vmatmul.mubr.f32.gmra.mrb[0].mxu0 %v5262
        %v5330 = vpop.f32.mrb[0].mxu0
        %v5331 = vadd.f32 %v5259, %v5330
        %v5332 = vpop.f32.mrb[0].mxu0
        %5333 = vdwg.mxu0
        %v5334 = vadd.f32 %v5156, %v5331
        %s5335 = scalar_lea.vmem %s31, 6
        %v5336 = vld [vmem:[%s5335] sm:$0x1]
        %s5337 = scalar_lea.vmem %s31, 7
        %v5338 = vld [vmem:[%s5337] sm:$0x1]
        %v5339 = vsel %vm993, %v5334, 0.0
        %5340 = vadd.xlane.f32.xlu0 %v5339
        %v5341 = vpop.xlane.xlu0 %5340
        %v5342 = vmul.f32 %v5341, %v2940
        %v5343 = vsub.f32 %v5334, %v5342
        %v5344 = vmul.f32 %v5343, %v5343
        %v5345 = vsel %vm993, %v5344, 0.0
        %5346 = vadd.xlane.f32.xlu0 %v5345
        %v5347 = vpop.xlane.xlu0 %5346
        %v5348 = vmul.f32 %v5347, %v2940
        %v5349 = vadd.f32 %v5348, 1e-05
        %v5350 = vrsqrt.pop %v5349
        %v5351 = vmul.f32 %v5343, %v5350
        %v5353 = vlaneseq
        %v5354 = vshrl.u32 %v5353, 7
        %v5355 = vsub.s32 0, %v5354
        %v5356 = vrot.slane %v5336, %v5355
        %v5358 = vmul.f32 %v5351, %v5356
        %v5360 = vlaneseq
        %v5361 = vshrl.u32 %v5360, 7
        %v5362 = vsub.s32 0, %v5361
        %v5363 = vrot.slane %v5338, %v5362
        %v5365 = vadd.f32 %v5358, %v5363
        %v5366 = vld [vmem:[%s9] sm:$0x1]
        %v5367 = vld [vmem:[%s33] sm:$0xff]
        %v5368 = vld [vmem:[%s33 + $0x8] sm:$0xff]
        %v5369 = vld [vmem:[%s33 + $0x10] sm:$0xff]
        %v5370 = vld [vmem:[%s33 + $0x18] sm:$0xff]
        %v5371 = vld [vmem:[%s35] sm:$0x1]
        %v5373 = vsel %vm993, %v5366, 0
        %5375 = vmatprep.subr.mxu0 0.0
        %5376 = vmatpush1.msra.mxu0 %v5367
        %5377 = vmatprep.subr.mxu0 0.0
        %5378 = vmatpush1.msra.mxu0 %v5368
        %5379 = vmatprep.subr.mxu0 0.0
        %5380 = vmatpush1.msra.mxu0 %v5369
        %5381 = vmatprep.subr.mxu0 0.0
        %5382 = vmatpush1.msra.mxu0 %v5370
        %5383 = vmatprep.subr.mxu0 0.0
        %5384 = vmatpush1.msra.mxu0 0.0
        %5385 = vmatprep.subr.mxu0 0.0
        %5386 = vmatpush1.msra.mxu0 0.0
        %5387 = vmatprep.subr.mxu0 0.0
        %5388 = vmatpush1.msra.mxu0 0.0
        %5389 = vmatprep.subr.mxu0 0.0
        %5390 = vmatpush1.msra.mxu0 0.0
        %5391 = vmatprep.subr.mxu0 0.0
        %5392 = vmatpush1.msra.mxu0 0.0
        %5393 = vmatprep.subr.mxu0 0.0
        %5394 = vmatpush1.msra.mxu0 0.0
        %5395 = vmatprep.subr.mxu0 0.0
        %5396 = vmatpush1.msra.mxu0 0.0
        %5397 = vmatprep.subr.mxu0 0.0
        %5398 = vmatpush1.msra.mxu0 0.0
        %5399 = vmatprep.subr.mxu0 0.0
        %5400 = vmatpush1.msra.mxu0 0.0
        %5401 = vmatprep.subr.mxu0 0.0
        %5402 = vmatpush1.msra.mxu0 0.0
        %5403 = vmatprep.subr.mxu0 0.0
        %5404 = vmatpush1.msra.mxu0 0.0
        %5405 = vmatprep.subr.mxu0 0.0
        %5406 = vmatpush1.msra.mxu0 0.0
        %5407 = vmatprep.subr.mxu0 0.0
        %5408 = vmatpush1.msra.mxu0 0.0
        %5409 = vmatprep.subr.mxu0 0.0
        %5410 = vmatpush1.msra.mxu0 0.0
        %5411 = vmatprep.subr.mxu0 0.0
        %5412 = vmatpush1.msra.mxu0 0.0
        %5413 = vmatprep.subr.mxu0 0.0
        %5414 = vmatpush1.msra.mxu0 0.0
        %5415 = vmatprep.subr.mxu0 0.0
        %5416 = vmatpush1.msra.mxu0 0.0
        %5417 = vmatprep.subr.mxu0 0.0
        %5418 = vmatpush1.msra.mxu0 0.0
        %5419 = vmatprep.subr.mxu0 0.0
        %5420 = vmatpush1.msra.mxu0 0.0
        %5421 = vmatprep.subr.mxu0 0.0
        %5422 = vmatpush1.msra.mxu0 0.0
        %5423 = vmatprep.subr.mxu0 0.0
        %5424 = vmatpush1.msra.mxu0 0.0
        %5425 = vmatprep.subr.mxu0 0.0
        %5426 = vmatpush1.msra.mxu0 0.0
        %5427 = vmatprep.subr.mxu0 0.0
        %5428 = vmatpush1.msra.mxu0 0.0
        %5429 = vmatprep.subr.mxu0 0.0
        %5430 = vmatpush1.msra.mxu0 0.0
        %5431 = vmatprep.subr.mxu0 0.0
        %5432 = vmatpush1.msra.mxu0 0.0
        %5433 = vmatprep.subr.mxu0 0.0
        %5434 = vmatpush1.msra.mxu0 0.0
        %5435 = vmatprep.subr.mxu0 0.0
        %5436 = vmatpush1.msra.mxu0 0.0
        %5437 = vmatprep.subr.mxu0 0.0
        %5438 = vmatpush1.msra.mxu0 0.0
        %5439 = vmatprep.mubr.f32.mxu0 0.0
        %5440 = vmatmul.mubr.f32.gmra.mrb[0].mxu0 %v5373
        %v5441 = vpop.f32.mrb[0].mxu0
        %v5442 = vadd.f32 %v5371, %v5441
        %v5443 = vpop.f32.mrb[0].mxu0
        %5444 = vdwg.mxu0
        %v5445 = vld [vmem:[%s37] sm:$0xff]
        %v5446 = vld [vmem:[%s37 + $0x8] sm:$0xff]
        %v5447 = vld [vmem:[%s37 + $0x10] sm:$0xff]
        %v5448 = vld [vmem:[%s37 + $0x18] sm:$0xff]
        %v5449 = vld [vmem:[%s39] sm:$0x1]
        %v5451 = vsel %vm993, %v5442, 0
        %5453 = vmatprep.subr.mxu0 0.0
        %5454 = vmatpush1.msra.mxu0 %v5445
        %5455 = vmatprep.subr.mxu0 0.0
        %5456 = vmatpush1.msra.mxu0 %v5446
        %5457 = vmatprep.subr.mxu0 0.0
        %5458 = vmatpush1.msra.mxu0 %v5447
        %5459 = vmatprep.subr.mxu0 0.0
        %5460 = vmatpush1.msra.mxu0 %v5448
        %5461 = vmatprep.subr.mxu0 0.0
        %5462 = vmatpush1.msra.mxu0 0.0
        %5463 = vmatprep.subr.mxu0 0.0
        %5464 = vmatpush1.msra.mxu0 0.0
        %5465 = vmatprep.subr.mxu0 0.0
        %5466 = vmatpush1.msra.mxu0 0.0
        %5467 = vmatprep.subr.mxu0 0.0
        %5468 = vmatpush1.msra.mxu0 0.0
        %5469 = vmatprep.subr.mxu0 0.0
        %5470 = vmatpush1.msra.mxu0 0.0
        %5471 = vmatprep.subr.mxu0 0.0
        %5472 = vmatpush1.msra.mxu0 0.0
        %5473 = vmatprep.subr.mxu0 0.0
        %5474 = vmatpush1.msra.mxu0 0.0
        %5475 = vmatprep.subr.mxu0 0.0
        %5476 = vmatpush1.msra.mxu0 0.0
        %5477 = vmatprep.subr.mxu0 0.0
        %5478 = vmatpush1.msra.mxu0 0.0
        %5479 = vmatprep.subr.mxu0 0.0
        %5480 = vmatpush1.msra.mxu0 0.0
        %5481 = vmatprep.subr.mxu0 0.0
        %5482 = vmatpush1.msra.mxu0 0.0
        %5483 = vmatprep.subr.mxu0 0.0
        %5484 = vmatpush1.msra.mxu0 0.0
        %5485 = vmatprep.subr.mxu0 0.0
        %5486 = vmatpush1.msra.mxu0 0.0
        %5487 = vmatprep.subr.mxu0 0.0
        %5488 = vmatpush1.msra.mxu0 0.0
        %5489 = vmatprep.subr.mxu0 0.0
        %5490 = vmatpush1.msra.mxu0 0.0
        %5491 = vmatprep.subr.mxu0 0.0
        %5492 = vmatpush1.msra.mxu0 0.0
        %5493 = vmatprep.subr.mxu0 0.0
        %5494 = vmatpush1.msra.mxu0 0.0
        %5495 = vmatprep.subr.mxu0 0.0
        %5496 = vmatpush1.msra.mxu0 0.0
        %5497 = vmatprep.subr.mxu0 0.0
        %5498 = vmatpush1.msra.mxu0 0.0
        %5499 = vmatprep.subr.mxu0 0.0
        %5500 = vmatpush1.msra.mxu0 0.0
        %5501 = vmatprep.subr.mxu0 0.0
        %5502 = vmatpush1.msra.mxu0 0.0
        %5503 = vmatprep.subr.mxu0 0.0
        %5504 = vmatpush1.msra.mxu0 0.0
        %5505 = vmatprep.subr.mxu0 0.0
        %5506 = vmatpush1.msra.mxu0 0.0
        %5507 = vmatprep.subr.mxu0 0.0
        %5508 = vmatpush1.msra.mxu0 0.0
        %5509 = vmatprep.subr.mxu0 0.0
        %5510 = vmatpush1.msra.mxu0 0.0
        %5511 = vmatprep.subr.mxu0 0.0
        %5512 = vmatpush1.msra.mxu0 0.0
        %5513 = vmatprep.subr.mxu0 0.0
        %5514 = vmatpush1.msra.mxu0 0.0
        %5515 = vmatprep.subr.mxu0 0.0
        %5516 = vmatpush1.msra.mxu0 0.0
        %5517 = vmatprep.mubr.f32.mxu0 0.0
        %5518 = vmatmul.mubr.f32.gmra.mrb[0].mxu0 %v5451
        %v5519 = vpop.f32.mrb[0].mxu0
        %v5520 = vadd.f32 %v5449, %v5519
        %v5521 = vpop.f32.mrb[0].mxu0
        %5522 = vdwg.mxu0
        %v5523 = vadd.f32 %v5366, %v5520
        %v5524 = vld [vmem:[%s57] sm:$0x1]
        %s5525 = scalar_lea.vmem %s57, 1
        %v5526 = vld [vmem:[%s5525] sm:$0x1]
        %vm5527 = vcmask 253952
        %v5528 = vsel %vm5527, %v5523, 0.0
        %5529 = vadd.xlane.f32.xlu0 %v5528
        %v5530 = vpop.xlane.xlu0 %5529
        %v5531 = vmul.f32 %v5530, %v2940
        %v5532 = vsub.f32 %v5523, %v5531
        %v5533 = vmul.f32 %v5532, %v5532
        %v5534 = vsel %vm5527, %v5533, 0.0
        %5535 = vadd.xlane.f32.xlu0 %v5534
        %v5536 = vpop.xlane.xlu0 %5535
        %v5537 = vmul.f32 %v5536, %v2940
        %v5538 = vadd.f32 %v5537, 1e-05
        %v5539 = vrsqrt.pop %v5538
        %v5540 = vmul.f32 %v5532, %v5539
        %v5541 = vmul.f32 %v5540, %v5524
        %v5542 = vadd.f32 %v5541, %v5526
        %v5543 = vld [vmem:[%s41] sm:$0xff]
        %v5544 = vld [vmem:[%s41 + $0x8] sm:$0xff]
        %v5545 = vld [vmem:[%s41 + $0x10] sm:$0xff]
        %v5546 = vld [vmem:[%s41 + $0x18] sm:$0xff]
        %v5547 = vld [vmem:[%s43] sm:$0x1]
        %v5549 = vsel %vm993, %v5542, 0
        %5551 = vmatprep.subr.mxu0 0.0
        %5552 = vmatpush1.msra.mxu0 %v5543
        %5553 = vmatprep.subr.mxu0 0.0
        %5554 = vmatpush1.msra.mxu0 %v5544
        %5555 = vmatprep.subr.mxu0 0.0
        %5556 = vmatpush1.msra.mxu0 %v5545
        %5557 = vmatprep.subr.mxu0 0.0
        %5558 = vmatpush1.msra.mxu0 %v5546
        %5559 = vmatprep.subr.mxu0 0.0
        %5560 = vmatpush1.msra.mxu0 0.0
        %5561 = vmatprep.subr.mxu0 0.0
        %5562 = vmatpush1.msra.mxu0 0.0
        %5563 = vmatprep.subr.mxu0 0.0
        %5564 = vmatpush1.msra.mxu0 0.0
        %5565 = vmatprep.subr.mxu0 0.0
        %5566 = vmatpush1.msra.mxu0 0.0
        %5567 = vmatprep.subr.mxu0 0.0
        %5568 = vmatpush1.msra.mxu0 0.0
        %5569 = vmatprep.subr.mxu0 0.0
        %5570 = vmatpush1.msra.mxu0 0.0
        %5571 = vmatprep.subr.mxu0 0.0
        %5572 = vmatpush1.msra.mxu0 0.0
        %5573 = vmatprep.subr.mxu0 0.0
        %5574 = vmatpush1.msra.mxu0 0.0
        %5575 = vmatprep.subr.mxu0 0.0
        %5576 = vmatpush1.msra.mxu0 0.0
        %5577 = vmatprep.subr.mxu0 0.0
        %5578 = vmatpush1.msra.mxu0 0.0
        %5579 = vmatprep.subr.mxu0 0.0
        %5580 = vmatpush1.msra.mxu0 0.0
        %5581 = vmatprep.subr.mxu0 0.0
        %5582 = vmatpush1.msra.mxu0 0.0
        %5583 = vmatprep.subr.mxu0 0.0
        %5584 = vmatpush1.msra.mxu0 0.0
        %5585 = vmatprep.subr.mxu0 0.0
        %5586 = vmatpush1.msra.mxu0 0.0
        %5587 = vmatprep.subr.mxu0 0.0
        %5588 = vmatpush1.msra.mxu0 0.0
        %5589 = vmatprep.subr.mxu0 0.0
        %5590 = vmatpush1.msra.mxu0 0.0
        %5591 = vmatprep.subr.mxu0 0.0
        %5592 = vmatpush1.msra.mxu0 0.0
        %5593 = vmatprep.subr.mxu0 0.0
        %5594 = vmatpush1.msra.mxu0 0.0
        %5595 = vmatprep.subr.mxu0 0.0
        %5596 = vmatpush1.msra.mxu0 0.0
        %5597 = vmatprep.subr.mxu0 0.0
        %5598 = vmatpush1.msra.mxu0 0.0
        %5599 = vmatprep.subr.mxu0 0.0
        %5600 = vmatpush1.msra.mxu0 0.0
        %5601 = vmatprep.subr.mxu0 0.0
        %5602 = vmatpush1.msra.mxu0 0.0
        %5603 = vmatprep.subr.mxu0 0.0
        %5604 = vmatpush1.msra.mxu0 0.0
        %5605 = vmatprep.subr.mxu0 0.0
        %5606 = vmatpush1.msra.mxu0 0.0
        %5607 = vmatprep.subr.mxu0 0.0
        %5608 = vmatpush1.msra.mxu0 0.0
        %5609 = vmatprep.subr.mxu0 0.0
        %5610 = vmatpush1.msra.mxu0 0.0
        %5611 = vmatprep.subr.mxu0 0.0
        %5612 = vmatpush1.msra.mxu0 0.0
        %5613 = vmatprep.subr.mxu0 0.0
        %5614 = vmatpush1.msra.mxu0 0.0
        %5615 = vmatprep.mubr.f32.mxu0 0.0
        %5616 = vmatmul.mubr.f32.gmra.mrb[0].mxu0 %v5549
        %v5617 = vpop.f32.mrb[0].mxu0
        %v5618 = vadd.f32 %v5547, %v5617
        %v5619 = vpop.f32.mrb[0].mxu0
        %5620 = vdwg.mxu0
        %s5621 = scalar_lea.vmem %s41, 128
        %v5622 = vld [vmem:[%s5621] sm:$0xff]
        %v5623 = vld [vmem:[%s5621 + $0x8] sm:$0xff]
        %v5624 = vld [vmem:[%s5621 + $0x10] sm:$0xff]
        %v5625 = vld [vmem:[%s5621 + $0x18] sm:$0xff]
        %s5626 = scalar_lea.vmem %s43, 4
        %v5627 = vld [vmem:[%s5626] sm:$0x1]
        %v5629 = vlaneseq
        %v5630 = vshrl.u32 %v5629, 7
        %v5631 = vsub.s32 0, %v5630
        %v5632 = vrot.slane %v5627, %v5631
        %v5635 = vsel %vm993, %v5365, 0
        %5637 = vmatprep.subr.mxu0 0.0
        %5638 = vmatpush1.msra.mxu0 %v5622
        %5639 = vmatprep.subr.mxu0 0.0
        %5640 = vmatpush1.msra.mxu0 %v5623
        %5641 = vmatprep.subr.mxu0 0.0
        %5642 = vmatpush1.msra.mxu0 %v5624
        %5643 = vmatprep.subr.mxu0 0.0
        %5644 = vmatpush1.msra.mxu0 %v5625
        %5645 = vmatprep.subr.mxu0 0.0
        %5646 = vmatpush1.msra.mxu0 0.0
        %5647 = vmatprep.subr.mxu0 0.0
        %5648 = vmatpush1.msra.mxu0 0.0
        %5649 = vmatprep.subr.mxu0 0.0
        %5650 = vmatpush1.msra.mxu0 0.0
        %5651 = vmatprep.subr.mxu0 0.0
        %5652 = vmatpush1.msra.mxu0 0.0
        %5653 = vmatprep.subr.mxu0 0.0
        %5654 = vmatpush1.msra.mxu0 0.0
        %5655 = vmatprep.subr.mxu0 0.0
        %5656 = vmatpush1.msra.mxu0 0.0
        %5657 = vmatprep.subr.mxu0 0.0
        %5658 = vmatpush1.msra.mxu0 0.0
        %5659 = vmatprep.subr.mxu0 0.0
        %5660 = vmatpush1.msra.mxu0 0.0
        %5661 = vmatprep.subr.mxu0 0.0
        %5662 = vmatpush1.msra.mxu0 0.0
        %5663 = vmatprep.subr.mxu0 0.0
        %5664 = vmatpush1.msra.mxu0 0.0
        %5665 = vmatprep.subr.mxu0 0.0
        %5666 = vmatpush1.msra.mxu0 0.0
        %5667 = vmatprep.subr.mxu0 0.0
        %5668 = vmatpush1.msra.mxu0 0.0
        %5669 = vmatprep.subr.mxu0 0.0
        %5670 = vmatpush1.msra.mxu0 0.0
        %5671 = vmatprep.subr.mxu0 0.0
        %5672 = vmatpush1.msra.mxu0 0.0
        %5673 = vmatprep.subr.mxu0 0.0
        %5674 = vmatpush1.msra.mxu0 0.0
        %5675 = vmatprep.subr.mxu0 0.0
        %5676 = vmatpush1.msra.mxu0 0.0
        %5677 = vmatprep.subr.mxu0 0.0
        %5678 = vmatpush1.msra.mxu0 0.0
        %5679 = vmatprep.subr.mxu0 0.0
        %5680 = vmatpush1.msra.mxu0 0.0
        %5681 = vmatprep.subr.mxu0 0.0
        %5682 = vmatpush1.msra.mxu0 0.0
        %5683 = vmatprep.subr.mxu0 0.0
        %5684 = vmatpush1.msra.mxu0 0.0
        %5685 = vmatprep.subr.mxu0 0.0
        %5686 = vmatpush1.msra.mxu0 0.0
        %5687 = vmatprep.subr.mxu0 0.0
        %5688 = vmatpush1.msra.mxu0 0.0
        %5689 = vmatprep.subr.mxu0 0.0
        %5690 = vmatpush1.msra.mxu0 0.0
        %5691 = vmatprep.subr.mxu0 0.0
        %5692 = vmatpush1.msra.mxu0 0.0
        %5693 = vmatprep.subr.mxu0 0.0
        %5694 = vmatpush1.msra.mxu0 0.0
        %5695 = vmatprep.subr.mxu0 0.0
        %5696 = vmatpush1.msra.mxu0 0.0
        %5697 = vmatprep.subr.mxu0 0.0
        %5698 = vmatpush1.msra.mxu0 0.0
        %5699 = vmatprep.subr.mxu0 0.0
        %5700 = vmatpush1.msra.mxu0 0.0
        %5701 = vmatprep.mubr.f32.mxu0 0.0
        %5702 = vmatmul.mubr.f32.gmra.mrb[0].mxu0 %v5635
        %v5703 = vpop.f32.mrb[0].mxu0
        %v5704 = vadd.f32 %v5632, %v5703
        %v5705 = vpop.f32.mrb[0].mxu0
        %5706 = vdwg.mxu0
        %s5707 = scalar_lea.vmem %s41, 256
        %v5708 = vld [vmem:[%s5707] sm:$0xff]
        %v5709 = vld [vmem:[%s5707 + $0x8] sm:$0xff]
        %v5710 = vld [vmem:[%s5707 + $0x10] sm:$0xff]
        %v5711 = vld [vmem:[%s5707 + $0x18] sm:$0xff]
        %s5712 = scalar_lea.vmem %s43, 8
        %v5713 = vld [vmem:[%s5712] sm:$0x1]
        %v5715 = vlaneseq
        %v5716 = vshrl.u32 %v5715, 7
        %v5717 = vsub.s32 0, %v5716
        %v5718 = vrot.slane %v5713, %v5717
        %5720 = vmatprep.subr.mxu0 0.0
        %5721 = vmatpush1.msra.mxu0 %v5708
        %5722 = vmatprep.subr.mxu0 0.0
        %5723 = vmatpush1.msra.mxu0 %v5709
        %5724 = vmatprep.subr.mxu0 0.0
        %5725 = vmatpush1.msra.mxu0 %v5710
        %5726 = vmatprep.subr.mxu0 0.0
        %5727 = vmatpush1.msra.mxu0 %v5711
        %5728 = vmatprep.subr.mxu0 0.0
        %5729 = vmatpush1.msra.mxu0 0.0
        %5730 = vmatprep.subr.mxu0 0.0
        %5731 = vmatpush1.msra.mxu0 0.0
        %5732 = vmatprep.subr.mxu0 0.0
        %5733 = vmatpush1.msra.mxu0 0.0
        %5734 = vmatprep.subr.mxu0 0.0
        %5735 = vmatpush1.msra.mxu0 0.0
        %5736 = vmatprep.subr.mxu0 0.0
        %5737 = vmatpush1.msra.mxu0 0.0
        %5738 = vmatprep.subr.mxu0 0.0
        %5739 = vmatpush1.msra.mxu0 0.0
        %5740 = vmatprep.subr.mxu0 0.0
        %5741 = vmatpush1.msra.mxu0 0.0
        %5742 = vmatprep.subr.mxu0 0.0
        %5743 = vmatpush1.msra.mxu0 0.0
        %5744 = vmatprep.subr.mxu0 0.0
        %5745 = vmatpush1.msra.mxu0 0.0
        %5746 = vmatprep.subr.mxu0 0.0
        %5747 = vmatpush1.msra.mxu0 0.0
        %5748 = vmatprep.subr.mxu0 0.0
        %5749 = vmatpush1.msra.mxu0 0.0
        %5750 = vmatprep.subr.mxu0 0.0
        %5751 = vmatpush1.msra.mxu0 0.0
        %5752 = vmatprep.subr.mxu0 0.0
        %5753 = vmatpush1.msra.mxu0 0.0
        %5754 = vmatprep.subr.mxu0 0.0
        %5755 = vmatpush1.msra.mxu0 0.0
        %5756 = vmatprep.subr.mxu0 0.0
        %5757 = vmatpush1.msra.mxu0 0.0
        %5758 = vmatprep.subr.mxu0 0.0
        %5759 = vmatpush1.msra.mxu0 0.0
        %5760 = vmatprep.subr.mxu0 0.0
        %5761 = vmatpush1.msra.mxu0 0.0
        %5762 = vmatprep.subr.mxu0 0.0
        %5763 = vmatpush1.msra.mxu0 0.0
        %5764 = vmatprep.subr.mxu0 0.0
        %5765 = vmatpush1.msra.mxu0 0.0
        %5766 = vmatprep.subr.mxu0 0.0
        %5767 = vmatpush1.msra.mxu0 0.0
        %5768 = vmatprep.subr.mxu0 0.0
        %5769 = vmatpush1.msra.mxu0 0.0
        %5770 = vmatprep.subr.mxu0 0.0
        %5771 = vmatpush1.msra.mxu0 0.0
        %5772 = vmatprep.subr.mxu0 0.0
        %5773 = vmatpush1.msra.mxu0 0.0
        %5774 = vmatprep.subr.mxu0 0.0
        %5775 = vmatpush1.msra.mxu0 0.0
        %5776 = vmatprep.subr.mxu0 0.0
        %5777 = vmatpush1.msra.mxu0 0.0
        %5778 = vmatprep.subr.mxu0 0.0
        %5779 = vmatpush1.msra.mxu0 0.0
        %5780 = vmatprep.subr.mxu0 0.0
        %5781 = vmatpush1.msra.mxu0 0.0
        %5782 = vmatprep.subr.mxu0 0.0
        %5783 = vmatpush1.msra.mxu0 0.0
        %5784 = vmatprep.mubr.f32.mxu0 0.0
        %5785 = vmatmul.mubr.f32.gmra.mrb[0].mxu0 %v5635
        %v5786 = vpop.f32.mrb[0].mxu0
        %v5787 = vadd.f32 %v5718, %v5786
        %v5788 = vpop.f32.mrb[0].mxu0
        %5789 = vdwg.mxu0
        %v5791 = vsel %vm906, %v5618, 0
        %v5794 = vsel %vm906, %v5704, 0
        %5796 = vmatprep.subr.mxu0 0.0
        %5797 = vmatpush1.xpose.msra.mxu0 %v5794
        %5798 = vmatprep.subr.mxu0 0.0
        %5799 = vmatpush1.xpose.msra.mxu0 0.0
        %5800 = vmatprep.subr.mxu0 0.0
        %5801 = vmatpush1.xpose.msra.mxu0 0.0
        %5802 = vmatprep.subr.mxu0 0.0
        %5803 = vmatpush1.xpose.msra.mxu0 0.0
        %5804 = vmatprep.subr.mxu0 0.0
        %5805 = vmatpush1.xpose.msra.mxu0 0.0
        %5806 = vmatprep.subr.mxu0 0.0
        %5807 = vmatpush1.xpose.msra.mxu0 0.0
        %5808 = vmatprep.subr.mxu0 0.0
        %5809 = vmatpush1.xpose.msra.mxu0 0.0
        %5810 = vmatprep.subr.mxu0 0.0
        %5811 = vmatpush1.xpose.msra.mxu0 0.0
        %5812 = vmatprep.subr.mxu0 0.0
        %5813 = vmatpush1.xpose.msra.mxu0 0.0
        %5814 = vmatprep.subr.mxu0 0.0
        %5815 = vmatpush1.xpose.msra.mxu0 0.0
        %5816 = vmatprep.subr.mxu0 0.0
        %5817 = vmatpush1.xpose.msra.mxu0 0.0
        %5818 = vmatprep.subr.mxu0 0.0
        %5819 = vmatpush1.xpose.msra.mxu0 0.0
        %5820 = vmatprep.subr.mxu0 0.0
        %5821 = vmatpush1.xpose.msra.mxu0 0.0
        %5822 = vmatprep.subr.mxu0 0.0
        %5823 = vmatpush1.xpose.msra.mxu0 0.0
        %5824 = vmatprep.subr.mxu0 0.0
        %5825 = vmatpush1.xpose.msra.mxu0 0.0
        %5826 = vmatprep.subr.mxu0 0.0
        %5827 = vmatpush1.xpose.msra.mxu0 0.0
        %5828 = vmatprep.subr.mxu0 0.0
        %5829 = vmatpush1.xpose.msra.mxu0 0.0
        %5830 = vmatprep.subr.mxu0 0.0
        %5831 = vmatpush1.xpose.msra.mxu0 0.0
        %5832 = vmatprep.subr.mxu0 0.0
        %5833 = vmatpush1.xpose.msra.mxu0 0.0
        %5834 = vmatprep.subr.mxu0 0.0
        %5835 = vmatpush1.xpose.msra.mxu0 0.0
        %5836 = vmatprep.subr.mxu0 0.0
        %5837 = vmatpush1.xpose.msra.mxu0 0.0
        %5838 = vmatprep.subr.mxu0 0.0
        %5839 = vmatpush1.xpose.msra.mxu0 0.0
        %5840 = vmatprep.subr.mxu0 0.0
        %5841 = vmatpush1.xpose.msra.mxu0 0.0
        %5842 = vmatprep.subr.mxu0 0.0
        %5843 = vmatpush1.xpose.msra.mxu0 0.0
        %5844 = vmatprep.subr.mxu0 0.0
        %5845 = vmatpush1.xpose.msra.mxu0 0.0
        %5846 = vmatprep.subr.mxu0 0.0
        %5847 = vmatpush1.xpose.msra.mxu0 0.0
        %5848 = vmatprep.subr.mxu0 0.0
        %5849 = vmatpush1.xpose.msra.mxu0 0.0
        %5850 = vmatprep.subr.mxu0 0.0
        %5851 = vmatpush1.xpose.msra.mxu0 0.0
        %5852 = vmatprep.subr.mxu0 0.0
        %5853 = vmatpush1.xpose.msra.mxu0 0.0
        %5854 = vmatprep.subr.mxu0 0.0
        %5855 = vmatpush1.xpose.msra.mxu0 0.0
        %5856 = vmatprep.subr.mxu0 0.0
        %5857 = vmatpush1.xpose.msra.mxu0 0.0
        %5858 = vmatprep.subr.mxu0 0.0
        %5859 = vmatpush1.xpose.msra.mxu0 0.0
        %5860 = vmatprep.mubr.f32.mxu0 0.0
        %5861 = vmatmul.mubr.f32.gmra.mrb[0].mxu0 %v5791
        %v5862 = vpop.f32.mrb[0].mxu0
        %v5863 = vadd.f32 0.0, %v5862
        %v5864 = vpop.f32.mrb[0].mxu0
        %5865 = vdwg.mxu0
        %v5866 = vmul.f32 %v5863, 0.35355338
        %vm5867 = vcmask 57344
        %v5868 = vsel %vm5867, %v5866, -inf
        %5869 = vmax.xlane.f32.xlu0 %v5868
        %v5870 = vpop.xlane.xlu0 %5869
        %v5871 = vsub.f32 %v5866, %v5870
        %v5872 = vmul.f32 %v5871, 1.442695
        %v5873 = vpow.pop %v5872
        %v5874 = vsel %vm5867, %v5873, 0.0
        %5875 = vadd.xlane.f32.xlu0 %v5874
        %v5876 = vpop.xlane.xlu0 %5875
        %v5877 = vrcp.pop %v5876
        %v5878 = vmul.f32 %v5873, %v5877
        %v5880 = vsel %vm906, %v5878, 0
        %5882 = vmatprep.subr.mxu0 0.0
        %5883 = vmatpush1.msra.mxu0 %v5787
        %5884 = vmatprep.subr.mxu0 0.0
        %5885 = vmatpush1.msra.mxu0 0.0
        %5886 = vmatprep.subr.mxu0 0.0
        %5887 = vmatpush1.msra.mxu0 0.0
        %5888 = vmatprep.subr.mxu0 0.0
        %5889 = vmatpush1.msra.mxu0 0.0
        %5890 = vmatprep.subr.mxu0 0.0
        %5891 = vmatpush1.msra.mxu0 0.0
        %5892 = vmatprep.subr.mxu0 0.0
        %5893 = vmatpush1.msra.mxu0 0.0
        %5894 = vmatprep.subr.mxu0 0.0
        %5895 = vmatpush1.msra.mxu0 0.0
        %5896 = vmatprep.subr.mxu0 0.0
        %5897 = vmatpush1.msra.mxu0 0.0
        %5898 = vmatprep.subr.mxu0 0.0
        %5899 = vmatpush1.msra.mxu0 0.0
        %5900 = vmatprep.subr.mxu0 0.0
        %5901 = vmatpush1.msra.mxu0 0.0
        %5902 = vmatprep.subr.mxu0 0.0
        %5903 = vmatpush1.msra.mxu0 0.0
        %5904 = vmatprep.subr.mxu0 0.0
        %5905 = vmatpush1.msra.mxu0 0.0
        %5906 = vmatprep.subr.mxu0 0.0
        %5907 = vmatpush1.msra.mxu0 0.0
        %5908 = vmatprep.subr.mxu0 0.0
        %5909 = vmatpush1.msra.mxu0 0.0
        %5910 = vmatprep.subr.mxu0 0.0
        %5911 = vmatpush1.msra.mxu0 0.0
        %5912 = vmatprep.subr.mxu0 0.0
        %5913 = vmatpush1.msra.mxu0 0.0
        %5914 = vmatprep.subr.mxu0 0.0
        %5915 = vmatpush1.msra.mxu0 0.0
        %5916 = vmatprep.subr.mxu0 0.0
        %5917 = vmatpush1.msra.mxu0 0.0
        %5918 = vmatprep.subr.mxu0 0.0
        %5919 = vmatpush1.msra.mxu0 0.0
        %5920 = vmatprep.subr.mxu0 0.0
        %5921 = vmatpush1.msra.mxu0 0.0
        %5922 = vmatprep.subr.mxu0 0.0
        %5923 = vmatpush1.msra.mxu0 0.0
        %5924 = vmatprep.subr.mxu0 0.0
        %5925 = vmatpush1.msra.mxu0 0.0
        %5926 = vmatprep.subr.mxu0 0.0
        %5927 = vmatpush1.msra.mxu0 0.0
        %5928 = vmatprep.subr.mxu0 0.0
        %5929 = vmatpush1.msra.mxu0 0.0
        %5930 = vmatprep.subr.mxu0 0.0
        %5931 = vmatpush1.msra.mxu0 0.0
        %5932 = vmatprep.subr.mxu0 0.0
        %5933 = vmatpush1.msra.mxu0 0.0
        %5934 = vmatprep.subr.mxu0 0.0
        %5935 = vmatpush1.msra.mxu0 0.0
        %5936 = vmatprep.subr.mxu0 0.0
        %5937 = vmatpush1.msra.mxu0 0.0
        %5938 = vmatprep.subr.mxu0 0.0
        %5939 = vmatpush1.msra.mxu0 0.0
        %5940 = vmatprep.subr.mxu0 0.0
        %5941 = vmatpush1.msra.mxu0 0.0
        %5942 = vmatprep.subr.mxu0 0.0
        %5943 = vmatpush1.msra.mxu0 0.0
        %5944 = vmatprep.subr.mxu0 0.0
        %5945 = vmatpush1.msra.mxu0 0.0
        %5946 = vmatprep.mubr.f32.mxu0 0.0
        %5947 = vmatmul.mubr.f32.gmra.mrb[0].mxu0 %v5880
        %v5948 = vpop.f32.mrb[0].mxu0
        %v5949 = vadd.f32 0.0, %v5948
        %v5950 = vpop.f32.mrb[0].mxu0
        %5951 = vdwg.mxu0
        %v5952 = vld [vmem:[%s45] sm:$0xff]
        %s5953 = scalar_lea.vmem %s41, 32
        %v5954 = vld [vmem:[%s5953] sm:$0xff]
        %v5955 = vld [vmem:[%s5953 + $0x8] sm:$0xff]
        %v5956 = vld [vmem:[%s5953 + $0x10] sm:$0xff]
        %v5957 = vld [vmem:[%s5953 + $0x18] sm:$0xff]
        %s5958 = scalar_lea.vmem %s43, 1
        %v5959 = vld [vmem:[%s5958] sm:$0x1]
        %5960 = vmatprep.subr.mxu0 0.0
        %5961 = vmatpush1.msra.mxu0 %v5954
        %5962 = vmatprep.subr.mxu0 0.0
        %5963 = vmatpush1.msra.mxu0 %v5955
        %5964 = vmatprep.subr.mxu0 0.0
        %5965 = vmatpush1.msra.mxu0 %v5956
        %5966 = vmatprep.subr.mxu0 0.0
        %5967 = vmatpush1.msra.mxu0 %v5957
        %5968 = vmatprep.subr.mxu0 0.0
        %5969 = vmatpush1.msra.mxu0 0.0
        %5970 = vmatprep.subr.mxu0 0.0
        %5971 = vmatpush1.msra.mxu0 0.0
        %5972 = vmatprep.subr.mxu0 0.0
        %5973 = vmatpush1.msra.mxu0 0.0
        %5974 = vmatprep.subr.mxu0 0.0
        %5975 = vmatpush1.msra.mxu0 0.0
        %5976 = vmatprep.subr.mxu0 0.0
        %5977 = vmatpush1.msra.mxu0 0.0
        %5978 = vmatprep.subr.mxu0 0.0
        %5979 = vmatpush1.msra.mxu0 0.0
        %5980 = vmatprep.subr.mxu0 0.0
        %5981 = vmatpush1.msra.mxu0 0.0
        %5982 = vmatprep.subr.mxu0 0.0
        %5983 = vmatpush1.msra.mxu0 0.0
        %5984 = vmatprep.subr.mxu0 0.0
        %5985 = vmatpush1.msra.mxu0 0.0
        %5986 = vmatprep.subr.mxu0 0.0
        %5987 = vmatpush1.msra.mxu0 0.0
        %5988 = vmatprep.subr.mxu0 0.0
        %5989 = vmatpush1.msra.mxu0 0.0
        %5990 = vmatprep.subr.mxu0 0.0
        %5991 = vmatpush1.msra.mxu0 0.0
        %5992 = vmatprep.subr.mxu0 0.0
        %5993 = vmatpush1.msra.mxu0 0.0
        %5994 = vmatprep.subr.mxu0 0.0
        %5995 = vmatpush1.msra.mxu0 0.0
        %5996 = vmatprep.subr.mxu0 0.0
        %5997 = vmatpush1.msra.mxu0 0.0
        %5998 = vmatprep.subr.mxu0 0.0
        %5999 = vmatpush1.msra.mxu0 0.0
        %6000 = vmatprep.subr.mxu0 0.0
        %6001 = vmatpush1.msra.mxu0 0.0
        %6002 = vmatprep.subr.mxu0 0.0
        %6003 = vmatpush1.msra.mxu0 0.0
        %6004 = vmatprep.subr.mxu0 0.0
        %6005 = vmatpush1.msra.mxu0 0.0
        %6006 = vmatprep.subr.mxu0 0.0
        %6007 = vmatpush1.msra.mxu0 0.0
        %6008 = vmatprep.subr.mxu0 0.0
        %6009 = vmatpush1.msra.mxu0 0.0
        %6010 = vmatprep.subr.mxu0 0.0
        %6011 = vmatpush1.msra.mxu0 0.0
        %6012 = vmatprep.subr.mxu0 0.0
        %6013 = vmatpush1.msra.mxu0 0.0
        %6014 = vmatprep.subr.mxu0 0.0
        %6015 = vmatpush1.msra.mxu0 0.0
        %6016 = vmatprep.subr.mxu0 0.0
        %6017 = vmatpush1.msra.mxu0 0.0
        %6018 = vmatprep.subr.mxu0 0.0
        %6019 = vmatpush1.msra.mxu0 0.0
        %6020 = vmatprep.subr.mxu0 0.0
        %6021 = vmatpush1.msra.mxu0 0.0
        %6022 = vmatprep.subr.mxu0 0.0
        %6023 = vmatpush1.msra.mxu0 0.0
        %6024 = vmatprep.mubr.f32.mxu0 0.0
        %6025 = vmatmul.mubr.f32.gmra.mrb[0].mxu0 %v5549
        %v6026 = vpop.f32.mrb[0].mxu0
        %v6027 = vadd.f32 %v5959, %v6026
        %v6028 = vpop.f32.mrb[0].mxu0
        %6029 = vdwg.mxu0
        %s6030 = scalar_lea.vmem %s41, 160
        %v6031 = vld [vmem:[%s6030] sm:$0xff]
        %v6032 = vld [vmem:[%s6030 + $0x8] sm:$0xff]
        %v6033 = vld [vmem:[%s6030 + $0x10] sm:$0xff]
        %v6034 = vld [vmem:[%s6030 + $0x18] sm:$0xff]
        %s6035 = scalar_lea.vmem %s43, 5
        %v6036 = vld [vmem:[%s6035] sm:$0x1]
        %v6038 = vlaneseq
        %v6039 = vshrl.u32 %v6038, 7
        %v6040 = vsub.s32 0, %v6039
        %v6041 = vrot.slane %v6036, %v6040
        %6043 = vmatprep.subr.mxu0 0.0
        %6044 = vmatpush1.msra.mxu0 %v6031
        %6045 = vmatprep.subr.mxu0 0.0
        %6046 = vmatpush1.msra.mxu0 %v6032
        %6047 = vmatprep.subr.mxu0 0.0
        %6048 = vmatpush1.msra.mxu0 %v6033
        %6049 = vmatprep.subr.mxu0 0.0
        %6050 = vmatpush1.msra.mxu0 %v6034
        %6051 = vmatprep.subr.mxu0 0.0
        %6052 = vmatpush1.msra.mxu0 0.0
        %6053 = vmatprep.subr.mxu0 0.0
        %6054 = vmatpush1.msra.mxu0 0.0
        %6055 = vmatprep.subr.mxu0 0.0
        %6056 = vmatpush1.msra.mxu0 0.0
        %6057 = vmatprep.subr.mxu0 0.0
        %6058 = vmatpush1.msra.mxu0 0.0
        %6059 = vmatprep.subr.mxu0 0.0
        %6060 = vmatpush1.msra.mxu0 0.0
        %6061 = vmatprep.subr.mxu0 0.0
        %6062 = vmatpush1.msra.mxu0 0.0
        %6063 = vmatprep.subr.mxu0 0.0
        %6064 = vmatpush1.msra.mxu0 0.0
        %6065 = vmatprep.subr.mxu0 0.0
        %6066 = vmatpush1.msra.mxu0 0.0
        %6067 = vmatprep.subr.mxu0 0.0
        %6068 = vmatpush1.msra.mxu0 0.0
        %6069 = vmatprep.subr.mxu0 0.0
        %6070 = vmatpush1.msra.mxu0 0.0
        %6071 = vmatprep.subr.mxu0 0.0
        %6072 = vmatpush1.msra.mxu0 0.0
        %6073 = vmatprep.subr.mxu0 0.0
        %6074 = vmatpush1.msra.mxu0 0.0
        %6075 = vmatprep.subr.mxu0 0.0
        %6076 = vmatpush1.msra.mxu0 0.0
        %6077 = vmatprep.subr.mxu0 0.0
        %6078 = vmatpush1.msra.mxu0 0.0
        %6079 = vmatprep.subr.mxu0 0.0
        %6080 = vmatpush1.msra.mxu0 0.0
        %6081 = vmatprep.subr.mxu0 0.0
        %6082 = vmatpush1.msra.mxu0 0.0
        %6083 = vmatprep.subr.mxu0 0.0
        %6084 = vmatpush1.msra.mxu0 0.0
        %6085 = vmatprep.subr.mxu0 0.0
        %6086 = vmatpush1.msra.mxu0 0.0
        %6087 = vmatprep.subr.mxu0 0.0
        %6088 = vmatpush1.msra.mxu0 0.0
        %6089 = vmatprep.subr.mxu0 0.0
        %6090 = vmatpush1.msra.mxu0 0.0
        %6091 = vmatprep.subr.mxu0 0.0
        %6092 = vmatpush1.msra.mxu0 0.0
        %6093 = vmatprep.subr.mxu0 0.0
        %6094 = vmatpush1.msra.mxu0 0.0
        %6095 = vmatprep.subr.mxu0 0.0
        %6096 = vmatpush1.msra.mxu0 0.0
        %6097 = vmatprep.subr.mxu0 0.0
        %6098 = vmatpush1.msra.mxu0 0.0
        %6099 = vmatprep.subr.mxu0 0.0
        %6100 = vmatpush1.msra.mxu0 0.0
        %6101 = vmatprep.subr.mxu0 0.0
        %6102 = vmatpush1.msra.mxu0 0.0
        %6103 = vmatprep.subr.mxu0 0.0
        %6104 = vmatpush1.msra.mxu0 0.0
        %6105 = vmatprep.subr.mxu0 0.0
        %6106 = vmatpush1.msra.mxu0 0.0
        %6107 = vmatprep.mubr.f32.mxu0 0.0
        %6108 = vmatmul.mubr.f32.gmra.mrb[0].mxu0 %v5635
        %v6109 = vpop.f32.mrb[0].mxu0
        %v6110 = vadd.f32 %v6041, %v6109
        %v6111 = vpop.f32.mrb[0].mxu0
        %6112 = vdwg.mxu0
        %s6113 = scalar_lea.vmem %s41, 288
        %v6114 = vld [vmem:[%s6113] sm:$0xff]
        %v6115 = vld [vmem:[%s6113 + $0x8] sm:$0xff]
        %v6116 = vld [vmem:[%s6113 + $0x10] sm:$0xff]
        %v6117 = vld [vmem:[%s6113 + $0x18] sm:$0xff]
        %s6118 = scalar_lea.vmem %s43, 9
        %v6119 = vld [vmem:[%s6118] sm:$0x1]
        %v6121 = vlaneseq
        %v6122 = vshrl.u32 %v6121, 7
        %v6123 = vsub.s32 0, %v6122
        %v6124 = vrot.slane %v6119, %v6123
        %6126 = vmatprep.subr.mxu0 0.0
        %6127 = vmatpush1.msra.mxu0 %v6114
        %6128 = vmatprep.subr.mxu0 0.0
        %6129 = vmatpush1.msra.mxu0 %v6115
        %6130 = vmatprep.subr.mxu0 0.0
        %6131 = vmatpush1.msra.mxu0 %v6116
        %6132 = vmatprep.subr.mxu0 0.0
        %6133 = vmatpush1.msra.mxu0 %v6117
        %6134 = vmatprep.subr.mxu0 0.0
        %6135 = vmatpush1.msra.mxu0 0.0
        %6136 = vmatprep.subr.mxu0 0.0
        %6137 = vmatpush1.msra.mxu0 0.0
        %6138 = vmatprep.subr.mxu0 0.0
        %6139 = vmatpush1.msra.mxu0 0.0
        %6140 = vmatprep.subr.mxu0 0.0
        %6141 = vmatpush1.msra.mxu0 0.0
        %6142 = vmatprep.subr.mxu0 0.0
        %6143 = vmatpush1.msra.mxu0 0.0
        %6144 = vmatprep.subr.mxu0 0.0
        %6145 = vmatpush1.msra.mxu0 0.0
        %6146 = vmatprep.subr.mxu0 0.0
        %6147 = vmatpush1.msra.mxu0 0.0
        %6148 = vmatprep.subr.mxu0 0.0
        %6149 = vmatpush1.msra.mxu0 0.0
        %6150 = vmatprep.subr.mxu0 0.0
        %6151 = vmatpush1.msra.mxu0 0.0
        %6152 = vmatprep.subr.mxu0 0.0
        %6153 = vmatpush1.msra.mxu0 0.0
        %6154 = vmatprep.subr.mxu0 0.0
        %6155 = vmatpush1.msra.mxu0 0.0
        %6156 = vmatprep.subr.mxu0 0.0
        %6157 = vmatpush1.msra.mxu0 0.0
        %6158 = vmatprep.subr.mxu0 0.0
        %6159 = vmatpush1.msra.mxu0 0.0
        %6160 = vmatprep.subr.mxu0 0.0
        %6161 = vmatpush1.msra.mxu0 0.0
        %6162 = vmatprep.subr.mxu0 0.0
        %6163 = vmatpush1.msra.mxu0 0.0
        %6164 = vmatprep.subr.mxu0 0.0
        %6165 = vmatpush1.msra.mxu0 0.0
        %6166 = vmatprep.subr.mxu0 0.0
        %6167 = vmatpush1.msra.mxu0 0.0
        %6168 = vmatprep.subr.mxu0 0.0
        %6169 = vmatpush1.msra.mxu0 0.0
        %6170 = vmatprep.subr.mxu0 0.0
        %6171 = vmatpush1.msra.mxu0 0.0
        %6172 = vmatprep.subr.mxu0 0.0
        %6173 = vmatpush1.msra.mxu0 0.0
        %6174 = vmatprep.subr.mxu0 0.0
        %6175 = vmatpush1.msra.mxu0 0.0
        %6176 = vmatprep.subr.mxu0 0.0
        %6177 = vmatpush1.msra.mxu0 0.0
        %6178 = vmatprep.subr.mxu0 0.0
        %6179 = vmatpush1.msra.mxu0 0.0
        %6180 = vmatprep.subr.mxu0 0.0
        %6181 = vmatpush1.msra.mxu0 0.0
        %6182 = vmatprep.subr.mxu0 0.0
        %6183 = vmatpush1.msra.mxu0 0.0
        %6184 = vmatprep.subr.mxu0 0.0
        %6185 = vmatpush1.msra.mxu0 0.0
        %6186 = vmatprep.subr.mxu0 0.0
        %6187 = vmatpush1.msra.mxu0 0.0
        %6188 = vmatprep.subr.mxu0 0.0
        %6189 = vmatpush1.msra.mxu0 0.0
        %6190 = vmatprep.mubr.f32.mxu0 0.0
        %6191 = vmatmul.mubr.f32.gmra.mrb[0].mxu0 %v5635
        %v6192 = vpop.f32.mrb[0].mxu0
        %v6193 = vadd.f32 %v6124, %v6192
        %v6194 = vpop.f32.mrb[0].mxu0
        %6195 = vdwg.mxu0
        %v6197 = vsel %vm906, %v6027, 0
        %v6200 = vsel %vm906, %v6110, 0
        %6202 = vmatprep.subr.mxu0 0.0
        %6203 = vmatpush1.xpose.msra.mxu0 %v6200
        %6204 = vmatprep.subr.mxu0 0.0
        %6205 = vmatpush1.xpose.msra.mxu0 0.0
        %6206 = vmatprep.subr.mxu0 0.0
        %6207 = vmatpush1.xpose.msra.mxu0 0.0
        %6208 = vmatprep.subr.mxu0 0.0
        %6209 = vmatpush1.xpose.msra.mxu0 0.0
        %6210 = vmatprep.subr.mxu0 0.0
        %6211 = vmatpush1.xpose.msra.mxu0 0.0
        %6212 = vmatprep.subr.mxu0 0.0
        %6213 = vmatpush1.xpose.msra.mxu0 0.0
        %6214 = vmatprep.subr.mxu0 0.0
        %6215 = vmatpush1.xpose.msra.mxu0 0.0
        %6216 = vmatprep.subr.mxu0 0.0
        %6217 = vmatpush1.xpose.msra.mxu0 0.0
        %6218 = vmatprep.subr.mxu0 0.0
        %6219 = vmatpush1.xpose.msra.mxu0 0.0
        %6220 = vmatprep.subr.mxu0 0.0
        %6221 = vmatpush1.xpose.msra.mxu0 0.0
        %6222 = vmatprep.subr.mxu0 0.0
        %6223 = vmatpush1.xpose.msra.mxu0 0.0
        %6224 = vmatprep.subr.mxu0 0.0
        %6225 = vmatpush1.xpose.msra.mxu0 0.0
        %6226 = vmatprep.subr.mxu0 0.0
        %6227 = vmatpush1.xpose.msra.mxu0 0.0
        %6228 = vmatprep.subr.mxu0 0.0
        %6229 = vmatpush1.xpose.msra.mxu0 0.0
        %6230 = vmatprep.subr.mxu0 0.0
        %6231 = vmatpush1.xpose.msra.mxu0 0.0
        %6232 = vmatprep.subr.mxu0 0.0
        %6233 = vmatpush1.xpose.msra.mxu0 0.0
        %6234 = vmatprep.subr.mxu0 0.0
        %6235 = vmatpush1.xpose.msra.mxu0 0.0
        %6236 = vmatprep.subr.mxu0 0.0
        %6237 = vmatpush1.xpose.msra.mxu0 0.0
        %6238 = vmatprep.subr.mxu0 0.0
        %6239 = vmatpush1.xpose.msra.mxu0 0.0
        %6240 = vmatprep.subr.mxu0 0.0
        %6241 = vmatpush1.xpose.msra.mxu0 0.0
        %6242 = vmatprep.subr.mxu0 0.0
        %6243 = vmatpush1.xpose.msra.mxu0 0.0
        %6244 = vmatprep.subr.mxu0 0.0
        %6245 = vmatpush1.xpose.msra.mxu0 0.0
        %6246 = vmatprep.subr.mxu0 0.0
        %6247 = vmatpush1.xpose.msra.mxu0 0.0
        %6248 = vmatprep.subr.mxu0 0.0
        %6249 = vmatpush1.xpose.msra.mxu0 0.0
        %6250 = vmatprep.subr.mxu0 0.0
        %6251 = vmatpush1.xpose.msra.mxu0 0.0
        %6252 = vmatprep.subr.mxu0 0.0
        %6253 = vmatpush1.xpose.msra.mxu0 0.0
        %6254 = vmatprep.subr.mxu0 0.0
        %6255 = vmatpush1.xpose.msra.mxu0 0.0
        %6256 = vmatprep.subr.mxu0 0.0
        %6257 = vmatpush1.xpose.msra.mxu0 0.0
        %6258 = vmatprep.subr.mxu0 0.0
        %6259 = vmatpush1.xpose.msra.mxu0 0.0
        %6260 = vmatprep.subr.mxu0 0.0
        %6261 = vmatpush1.xpose.msra.mxu0 0.0
        %6262 = vmatprep.subr.mxu0 0.0
        %6263 = vmatpush1.xpose.msra.mxu0 0.0
        %6264 = vmatprep.subr.mxu0 0.0
        %6265 = vmatpush1.xpose.msra.mxu0 0.0
        %6266 = vmatprep.mubr.f32.mxu0 0.0
        %6267 = vmatmul.mubr.f32.gmra.mrb[0].mxu0 %v6197
        %v6268 = vpop.f32.mrb[0].mxu0
        %v6269 = vadd.f32 0.0, %v6268
        %v6270 = vpop.f32.mrb[0].mxu0
        %6271 = vdwg.mxu0
        %v6272 = vmul.f32 %v6269, 0.35355338
        %v6273 = vsel %vm5867, %v6272, -inf
        %6274 = vmax.xlane.f32.xlu0 %v6273
        %v6275 = vpop.xlane.xlu0 %6274
        %v6276 = vsub.f32 %v6272, %v6275
        %v6277 = vmul.f32 %v6276, 1.442695
        %v6278 = vpow.pop %v6277
        %v6279 = vsel %vm5867, %v6278, 0.0
        %6280 = vadd.xlane.f32.xlu0 %v6279
        %v6281 = vpop.xlane.xlu0 %6280
        %v6282 = vrcp.pop %v6281
        %v6283 = vmul.f32 %v6278, %v6282
        %v6285 = vsel %vm906, %v6283, 0
        %6287 = vmatprep.subr.mxu0 0.0
        %6288 = vmatpush1.msra.mxu0 %v6193
        %6289 = vmatprep.subr.mxu0 0.0
        %6290 = vmatpush1.msra.mxu0 0.0
        %6291 = vmatprep.subr.mxu0 0.0
        %6292 = vmatpush1.msra.mxu0 0.0
        %6293 = vmatprep.subr.mxu0 0.0
        %6294 = vmatpush1.msra.mxu0 0.0
        %6295 = vmatprep.subr.mxu0 0.0
        %6296 = vmatpush1.msra.mxu0 0.0
        %6297 = vmatprep.subr.mxu0 0.0
        %6298 = vmatpush1.msra.mxu0 0.0
        %6299 = vmatprep.subr.mxu0 0.0
        %6300 = vmatpush1.msra.mxu0 0.0
        %6301 = vmatprep.subr.mxu0 0.0
        %6302 = vmatpush1.msra.mxu0 0.0
        %6303 = vmatprep.subr.mxu0 0.0
        %6304 = vmatpush1.msra.mxu0 0.0
        %6305 = vmatprep.subr.mxu0 0.0
        %6306 = vmatpush1.msra.mxu0 0.0
        %6307 = vmatprep.subr.mxu0 0.0
        %6308 = vmatpush1.msra.mxu0 0.0
        %6309 = vmatprep.subr.mxu0 0.0
        %6310 = vmatpush1.msra.mxu0 0.0
        %6311 = vmatprep.subr.mxu0 0.0
        %6312 = vmatpush1.msra.mxu0 0.0
        %6313 = vmatprep.subr.mxu0 0.0
        %6314 = vmatpush1.msra.mxu0 0.0
        %6315 = vmatprep.subr.mxu0 0.0
        %6316 = vmatpush1.msra.mxu0 0.0
        %6317 = vmatprep.subr.mxu0 0.0
        %6318 = vmatpush1.msra.mxu0 0.0
        %6319 = vmatprep.subr.mxu0 0.0
        %6320 = vmatpush1.msra.mxu0 0.0
        %6321 = vmatprep.subr.mxu0 0.0
        %6322 = vmatpush1.msra.mxu0 0.0
        %6323 = vmatprep.subr.mxu0 0.0
        %6324 = vmatpush1.msra.mxu0 0.0
        %6325 = vmatprep.subr.mxu0 0.0
        %6326 = vmatpush1.msra.mxu0 0.0
        %6327 = vmatprep.subr.mxu0 0.0
        %6328 = vmatpush1.msra.mxu0 0.0
        %6329 = vmatprep.subr.mxu0 0.0
        %6330 = vmatpush1.msra.mxu0 0.0
        %6331 = vmatprep.subr.mxu0 0.0
        %6332 = vmatpush1.msra.mxu0 0.0
        %6333 = vmatprep.subr.mxu0 0.0
        %6334 = vmatpush1.msra.mxu0 0.0
        %6335 = vmatprep.subr.mxu0 0.0
        %6336 = vmatpush1.msra.mxu0 0.0
        %6337 = vmatprep.subr.mxu0 0.0
        %6338 = vmatpush1.msra.mxu0 0.0
        %6339 = vmatprep.subr.mxu0 0.0
        %6340 = vmatpush1.msra.mxu0 0.0
        %6341 = vmatprep.subr.mxu0 0.0
        %6342 = vmatpush1.msra.mxu0 0.0
        %6343 = vmatprep.subr.mxu0 0.0
        %6344 = vmatpush1.msra.mxu0 0.0
        %6345 = vmatprep.subr.mxu0 0.0
        %6346 = vmatpush1.msra.mxu0 0.0
        %6347 = vmatprep.subr.mxu0 0.0
        %6348 = vmatpush1.msra.mxu0 0.0
        %6349 = vmatprep.subr.mxu0 0.0
        %6350 = vmatpush1.msra.mxu0 0.0
        %6351 = vmatprep.mubr.f32.mxu0 0.0
        %6352 = vmatmul.mubr.f32.gmra.mrb[0].mxu0 %v6285
        %v6353 = vpop.f32.mrb[0].mxu0
        %v6354 = vadd.f32 0.0, %v6353
        %v6355 = vpop.f32.mrb[0].mxu0
        %6356 = vdwg.mxu0
        %s6357 = scalar_lea.vmem %s45, 8
        %v6358 = vld [vmem:[%s6357] sm:$0xff]
        %v6360 = vsel %vm906, %v6354, 0
        %6362 = vmatprep.subr.mxu0 0.0
        %6363 = vmatpush1.msra.mxu0 %v6358
        %6364 = vmatprep.subr.mxu0 0.0
        %6365 = vmatpush1.msra.mxu0 0.0
        %6366 = vmatprep.subr.mxu0 0.0
        %6367 = vmatpush1.msra.mxu0 0.0
        %6368 = vmatprep.subr.mxu0 0.0
        %6369 = vmatpush1.msra.mxu0 0.0
        %6370 = vmatprep.subr.mxu0 0.0
        %6371 = vmatpush1.msra.mxu0 0.0
        %6372 = vmatprep.subr.mxu0 0.0
        %6373 = vmatpush1.msra.mxu0 0.0
        %6374 = vmatprep.subr.mxu0 0.0
        %6375 = vmatpush1.msra.mxu0 0.0
        %6376 = vmatprep.subr.mxu0 0.0
        %6377 = vmatpush1.msra.mxu0 0.0
        %6378 = vmatprep.subr.mxu0 0.0
        %6379 = vmatpush1.msra.mxu0 0.0
        %6380 = vmatprep.subr.mxu0 0.0
        %6381 = vmatpush1.msra.mxu0 0.0
        %6382 = vmatprep.subr.mxu0 0.0
        %6383 = vmatpush1.msra.mxu0 0.0
        %6384 = vmatprep.subr.mxu0 0.0
        %6385 = vmatpush1.msra.mxu0 0.0
        %6386 = vmatprep.subr.mxu0 0.0
        %6387 = vmatpush1.msra.mxu0 0.0
        %6388 = vmatprep.subr.mxu0 0.0
        %6389 = vmatpush1.msra.mxu0 0.0
        %6390 = vmatprep.subr.mxu0 0.0
        %6391 = vmatpush1.msra.mxu0 0.0
        %6392 = vmatprep.subr.mxu0 0.0
        %6393 = vmatpush1.msra.mxu0 0.0
        %6394 = vmatprep.subr.mxu0 0.0
        %6395 = vmatpush1.msra.mxu0 0.0
        %6396 = vmatprep.subr.mxu0 0.0
        %6397 = vmatpush1.msra.mxu0 0.0
        %6398 = vmatprep.subr.mxu0 0.0
        %6399 = vmatpush1.msra.mxu0 0.0
        %6400 = vmatprep.subr.mxu0 0.0
        %6401 = vmatpush1.msra.mxu0 0.0
        %6402 = vmatprep.subr.mxu0 0.0
        %6403 = vmatpush1.msra.mxu0 0.0
        %6404 = vmatprep.subr.mxu0 0.0
        %6405 = vmatpush1.msra.mxu0 0.0
        %6406 = vmatprep.subr.mxu0 0.0
        %6407 = vmatpush1.msra.mxu0 0.0
        %6408 = vmatprep.subr.mxu0 0.0
        %6409 = vmatpush1.msra.mxu0 0.0
        %6410 = vmatprep.subr.mxu0 0.0
        %6411 = vmatpush1.msra.mxu0 0.0
        %6412 = vmatprep.subr.mxu0 0.0
        %6413 = vmatpush1.msra.mxu0 0.0
        %6414 = vmatprep.subr.mxu0 0.0
        %6415 = vmatpush1.msra.mxu0 0.0
        %6416 = vmatprep.subr.mxu0 0.0
        %6417 = vmatpush1.msra.mxu0 0.0
        %6418 = vmatprep.subr.mxu0 0.0
        %6419 = vmatpush1.msra.mxu0 0.0
        %6420 = vmatprep.subr.mxu0 0.0
        %6421 = vmatpush1.msra.mxu0 0.0
        %6422 = vmatprep.subr.mxu0 0.0
        %6423 = vmatpush1.msra.mxu0 0.0
        %6424 = vmatprep.subr.mxu0 0.0
        %6425 = vmatpush1.msra.mxu0 0.0
        %6426 = vmatprep.mubr.f32.mxu0 0.0
        %6427 = vmatmul.mubr.f32.gmra.mrb[0].mxu0 %v6360
        %v6428 = vpop.f32.mrb[0].mxu0
        %v6429 = vadd.f32 0.0, %v6428
        %v6430 = vpop.f32.mrb[0].mxu0
        %6431 = vdwg.mxu0
        %v6433 = vsel %vm906, %v5949, 0
        %6435 = vmatprep.subr.mxu0 0.0
        %6436 = vmatpush1.msra.mxu0 %v5952
        %6437 = vmatprep.subr.mxu0 0.0
        %6438 = vmatpush1.msra.mxu0 0.0
        %6439 = vmatprep.subr.mxu0 0.0
        %6440 = vmatpush1.msra.mxu0 0.0
        %6441 = vmatprep.subr.mxu0 0.0
        %6442 = vmatpush1.msra.mxu0 0.0
        %6443 = vmatprep.subr.mxu0 0.0
        %6444 = vmatpush1.msra.mxu0 0.0
        %6445 = vmatprep.subr.mxu0 0.0
        %6446 = vmatpush1.msra.mxu0 0.0
        %6447 = vmatprep.subr.mxu0 0.0
        %6448 = vmatpush1.msra.mxu0 0.0
        %6449 = vmatprep.subr.mxu0 0.0
        %6450 = vmatpush1.msra.mxu0 0.0
        %6451 = vmatprep.subr.mxu0 0.0
        %6452 = vmatpush1.msra.mxu0 0.0
        %6453 = vmatprep.subr.mxu0 0.0
        %6454 = vmatpush1.msra.mxu0 0.0
        %6455 = vmatprep.subr.mxu0 0.0
        %6456 = vmatpush1.msra.mxu0 0.0
        %6457 = vmatprep.subr.mxu0 0.0
        %6458 = vmatpush1.msra.mxu0 0.0
        %6459 = vmatprep.subr.mxu0 0.0
        %6460 = vmatpush1.msra.mxu0 0.0
        %6461 = vmatprep.subr.mxu0 0.0
        %6462 = vmatpush1.msra.mxu0 0.0
        %6463 = vmatprep.subr.mxu0 0.0
        %6464 = vmatpush1.msra.mxu0 0.0
        %6465 = vmatprep.subr.mxu0 0.0
        %6466 = vmatpush1.msra.mxu0 0.0
        %6467 = vmatprep.subr.mxu0 0.0
        %6468 = vmatpush1.msra.mxu0 0.0
        %6469 = vmatprep.subr.mxu0 0.0
        %6470 = vmatpush1.msra.mxu0 0.0
        %6471 = vmatprep.subr.mxu0 0.0
        %6472 = vmatpush1.msra.mxu0 0.0
        %6473 = vmatprep.subr.mxu0 0.0
        %6474 = vmatpush1.msra.mxu0 0.0
        %6475 = vmatprep.subr.mxu0 0.0
        %6476 = vmatpush1.msra.mxu0 0.0
        %6477 = vmatprep.subr.mxu0 0.0
        %6478 = vmatpush1.msra.mxu0 0.0
        %6479 = vmatprep.subr.mxu0 0.0
        %6480 = vmatpush1.msra.mxu0 0.0
        %6481 = vmatprep.subr.mxu0 0.0
        %6482 = vmatpush1.msra.mxu0 0.0
        %6483 = vmatprep.subr.mxu0 0.0
        %6484 = vmatpush1.msra.mxu0 0.0
        %6485 = vmatprep.subr.mxu0 0.0
        %6486 = vmatpush1.msra.mxu0 0.0
        %6487 = vmatprep.subr.mxu0 0.0
        %6488 = vmatpush1.msra.mxu0 0.0
        %6489 = vmatprep.subr.mxu0 0.0
        %6490 = vmatpush1.msra.mxu0 0.0
        %6491 = vmatprep.subr.mxu0 0.0
        %6492 = vmatpush1.msra.mxu0 0.0
        %6493 = vmatprep.subr.mxu0 0.0
        %6494 = vmatpush1.msra.mxu0 0.0
        %6495 = vmatprep.subr.mxu0 0.0
        %6496 = vmatpush1.msra.mxu0 0.0
        %6497 = vmatprep.subr.mxu0 0.0
        %6498 = vmatpush1.msra.mxu0 0.0
        %6499 = vmatprep.mubr.f32.mxu0 0.0
        %6500 = vmatmul.mubr.f32.gmra.mrb[0].mxu0 %v6433
        %v6501 = vpop.f32.mrb[0].mxu0
        %v6502 = vadd.f32 %v6429, %v6501
        %v6503 = vpop.f32.mrb[0].mxu0
        %6504 = vdwg.mxu0
        %s6505 = scalar_lea.vmem %s41, 64
        %v6506 = vld [vmem:[%s6505] sm:$0xff]
        %v6507 = vld [vmem:[%s6505 + $0x8] sm:$0xff]
        %v6508 = vld [vmem:[%s6505 + $0x10] sm:$0xff]
        %v6509 = vld [vmem:[%s6505 + $0x18] sm:$0xff]
        %s6510 = scalar_lea.vmem %s43, 2
        %v6511 = vld [vmem:[%s6510] sm:$0x1]
        %6512 = vmatprep.subr.mxu0 0.0
        %6513 = vmatpush1.msra.mxu0 %v6506
        %6514 = vmatprep.subr.mxu0 0.0
        %6515 = vmatpush1.msra.mxu0 %v6507
        %6516 = vmatprep.subr.mxu0 0.0
        %6517 = vmatpush1.msra.mxu0 %v6508
        %6518 = vmatprep.subr.mxu0 0.0
        %6519 = vmatpush1.msra.mxu0 %v6509
        %6520 = vmatprep.subr.mxu0 0.0
        %6521 = vmatpush1.msra.mxu0 0.0
        %6522 = vmatprep.subr.mxu0 0.0
        %6523 = vmatpush1.msra.mxu0 0.0
        %6524 = vmatprep.subr.mxu0 0.0
        %6525 = vmatpush1.msra.mxu0 0.0
        %6526 = vmatprep.subr.mxu0 0.0
        %6527 = vmatpush1.msra.mxu0 0.0
        %6528 = vmatprep.subr.mxu0 0.0
        %6529 = vmatpush1.msra.mxu0 0.0
        %6530 = vmatprep.subr.mxu0 0.0
        %6531 = vmatpush1.msra.mxu0 0.0
        %6532 = vmatprep.subr.mxu0 0.0
        %6533 = vmatpush1.msra.mxu0 0.0
        %6534 = vmatprep.subr.mxu0 0.0
        %6535 = vmatpush1.msra.mxu0 0.0
        %6536 = vmatprep.subr.mxu0 0.0
        %6537 = vmatpush1.msra.mxu0 0.0
        %6538 = vmatprep.subr.mxu0 0.0
        %6539 = vmatpush1.msra.mxu0 0.0
        %6540 = vmatprep.subr.mxu0 0.0
        %6541 = vmatpush1.msra.mxu0 0.0
        %6542 = vmatprep.subr.mxu0 0.0
        %6543 = vmatpush1.msra.mxu0 0.0
        %6544 = vmatprep.subr.mxu0 0.0
        %6545 = vmatpush1.msra.mxu0 0.0
        %6546 = vmatprep.subr.mxu0 0.0
        %6547 = vmatpush1.msra.mxu0 0.0
        %6548 = vmatprep.subr.mxu0 0.0
        %6549 = vmatpush1.msra.mxu0 0.0
        %6550 = vmatprep.subr.mxu0 0.0
        %6551 = vmatpush1.msra.mxu0 0.0
        %6552 = vmatprep.subr.mxu0 0.0
        %6553 = vmatpush1.msra.mxu0 0.0
        %6554 = vmatprep.subr.mxu0 0.0
        %6555 = vmatpush1.msra.mxu0 0.0
        %6556 = vmatprep.subr.mxu0 0.0
        %6557 = vmatpush1.msra.mxu0 0.0
        %6558 = vmatprep.subr.mxu0 0.0
        %6559 = vmatpush1.msra.mxu0 0.0
        %6560 = vmatprep.subr.mxu0 0.0
        %6561 = vmatpush1.msra.mxu0 0.0
        %6562 = vmatprep.subr.mxu0 0.0
        %6563 = vmatpush1.msra.mxu0 0.0
        %6564 = vmatprep.subr.mxu0 0.0
        %6565 = vmatpush1.msra.mxu0 0.0
        %6566 = vmatprep.subr.mxu0 0.0
        %6567 = vmatpush1.msra.mxu0 0.0
        %6568 = vmatprep.subr.mxu0 0.0
        %6569 = vmatpush1.msra.mxu0 0.0
        %6570 = vmatprep.subr.mxu0 0.0
        %6571 = vmatpush1.msra.mxu0 0.0
        %6572 = vmatprep.subr.mxu0 0.0
        %6573 = vmatpush1.msra.mxu0 0.0
        %6574 = vmatprep.subr.mxu0 0.0
        %6575 = vmatpush1.msra.mxu0 0.0
        %6576 = vmatprep.mubr.f32.mxu0 0.0
        %6577 = vmatmul.mubr.f32.gmra.mrb[0].mxu0 %v5549
        %v6578 = vpop.f32.mrb[0].mxu0
        %v6579 = vadd.f32 %v6511, %v6578
        %v6580 = vpop.f32.mrb[0].mxu0
        %6581 = vdwg.mxu0
        %s6582 = scalar_lea.vmem %s41, 192
        %v6583 = vld [vmem:[%s6582] sm:$0xff]
        %v6584 = vld [vmem:[%s6582 + $0x8] sm:$0xff]
        %v6585 = vld [vmem:[%s6582 + $0x10] sm:$0xff]
        %v6586 = vld [vmem:[%s6582 + $0x18] sm:$0xff]
        %s6587 = scalar_lea.vmem %s43, 6
        %v6588 = vld [vmem:[%s6587] sm:$0x1]
        %v6590 = vlaneseq
        %v6591 = vshrl.u32 %v6590, 7
        %v6592 = vsub.s32 0, %v6591
        %v6593 = vrot.slane %v6588, %v6592
        %6595 = vmatprep.subr.mxu0 0.0
        %6596 = vmatpush1.msra.mxu0 %v6583
        %6597 = vmatprep.subr.mxu0 0.0
        %6598 = vmatpush1.msra.mxu0 %v6584
        %6599 = vmatprep.subr.mxu0 0.0
        %6600 = vmatpush1.msra.mxu0 %v6585
        %6601 = vmatprep.subr.mxu0 0.0
        %6602 = vmatpush1.msra.mxu0 %v6586
        %6603 = vmatprep.subr.mxu0 0.0
        %6604 = vmatpush1.msra.mxu0 0.0
        %6605 = vmatprep.subr.mxu0 0.0
        %6606 = vmatpush1.msra.mxu0 0.0
        %6607 = vmatprep.subr.mxu0 0.0
        %6608 = vmatpush1.msra.mxu0 0.0
        %6609 = vmatprep.subr.mxu0 0.0
        %6610 = vmatpush1.msra.mxu0 0.0
        %6611 = vmatprep.subr.mxu0 0.0
        %6612 = vmatpush1.msra.mxu0 0.0
        %6613 = vmatprep.subr.mxu0 0.0
        %6614 = vmatpush1.msra.mxu0 0.0
        %6615 = vmatprep.subr.mxu0 0.0
        %6616 = vmatpush1.msra.mxu0 0.0
        %6617 = vmatprep.subr.mxu0 0.0
        %6618 = vmatpush1.msra.mxu0 0.0
        %6619 = vmatprep.subr.mxu0 0.0
        %6620 = vmatpush1.msra.mxu0 0.0
        %6621 = vmatprep.subr.mxu0 0.0
        %6622 = vmatpush1.msra.mxu0 0.0
        %6623 = vmatprep.subr.mxu0 0.0
        %6624 = vmatpush1.msra.mxu0 0.0
        %6625 = vmatprep.subr.mxu0 0.0
        %6626 = vmatpush1.msra.mxu0 0.0
        %6627 = vmatprep.subr.mxu0 0.0
        %6628 = vmatpush1.msra.mxu0 0.0
        %6629 = vmatprep.subr.mxu0 0.0
        %6630 = vmatpush1.msra.mxu0 0.0
        %6631 = vmatprep.subr.mxu0 0.0
        %6632 = vmatpush1.msra.mxu0 0.0
        %6633 = vmatprep.subr.mxu0 0.0
        %6634 = vmatpush1.msra.mxu0 0.0
        %6635 = vmatprep.subr.mxu0 0.0
        %6636 = vmatpush1.msra.mxu0 0.0
        %6637 = vmatprep.subr.mxu0 0.0
        %6638 = vmatpush1.msra.mxu0 0.0
        %6639 = vmatprep.subr.mxu0 0.0
        %6640 = vmatpush1.msra.mxu0 0.0
        %6641 = vmatprep.subr.mxu0 0.0
        %6642 = vmatpush1.msra.mxu0 0.0
        %6643 = vmatprep.subr.mxu0 0.0
        %6644 = vmatpush1.msra.mxu0 0.0
        %6645 = vmatprep.subr.mxu0 0.0
        %6646 = vmatpush1.msra.mxu0 0.0
        %6647 = vmatprep.subr.mxu0 0.0
        %6648 = vmatpush1.msra.mxu0 0.0
        %6649 = vmatprep.subr.mxu0 0.0
        %6650 = vmatpush1.msra.mxu0 0.0
        %6651 = vmatprep.subr.mxu0 0.0
        %6652 = vmatpush1.msra.mxu0 0.0
        %6653 = vmatprep.subr.mxu0 0.0
        %6654 = vmatpush1.msra.mxu0 0.0
        %6655 = vmatprep.subr.mxu0 0.0
        %6656 = vmatpush1.msra.mxu0 0.0
        %6657 = vmatprep.subr.mxu0 0.0
        %6658 = vmatpush1.msra.mxu0 0.0
        %6659 = vmatprep.mubr.f32.mxu0 0.0
        %6660 = vmatmul.mubr.f32.gmra.mrb[0].mxu0 %v5635
        %v6661 = vpop.f32.mrb[0].mxu0
        %v6662 = vadd.f32 %v6593, %v6661
        %v6663 = vpop.f32.mrb[0].mxu0
        %6664 = vdwg.mxu0
        %s6665 = scalar_lea.vmem %s41, 320
        %v6666 = vld [vmem:[%s6665] sm:$0xff]
        %v6667 = vld [vmem:[%s6665 + $0x8] sm:$0xff]
        %v6668 = vld [vmem:[%s6665 + $0x10] sm:$0xff]
        %v6669 = vld [vmem:[%s6665 + $0x18] sm:$0xff]
        %s6670 = scalar_lea.vmem %s43, 10
        %v6671 = vld [vmem:[%s6670] sm:$0x1]
        %v6673 = vlaneseq
        %v6674 = vshrl.u32 %v6673, 7
        %v6675 = vsub.s32 0, %v6674
        %v6676 = vrot.slane %v6671, %v6675
        %6678 = vmatprep.subr.mxu0 0.0
        %6679 = vmatpush1.msra.mxu0 %v6666
        %6680 = vmatprep.subr.mxu0 0.0
        %6681 = vmatpush1.msra.mxu0 %v6667
        %6682 = vmatprep.subr.mxu0 0.0
        %6683 = vmatpush1.msra.mxu0 %v6668
        %6684 = vmatprep.subr.mxu0 0.0
        %6685 = vmatpush1.msra.mxu0 %v6669
        %6686 = vmatprep.subr.mxu0 0.0
        %6687 = vmatpush1.msra.mxu0 0.0
        %6688 = vmatprep.subr.mxu0 0.0
        %6689 = vmatpush1.msra.mxu0 0.0
        %6690 = vmatprep.subr.mxu0 0.0
        %6691 = vmatpush1.msra.mxu0 0.0
        %6692 = vmatprep.subr.mxu0 0.0
        %6693 = vmatpush1.msra.mxu0 0.0
        %6694 = vmatprep.subr.mxu0 0.0
        %6695 = vmatpush1.msra.mxu0 0.0
        %6696 = vmatprep.subr.mxu0 0.0
        %6697 = vmatpush1.msra.mxu0 0.0
        %6698 = vmatprep.subr.mxu0 0.0
        %6699 = vmatpush1.msra.mxu0 0.0
        %6700 = vmatprep.subr.mxu0 0.0
        %6701 = vmatpush1.msra.mxu0 0.0
        %6702 = vmatprep.subr.mxu0 0.0
        %6703 = vmatpush1.msra.mxu0 0.0
        %6704 = vmatprep.subr.mxu0 0.0
        %6705 = vmatpush1.msra.mxu0 0.0
        %6706 = vmatprep.subr.mxu0 0.0
        %6707 = vmatpush1.msra.mxu0 0.0
        %6708 = vmatprep.subr.mxu0 0.0
        %6709 = vmatpush1.msra.mxu0 0.0
        %6710 = vmatprep.subr.mxu0 0.0
        %6711 = vmatpush1.msra.mxu0 0.0
        %6712 = vmatprep.subr.mxu0 0.0
        %6713 = vmatpush1.msra.mxu0 0.0
        %6714 = vmatprep.subr.mxu0 0.0
        %6715 = vmatpush1.msra.mxu0 0.0
        %6716 = vmatprep.subr.mxu0 0.0
        %6717 = vmatpush1.msra.mxu0 0.0
        %6718 = vmatprep.subr.mxu0 0.0
        %6719 = vmatpush1.msra.mxu0 0.0
        %6720 = vmatprep.subr.mxu0 0.0
        %6721 = vmatpush1.msra.mxu0 0.0
        %6722 = vmatprep.subr.mxu0 0.0
        %6723 = vmatpush1.msra.mxu0 0.0
        %6724 = vmatprep.subr.mxu0 0.0
        %6725 = vmatpush1.msra.mxu0 0.0
        %6726 = vmatprep.subr.mxu0 0.0
        %6727 = vmatpush1.msra.mxu0 0.0
        %6728 = vmatprep.subr.mxu0 0.0
        %6729 = vmatpush1.msra.mxu0 0.0
        %6730 = vmatprep.subr.mxu0 0.0
        %6731 = vmatpush1.msra.mxu0 0.0
        %6732 = vmatprep.subr.mxu0 0.0
        %6733 = vmatpush1.msra.mxu0 0.0
        %6734 = vmatprep.subr.mxu0 0.0
        %6735 = vmatpush1.msra.mxu0 0.0
        %6736 = vmatprep.subr.mxu0 0.0
        %6737 = vmatpush1.msra.mxu0 0.0
        %6738 = vmatprep.subr.mxu0 0.0
        %6739 = vmatpush1.msra.mxu0 0.0
        %6740 = vmatprep.subr.mxu0 0.0
        %6741 = vmatpush1.msra.mxu0 0.0
        %6742 = vmatprep.mubr.f32.mxu0 0.0
        %6743 = vmatmul.mubr.f32.gmra.mrb[0].mxu0 %v5635
        %v6744 = vpop.f32.mrb[0].mxu0
        %v6745 = vadd.f32 %v6676, %v6744
        %v6746 = vpop.f32.mrb[0].mxu0
        %6747 = vdwg.mxu0
        %v6749 = vsel %vm906, %v6579, 0
        %v6752 = vsel %vm906, %v6662, 0
        %6754 = vmatprep.subr.mxu0 0.0
        %6755 = vmatpush1.xpose.msra.mxu0 %v6752
        %6756 = vmatprep.subr.mxu0 0.0
        %6757 = vmatpush1.xpose.msra.mxu0 0.0
        %6758 = vmatprep.subr.mxu0 0.0
        %6759 = vmatpush1.xpose.msra.mxu0 0.0
        %6760 = vmatprep.subr.mxu0 0.0
        %6761 = vmatpush1.xpose.msra.mxu0 0.0
        %6762 = vmatprep.subr.mxu0 0.0
        %6763 = vmatpush1.xpose.msra.mxu0 0.0
        %6764 = vmatprep.subr.mxu0 0.0
        %6765 = vmatpush1.xpose.msra.mxu0 0.0
        %6766 = vmatprep.subr.mxu0 0.0
        %6767 = vmatpush1.xpose.msra.mxu0 0.0
        %6768 = vmatprep.subr.mxu0 0.0
        %6769 = vmatpush1.xpose.msra.mxu0 0.0
        %6770 = vmatprep.subr.mxu0 0.0
        %6771 = vmatpush1.xpose.msra.mxu0 0.0
        %6772 = vmatprep.subr.mxu0 0.0
        %6773 = vmatpush1.xpose.msra.mxu0 0.0
        %6774 = vmatprep.subr.mxu0 0.0
        %6775 = vmatpush1.xpose.msra.mxu0 0.0
        %6776 = vmatprep.subr.mxu0 0.0
        %6777 = vmatpush1.xpose.msra.mxu0 0.0
        %6778 = vmatprep.subr.mxu0 0.0
        %6779 = vmatpush1.xpose.msra.mxu0 0.0
        %6780 = vmatprep.subr.mxu0 0.0
        %6781 = vmatpush1.xpose.msra.mxu0 0.0
        %6782 = vmatprep.subr.mxu0 0.0
        %6783 = vmatpush1.xpose.msra.mxu0 0.0
        %6784 = vmatprep.subr.mxu0 0.0
        %6785 = vmatpush1.xpose.msra.mxu0 0.0
        %6786 = vmatprep.subr.mxu0 0.0
        %6787 = vmatpush1.xpose.msra.mxu0 0.0
        %6788 = vmatprep.subr.mxu0 0.0
        %6789 = vmatpush1.xpose.msra.mxu0 0.0
        %6790 = vmatprep.subr.mxu0 0.0
        %6791 = vmatpush1.xpose.msra.mxu0 0.0
        %6792 = vmatprep.subr.mxu0 0.0
        %6793 = vmatpush1.xpose.msra.mxu0 0.0
        %6794 = vmatprep.subr.mxu0 0.0
        %6795 = vmatpush1.xpose.msra.mxu0 0.0
        %6796 = vmatprep.subr.mxu0 0.0
        %6797 = vmatpush1.xpose.msra.mxu0 0.0
        %6798 = vmatprep.subr.mxu0 0.0
        %6799 = vmatpush1.xpose.msra.mxu0 0.0
        %6800 = vmatprep.subr.mxu0 0.0
        %6801 = vmatpush1.xpose.msra.mxu0 0.0
        %6802 = vmatprep.subr.mxu0 0.0
        %6803 = vmatpush1.xpose.msra.mxu0 0.0
        %6804 = vmatprep.subr.mxu0 0.0
        %6805 = vmatpush1.xpose.msra.mxu0 0.0
        %6806 = vmatprep.subr.mxu0 0.0
        %6807 = vmatpush1.xpose.msra.mxu0 0.0
        %6808 = vmatprep.subr.mxu0 0.0
        %6809 = vmatpush1.xpose.msra.mxu0 0.0
        %6810 = vmatprep.subr.mxu0 0.0
        %6811 = vmatpush1.xpose.msra.mxu0 0.0
        %6812 = vmatprep.subr.mxu0 0.0
        %6813 = vmatpush1.xpose.msra.mxu0 0.0
        %6814 = vmatprep.subr.mxu0 0.0
        %6815 = vmatpush1.xpose.msra.mxu0 0.0
        %6816 = vmatprep.subr.mxu0 0.0
        %6817 = vmatpush1.xpose.msra.mxu0 0.0
        %6818 = vmatprep.mubr.f32.mxu0 0.0
        %6819 = vmatmul.mubr.f32.gmra.mrb[0].mxu0 %v6749
        %v6820 = vpop.f32.mrb[0].mxu0
        %v6821 = vadd.f32 0.0, %v6820
        %v6822 = vpop.f32.mrb[0].mxu0
        %6823 = vdwg.mxu0
        %v6824 = vmul.f32 %v6821, 0.35355338
        %v6825 = vsel %vm5867, %v6824, -inf
        %6826 = vmax.xlane.f32.xlu0 %v6825
        %v6827 = vpop.xlane.xlu0 %6826
        %v6828 = vsub.f32 %v6824, %v6827
        %v6829 = vmul.f32 %v6828, 1.442695
        %v6830 = vpow.pop %v6829
        %v6831 = vsel %vm5867, %v6830, 0.0
        %6832 = vadd.xlane.f32.xlu0 %v6831
        %v6833 = vpop.xlane.xlu0 %6832
        %v6834 = vrcp.pop %v6833
        %v6835 = vmul.f32 %v6830, %v6834
        %v6837 = vsel %vm906, %v6835, 0
        %6839 = vmatprep.subr.mxu0 0.0
        %6840 = vmatpush1.msra.mxu0 %v6745
        %6841 = vmatprep.subr.mxu0 0.0
        %6842 = vmatpush1.msra.mxu0 0.0
        %6843 = vmatprep.subr.mxu0 0.0
        %6844 = vmatpush1.msra.mxu0 0.0
        %6845 = vmatprep.subr.mxu0 0.0
        %6846 = vmatpush1.msra.mxu0 0.0
        %6847 = vmatprep.subr.mxu0 0.0
        %6848 = vmatpush1.msra.mxu0 0.0
        %6849 = vmatprep.subr.mxu0 0.0
        %6850 = vmatpush1.msra.mxu0 0.0
        %6851 = vmatprep.subr.mxu0 0.0
        %6852 = vmatpush1.msra.mxu0 0.0
        %6853 = vmatprep.subr.mxu0 0.0
        %6854 = vmatpush1.msra.mxu0 0.0
        %6855 = vmatprep.subr.mxu0 0.0
        %6856 = vmatpush1.msra.mxu0 0.0
        %6857 = vmatprep.subr.mxu0 0.0
        %6858 = vmatpush1.msra.mxu0 0.0
        %6859 = vmatprep.subr.mxu0 0.0
        %6860 = vmatpush1.msra.mxu0 0.0
        %6861 = vmatprep.subr.mxu0 0.0
        %6862 = vmatpush1.msra.mxu0 0.0
        %6863 = vmatprep.subr.mxu0 0.0
        %6864 = vmatpush1.msra.mxu0 0.0
        %6865 = vmatprep.subr.mxu0 0.0
        %6866 = vmatpush1.msra.mxu0 0.0
        %6867 = vmatprep.subr.mxu0 0.0
        %6868 = vmatpush1.msra.mxu0 0.0
        %6869 = vmatprep.subr.mxu0 0.0
        %6870 = vmatpush1.msra.mxu0 0.0
        %6871 = vmatprep.subr.mxu0 0.0
        %6872 = vmatpush1.msra.mxu0 0.0
        %6873 = vmatprep.subr.mxu0 0.0
        %6874 = vmatpush1.msra.mxu0 0.0
        %6875 = vmatprep.subr.mxu0 0.0
        %6876 = vmatpush1.msra.mxu0 0.0
        %6877 = vmatprep.subr.mxu0 0.0
        %6878 = vmatpush1.msra.mxu0 0.0
        %6879 = vmatprep.subr.mxu0 0.0
        %6880 = vmatpush1.msra.mxu0 0.0
        %6881 = vmatprep.subr.mxu0 0.0
        %6882 = vmatpush1.msra.mxu0 0.0
        %6883 = vmatprep.subr.mxu0 0.0
        %6884 = vmatpush1.msra.mxu0 0.0
        %6885 = vmatprep.subr.mxu0 0.0
        %6886 = vmatpush1.msra.mxu0 0.0
        %6887 = vmatprep.subr.mxu0 0.0
        %6888 = vmatpush1.msra.mxu0 0.0
        %6889 = vmatprep.subr.mxu0 0.0
        %6890 = vmatpush1.msra.mxu0 0.0
        %6891 = vmatprep.subr.mxu0 0.0
        %6892 = vmatpush1.msra.mxu0 0.0
        %6893 = vmatprep.subr.mxu0 0.0
        %6894 = vmatpush1.msra.mxu0 0.0
        %6895 = vmatprep.subr.mxu0 0.0
        %6896 = vmatpush1.msra.mxu0 0.0
        %6897 = vmatprep.subr.mxu0 0.0
        %6898 = vmatpush1.msra.mxu0 0.0
        %6899 = vmatprep.subr.mxu0 0.0
        %6900 = vmatpush1.msra.mxu0 0.0
        %6901 = vmatprep.subr.mxu0 0.0
        %6902 = vmatpush1.msra.mxu0 0.0
        %6903 = vmatprep.mubr.f32.mxu0 0.0
        %6904 = vmatmul.mubr.f32.gmra.mrb[0].mxu0 %v6837
        %v6905 = vpop.f32.mrb[0].mxu0
        %v6906 = vadd.f32 0.0, %v6905
        %v6907 = vpop.f32.mrb[0].mxu0
        %6908 = vdwg.mxu0
        %s6909 = scalar_lea.vmem %s45, 16
        %v6910 = vld [vmem:[%s6909] sm:$0xff]
        %v6912 = vsel %vm906, %v6906, 0
        %6914 = vmatprep.subr.mxu0 0.0
        %6915 = vmatpush1.msra.mxu0 %v6910
        %6916 = vmatprep.subr.mxu0 0.0
        %6917 = vmatpush1.msra.mxu0 0.0
        %6918 = vmatprep.subr.mxu0 0.0
        %6919 = vmatpush1.msra.mxu0 0.0
        %6920 = vmatprep.subr.mxu0 0.0
        %6921 = vmatpush1.msra.mxu0 0.0
        %6922 = vmatprep.subr.mxu0 0.0
        %6923 = vmatpush1.msra.mxu0 0.0
        %6924 = vmatprep.subr.mxu0 0.0
        %6925 = vmatpush1.msra.mxu0 0.0
        %6926 = vmatprep.subr.mxu0 0.0
        %6927 = vmatpush1.msra.mxu0 0.0
        %6928 = vmatprep.subr.mxu0 0.0
        %6929 = vmatpush1.msra.mxu0 0.0
        %6930 = vmatprep.subr.mxu0 0.0
        %6931 = vmatpush1.msra.mxu0 0.0
        %6932 = vmatprep.subr.mxu0 0.0
        %6933 = vmatpush1.msra.mxu0 0.0
        %6934 = vmatprep.subr.mxu0 0.0
        %6935 = vmatpush1.msra.mxu0 0.0
        %6936 = vmatprep.subr.mxu0 0.0
        %6937 = vmatpush1.msra.mxu0 0.0
        %6938 = vmatprep.subr.mxu0 0.0
        %6939 = vmatpush1.msra.mxu0 0.0
        %6940 = vmatprep.subr.mxu0 0.0
        %6941 = vmatpush1.msra.mxu0 0.0
        %6942 = vmatprep.subr.mxu0 0.0
        %6943 = vmatpush1.msra.mxu0 0.0
        %6944 = vmatprep.subr.mxu0 0.0
        %6945 = vmatpush1.msra.mxu0 0.0
        %6946 = vmatprep.subr.mxu0 0.0
        %6947 = vmatpush1.msra.mxu0 0.0
        %6948 = vmatprep.subr.mxu0 0.0
        %6949 = vmatpush1.msra.mxu0 0.0
        %6950 = vmatprep.subr.mxu0 0.0
        %6951 = vmatpush1.msra.mxu0 0.0
        %6952 = vmatprep.subr.mxu0 0.0
        %6953 = vmatpush1.msra.mxu0 0.0
        %6954 = vmatprep.subr.mxu0 0.0
        %6955 = vmatpush1.msra.mxu0 0.0
        %6956 = vmatprep.subr.mxu0 0.0
        %6957 = vmatpush1.msra.mxu0 0.0
        %6958 = vmatprep.subr.mxu0 0.0
        %6959 = vmatpush1.msra.mxu0 0.0
        %6960 = vmatprep.subr.mxu0 0.0
        %6961 = vmatpush1.msra.mxu0 0.0
        %6962 = vmatprep.subr.mxu0 0.0
        %6963 = vmatpush1.msra.mxu0 0.0
        %6964 = vmatprep.subr.mxu0 0.0
        %6965 = vmatpush1.msra.mxu0 0.0
        %6966 = vmatprep.subr.mxu0 0.0
        %6967 = vmatpush1.msra.mxu0 0.0
        %6968 = vmatprep.subr.mxu0 0.0
        %6969 = vmatpush1.msra.mxu0 0.0
        %6970 = vmatprep.subr.mxu0 0.0
        %6971 = vmatpush1.msra.mxu0 0.0
        %6972 = vmatprep.subr.mxu0 0.0
        %6973 = vmatpush1.msra.mxu0 0.0
        %6974 = vmatprep.subr.mxu0 0.0
        %6975 = vmatpush1.msra.mxu0 0.0
        %6976 = vmatprep.subr.mxu0 0.0
        %6977 = vmatpush1.msra.mxu0 0.0
        %6978 = vmatprep.mubr.f32.mxu0 0.0
        %6979 = vmatmul.mubr.f32.gmra.mrb[0].mxu0 %v6912
        %v6980 = vpop.f32.mrb[0].mxu0
        %v6981 = vadd.f32 0.0, %v6980
        %v6982 = vpop.f32.mrb[0].mxu0
        %6983 = vdwg.mxu0
        %v6984 = vadd.f32 %v6502, %v6981
        %s6985 = scalar_lea.vmem %s41, 96
        %v6986 = vld [vmem:[%s6985] sm:$0xff]
        %v6987 = vld [vmem:[%s6985 + $0x8] sm:$0xff]
        %v6988 = vld [vmem:[%s6985 + $0x10] sm:$0xff]
        %v6989 = vld [vmem:[%s6985 + $0x18] sm:$0xff]
        %s6990 = scalar_lea.vmem %s43, 3
        %v6991 = vld [vmem:[%s6990] sm:$0x1]
        %6992 = vmatprep.subr.mxu0 0.0
        %6993 = vmatpush1.msra.mxu0 %v6986
        %6994 = vmatprep.subr.mxu0 0.0
        %6995 = vmatpush1.msra.mxu0 %v6987
        %6996 = vmatprep.subr.mxu0 0.0
        %6997 = vmatpush1.msra.mxu0 %v6988
        %6998 = vmatprep.subr.mxu0 0.0
        %6999 = vmatpush1.msra.mxu0 %v6989
        %7000 = vmatprep.subr.mxu0 0.0
        %7001 = vmatpush1.msra.mxu0 0.0
        %7002 = vmatprep.subr.mxu0 0.0
        %7003 = vmatpush1.msra.mxu0 0.0
        %7004 = vmatprep.subr.mxu0 0.0
        %7005 = vmatpush1.msra.mxu0 0.0
        %7006 = vmatprep.subr.mxu0 0.0
        %7007 = vmatpush1.msra.mxu0 0.0
        %7008 = vmatprep.subr.mxu0 0.0
        %7009 = vmatpush1.msra.mxu0 0.0
        %7010 = vmatprep.subr.mxu0 0.0
        %7011 = vmatpush1.msra.mxu0 0.0
        %7012 = vmatprep.subr.mxu0 0.0
        %7013 = vmatpush1.msra.mxu0 0.0
        %7014 = vmatprep.subr.mxu0 0.0
        %7015 = vmatpush1.msra.mxu0 0.0
        %7016 = vmatprep.subr.mxu0 0.0
        %7017 = vmatpush1.msra.mxu0 0.0
        %7018 = vmatprep.subr.mxu0 0.0
        %7019 = vmatpush1.msra.mxu0 0.0
        %7020 = vmatprep.subr.mxu0 0.0
        %7021 = vmatpush1.msra.mxu0 0.0
        %7022 = vmatprep.subr.mxu0 0.0
        %7023 = vmatpush1.msra.mxu0 0.0
        %7024 = vmatprep.subr.mxu0 0.0
        %7025 = vmatpush1.msra.mxu0 0.0
        %7026 = vmatprep.subr.mxu0 0.0
        %7027 = vmatpush1.msra.mxu0 0.0
        %7028 = vmatprep.subr.mxu0 0.0
        %7029 = vmatpush1.msra.mxu0 0.0
        %7030 = vmatprep.subr.mxu0 0.0
        %7031 = vmatpush1.msra.mxu0 0.0
        %7032 = vmatprep.subr.mxu0 0.0
        %7033 = vmatpush1.msra.mxu0 0.0
        %7034 = vmatprep.subr.mxu0 0.0
        %7035 = vmatpush1.msra.mxu0 0.0
        %7036 = vmatprep.subr.mxu0 0.0
        %7037 = vmatpush1.msra.mxu0 0.0
        %7038 = vmatprep.subr.mxu0 0.0
        %7039 = vmatpush1.msra.mxu0 0.0
        %7040 = vmatprep.subr.mxu0 0.0
        %7041 = vmatpush1.msra.mxu0 0.0
        %7042 = vmatprep.subr.mxu0 0.0
        %7043 = vmatpush1.msra.mxu0 0.0
        %7044 = vmatprep.subr.mxu0 0.0
        %7045 = vmatpush1.msra.mxu0 0.0
        %7046 = vmatprep.subr.mxu0 0.0
        %7047 = vmatpush1.msra.mxu0 0.0
        %7048 = vmatprep.subr.mxu0 0.0
        %7049 = vmatpush1.msra.mxu0 0.0
        %7050 = vmatprep.subr.mxu0 0.0
        %7051 = vmatpush1.msra.mxu0 0.0
        %7052 = vmatprep.subr.mxu0 0.0
        %7053 = vmatpush1.msra.mxu0 0.0
        %7054 = vmatprep.subr.mxu0 0.0
        %7055 = vmatpush1.msra.mxu0 0.0
        %7056 = vmatprep.mubr.f32.mxu0 0.0
        %7057 = vmatmul.mubr.f32.gmra.mrb[0].mxu0 %v5549
        %v7058 = vpop.f32.mrb[0].mxu0
        %v7059 = vadd.f32 %v6991, %v7058
        %v7060 = vpop.f32.mrb[0].mxu0
        %7061 = vdwg.mxu0
        %s7062 = scalar_lea.vmem %s41, 224
        %v7063 = vld [vmem:[%s7062] sm:$0xff]
        %v7064 = vld [vmem:[%s7062 + $0x8] sm:$0xff]
        %v7065 = vld [vmem:[%s7062 + $0x10] sm:$0xff]
        %v7066 = vld [vmem:[%s7062 + $0x18] sm:$0xff]
        %s7067 = scalar_lea.vmem %s43, 7
        %v7068 = vld [vmem:[%s7067] sm:$0x1]
        %v7070 = vlaneseq
        %v7071 = vshrl.u32 %v7070, 7
        %v7072 = vsub.s32 0, %v7071
        %v7073 = vrot.slane %v7068, %v7072
        %7075 = vmatprep.subr.mxu0 0.0
        %7076 = vmatpush1.msra.mxu0 %v7063
        %7077 = vmatprep.subr.mxu0 0.0
        %7078 = vmatpush1.msra.mxu0 %v7064
        %7079 = vmatprep.subr.mxu0 0.0
        %7080 = vmatpush1.msra.mxu0 %v7065
        %7081 = vmatprep.subr.mxu0 0.0
        %7082 = vmatpush1.msra.mxu0 %v7066
        %7083 = vmatprep.subr.mxu0 0.0
        %7084 = vmatpush1.msra.mxu0 0.0
        %7085 = vmatprep.subr.mxu0 0.0
        %7086 = vmatpush1.msra.mxu0 0.0
        %7087 = vmatprep.subr.mxu0 0.0
        %7088 = vmatpush1.msra.mxu0 0.0
        %7089 = vmatprep.subr.mxu0 0.0
        %7090 = vmatpush1.msra.mxu0 0.0
        %7091 = vmatprep.subr.mxu0 0.0
        %7092 = vmatpush1.msra.mxu0 0.0
        %7093 = vmatprep.subr.mxu0 0.0
        %7094 = vmatpush1.msra.mxu0 0.0
        %7095 = vmatprep.subr.mxu0 0.0
        %7096 = vmatpush1.msra.mxu0 0.0
        %7097 = vmatprep.subr.mxu0 0.0
        %7098 = vmatpush1.msra.mxu0 0.0
        %7099 = vmatprep.subr.mxu0 0.0
        %7100 = vmatpush1.msra.mxu0 0.0
        %7101 = vmatprep.subr.mxu0 0.0
        %7102 = vmatpush1.msra.mxu0 0.0
        %7103 = vmatprep.subr.mxu0 0.0
        %7104 = vmatpush1.msra.mxu0 0.0
        %7105 = vmatprep.subr.mxu0 0.0
        %7106 = vmatpush1.msra.mxu0 0.0
        %7107 = vmatprep.subr.mxu0 0.0
        %7108 = vmatpush1.msra.mxu0 0.0
        %7109 = vmatprep.subr.mxu0 0.0
        %7110 = vmatpush1.msra.mxu0 0.0
        %7111 = vmatprep.subr.mxu0 0.0
        %7112 = vmatpush1.msra.mxu0 0.0
        %7113 = vmatprep.subr.mxu0 0.0
        %7114 = vmatpush1.msra.mxu0 0.0
        %7115 = vmatprep.subr.mxu0 0.0
        %7116 = vmatpush1.msra.mxu0 0.0
        %7117 = vmatprep.subr.mxu0 0.0
        %7118 = vmatpush1.msra.mxu0 0.0
        %7119 = vmatprep.subr.mxu0 0.0
        %7120 = vmatpush1.msra.mxu0 0.0
        %7121 = vmatprep.subr.mxu0 0.0
        %7122 = vmatpush1.msra.mxu0 0.0
        %7123 = vmatprep.subr.mxu0 0.0
        %7124 = vmatpush1.msra.mxu0 0.0
        %7125 = vmatprep.subr.mxu0 0.0
        %7126 = vmatpush1.msra.mxu0 0.0
        %7127 = vmatprep.subr.mxu0 0.0
        %7128 = vmatpush1.msra.mxu0 0.0
        %7129 = vmatprep.subr.mxu0 0.0
        %7130 = vmatpush1.msra.mxu0 0.0
        %7131 = vmatprep.subr.mxu0 0.0
        %7132 = vmatpush1.msra.mxu0 0.0
        %7133 = vmatprep.subr.mxu0 0.0
        %7134 = vmatpush1.msra.mxu0 0.0
        %7135 = vmatprep.subr.mxu0 0.0
        %7136 = vmatpush1.msra.mxu0 0.0
        %7137 = vmatprep.subr.mxu0 0.0
        %7138 = vmatpush1.msra.mxu0 0.0
        %7139 = vmatprep.mubr.f32.mxu0 0.0
        %7140 = vmatmul.mubr.f32.gmra.mrb[0].mxu0 %v5635
        %v7141 = vpop.f32.mrb[0].mxu0
        %v7142 = vadd.f32 %v7073, %v7141
        %v7143 = vpop.f32.mrb[0].mxu0
        %7144 = vdwg.mxu0
        %s7145 = scalar_lea.vmem %s41, 352
        %v7146 = vld [vmem:[%s7145] sm:$0xff]
        %v7147 = vld [vmem:[%s7145 + $0x8] sm:$0xff]
        %v7148 = vld [vmem:[%s7145 + $0x10] sm:$0xff]
        %v7149 = vld [vmem:[%s7145 + $0x18] sm:$0xff]
        %s7150 = scalar_lea.vmem %s43, 11
        %v7151 = vld [vmem:[%s7150] sm:$0x1]
        %v7153 = vlaneseq
        %v7154 = vshrl.u32 %v7153, 7
        %v7155 = vsub.s32 0, %v7154
        %v7156 = vrot.slane %v7151, %v7155
        %7158 = vmatprep.subr.mxu0 0.0
        %7159 = vmatpush1.msra.mxu0 %v7146
        %7160 = vmatprep.subr.mxu0 0.0
        %7161 = vmatpush1.msra.mxu0 %v7147
        %7162 = vmatprep.subr.mxu0 0.0
        %7163 = vmatpush1.msra.mxu0 %v7148
        %7164 = vmatprep.subr.mxu0 0.0
        %7165 = vmatpush1.msra.mxu0 %v7149
        %7166 = vmatprep.subr.mxu0 0.0
        %7167 = vmatpush1.msra.mxu0 0.0
        %7168 = vmatprep.subr.mxu0 0.0
        %7169 = vmatpush1.msra.mxu0 0.0
        %7170 = vmatprep.subr.mxu0 0.0
        %7171 = vmatpush1.msra.mxu0 0.0
        %7172 = vmatprep.subr.mxu0 0.0
        %7173 = vmatpush1.msra.mxu0 0.0
        %7174 = vmatprep.subr.mxu0 0.0
        %7175 = vmatpush1.msra.mxu0 0.0
        %7176 = vmatprep.subr.mxu0 0.0
        %7177 = vmatpush1.msra.mxu0 0.0
        %7178 = vmatprep.subr.mxu0 0.0
        %7179 = vmatpush1.msra.mxu0 0.0
        %7180 = vmatprep.subr.mxu0 0.0
        %7181 = vmatpush1.msra.mxu0 0.0
        %7182 = vmatprep.subr.mxu0 0.0
        %7183 = vmatpush1.msra.mxu0 0.0
        %7184 = vmatprep.subr.mxu0 0.0
        %7185 = vmatpush1.msra.mxu0 0.0
        %7186 = vmatprep.subr.mxu0 0.0
        %7187 = vmatpush1.msra.mxu0 0.0
        %7188 = vmatprep.subr.mxu0 0.0
        %7189 = vmatpush1.msra.mxu0 0.0
        %7190 = vmatprep.subr.mxu0 0.0
        %7191 = vmatpush1.msra.mxu0 0.0
        %7192 = vmatprep.subr.mxu0 0.0
        %7193 = vmatpush1.msra.mxu0 0.0
        %7194 = vmatprep.subr.mxu0 0.0
        %7195 = vmatpush1.msra.mxu0 0.0
        %7196 = vmatprep.subr.mxu0 0.0
        %7197 = vmatpush1.msra.mxu0 0.0
        %7198 = vmatprep.subr.mxu0 0.0
        %7199 = vmatpush1.msra.mxu0 0.0
        %7200 = vmatprep.subr.mxu0 0.0
        %7201 = vmatpush1.msra.mxu0 0.0
        %7202 = vmatprep.subr.mxu0 0.0
        %7203 = vmatpush1.msra.mxu0 0.0
        %7204 = vmatprep.subr.mxu0 0.0
        %7205 = vmatpush1.msra.mxu0 0.0
        %7206 = vmatprep.subr.mxu0 0.0
        %7207 = vmatpush1.msra.mxu0 0.0
        %7208 = vmatprep.subr.mxu0 0.0
        %7209 = vmatpush1.msra.mxu0 0.0
        %7210 = vmatprep.subr.mxu0 0.0
        %7211 = vmatpush1.msra.mxu0 0.0
        %7212 = vmatprep.subr.mxu0 0.0
        %7213 = vmatpush1.msra.mxu0 0.0
        %7214 = vmatprep.subr.mxu0 0.0
        %7215 = vmatpush1.msra.mxu0 0.0
        %7216 = vmatprep.subr.mxu0 0.0
        %7217 = vmatpush1.msra.mxu0 0.0
        %7218 = vmatprep.subr.mxu0 0.0
        %7219 = vmatpush1.msra.mxu0 0.0
        %7220 = vmatprep.subr.mxu0 0.0
        %7221 = vmatpush1.msra.mxu0 0.0
        %7222 = vmatprep.mubr.f32.mxu0 0.0
        %7223 = vmatmul.mubr.f32.gmra.mrb[0].mxu0 %v5635
        %v7224 = vpop.f32.mrb[0].mxu0
        %v7225 = vadd.f32 %v7156, %v7224
        %v7226 = vpop.f32.mrb[0].mxu0
        %7227 = vdwg.mxu0
        %v7229 = vsel %vm906, %v7059, 0
        %v7232 = vsel %vm906, %v7142, 0
        %7234 = vmatprep.subr.mxu0 0.0
        %7235 = vmatpush1.xpose.msra.mxu0 %v7232
        %7236 = vmatprep.subr.mxu0 0.0
        %7237 = vmatpush1.xpose.msra.mxu0 0.0
        %7238 = vmatprep.subr.mxu0 0.0
        %7239 = vmatpush1.xpose.msra.mxu0 0.0
        %7240 = vmatprep.subr.mxu0 0.0
        %7241 = vmatpush1.xpose.msra.mxu0 0.0
        %7242 = vmatprep.subr.mxu0 0.0
        %7243 = vmatpush1.xpose.msra.mxu0 0.0
        %7244 = vmatprep.subr.mxu0 0.0
        %7245 = vmatpush1.xpose.msra.mxu0 0.0
        %7246 = vmatprep.subr.mxu0 0.0
        %7247 = vmatpush1.xpose.msra.mxu0 0.0
        %7248 = vmatprep.subr.mxu0 0.0
        %7249 = vmatpush1.xpose.msra.mxu0 0.0
        %7250 = vmatprep.subr.mxu0 0.0
        %7251 = vmatpush1.xpose.msra.mxu0 0.0
        %7252 = vmatprep.subr.mxu0 0.0
        %7253 = vmatpush1.xpose.msra.mxu0 0.0
        %7254 = vmatprep.subr.mxu0 0.0
        %7255 = vmatpush1.xpose.msra.mxu0 0.0
        %7256 = vmatprep.subr.mxu0 0.0
        %7257 = vmatpush1.xpose.msra.mxu0 0.0
        %7258 = vmatprep.subr.mxu0 0.0
        %7259 = vmatpush1.xpose.msra.mxu0 0.0
        %7260 = vmatprep.subr.mxu0 0.0
        %7261 = vmatpush1.xpose.msra.mxu0 0.0
        %7262 = vmatprep.subr.mxu0 0.0
        %7263 = vmatpush1.xpose.msra.mxu0 0.0
        %7264 = vmatprep.subr.mxu0 0.0
        %7265 = vmatpush1.xpose.msra.mxu0 0.0
        %7266 = vmatprep.subr.mxu0 0.0
        %7267 = vmatpush1.xpose.msra.mxu0 0.0
        %7268 = vmatprep.subr.mxu0 0.0
        %7269 = vmatpush1.xpose.msra.mxu0 0.0
        %7270 = vmatprep.subr.mxu0 0.0
        %7271 = vmatpush1.xpose.msra.mxu0 0.0
        %7272 = vmatprep.subr.mxu0 0.0
        %7273 = vmatpush1.xpose.msra.mxu0 0.0
        %7274 = vmatprep.subr.mxu0 0.0
        %7275 = vmatpush1.xpose.msra.mxu0 0.0
        %7276 = vmatprep.subr.mxu0 0.0
        %7277 = vmatpush1.xpose.msra.mxu0 0.0
        %7278 = vmatprep.subr.mxu0 0.0
        %7279 = vmatpush1.xpose.msra.mxu0 0.0
        %7280 = vmatprep.subr.mxu0 0.0
        %7281 = vmatpush1.xpose.msra.mxu0 0.0
        %7282 = vmatprep.subr.mxu0 0.0
        %7283 = vmatpush1.xpose.msra.mxu0 0.0
        %7284 = vmatprep.subr.mxu0 0.0
        %7285 = vmatpush1.xpose.msra.mxu0 0.0
        %7286 = vmatprep.subr.mxu0 0.0
        %7287 = vmatpush1.xpose.msra.mxu0 0.0
        %7288 = vmatprep.subr.mxu0 0.0
        %7289 = vmatpush1.xpose.msra.mxu0 0.0
        %7290 = vmatprep.subr.mxu0 0.0
        %7291 = vmatpush1.xpose.msra.mxu0 0.0
        %7292 = vmatprep.subr.mxu0 0.0
        %7293 = vmatpush1.xpose.msra.mxu0 0.0
        %7294 = vmatprep.subr.mxu0 0.0
        %7295 = vmatpush1.xpose.msra.mxu0 0.0
        %7296 = vmatprep.subr.mxu0 0.0
        %7297 = vmatpush1.xpose.msra.mxu0 0.0
        %7298 = vmatprep.mubr.f32.mxu0 0.0
        %7299 = vmatmul.mubr.f32.gmra.mrb[0].mxu0 %v7229
        %v7300 = vpop.f32.mrb[0].mxu0
        %v7301 = vadd.f32 0.0, %v7300
        %v7302 = vpop.f32.mrb[0].mxu0
        %7303 = vdwg.mxu0
        %v7304 = vmul.f32 %v7301, 0.35355338
        %v7305 = vsel %vm5867, %v7304, -inf
        %7306 = vmax.xlane.f32.xlu0 %v7305
        %v7307 = vpop.xlane.xlu0 %7306
        %v7308 = vsub.f32 %v7304, %v7307
        %v7309 = vmul.f32 %v7308, 1.442695
        %v7310 = vpow.pop %v7309
        %v7311 = vsel %vm5867, %v7310, 0.0
        %7312 = vadd.xlane.f32.xlu0 %v7311
        %v7313 = vpop.xlane.xlu0 %7312
        %v7314 = vrcp.pop %v7313
        %v7315 = vmul.f32 %v7310, %v7314
        %v7317 = vsel %vm906, %v7315, 0
        %7319 = vmatprep.subr.mxu0 0.0
        %7320 = vmatpush1.msra.mxu0 %v7225
        %7321 = vmatprep.subr.mxu0 0.0
        %7322 = vmatpush1.msra.mxu0 0.0
        %7323 = vmatprep.subr.mxu0 0.0
        %7324 = vmatpush1.msra.mxu0 0.0
        %7325 = vmatprep.subr.mxu0 0.0
        %7326 = vmatpush1.msra.mxu0 0.0
        %7327 = vmatprep.subr.mxu0 0.0
        %7328 = vmatpush1.msra.mxu0 0.0
        %7329 = vmatprep.subr.mxu0 0.0
        %7330 = vmatpush1.msra.mxu0 0.0
        %7331 = vmatprep.subr.mxu0 0.0
        %7332 = vmatpush1.msra.mxu0 0.0
        %7333 = vmatprep.subr.mxu0 0.0
        %7334 = vmatpush1.msra.mxu0 0.0
        %7335 = vmatprep.subr.mxu0 0.0
        %7336 = vmatpush1.msra.mxu0 0.0
        %7337 = vmatprep.subr.mxu0 0.0
        %7338 = vmatpush1.msra.mxu0 0.0
        %7339 = vmatprep.subr.mxu0 0.0
        %7340 = vmatpush1.msra.mxu0 0.0
        %7341 = vmatprep.subr.mxu0 0.0
        %7342 = vmatpush1.msra.mxu0 0.0
        %7343 = vmatprep.subr.mxu0 0.0
        %7344 = vmatpush1.msra.mxu0 0.0
        %7345 = vmatprep.subr.mxu0 0.0
        %7346 = vmatpush1.msra.mxu0 0.0
        %7347 = vmatprep.subr.mxu0 0.0
        %7348 = vmatpush1.msra.mxu0 0.0
        %7349 = vmatprep.subr.mxu0 0.0
        %7350 = vmatpush1.msra.mxu0 0.0
        %7351 = vmatprep.subr.mxu0 0.0
        %7352 = vmatpush1.msra.mxu0 0.0
        %7353 = vmatprep.subr.mxu0 0.0
        %7354 = vmatpush1.msra.mxu0 0.0
        %7355 = vmatprep.subr.mxu0 0.0
        %7356 = vmatpush1.msra.mxu0 0.0
        %7357 = vmatprep.subr.mxu0 0.0
        %7358 = vmatpush1.msra.mxu0 0.0
        %7359 = vmatprep.subr.mxu0 0.0
        %7360 = vmatpush1.msra.mxu0 0.0
        %7361 = vmatprep.subr.mxu0 0.0
        %7362 = vmatpush1.msra.mxu0 0.0
        %7363 = vmatprep.subr.mxu0 0.0
        %7364 = vmatpush1.msra.mxu0 0.0
        %7365 = vmatprep.subr.mxu0 0.0
        %7366 = vmatpush1.msra.mxu0 0.0
        %7367 = vmatprep.subr.mxu0 0.0
        %7368 = vmatpush1.msra.mxu0 0.0
        %7369 = vmatprep.subr.mxu0 0.0
        %7370 = vmatpush1.msra.mxu0 0.0
        %7371 = vmatprep.subr.mxu0 0.0
        %7372 = vmatpush1.msra.mxu0 0.0
        %7373 = vmatprep.subr.mxu0 0.0
        %7374 = vmatpush1.msra.mxu0 0.0
        %7375 = vmatprep.subr.mxu0 0.0
        %7376 = vmatpush1.msra.mxu0 0.0
        %7377 = vmatprep.subr.mxu0 0.0
        %7378 = vmatpush1.msra.mxu0 0.0
        %7379 = vmatprep.subr.mxu0 0.0
        %7380 = vmatpush1.msra.mxu0 0.0
        %7381 = vmatprep.subr.mxu0 0.0
        %7382 = vmatpush1.msra.mxu0 0.0
        %7383 = vmatprep.mubr.f32.mxu0 0.0
        %7384 = vmatmul.mubr.f32.gmra.mrb[0].mxu0 %v7317
        %v7385 = vpop.f32.mrb[0].mxu0
        %v7386 = vadd.f32 0.0, %v7385
        %v7387 = vpop.f32.mrb[0].mxu0
        %7388 = vdwg.mxu0
        %s7389 = scalar_lea.vmem %s45, 24
        %v7390 = vld [vmem:[%s7389] sm:$0xff]
        %v7392 = vsel %vm906, %v7386, 0
        %7394 = vmatprep.subr.mxu0 0.0
        %7395 = vmatpush1.msra.mxu0 %v7390
        %7396 = vmatprep.subr.mxu0 0.0
        %7397 = vmatpush1.msra.mxu0 0.0
        %7398 = vmatprep.subr.mxu0 0.0
        %7399 = vmatpush1.msra.mxu0 0.0
        %7400 = vmatprep.subr.mxu0 0.0
        %7401 = vmatpush1.msra.mxu0 0.0
        %7402 = vmatprep.subr.mxu0 0.0
        %7403 = vmatpush1.msra.mxu0 0.0
        %7404 = vmatprep.subr.mxu0 0.0
        %7405 = vmatpush1.msra.mxu0 0.0
        %7406 = vmatprep.subr.mxu0 0.0
        %7407 = vmatpush1.msra.mxu0 0.0
        %7408 = vmatprep.subr.mxu0 0.0
        %7409 = vmatpush1.msra.mxu0 0.0
        %7410 = vmatprep.subr.mxu0 0.0
        %7411 = vmatpush1.msra.mxu0 0.0
        %7412 = vmatprep.subr.mxu0 0.0
        %7413 = vmatpush1.msra.mxu0 0.0
        %7414 = vmatprep.subr.mxu0 0.0
        %7415 = vmatpush1.msra.mxu0 0.0
        %7416 = vmatprep.subr.mxu0 0.0
        %7417 = vmatpush1.msra.mxu0 0.0
        %7418 = vmatprep.subr.mxu0 0.0
        %7419 = vmatpush1.msra.mxu0 0.0
        %7420 = vmatprep.subr.mxu0 0.0
        %7421 = vmatpush1.msra.mxu0 0.0
        %7422 = vmatprep.subr.mxu0 0.0
        %7423 = vmatpush1.msra.mxu0 0.0
        %7424 = vmatprep.subr.mxu0 0.0
        %7425 = vmatpush1.msra.mxu0 0.0
        %7426 = vmatprep.subr.mxu0 0.0
        %7427 = vmatpush1.msra.mxu0 0.0
        %7428 = vmatprep.subr.mxu0 0.0
        %7429 = vmatpush1.msra.mxu0 0.0
        %7430 = vmatprep.subr.mxu0 0.0
        %7431 = vmatpush1.msra.mxu0 0.0
        %7432 = vmatprep.subr.mxu0 0.0
        %7433 = vmatpush1.msra.mxu0 0.0
        %7434 = vmatprep.subr.mxu0 0.0
        %7435 = vmatpush1.msra.mxu0 0.0
        %7436 = vmatprep.subr.mxu0 0.0
        %7437 = vmatpush1.msra.mxu0 0.0
        %7438 = vmatprep.subr.mxu0 0.0
        %7439 = vmatpush1.msra.mxu0 0.0
        %7440 = vmatprep.subr.mxu0 0.0
        %7441 = vmatpush1.msra.mxu0 0.0
        %7442 = vmatprep.subr.mxu0 0.0
        %7443 = vmatpush1.msra.mxu0 0.0
        %7444 = vmatprep.subr.mxu0 0.0
        %7445 = vmatpush1.msra.mxu0 0.0
        %7446 = vmatprep.subr.mxu0 0.0
        %7447 = vmatpush1.msra.mxu0 0.0
        %7448 = vmatprep.subr.mxu0 0.0
        %7449 = vmatpush1.msra.mxu0 0.0
        %7450 = vmatprep.subr.mxu0 0.0
        %7451 = vmatpush1.msra.mxu0 0.0
        %7452 = vmatprep.subr.mxu0 0.0
        %7453 = vmatpush1.msra.mxu0 0.0
        %7454 = vmatprep.subr.mxu0 0.0
        %7455 = vmatpush1.msra.mxu0 0.0
        %7456 = vmatprep.subr.mxu0 0.0
        %7457 = vmatpush1.msra.mxu0 0.0
        %7458 = vmatprep.mubr.f32.mxu0 0.0
        %7459 = vmatmul.mubr.f32.gmra.mrb[0].mxu0 %v7392
        %v7460 = vpop.f32.mrb[0].mxu0
        %v7461 = vadd.f32 0.0, %v7460
        %v7462 = vpop.f32.mrb[0].mxu0
        %7463 = vdwg.mxu0
        %v7464 = vadd.f32 %v6984, %v7461
        %v7465 = vld [vmem:[%s47] sm:$0x1]
        %v7466 = vadd.f32 %v7464, %v7465
        %v7467 = vadd.f32 %v5542, %v7466
        %s7468 = scalar_lea.vmem %s57, 2
        %v7469 = vld [vmem:[%s7468] sm:$0x1]
        %s7470 = scalar_lea.vmem %s57, 3
        %v7471 = vld [vmem:[%s7470] sm:$0x1]
        %v7472 = vsel %vm5527, %v7467, 0.0
        %7473 = vadd.xlane.f32.xlu0 %v7472
        %v7474 = vpop.xlane.xlu0 %7473
        %v7475 = vmul.f32 %v7474, %v2940
        %v7476 = vsub.f32 %v7467, %v7475
        %v7477 = vmul.f32 %v7476, %v7476
        %v7478 = vsel %vm5527, %v7477, 0.0
        %7479 = vadd.xlane.f32.xlu0 %v7478
        %v7480 = vpop.xlane.xlu0 %7479
        %v7481 = vmul.f32 %v7480, %v2940
        %v7482 = vadd.f32 %v7481, 1e-05
        %v7483 = vrsqrt.pop %v7482
        %v7484 = vmul.f32 %v7476, %v7483
        %v7485 = vmul.f32 %v7484, %v7469
        %v7486 = vadd.f32 %v7485, %v7471
        %v7487 = vld [vmem:[%s49] sm:$0xff]
        %v7488 = vld [vmem:[%s49 + $0x8] sm:$0xff]
        %v7489 = vld [vmem:[%s49 + $0x10] sm:$0xff]
        %v7490 = vld [vmem:[%s49 + $0x18] sm:$0xff]
        %v7491 = vld [vmem:[%s51] sm:$0x1]
        %v7493 = vsel %vm993, %v7486, 0
        %7495 = vmatprep.subr.mxu0 0.0
        %7496 = vmatpush1.msra.mxu0 %v7487
        %7497 = vmatprep.subr.mxu0 0.0
        %7498 = vmatpush1.msra.mxu0 %v7488
        %7499 = vmatprep.subr.mxu0 0.0
        %7500 = vmatpush1.msra.mxu0 %v7489
        %7501 = vmatprep.subr.mxu0 0.0
        %7502 = vmatpush1.msra.mxu0 %v7490
        %7503 = vmatprep.subr.mxu0 0.0
        %7504 = vmatpush1.msra.mxu0 0.0
        %7505 = vmatprep.subr.mxu0 0.0
        %7506 = vmatpush1.msra.mxu0 0.0
        %7507 = vmatprep.subr.mxu0 0.0
        %7508 = vmatpush1.msra.mxu0 0.0
        %7509 = vmatprep.subr.mxu0 0.0
        %7510 = vmatpush1.msra.mxu0 0.0
        %7511 = vmatprep.subr.mxu0 0.0
        %7512 = vmatpush1.msra.mxu0 0.0
        %7513 = vmatprep.subr.mxu0 0.0
        %7514 = vmatpush1.msra.mxu0 0.0
        %7515 = vmatprep.subr.mxu0 0.0
        %7516 = vmatpush1.msra.mxu0 0.0
        %7517 = vmatprep.subr.mxu0 0.0
        %7518 = vmatpush1.msra.mxu0 0.0
        %7519 = vmatprep.subr.mxu0 0.0
        %7520 = vmatpush1.msra.mxu0 0.0
        %7521 = vmatprep.subr.mxu0 0.0
        %7522 = vmatpush1.msra.mxu0 0.0
        %7523 = vmatprep.subr.mxu0 0.0
        %7524 = vmatpush1.msra.mxu0 0.0
        %7525 = vmatprep.subr.mxu0 0.0
        %7526 = vmatpush1.msra.mxu0 0.0
        %7527 = vmatprep.subr.mxu0 0.0
        %7528 = vmatpush1.msra.mxu0 0.0
        %7529 = vmatprep.subr.mxu0 0.0
        %7530 = vmatpush1.msra.mxu0 0.0
        %7531 = vmatprep.subr.mxu0 0.0
        %7532 = vmatpush1.msra.mxu0 0.0
        %7533 = vmatprep.subr.mxu0 0.0
        %7534 = vmatpush1.msra.mxu0 0.0
        %7535 = vmatprep.subr.mxu0 0.0
        %7536 = vmatpush1.msra.mxu0 0.0
        %7537 = vmatprep.subr.mxu0 0.0
        %7538 = vmatpush1.msra.mxu0 0.0
        %7539 = vmatprep.subr.mxu0 0.0
        %7540 = vmatpush1.msra.mxu0 0.0
        %7541 = vmatprep.subr.mxu0 0.0
        %7542 = vmatpush1.msra.mxu0 0.0
        %7543 = vmatprep.subr.mxu0 0.0
        %7544 = vmatpush1.msra.mxu0 0.0
        %7545 = vmatprep.subr.mxu0 0.0
        %7546 = vmatpush1.msra.mxu0 0.0
        %7547 = vmatprep.subr.mxu0 0.0
        %7548 = vmatpush1.msra.mxu0 0.0
        %7549 = vmatprep.subr.mxu0 0.0
        %7550 = vmatpush1.msra.mxu0 0.0
        %7551 = vmatprep.subr.mxu0 0.0
        %7552 = vmatpush1.msra.mxu0 0.0
        %7553 = vmatprep.subr.mxu0 0.0
        %7554 = vmatpush1.msra.mxu0 0.0
        %7555 = vmatprep.subr.mxu0 0.0
        %7556 = vmatpush1.msra.mxu0 0.0
        %7557 = vmatprep.subr.mxu0 0.0
        %7558 = vmatpush1.msra.mxu0 0.0
        %7559 = vmatprep.mubr.f32.mxu0 0.0
        %7560 = vmatmul.mubr.f32.gmra.mrb[0].mxu0 %v7493
        %v7561 = vpop.f32.mrb[0].mxu0
        %v7562 = vadd.f32 %v7491, %v7561
        %v7563 = vpop.f32.mrb[0].mxu0
        %7564 = vdwg.mxu0
        %v7565 = vmax.f32 %v7562, 0.0
        %v7566 = vld [vmem:[%s53] sm:$0xff]
        %v7567 = vld [vmem:[%s53 + $0x8] sm:$0xff]
        %v7568 = vld [vmem:[%s53 + $0x10] sm:$0xff]
        %v7569 = vld [vmem:[%s53 + $0x18] sm:$0xff]
        %v7570 = vld [vmem:[%s53 + $0x20] sm:$0xff]
        %v7571 = vld [vmem:[%s53 + $0x28] sm:$0xff]
        %v7572 = vld [vmem:[%s53 + $0x30] sm:$0xff]
        %v7573 = vld [vmem:[%s53 + $0x38] sm:$0xff]
        %v7574 = vld [vmem:[%s55] sm:$0x1]
        %v7576 = vsel %vm3065, %v7565, 0
        %7578 = vmatprep.subr.mxu0 0.0
        %7579 = vmatpush1.msra.mxu0 %v7566
        %7580 = vmatprep.subr.mxu0 0.0
        %7581 = vmatpush1.msra.mxu0 %v7567
        %7582 = vmatprep.subr.mxu0 0.0
        %7583 = vmatpush1.msra.mxu0 %v7568
        %7584 = vmatprep.subr.mxu0 0.0
        %7585 = vmatpush1.msra.mxu0 %v7569
        %7586 = vmatprep.subr.mxu0 0.0
        %7587 = vmatpush1.msra.mxu0 %v7570
        %7588 = vmatprep.subr.mxu0 0.0
        %7589 = vmatpush1.msra.mxu0 %v7571
        %7590 = vmatprep.subr.mxu0 0.0
        %7591 = vmatpush1.msra.mxu0 %v7572
        %7592 = vmatprep.subr.mxu0 0.0
        %7593 = vmatpush1.msra.mxu0 %v7573
        %7594 = vmatprep.subr.mxu0 0.0
        %7595 = vmatpush1.msra.mxu0 0.0
        %7596 = vmatprep.subr.mxu0 0.0
        %7597 = vmatpush1.msra.mxu0 0.0
        %7598 = vmatprep.subr.mxu0 0.0
        %7599 = vmatpush1.msra.mxu0 0.0
        %7600 = vmatprep.subr.mxu0 0.0
        %7601 = vmatpush1.msra.mxu0 0.0
        %7602 = vmatprep.subr.mxu0 0.0
        %7603 = vmatpush1.msra.mxu0 0.0
        %7604 = vmatprep.subr.mxu0 0.0
        %7605 = vmatpush1.msra.mxu0 0.0
        %7606 = vmatprep.subr.mxu0 0.0
        %7607 = vmatpush1.msra.mxu0 0.0
        %7608 = vmatprep.subr.mxu0 0.0
        %7609 = vmatpush1.msra.mxu0 0.0
        %7610 = vmatprep.subr.mxu0 0.0
        %7611 = vmatpush1.msra.mxu0 0.0
        %7612 = vmatprep.subr.mxu0 0.0
        %7613 = vmatpush1.msra.mxu0 0.0
        %7614 = vmatprep.subr.mxu0 0.0
        %7615 = vmatpush1.msra.mxu0 0.0
        %7616 = vmatprep.subr.mxu0 0.0
        %7617 = vmatpush1.msra.mxu0 0.0
        %7618 = vmatprep.subr.mxu0 0.0
        %7619 = vmatpush1.msra.mxu0 0.0
        %7620 = vmatprep.subr.mxu0 0.0
        %7621 = vmatpush1.msra.mxu0 0.0
        %7622 = vmatprep.subr.mxu0 0.0
        %7623 = vmatpush1.msra.mxu0 0.0
        %7624 = vmatprep.subr.mxu0 0.0
        %7625 = vmatpush1.msra.mxu0 0.0
        %7626 = vmatprep.subr.mxu0 0.0
        %7627 = vmatpush1.msra.mxu0 0.0
        %7628 = vmatprep.subr.mxu0 0.0
        %7629 = vmatpush1.msra.mxu0 0.0
        %7630 = vmatprep.subr.mxu0 0.0
        %7631 = vmatpush1.msra.mxu0 0.0
        %7632 = vmatprep.subr.mxu0 0.0
        %7633 = vmatpush1.msra.mxu0 0.0
        %7634 = vmatprep.subr.mxu0 0.0
        %7635 = vmatpush1.msra.mxu0 0.0
        %7636 = vmatprep.subr.mxu0 0.0
        %7637 = vmatpush1.msra.mxu0 0.0
        %7638 = vmatprep.subr.mxu0 0.0
        %7639 = vmatpush1.msra.mxu0 0.0
        %7640 = vmatprep.subr.mxu0 0.0
        %7641 = vmatpush1.msra.mxu0 0.0
        %7642 = vmatprep.mubr.f32.mxu0 0.0
        %7643 = vmatmul.mubr.f32.gmra.mrb[0].mxu0 %v7576
        %v7644 = vpop.f32.mrb[0].mxu0
        %v7645 = vadd.f32 %v7574, %v7644
        %v7646 = vpop.f32.mrb[0].mxu0
        %7647 = vdwg.mxu0
        %v7648 = vadd.f32 %v7486, %v7645
        %s7649 = scalar_lea.vmem %s57, 4
        %v7650 = vld [vmem:[%s7649] sm:$0x1]
        %s7651 = scalar_lea.vmem %s57, 5
        %v7652 = vld [vmem:[%s7651] sm:$0x1]
        %v7653 = vsel %vm5527, %v7648, 0.0
        %7654 = vadd.xlane.f32.xlu0 %v7653
        %v7655 = vpop.xlane.xlu0 %7654
        %v7656 = vmul.f32 %v7655, %v2940
        %v7657 = vsub.f32 %v7648, %v7656
        %v7658 = vmul.f32 %v7657, %v7657
        %v7659 = vsel %vm5527, %v7658, 0.0
        %7660 = vadd.xlane.f32.xlu0 %v7659
        %v7661 = vpop.xlane.xlu0 %7660
        %v7662 = vmul.f32 %v7661, %v2940
        %v7663 = vadd.f32 %v7662, 1e-05
        %v7664 = vrsqrt.pop %v7663
        %v7665 = vmul.f32 %v7657, %v7664
        %v7666 = vmul.f32 %v7665, %v7650
        %v7667 = vadd.f32 %v7666, %v7652
        %v7668 = vld [vmem:[%s11] sm:$0xff]
        %v7669 = vld [vmem:[%s11 + $0x8] sm:$0xff]
        %v7670 = vld [vmem:[%s11 + $0x10] sm:$0xff]
        %v7671 = vld [vmem:[%s11 + $0x18] sm:$0xff]
        %v7672 = vld [vmem:[%s13] sm:$0x1]
        %v7674 = vsel %vm993, %v7667, 0
        %7676 = vmatprep.subr.mxu0 0.0
        %7677 = vmatpush1.msra.mxu0 %v7668
        %7678 = vmatprep.subr.mxu0 0.0
        %7679 = vmatpush1.msra.mxu0 %v7669
        %7680 = vmatprep.subr.mxu0 0.0
        %7681 = vmatpush1.msra.mxu0 %v7670
        %7682 = vmatprep.subr.mxu0 0.0
        %7683 = vmatpush1.msra.mxu0 %v7671
        %7684 = vmatprep.subr.mxu0 0.0
        %7685 = vmatpush1.msra.mxu0 0.0
        %7686 = vmatprep.subr.mxu0 0.0
        %7687 = vmatpush1.msra.mxu0 0.0
        %7688 = vmatprep.subr.mxu0 0.0
        %7689 = vmatpush1.msra.mxu0 0.0
        %7690 = vmatprep.subr.mxu0 0.0
        %7691 = vmatpush1.msra.mxu0 0.0
        %7692 = vmatprep.subr.mxu0 0.0
        %7693 = vmatpush1.msra.mxu0 0.0
        %7694 = vmatprep.subr.mxu0 0.0
        %7695 = vmatpush1.msra.mxu0 0.0
        %7696 = vmatprep.subr.mxu0 0.0
        %7697 = vmatpush1.msra.mxu0 0.0
        %7698 = vmatprep.subr.mxu0 0.0
        %7699 = vmatpush1.msra.mxu0 0.0
        %7700 = vmatprep.subr.mxu0 0.0
        %7701 = vmatpush1.msra.mxu0 0.0
        %7702 = vmatprep.subr.mxu0 0.0
        %7703 = vmatpush1.msra.mxu0 0.0
        %7704 = vmatprep.subr.mxu0 0.0
        %7705 = vmatpush1.msra.mxu0 0.0
        %7706 = vmatprep.subr.mxu0 0.0
        %7707 = vmatpush1.msra.mxu0 0.0
        %7708 = vmatprep.subr.mxu0 0.0
        %7709 = vmatpush1.msra.mxu0 0.0
        %7710 = vmatprep.subr.mxu0 0.0
        %7711 = vmatpush1.msra.mxu0 0.0
        %7712 = vmatprep.subr.mxu0 0.0
        %7713 = vmatpush1.msra.mxu0 0.0
        %7714 = vmatprep.subr.mxu0 0.0
        %7715 = vmatpush1.msra.mxu0 0.0
        %7716 = vmatprep.subr.mxu0 0.0
        %7717 = vmatpush1.msra.mxu0 0.0
        %7718 = vmatprep.subr.mxu0 0.0
        %7719 = vmatpush1.msra.mxu0 0.0
        %7720 = vmatprep.subr.mxu0 0.0
        %7721 = vmatpush1.msra.mxu0 0.0
        %7722 = vmatprep.subr.mxu0 0.0
        %7723 = vmatpush1.msra.mxu0 0.0
        %7724 = vmatprep.subr.mxu0 0.0
        %7725 = vmatpush1.msra.mxu0 0.0
        %7726 = vmatprep.subr.mxu0 0.0
        %7727 = vmatpush1.msra.mxu0 0.0
        %7728 = vmatprep.subr.mxu0 0.0
        %7729 = vmatpush1.msra.mxu0 0.0
        %7730 = vmatprep.subr.mxu0 0.0
        %7731 = vmatpush1.msra.mxu0 0.0
        %7732 = vmatprep.subr.mxu0 0.0
        %7733 = vmatpush1.msra.mxu0 0.0
        %7734 = vmatprep.subr.mxu0 0.0
        %7735 = vmatpush1.msra.mxu0 0.0
        %7736 = vmatprep.subr.mxu0 0.0
        %7737 = vmatpush1.msra.mxu0 0.0
        %7738 = vmatprep.subr.mxu0 0.0
        %7739 = vmatpush1.msra.mxu0 0.0
        %7740 = vmatprep.mubr.f32.mxu0 0.0
        %7741 = vmatmul.mubr.f32.gmra.mrb[0].mxu0 %v7674
        %v7742 = vpop.f32.mrb[0].mxu0
        %v7743 = vadd.f32 %v7672, %v7742
        %v7744 = vpop.f32.mrb[0].mxu0
        %7745 = vdwg.mxu0
        %7746 = vst [vmem:[%s892] sm:$0x1] %v7743
        %s7747 = sand.u32 %s695, 1
        %s7748 = scalar_lea.sflag [#allocation3], %s7747
        %s7749 = sand.u32 %s695, 1
        %s7750 = scalar_lea.vmem [#allocation2], %s7749
        // Predicated region
        $region137: #{_lambda_.1} parent=135 // pred_check
          %p7751 = pneg %p705
        $region138: #{_lambda_.1} parent=135 // pred_check_branch
          %7753 = sbr.rel (%p7751) target = $region140
        $region139: #{_lambda_.1} parent=135 // pred_region
          %s7755 = ssub.s32 16, 16
          %7756 = vsyncadd %s7748, %s7755
          %s7757 = smul.addr %s73, 16
          %s7758 = scalar_lea.hbm %s59, %s7757
          %s7760 = sshll.u32 %s7750, 4
          %s7761 = int_to_ptr.vmem [resolvable:$true] %s7760
          %7763 = dma.vmem_to_hbm [thread:$0]  %s7761, 16, %s7758, %s7748
        $region140: #{_lambda_.1} parent=135 // pred_fallthru
          _
      $region136: #{_lambda_.1} parent=5 // pred_fallthru
        _
      %p7764 = scmp.le.s32.totalorder 2, %s68
      // Predicated region
      $region141: #{_lambda_.1} parent=5 // pred_check
        %p7765 = pneg %p7764
      $region142: #{_lambda_.1} parent=5 // pred_check_branch
        %7767 = sbr.rel (%p7765) target = $region144
      $region143: #{_lambda_.1} parent=5 // pred_region
        %s7768 = ssub.s32 %s68, 2
        // Predicated region
        $region145: #{_lambda_.1} parent=143 // pred_check
          %p7769 = pneg %p711
        $region146: #{_lambda_.1} parent=143 // pred_check_branch
          %7771 = sbr.rel (%p7769) target = $region148
        $region147: #{_lambda_.1} parent=143 // pred_region
          %s7772 = sand.u32 %s696, 1
          %s7773 = scalar_lea.sflag [#allocation3], %s7772
          %s7774 = sand.u32 %s696, 1
          %s7775 = scalar_lea.vmem [#allocation2], %s7774
          %7776 = dma.done %s7773, 16
        $region148: #{_lambda_.1} parent=143 // pred_fallthru
          _
      $region144: #{_lambda_.1} parent=5 // pred_fallthru
        _
    $region6: #{_lambda_.1} parent=1 // loop_footer
      %s72 = sadd.s32 1, %s68
    $region7: #{_lambda_.1} parent=1 // loop_footer_branch
      %67 = sbr.rel target = $region3
    $region8: #{_lambda_.1} parent=1 // loop_exit
      _
    %7777 = vsyncpa [#allocation3], 1
    %s7778 = scalar_lea.sflag [#allocation3], 1
    %7779 = vsyncpa %s7778, 1

</llo_original>
